<compile_context>
chip_gen: v6e
topology: v6e:2x2x1
jax: 0.10.0
libtpu: 0.0.40
codegen_flags: <defaults>
</compile_context>

<pallas_src>
import functools
import math

import jax
import jax.numpy as jnp
from jax.experimental import pallas as pl
from jax.experimental.pallas import tpu as pltpu


def _layer_norm(x, w, b, eps=1e-5):
    u = jnp.mean(x, axis=-1, keepdims=True)
    xc = x - u
    s = jnp.mean(xc * xc, axis=-1, keepdims=True)
    return w * (xc * jax.lax.rsqrt(s + eps)) + b


def _gelu_exact(x):
    # torch nn.GELU() default = exact erf form
    return 0.5 * x * (1.0 + jax.lax.erf(x * (1.0 / math.sqrt(2.0))))


def gpt2_layer_kernel(xs_ref, xq_ref,
                      wq_ref, bq_ref, wk_ref, bk_ref, wv_ref, bv_ref,
                      wo_ref, bo_ref,
                      ln1_w_ref, ln1_b_ref,
                      wfc_ref, bfc_ref, wout_ref, bout_ref,
                      ln2_w_ref, ln2_b_ref,
                      out_ref,
                      k_scr, v_scr,
                      *, num_heads, head_dim, block_q, block_k):
    qi = pl.program_id(1)
    NH, d = num_heads, head_dim
    S = k_scr.shape[1]
    H = NH * d

    def matmul(a_bf16, w_ref, b_ref):
        # bf16 operands, f32 accumulation on the MXU; bias add in f32.
        return (jnp.dot(a_bf16, w_ref[...], preferred_element_type=jnp.float32)
                + b_ref[...])

    # ---- K/V projection over the full sequence: once per batch element, stored
    # head-major so query tiles never re-transpose K/V. --------------------------
    @pl.when(qi == 0)
    def _():
        xs = xs_ref[0]                                            # (S, H) bf16
        k = matmul(xs, wk_ref, bk_ref)                            # (S, H) f32
        v = matmul(xs, wv_ref, bv_ref)
        k_scr[...] = jnp.swapaxes(k.reshape(S, NH, d), 0, 1).astype(jnp.bfloat16)
        v_scr[...] = jnp.swapaxes(v.reshape(S, NH, d), 0, 1).astype(jnp.bfloat16)

    # ---- query tile -------------------------------------------------------------
    x_q_f32 = xq_ref[0].astype(jnp.float32)                      # (TQ, H)
    x_q = x_q_f32.astype(jnp.bfloat16)

    # q projection with 1/sqrt(head_dim) folded in (cheaper than scaling scores).
    scale = 1.0 / math.sqrt(d)
    q = matmul(x_q, wq_ref, bq_ref) * scale                      # (TQ, H) f32
    qh = jnp.swapaxes(q.astype(jnp.bfloat16).reshape(block_q, NH, d), 0, 1)  # (NH,TQ,d)

    # ---- flash-style attention over key blocks (online softmax) -----------------
    num_kb = S // block_k

    def kv_step(kb, carry):
        m_prev, l_prev, acc_prev = carry
        k0 = pl.multiple_of(kb * block_k, block_k)
        k_blk = k_scr[:, pl.ds(k0, block_k), :]                  # (NH, tk, d) bf16
        v_blk = v_scr[:, pl.ds(k0, block_k), :]
        s = jnp.einsum('hqd,hkd->hqk', qh, k_blk,
                       preferred_element_type=jnp.float32)       # (NH, TQ, tk) f32
        m_new = jnp.maximum(m_prev, jnp.max(s, axis=-1, keepdims=True))
        alpha = jnp.exp(m_prev - m_new)
        p = jnp.exp(s - m_new)
        l_new = alpha * l_prev + jnp.sum(p, axis=-1, keepdims=True)
        acc_new = alpha * acc_prev + jnp.einsum(
            'hqk,hkd->hqd', p.astype(jnp.bfloat16), v_blk,
            preferred_element_type=jnp.float32)
        return m_new, l_new, acc_new

    carry0 = (jnp.full((NH, block_q, 1), -jnp.inf, jnp.float32),
              jnp.zeros((NH, block_q, 1), jnp.float32),
              jnp.zeros((NH, block_q, d), jnp.float32))
    loop_kwargs = {"unroll": True} if num_kb <= 8 else {}
    _, l_fin, acc = jax.lax.fori_loop(0, num_kb, kv_step, carry0, **loop_kwargs)

    # attention dropout: identity (eval)
    ctx = acc * pl.reciprocal(l_fin, approx=True)                # (NH, TQ, d) f32
    # NOTE: folding the head axis directly into the output projection would need a
    # dot_general with two contracting dims (unsupported in Mosaic), so we keep one
    # small (TQ, H)-sized relayout here.
    ctx = jnp.swapaxes(ctx, 0, 1).reshape(block_q, H)            # (TQ, H)
    attn_out = matmul(ctx.astype(jnp.bfloat16), wo_ref, bo_ref)

    # ---- residual + LayerNorm 1 (f32) -------------------------------------------
    x1 = _layer_norm(x_q_f32 + attn_out, ln1_w_ref[...], ln1_b_ref[...])

    # ---- MLP (bf16 matmuls, f32 accumulate / activation) -------------------------
    ffn = _gelu_exact(matmul(x1.astype(jnp.bfloat16), wfc_ref, bfc_ref))
    mlp_out = matmul(ffn.astype(jnp.bfloat16), wout_ref, bout_ref)

    # ---- residual + LayerNorm 2 (f32) -------------------------------------------
    x2 = _layer_norm(x1 + mlp_out, ln2_w_ref[...], ln2_b_ref[...])

    out_ref[0] = x2.astype(out_ref.dtype)        # lane-dense (TQ, H) store


_PARAM_ORDER = ['wq', 'bq', 'wk', 'bk', 'wv', 'bv', 'wo', 'bo',
                'ln1_w', 'ln1_b', 'wfc', 'bfc', 'wout', 'bout',
                'ln2_w', 'ln2_b']
_BF16_WEIGHTS = frozenset({'wq', 'wk', 'wv', 'wo', 'wfc', 'wout'})


def _compiler_params():
    try:
        cap = int(pltpu.get_tpu_info().vmem_capacity_bytes)
        vmem_limit = (cap * 3) // 4
    except Exception:
        # Explicit fallback: never leave the small scoped default (16/32 MiB);
        # 48 MiB is safe on v5e/v6e (128 MiB) and v7x (64 MiB).
        vmem_limit = 48 * 1024 * 1024
    return pltpu.CompilerParams(
        dimension_semantics=("parallel", "arbitrary"),
        vmem_limit_bytes=vmem_limit)


def _largest_tile(S, cap):
    """Largest divisor of S that is a multiple of 8 and <= cap; else S."""
    for c in range(min(cap, S), 7, -1):
        if S % c == 0 and c % 8 == 0:
            return c
    return S


def gpt2_layer(x, params, num_heads, *, block_q=None, block_k=None):
    B, S, H = x.shape
    assert H % num_heads == 0
    head_dim = H // num_heads

    if block_q is None:
        block_q = _largest_tile(S, 256)
    if block_k is None:
        block_k = _largest_tile(S, 512)
    assert S % block_q == 0 and (block_q == S or block_q % 8 == 0)
    assert S % block_k == 0 and (block_k == S or block_k % 8 == 0)
    num_q_blocks = S // block_q

    # Matmul weights in bf16 (halves weight VMEM + DMA bytes, bf16 MXU path);
    # biases / LayerNorm params stay f32.
    param_args = []
    for name in _PARAM_ORDER:
        p = params[name]
        p = p.astype(jnp.bfloat16) if name in _BF16_WEIGHTS else p.astype(jnp.float32)
        param_args.append(p)

    # Full-sequence x (only used for the K/V projection) travels as bf16;
    # the per-tile query/residual path keeps full precision.
    x_bf16 = x.astype(jnp.bfloat16)

    kernel = functools.partial(gpt2_layer_kernel,
                               num_heads=num_heads, head_dim=head_dim,
                               block_q=block_q, block_k=block_k)

    def run(param_mode):
        def pspec(p):
            kwargs = {} if param_mode is None else {"pipeline_mode": param_mode}
            return pl.BlockSpec(p.shape, lambda b, qi, n=p.ndim: (0,) * n, **kwargs)

        in_specs = [
            pl.BlockSpec((1, S, H), lambda b, qi: (b, 0, 0)),          # bf16 full-seq x
            pl.BlockSpec((1, block_q, H), lambda b, qi: (b, qi, 0)),   # f32 query tile
        ] + [pspec(p) for p in param_args]

        return pl.pallas_call(
            kernel,
            out_shape=jax.ShapeDtypeStruct((B, S, H), x.dtype),
            grid_spec=pltpu.PrefetchScalarGridSpec(
                num_scalar_prefetch=0,
                grid=(B, num_q_blocks),
                in_specs=in_specs,
                out_specs=pl.BlockSpec((1, block_q, H), lambda b, qi: (b, qi, 0)),
                scratch_shapes=[
                    pltpu.VMEM((num_heads, S, head_dim), jnp.bfloat16),  # K head-major
                    pltpu.VMEM((num_heads, S, head_dim), jnp.bfloat16),  # V head-major
                ],
            ),
            compiler_params=_compiler_params(),
        )(x_bf16, x, *param_args)

    # Single-buffer the grid-invariant parameters; fall back cleanly if this JAX
    # build rejects Buffered(1).
    buffered = getattr(pl, "Buffered", None)
    if buffered is not None:
        try:
            return run(buffered(1))
        except Exception:
            pass
    return run(None)


def gpt2_layer_reference(x, params, num_heads):
    """Pure-JAX f32 reference matching the PyTorch GPT2Layer forward (eval mode)."""
    B, S, H = x.shape
    d = H // num_heads

    def lin(v, w, b):
        return v @ w + b

    q = lin(x, params['wq'], params['bq'])
    k = lin(x, params['wk'], params['bk'])
    v = lin(x, params['wv'], params['bv'])
    q = q.reshape(B, S, num_heads, d).transpose(0, 2, 1, 3)
    k = k.reshape(B, S, num_heads, d).transpose(0, 2, 1, 3)
    v = v.reshape(B, S, num_heads, d).transpose(0, 2, 1, 3)
    scores = (q @ jnp.swapaxes(k, -1, -2)) / math.sqrt(d)
    probs = jax.nn.softmax(scores, axis=-1)
    ctx = (probs @ v).transpose(0, 2, 1, 3).reshape(B, S, H)
    attn = lin(ctx, params['wo'], params['bo'])
    x1 = _layer_norm(x + attn, params['ln1_w'], params['ln1_b'])
    ffn = _gelu_exact(lin(x1, params['wfc'], params['bfc']))
    x2 = _layer_norm(x1 + lin(ffn, params['wout'], params['bout']),
                     params['ln2_w'], params['ln2_b'])
    return x2


def init_params(key, hidden_size, intermediate_size):
    ks = jax.random.split(key, 12)
    H, I = hidden_size, intermediate_size
    w = lambda k, shape: (0.02 * jax.random.normal(k, shape)).astype(jnp.float32)
    return {
        # attention (weights pre-transposed to [in, out])
        'wq': w(ks[0], (H, H)),  'bq': w(ks[1], (1, H)),
        'wk': w(ks[2], (H, H)),  'bk': w(ks[3], (1, H)),
        'wv': w(ks[4], (H, H)),  'bv': w(ks[5], (1, H)),
        'wo': w(ks[6], (H, H)),  'bo': w(ks[7], (1, H)),
        # layernorms (torch init: weight=1, bias=0)
        'ln1_w': jnp.ones((1, H), jnp.float32), 'ln1_b': jnp.zeros((1, H), jnp.float32),
        'ln2_w': jnp.ones((1, H), jnp.float32), 'ln2_b': jnp.zeros((1, H), jnp.float32),
        # MLP
        'wfc': w(ks[8], (H, I)),   'bfc': w(ks[9], (1, I)),
        'wout': w(ks[10], (I, H)), 'bout': w(ks[11], (1, H)),
    }


if __name__ == "__main__":
    # Small but layout-friendly shapes: head_dim = 128 (full lane tile); block_q = 8
    # and block_k = 8 so the query-tile grid axis AND the key-block flash loop are
    # both actually exercised (2 q-tiles x 2 k-blocks per batch element).
    B, S, H, NH, I = 2, 16, 256, 2, 512

    key = jax.random.PRNGKey(0)
    k_x, k_p = jax.random.split(key)
    x = jax.random.normal(k_x, (B, S, H), dtype=jnp.float32)
    params = init_params(k_p, H, I)

    out = gpt2_layer(x, params, num_heads=NH, block_q=8, block_k=8)
    jax.block_until_ready(out)

    assert out.shape == (B, S, H) and out.dtype == jnp.float32
    assert bool(jnp.all(jnp.isfinite(out)))

    ref = gpt2_layer_reference(x, params, NH)
    max_err = float(jnp.max(jnp.abs(out - ref)))
    assert max_err < 5e-2, f"mismatch vs f32 reference: max abs err = {max_err}"

    print("KERNEL_OK")
</pallas_src>

<mosaic_0001>
module attributes {stable_mosaic.version = 11 : i64} {
  func.func @gpt2_layer_kernel(%arg0: i32, %arg1: i32, %arg2: memref<1x16x256xbf16, #tpu.memory_space<vmem>>, %arg3: memref<1x8x256xf32, #tpu.memory_space<vmem>>, %arg4: memref<256x256xbf16, #tpu.memory_space<vmem>>, %arg5: memref<1x256xf32, #tpu.memory_space<vmem>>, %arg6: memref<256x256xbf16, #tpu.memory_space<vmem>>, %arg7: memref<1x256xf32, #tpu.memory_space<vmem>>, %arg8: memref<256x256xbf16, #tpu.memory_space<vmem>>, %arg9: memref<1x256xf32, #tpu.memory_space<vmem>>, %arg10: memref<256x256xbf16, #tpu.memory_space<vmem>>, %arg11: memref<1x256xf32, #tpu.memory_space<vmem>>, %arg12: memref<1x256xf32, #tpu.memory_space<vmem>>, %arg13: memref<1x256xf32, #tpu.memory_space<vmem>>, %arg14: memref<256x512xbf16, #tpu.memory_space<vmem>>, %arg15: memref<1x512xf32, #tpu.memory_space<vmem>>, %arg16: memref<512x256xbf16, #tpu.memory_space<vmem>>, %arg17: memref<1x256xf32, #tpu.memory_space<vmem>>, %arg18: memref<1x256xf32, #tpu.memory_space<vmem>>, %arg19: memref<1x256xf32, #tpu.memory_space<vmem>>, %arg20: memref<1x8x256xf32, #tpu.memory_space<vmem>>, %arg21: memref<2x16x128xbf16, #tpu.memory_space<vmem>>, %arg22: memref<2x16x128xbf16, #tpu.memory_space<vmem>>) attributes {dimension_semantics = [#tpu.dimension_semantics<parallel>, #tpu.dimension_semantics<arbitrary>], iteration_bounds = array<i64: 2, 2>, scalar_prefetch = 0 : i64, scratch_operands = 2 : i64, tpu.core_type = #tpu.core_type<tc>, window_params = [{transform_indices = @transform_0, window_bounds = array<i64: 1, 16, 256>}, {transform_indices = @transform_1, window_bounds = array<i64: 1, 8, 256>}, {pipeline_mode = #tpu.pipeline_mode<synchronous>, transform_indices = @transform_2, window_bounds = array<i64: 256, 256>}, {pipeline_mode = #tpu.pipeline_mode<synchronous>, transform_indices = @transform_3, window_bounds = array<i64: 1, 256>}, {pipeline_mode = #tpu.pipeline_mode<synchronous>, transform_indices = @transform_4, window_bounds = array<i64: 256, 256>}, {pipeline_mode = #tpu.pipeline_mode<synchronous>, transform_indices = @transform_5, window_bounds = array<i64: 1, 256>}, {pipeline_mode = #tpu.pipeline_mode<synchronous>, transform_indices = @transform_6, window_bounds = array<i64: 256, 256>}, {pipeline_mode = #tpu.pipeline_mode<synchronous>, transform_indices = @transform_7, window_bounds = array<i64: 1, 256>}, {pipeline_mode = #tpu.pipeline_mode<synchronous>, transform_indices = @transform_8, window_bounds = array<i64: 256, 256>}, {pipeline_mode = #tpu.pipeline_mode<synchronous>, transform_indices = @transform_9, window_bounds = array<i64: 1, 256>}, {pipeline_mode = #tpu.pipeline_mode<synchronous>, transform_indices = @transform_10, window_bounds = array<i64: 1, 256>}, {pipeline_mode = #tpu.pipeline_mode<synchronous>, transform_indices = @transform_11, window_bounds = array<i64: 1, 256>}, {pipeline_mode = #tpu.pipeline_mode<synchronous>, transform_indices = @transform_12, window_bounds = array<i64: 256, 512>}, {pipeline_mode = #tpu.pipeline_mode<synchronous>, transform_indices = @transform_13, window_bounds = array<i64: 1, 512>}, {pipeline_mode = #tpu.pipeline_mode<synchronous>, transform_indices = @transform_14, window_bounds = array<i64: 512, 256>}, {pipeline_mode = #tpu.pipeline_mode<synchronous>, transform_indices = @transform_15, window_bounds = array<i64: 1, 256>}, {pipeline_mode = #tpu.pipeline_mode<synchronous>, transform_indices = @transform_16, window_bounds = array<i64: 1, 256>}, {pipeline_mode = #tpu.pipeline_mode<synchronous>, transform_indices = @transform_17, window_bounds = array<i64: 1, 256>}, {transform_indices = @transform_18, window_bounds = array<i64: 1, 8, 256>}]} {
    %c0_i32 = arith.constant 0 : i32
    %0 = arith.cmpi eq, %arg1, %c0_i32 : i32
    %1 = arith.extui %0 : i1 to i32
    %c0_i32_0 = arith.constant 0 : i32
    %2 = arith.cmpi ne, %1, %c0_i32_0 : i32
    scf.if %2 {
      %c0_68 = arith.constant 0 : index
      %c0_69 = arith.constant 0 : index
      %c0_70 = arith.constant 0 : index
      %147 = vector.load %arg2[%c0_68, %c0_69, %c0_70] : memref<1x16x256xbf16, #tpu.memory_space<vmem>>, vector<1x16x256xbf16>
      %148 = vector.shape_cast %147 : vector<1x16x256xbf16> to vector<16x256xbf16>
      %c0_71 = arith.constant 0 : index
      %c0_72 = arith.constant 0 : index
      %149 = vector.load %arg6[%c0_71, %c0_72] : memref<256x256xbf16, #tpu.memory_space<vmem>>, vector<256x256xbf16>
      %cst_73 = arith.constant dense<0.000000e+00> : vector<16x256xf32>
      %150 = tpu.matmul %148, %149, %cst_73 {dimension_numbers = #tpu.dot_dimension_numbers<[1], [0], [0], [1], [0, 0, 1, 1], [], []>} : vector<16x256xbf16>, vector<256x256xbf16>, vector<16x256xf32> -> vector<16x256xf32>
      %c0_74 = arith.constant 0 : index
      %c0_75 = arith.constant 0 : index
      %151 = vector.load %arg7[%c0_74, %c0_75] : memref<1x256xf32, #tpu.memory_space<vmem>>, vector<1x256xf32>
      %152 = vector.broadcast %151 : vector<1x256xf32> to vector<16x256xf32>
      %153 = arith.addf %150, %152 : vector<16x256xf32>
      %c0_76 = arith.constant 0 : index
      %c0_77 = arith.constant 0 : index
      %154 = vector.load %arg8[%c0_76, %c0_77] : memref<256x256xbf16, #tpu.memory_space<vmem>>, vector<256x256xbf16>
      %cst_78 = arith.constant dense<0.000000e+00> : vector<16x256xf32>
      %155 = tpu.matmul %148, %154, %cst_78 {dimension_numbers = #tpu.dot_dimension_numbers<[1], [0], [0], [1], [0, 0, 1, 1], [], []>} : vector<16x256xbf16>, vector<256x256xbf16>, vector<16x256xf32> -> vector<16x256xf32>
      %c0_79 = arith.constant 0 : index
      %c0_80 = arith.constant 0 : index
      %156 = vector.load %arg9[%c0_79, %c0_80] : memref<1x256xf32, #tpu.memory_space<vmem>>, vector<1x256xf32>
      %157 = vector.broadcast %156 : vector<1x256xf32> to vector<16x256xf32>
      %158 = arith.addf %155, %157 : vector<16x256xf32>
      %159 = vector.shape_cast %153 : vector<16x256xf32> to vector<16x2x128xf32>
      %160 = tpu.transpose %159, [1, 0, 2] : vector<16x2x128xf32> -> vector<2x16x128xf32>
      %161 = arith.truncf %160 : vector<2x16x128xf32> to vector<2x16x128xbf16>
      %c0_81 = arith.constant 0 : index
      %c0_82 = arith.constant 0 : index
      %c0_83 = arith.constant 0 : index
      %162 = vector.load %arg21[%c0_81, %c0_82, %c0_83] : memref<2x16x128xbf16, #tpu.memory_space<vmem>>, vector<2x16x128xbf16>
      tpu.vector_store %arg21[%c0_81, %c0_82, %c0_83], %161 {strides = array<i32>} : memref<2x16x128xbf16, #tpu.memory_space<vmem>>, vector<2x16x128xbf16>,
      %163 = vector.shape_cast %158 : vector<16x256xf32> to vector<16x2x128xf32>
      %164 = tpu.transpose %163, [1, 0, 2] : vector<16x2x128xf32> -> vector<2x16x128xf32>
      %165 = arith.truncf %164 : vector<2x16x128xf32> to vector<2x16x128xbf16>
      %c0_84 = arith.constant 0 : index
      %c0_85 = arith.constant 0 : index
      %c0_86 = arith.constant 0 : index
      %166 = vector.load %arg22[%c0_84, %c0_85, %c0_86] : memref<2x16x128xbf16, #tpu.memory_space<vmem>>, vector<2x16x128xbf16>
      tpu.vector_store %arg22[%c0_84, %c0_85, %c0_86], %165 {strides = array<i32>} : memref<2x16x128xbf16, #tpu.memory_space<vmem>>, vector<2x16x128xbf16>,
    } else {
    }
    %c0 = arith.constant 0 : index
    %c0_1 = arith.constant 0 : index
    %c0_2 = arith.constant 0 : index
    %3 = vector.load %arg3[%c0, %c0_1, %c0_2] : memref<1x8x256xf32, #tpu.memory_space<vmem>>, vector<1x8x256xf32>
    %4 = vector.shape_cast %3 : vector<1x8x256xf32> to vector<8x256xf32>
    %5 = arith.truncf %4 : vector<8x256xf32> to vector<8x256xbf16>
    %c0_3 = arith.constant 0 : index
    %c0_4 = arith.constant 0 : index
    %6 = vector.load %arg4[%c0_3, %c0_4] : memref<256x256xbf16, #tpu.memory_space<vmem>>, vector<256x256xbf16>
    %cst = arith.constant dense<0.000000e+00> : vector<8x256xf32>
    %7 = tpu.matmul %5, %6, %cst {dimension_numbers = #tpu.dot_dimension_numbers<[1], [0], [0], [1], [0, 0, 1, 1], [], []>} : vector<8x256xbf16>, vector<256x256xbf16>, vector<8x256xf32> -> vector<8x256xf32>
    %c0_5 = arith.constant 0 : index
    %c0_6 = arith.constant 0 : index
    %8 = vector.load %arg5[%c0_5, %c0_6] : memref<1x256xf32, #tpu.memory_space<vmem>>, vector<1x256xf32>
    %9 = vector.broadcast %8 : vector<1x256xf32> to vector<8x256xf32>
    %10 = arith.addf %7, %9 : vector<8x256xf32>
    %cst_7 = arith.constant 0.0883883461 : f32
    %11 = vector.broadcast %cst_7 : f32 to vector<8x256xf32>
    %12 = arith.mulf %10, %11 : vector<8x256xf32>
    %13 = arith.truncf %12 : vector<8x256xf32> to vector<8x256xbf16>
    %14 = vector.shape_cast %13 : vector<8x256xbf16> to vector<8x2x128xbf16>
    %15 = tpu.transpose %14, [1, 0, 2] : vector<8x2x128xbf16> -> vector<2x8x128xbf16>
    %cst_8 = arith.constant 0xFF800000 : f32
    %16 = vector.broadcast %cst_8 : f32 to vector<2x8x1xf32>
    %cst_9 = arith.constant 0.000000e+00 : f32
    %17 = vector.broadcast %cst_9 : f32 to vector<2x8x1xf32>
    %cst_10 = arith.constant 0.000000e+00 : f32
    %18 = vector.broadcast %cst_10 : f32 to vector<2x8x128xf32>
    %c0_i32_11 = arith.constant 0 : i32
    %c8_i32 = arith.constant 8 : i32
    %19 = arith.muli %c0_i32_11, %c8_i32 : i32
    %20 = tpu.assume_multiple %19, 8 : i32
    %c0_12 = arith.constant 0 : index
    %21 = arith.index_cast %20 : i32 to index
    %c0_13 = arith.constant 0 : index
    %22 = vector.load %arg21[%c0_12, %21, %c0_13] : memref<2x16x128xbf16, #tpu.memory_space<vmem>>, vector<2x8x128xbf16>
    %c0_14 = arith.constant 0 : index
    %23 = arith.index_cast %20 : i32 to index
    %c0_15 = arith.constant 0 : index
    %24 = vector.load %arg22[%c0_14, %23, %c0_15] : memref<2x16x128xbf16, #tpu.memory_space<vmem>>, vector<2x8x128xbf16>
    "tpu.trace_start"() <{level = 10 : i32, message = "hqd,hkd->hqk"}> : () -> ()
    %cst_16 = arith.constant dense<0.000000e+00> : vector<2x8x8xf32>
    %25 = tpu.matmul %15, %22, %cst_16 {dimension_numbers = #tpu.dot_dimension_numbers<[2], [2], [1], [1], [0, 0, 0, 1, 1, 1], [0], [0]>} : vector<2x8x128xbf16>, vector<2x8x128xbf16>, vector<2x8x8xf32> -> vector<2x8x8xf32>
    "tpu.trace_stop"() : () -> ()
    %cst_17 = arith.constant dense<0xFF800000> : vector<2x8xf32>
    %26 = vector.multi_reduction <maximumf>, %25, %cst_17 [2] : vector<2x8x8xf32> to vector<2x8xf32>
    %27 = vector.shape_cast %26 : vector<2x8xf32> to vector<2x8x1xf32>
    %28 = arith.maximumf %16, %27 : vector<2x8x1xf32>
    %29 = arith.subf %16, %28 : vector<2x8x1xf32>
    %30 = math.exp %29 : vector<2x8x1xf32>
    %31 = vector.broadcast %28 : vector<2x8x1xf32> to vector<2x8x8xf32>
    %32 = arith.subf %25, %31 : vector<2x8x8xf32>
    %33 = math.exp %32 : vector<2x8x8xf32>
    %34 = arith.mulf %30, %17 : vector<2x8x1xf32>
    %cst_18 = arith.constant dense<0.000000e+00> : vector<2x8xf32>
    %35 = vector.multi_reduction <add>, %33, %cst_18 [2] : vector<2x8x8xf32> to vector<2x8xf32>
    %36 = vector.shape_cast %35 : vector<2x8xf32> to vector<2x8x1xf32>
    %37 = arith.addf %34, %36 : vector<2x8x1xf32>
    %38 = vector.broadcast %30 : vector<2x8x1xf32> to vector<2x8x128xf32>
    %39 = arith.mulf %38, %18 : vector<2x8x128xf32>
    %40 = arith.truncf %33 : vector<2x8x8xf32> to vector<2x8x8xbf16>
    "tpu.trace_start"() <{level = 10 : i32, message = "hqk,hkd->hqd"}> : () -> ()
    %cst_19 = arith.constant dense<0.000000e+00> : vector<2x8x128xf32>
    %41 = tpu.matmul %40, %24, %cst_19 {dimension_numbers = #tpu.dot_dimension_numbers<[2], [1], [1], [2], [0, 0, 0, 1, 1, 2], [0], [0]>} : vector<2x8x8xbf16>, vector<2x8x128xbf16>, vector<2x8x128xf32> -> vector<2x8x128xf32>
    "tpu.trace_stop"() : () -> ()
    %42 = arith.addf %39, %41 : vector<2x8x128xf32>
    %c1_i32 = arith.constant 1 : i32
    %c8_i32_20 = arith.constant 8 : i32
    %43 = arith.muli %c1_i32, %c8_i32_20 : i32
    %44 = tpu.assume_multiple %43, 8 : i32
    %c0_21 = arith.constant 0 : index
    %45 = arith.index_cast %44 : i32 to index
    %c0_22 = arith.constant 0 : index
    %46 = vector.load %arg21[%c0_21, %45, %c0_22] : memref<2x16x128xbf16, #tpu.memory_space<vmem>>, vector<2x8x128xbf16>
    %c0_23 = arith.constant 0 : index
    %47 = arith.index_cast %44 : i32 to index
    %c0_24 = arith.constant 0 : index
    %48 = vector.load %arg22[%c0_23, %47, %c0_24] : memref<2x16x128xbf16, #tpu.memory_space<vmem>>, vector<2x8x128xbf16>
    "tpu.trace_start"() <{level = 10 : i32, message = "hqd,hkd->hqk"}> : () -> ()
    %cst_25 = arith.constant dense<0.000000e+00> : vector<2x8x8xf32>
    %49 = tpu.matmul %15, %46, %cst_25 {dimension_numbers = #tpu.dot_dimension_numbers<[2], [2], [1], [1], [0, 0, 0, 1, 1, 1], [0], [0]>} : vector<2x8x128xbf16>, vector<2x8x128xbf16>, vector<2x8x8xf32> -> vector<2x8x8xf32>
    "tpu.trace_stop"() : () -> ()
    %cst_26 = arith.constant dense<0xFF800000> : vector<2x8xf32>
    %50 = vector.multi_reduction <maximumf>, %49, %cst_26 [2] : vector<2x8x8xf32> to vector<2x8xf32>
    %51 = vector.shape_cast %50 : vector<2x8xf32> to vector<2x8x1xf32>
    %52 = arith.maximumf %28, %51 : vector<2x8x1xf32>
    %53 = arith.subf %28, %52 : vector<2x8x1xf32>
    %54 = math.exp %53 : vector<2x8x1xf32>
    %55 = vector.broadcast %52 : vector<2x8x1xf32> to vector<2x8x8xf32>
    %56 = arith.subf %49, %55 : vector<2x8x8xf32>
    %57 = math.exp %56 : vector<2x8x8xf32>
    %58 = arith.mulf %54, %37 : vector<2x8x1xf32>
    %cst_27 = arith.constant dense<0.000000e+00> : vector<2x8xf32>
    %59 = vector.multi_reduction <add>, %57, %cst_27 [2] : vector<2x8x8xf32> to vector<2x8xf32>
    %60 = vector.shape_cast %59 : vector<2x8xf32> to vector<2x8x1xf32>
    %61 = arith.addf %58, %60 : vector<2x8x1xf32>
    %62 = vector.broadcast %54 : vector<2x8x1xf32> to vector<2x8x128xf32>
    %63 = arith.mulf %62, %42 : vector<2x8x128xf32>
    %64 = arith.truncf %57 : vector<2x8x8xf32> to vector<2x8x8xbf16>
    "tpu.trace_start"() <{level = 10 : i32, message = "hqk,hkd->hqd"}> : () -> ()
    %cst_28 = arith.constant dense<0.000000e+00> : vector<2x8x128xf32>
    %65 = tpu.matmul %64, %48, %cst_28 {dimension_numbers = #tpu.dot_dimension_numbers<[2], [1], [1], [2], [0, 0, 0, 1, 1, 2], [0], [0]>} : vector<2x8x8xbf16>, vector<2x8x128xbf16>, vector<2x8x128xf32> -> vector<2x8x128xf32>
    "tpu.trace_stop"() : () -> ()
    %66 = arith.addf %63, %65 : vector<2x8x128xf32>
    %c2_i32 = arith.constant 2 : i32
    %67 = tpu.reciprocal %61 {approx = true} : vector<2x8x1xf32> -> vector<2x8x1xf32>
    %68 = vector.broadcast %67 : vector<2x8x1xf32> to vector<2x8x128xf32>
    %69 = arith.mulf %66, %68 : vector<2x8x128xf32>
    %70 = tpu.transpose %69, [1, 0, 2] : vector<2x8x128xf32> -> vector<8x2x128xf32>
    %71 = vector.shape_cast %70 : vector<8x2x128xf32> to vector<8x256xf32>
    %72 = arith.truncf %71 : vector<8x256xf32> to vector<8x256xbf16>
    %c0_29 = arith.constant 0 : index
    %c0_30 = arith.constant 0 : index
    %73 = vector.load %arg10[%c0_29, %c0_30] : memref<256x256xbf16, #tpu.memory_space<vmem>>, vector<256x256xbf16>
    %cst_31 = arith.constant dense<0.000000e+00> : vector<8x256xf32>
    %74 = tpu.matmul %72, %73, %cst_31 {dimension_numbers = #tpu.dot_dimension_numbers<[1], [0], [0], [1], [0, 0, 1, 1], [], []>} : vector<8x256xbf16>, vector<256x256xbf16>, vector<8x256xf32> -> vector<8x256xf32>
    %c0_32 = arith.constant 0 : index
    %c0_33 = arith.constant 0 : index
    %75 = vector.load %arg11[%c0_32, %c0_33] : memref<1x256xf32, #tpu.memory_space<vmem>>, vector<1x256xf32>
    %76 = vector.broadcast %75 : vector<1x256xf32> to vector<8x256xf32>
    %77 = arith.addf %74, %76 : vector<8x256xf32>
    %78 = arith.addf %4, %77 : vector<8x256xf32>
    %c0_34 = arith.constant 0 : index
    %c0_35 = arith.constant 0 : index
    %79 = vector.load %arg12[%c0_34, %c0_35] : memref<1x256xf32, #tpu.memory_space<vmem>>, vector<1x256xf32>
    %c0_36 = arith.constant 0 : index
    %c0_37 = arith.constant 0 : index
    %80 = vector.load %arg13[%c0_36, %c0_37] : memref<1x256xf32, #tpu.memory_space<vmem>>, vector<1x256xf32>
    %cst_38 = arith.constant dense<0.000000e+00> : vector<8xf32>
    %81 = vector.multi_reduction <add>, %78, %cst_38 [1] : vector<8x256xf32> to vector<8xf32>
    %82 = vector.shape_cast %81 : vector<8xf32> to vector<8x1xf32>
    %cst_39 = arith.constant 2.560000e+02 : f32
    %83 = vector.broadcast %cst_39 : f32 to vector<8x1xf32>
    %84 = arith.divf %82, %83 : vector<8x1xf32>
    %85 = vector.broadcast %84 : vector<8x1xf32> to vector<8x256xf32>
    %86 = arith.subf %78, %85 : vector<8x256xf32>
    %87 = arith.mulf %86, %86 : vector<8x256xf32>
    %cst_40 = arith.constant dense<0.000000e+00> : vector<8xf32>
    %88 = vector.multi_reduction <add>, %87, %cst_40 [1] : vector<8x256xf32> to vector<8xf32>
    %89 = vector.shape_cast %88 : vector<8xf32> to vector<8x1xf32>
    %cst_41 = arith.constant 2.560000e+02 : f32
    %90 = vector.broadcast %cst_41 : f32 to vector<8x1xf32>
    %91 = arith.divf %89, %90 : vector<8x1xf32>
    %cst_42 = arith.constant 9.99999974E-6 : f32
    %92 = vector.broadcast %cst_42 : f32 to vector<8x1xf32>
    %93 = arith.addf %91, %92 : vector<8x1xf32>
    %94 = math.rsqrt %93 : vector<8x1xf32>
    %95 = vector.broadcast %94 : vector<8x1xf32> to vector<8x256xf32>
    %96 = arith.mulf %86, %95 : vector<8x256xf32>
    %97 = vector.broadcast %79 : vector<1x256xf32> to vector<8x256xf32>
    %98 = arith.mulf %97, %96 : vector<8x256xf32>
    %99 = vector.broadcast %80 : vector<1x256xf32> to vector<8x256xf32>
    %100 = arith.addf %98, %99 : vector<8x256xf32>
    %101 = arith.truncf %100 : vector<8x256xf32> to vector<8x256xbf16>
    %c0_43 = arith.constant 0 : index
    %c0_44 = arith.constant 0 : index
    %102 = vector.load %arg14[%c0_43, %c0_44] : memref<256x512xbf16, #tpu.memory_space<vmem>>, vector<256x512xbf16>
    %cst_45 = arith.constant dense<0.000000e+00> : vector<8x512xf32>
    %103 = tpu.matmul %101, %102, %cst_45 {dimension_numbers = #tpu.dot_dimension_numbers<[1], [0], [0], [1], [0, 0, 1, 1], [], []>} : vector<8x256xbf16>, vector<256x512xbf16>, vector<8x512xf32> -> vector<8x512xf32>
    %c0_46 = arith.constant 0 : index
    %c0_47 = arith.constant 0 : index
    %104 = vector.load %arg15[%c0_46, %c0_47] : memref<1x512xf32, #tpu.memory_space<vmem>>, vector<1x512xf32>
    %105 = vector.broadcast %104 : vector<1x512xf32> to vector<8x512xf32>
    %106 = arith.addf %103, %105 : vector<8x512xf32>
    %cst_48 = arith.constant 5.000000e-01 : f32
    %107 = vector.broadcast %cst_48 : f32 to vector<8x512xf32>
    %108 = arith.mulf %107, %106 : vector<8x512xf32>
    %cst_49 = arith.constant 0.707106769 : f32
    %109 = vector.broadcast %cst_49 : f32 to vector<8x512xf32>
    %110 = arith.mulf %106, %109 : vector<8x512xf32>
    %111 = math.erf %110 : vector<8x512xf32>
    %cst_50 = arith.constant 1.000000e+00 : f32
    %112 = vector.broadcast %cst_50 : f32 to vector<8x512xf32>
    %113 = arith.addf %112, %111 : vector<8x512xf32>
    %114 = arith.mulf %108, %113 : vector<8x512xf32>
    %115 = arith.truncf %114 : vector<8x512xf32> to vector<8x512xbf16>
    %c0_51 = arith.constant 0 : index
    %c0_52 = arith.constant 0 : index
    %116 = vector.load %arg16[%c0_51, %c0_52] : memref<512x256xbf16, #tpu.memory_space<vmem>>, vector<512x256xbf16>
    %cst_53 = arith.constant dense<0.000000e+00> : vector<8x256xf32>
    %117 = tpu.matmul %115, %116, %cst_53 {dimension_numbers = #tpu.dot_dimension_numbers<[1], [0], [0], [1], [0, 0, 1, 1], [], []>} : vector<8x512xbf16>, vector<512x256xbf16>, vector<8x256xf32> -> vector<8x256xf32>
    %c0_54 = arith.constant 0 : index
    %c0_55 = arith.constant 0 : index
    %118 = vector.load %arg17[%c0_54, %c0_55] : memref<1x256xf32, #tpu.memory_space<vmem>>, vector<1x256xf32>
    %119 = vector.broadcast %118 : vector<1x256xf32> to vector<8x256xf32>
    %120 = arith.addf %117, %119 : vector<8x256xf32>
    %121 = arith.addf %100, %120 : vector<8x256xf32>
    %c0_56 = arith.constant 0 : index
    %c0_57 = arith.constant 0 : index
    %122 = vector.load %arg18[%c0_56, %c0_57] : memref<1x256xf32, #tpu.memory_space<vmem>>, vector<1x256xf32>
    %c0_58 = arith.constant 0 : index
    %c0_59 = arith.constant 0 : index
    %123 = vector.load %arg19[%c0_58, %c0_59] : memref<1x256xf32, #tpu.memory_space<vmem>>, vector<1x256xf32>
    %cst_60 = arith.constant dense<0.000000e+00> : vector<8xf32>
    %124 = vector.multi_reduction <add>, %121, %cst_60 [1] : vector<8x256xf32> to vector<8xf32>
    %125 = vector.shape_cast %124 : vector<8xf32> to vector<8x1xf32>
    %cst_61 = arith.constant 2.560000e+02 : f32
    %126 = vector.broadcast %cst_61 : f32 to vector<8x1xf32>
    %127 = arith.divf %125, %126 : vector<8x1xf32>
    %128 = vector.broadcast %127 : vector<8x1xf32> to vector<8x256xf32>
    %129 = arith.subf %121, %128 : vector<8x256xf32>
    %130 = arith.mulf %129, %129 : vector<8x256xf32>
    %cst_62 = arith.constant dense<0.000000e+00> : vector<8xf32>
    %131 = vector.multi_reduction <add>, %130, %cst_62 [1] : vector<8x256xf32> to vector<8xf32>
    %132 = vector.shape_cast %131 : vector<8xf32> to vector<8x1xf32>
    %cst_63 = arith.constant 2.560000e+02 : f32
    %133 = vector.broadcast %cst_63 : f32 to vector<8x1xf32>
    %134 = arith.divf %132, %133 : vector<8x1xf32>
    %cst_64 = arith.constant 9.99999974E-6 : f32
    %135 = vector.broadcast %cst_64 : f32 to vector<8x1xf32>
    %136 = arith.addf %134, %135 : vector<8x1xf32>
    %137 = math.rsqrt %136 : vector<8x1xf32>
    %138 = vector.broadcast %137 : vector<8x1xf32> to vector<8x256xf32>
    %139 = arith.mulf %129, %138 : vector<8x256xf32>
    %140 = vector.broadcast %122 : vector<1x256xf32> to vector<8x256xf32>
    %141 = arith.mulf %140, %139 : vector<8x256xf32>
    %142 = vector.broadcast %123 : vector<1x256xf32> to vector<8x256xf32>
    %143 = arith.addf %141, %142 : vector<8x256xf32>
    %c0_65 = arith.constant 0 : index
    %c0_66 = arith.constant 0 : index
    %c0_67 = arith.constant 0 : index
    %144 = vector.load %arg20[%c0_65, %c0_66, %c0_67] : memref<1x8x256xf32, #tpu.memory_space<vmem>>, vector<1x8x256xf32>
    %145 = vector.shape_cast %144 : vector<1x8x256xf32> to vector<8x256xf32>
    %146 = vector.shape_cast %143 : vector<8x256xf32> to vector<1x8x256xf32>
    tpu.vector_store %arg20[%c0_65, %c0_66, %c0_67], %146 {strides = array<i32>} : memref<1x8x256xf32, #tpu.memory_space<vmem>>, vector<1x8x256xf32>,
    return
  }
  func.func @transform_0(%arg0: i32, %arg1: i32) -> (i32, i32, i32) {
    %c0_i32 = arith.constant 0 : i32
    %c0_i32_0 = arith.constant 0 : i32
    %c0_i32_1 = arith.constant 0 : i32
    return %arg0, %c0_i32, %c0_i32_0 : i32, i32, i32
  }
  func.func @transform_1(%arg0: i32, %arg1: i32) -> (i32, i32, i32) {
    %c0_i32 = arith.constant 0 : i32
    %c0_i32_0 = arith.constant 0 : i32
    return %arg0, %arg1, %c0_i32 : i32, i32, i32
  }
  func.func @transform_2(%arg0: i32, %arg1: i32) -> (i32, i32) {
    %c0_i32 = arith.constant 0 : i32
    %c0_i32_0 = arith.constant 0 : i32
    %c0_i32_1 = arith.constant 0 : i32
    return %c0_i32, %c0_i32_0 : i32, i32
  }
  func.func @transform_3(%arg0: i32, %arg1: i32) -> (i32, i32) {
    %c0_i32 = arith.constant 0 : i32
    %c0_i32_0 = arith.constant 0 : i32
    %c0_i32_1 = arith.constant 0 : i32
    return %c0_i32, %c0_i32_0 : i32, i32
  }
  func.func @transform_4(%arg0: i32, %arg1: i32) -> (i32, i32) {
    %c0_i32 = arith.constant 0 : i32
    %c0_i32_0 = arith.constant 0 : i32
    %c0_i32_1 = arith.constant 0 : i32
    return %c0_i32, %c0_i32_0 : i32, i32
  }
  func.func @transform_5(%arg0: i32, %arg1: i32) -> (i32, i32) {
    %c0_i32 = arith.constant 0 : i32
    %c0_i32_0 = arith.constant 0 : i32
    %c0_i32_1 = arith.constant 0 : i32
    return %c0_i32, %c0_i32_0 : i32, i32
  }
  func.func @transform_6(%arg0: i32, %arg1: i32) -> (i32, i32) {
    %c0_i32 = arith.constant 0 : i32
    %c0_i32_0 = arith.constant 0 : i32
    %c0_i32_1 = arith.constant 0 : i32
    return %c0_i32, %c0_i32_0 : i32, i32
  }
  func.func @transform_7(%arg0: i32, %arg1: i32) -> (i32, i32) {
    %c0_i32 = arith.constant 0 : i32
    %c0_i32_0 = arith.constant 0 : i32
    %c0_i32_1 = arith.constant 0 : i32
    return %c0_i32, %c0_i32_0 : i32, i32
  }
  func.func @transform_8(%arg0: i32, %arg1: i32) -> (i32, i32) {
    %c0_i32 = arith.constant 0 : i32
    %c0_i32_0 = arith.constant 0 : i32
    %c0_i32_1 = arith.constant 0 : i32
    return %c0_i32, %c0_i32_0 : i32, i32
  }
  func.func @transform_9(%arg0: i32, %arg1: i32) -> (i32, i32) {
    %c0_i32 = arith.constant 0 : i32
    %c0_i32_0 = arith.constant 0 : i32
    %c0_i32_1 = arith.constant 0 : i32
    return %c0_i32, %c0_i32_0 : i32, i32
  }
  func.func @transform_10(%arg0: i32, %arg1: i32) -> (i32, i32) {
    %c0_i32 = arith.constant 0 : i32
    %c0_i32_0 = arith.constant 0 : i32
    %c0_i32_1 = arith.constant 0 : i32
    return %c0_i32, %c0_i32_0 : i32, i32
  }
  func.func @transform_11(%arg0: i32, %arg1: i32) -> (i32, i32) {
    %c0_i32 = arith.constant 0 : i32
    %c0_i32_0 = arith.constant 0 : i32
    %c0_i32_1 = arith.constant 0 : i32
    return %c0_i32, %c0_i32_0 : i32, i32
  }
  func.func @transform_12(%arg0: i32, %arg1: i32) -> (i32, i32) {
    %c0_i32 = arith.constant 0 : i32
    %c0_i32_0 = arith.constant 0 : i32
    %c0_i32_1 = arith.constant 0 : i32
    return %c0_i32, %c0_i32_0 : i32, i32
  }
  func.func @transform_13(%arg0: i32, %arg1: i32) -> (i32, i32) {
    %c0_i32 = arith.constant 0 : i32
    %c0_i32_0 = arith.constant 0 : i32
    %c0_i32_1 = arith.constant 0 : i32
    return %c0_i32, %c0_i32_0 : i32, i32
  }
  func.func @transform_14(%arg0: i32, %arg1: i32) -> (i32, i32) {
    %c0_i32 = arith.constant 0 : i32
    %c0_i32_0 = arith.constant 0 : i32
    %c0_i32_1 = arith.constant 0 : i32
    return %c0_i32, %c0_i32_0 : i32, i32
  }
  func.func @transform_15(%arg0: i32, %arg1: i32) -> (i32, i32) {
    %c0_i32 = arith.constant 0 : i32
    %c0_i32_0 = arith.constant 0 : i32
    %c0_i32_1 = arith.constant 0 : i32
    return %c0_i32, %c0_i32_0 : i32, i32
  }
  func.func @transform_16(%arg0: i32, %arg1: i32) -> (i32, i32) {
    %c0_i32 = arith.constant 0 : i32
    %c0_i32_0 = arith.constant 0 : i32
    %c0_i32_1 = arith.constant 0 : i32
    return %c0_i32, %c0_i32_0 : i32, i32
  }
  func.func @transform_17(%arg0: i32, %arg1: i32) -> (i32, i32) {
    %c0_i32 = arith.constant 0 : i32
    %c0_i32_0 = arith.constant 0 : i32
    %c0_i32_1 = arith.constant 0 : i32
    return %c0_i32, %c0_i32_0 : i32, i32
  }
  func.func @transform_18(%arg0: i32, %arg1: i32) -> (i32, i32, i32) {
    %c0_i32 = arith.constant 0 : i32
    %c0_i32_0 = arith.constant 0 : i32
    return %arg0, %arg1, %c0_i32 : i32, i32, i32
  }
}

module attributes {stable_mosaic.version = 11 : i64} {
  func.func @gpt2_layer_kernel(%arg0: i32, %arg1: i32, %arg2: memref<1x16x256xbf16, #tpu.memory_space<vmem>>, %arg3: memref<1x8x256xf32, #tpu.memory_space<vmem>>, %arg4: memref<256x256xbf16, #tpu.memory_space<vmem>>, %arg5: memref<1x256xf32, #tpu.memory_space<vmem>>, %arg6: memref<256x256xbf16, #tpu.memory_space<vmem>>, %arg7: memref<1x256xf32, #tpu.memory_space<vmem>>, %arg8: memref<256x256xbf16, #tpu.memory_space<vmem>>, %arg9: memref<1x256xf32, #tpu.memory_space<vmem>>, %arg10: memref<256x256xbf16, #tpu.memory_space<vmem>>, %arg11: memref<1x256xf32, #tpu.memory_space<vmem>>, %arg12: memref<1x256xf32, #tpu.memory_space<vmem>>, %arg13: memref<1x256xf32, #tpu.memory_space<vmem>>, %arg14: memref<256x512xbf16, #tpu.memory_space<vmem>>, %arg15: memref<1x512xf32, #tpu.memory_space<vmem>>, %arg16: memref<512x256xbf16, #tpu.memory_space<vmem>>, %arg17: memref<1x256xf32, #tpu.memory_space<vmem>>, %arg18: memref<1x256xf32, #tpu.memory_space<vmem>>, %arg19: memref<1x256xf32, #tpu.memory_space<vmem>>, %arg20: memref<1x8x256xf32, #tpu.memory_space<vmem>>, %arg21: memref<2x16x128xbf16, #tpu.memory_space<vmem>>, %arg22: memref<2x16x128xbf16, #tpu.memory_space<vmem>>) attributes {dimension_semantics = [#tpu.dimension_semantics<parallel>, #tpu.dimension_semantics<arbitrary>], iteration_bounds = array<i64: 2, 2>, scalar_prefetch = 0 : i64, scratch_operands = 2 : i64, tpu.core_type = #tpu.core_type<tc>, window_params = [{transform_indices = @transform_0, window_bounds = array<i64: 1, 16, 256>}, {transform_indices = @transform_1, window_bounds = array<i64: 1, 8, 256>}, {pipeline_mode = #tpu.pipeline_mode<synchronous>, transform_indices = @transform_2, window_bounds = array<i64: 256, 256>}, {pipeline_mode = #tpu.pipeline_mode<synchronous>, transform_indices = @transform_3, window_bounds = array<i64: 1, 256>}, {pipeline_mode = #tpu.pipeline_mode<synchronous>, transform_indices = @transform_4, window_bounds = array<i64: 256, 256>}, {pipeline_mode = #tpu.pipeline_mode<synchronous>, transform_indices = @transform_5, window_bounds = array<i64: 1, 256>}, {pipeline_mode = #tpu.pipeline_mode<synchronous>, transform_indices = @transform_6, window_bounds = array<i64: 256, 256>}, {pipeline_mode = #tpu.pipeline_mode<synchronous>, transform_indices = @transform_7, window_bounds = array<i64: 1, 256>}, {pipeline_mode = #tpu.pipeline_mode<synchronous>, transform_indices = @transform_8, window_bounds = array<i64: 256, 256>}, {pipeline_mode = #tpu.pipeline_mode<synchronous>, transform_indices = @transform_9, window_bounds = array<i64: 1, 256>}, {pipeline_mode = #tpu.pipeline_mode<synchronous>, transform_indices = @transform_10, window_bounds = array<i64: 1, 256>}, {pipeline_mode = #tpu.pipeline_mode<synchronous>, transform_indices = @transform_11, window_bounds = array<i64: 1, 256>}, {pipeline_mode = #tpu.pipeline_mode<synchronous>, transform_indices = @transform_12, window_bounds = array<i64: 256, 512>}, {pipeline_mode = #tpu.pipeline_mode<synchronous>, transform_indices = @transform_13, window_bounds = array<i64: 1, 512>}, {pipeline_mode = #tpu.pipeline_mode<synchronous>, transform_indices = @transform_14, window_bounds = array<i64: 512, 256>}, {pipeline_mode = #tpu.pipeline_mode<synchronous>, transform_indices = @transform_15, window_bounds = array<i64: 1, 256>}, {pipeline_mode = #tpu.pipeline_mode<synchronous>, transform_indices = @transform_16, window_bounds = array<i64: 1, 256>}, {pipeline_mode = #tpu.pipeline_mode<synchronous>, transform_indices = @transform_17, window_bounds = array<i64: 1, 256>}, {transform_indices = @transform_18, window_bounds = array<i64: 1, 8, 256>}]} {
    %c0_i32 = arith.constant 0 : i32
    %0 = arith.cmpi eq, %arg1, %c0_i32 : i32
    %1 = arith.extui %0 : i1 to i32
    %c0_i32_0 = arith.constant 0 : i32
    %2 = arith.cmpi ne, %1, %c0_i32_0 : i32
    scf.if %2 {
      %c0_68 = arith.constant 0 : index
      %c0_69 = arith.constant 0 : index
      %c0_70 = arith.constant 0 : index
      %147 = vector.load %arg2[%c0_68, %c0_69, %c0_70] : memref<1x16x256xbf16, #tpu.memory_space<vmem>>, vector<1x16x256xbf16>
      %148 = vector.shape_cast %147 : vector<1x16x256xbf16> to vector<16x256xbf16>
      %c0_71 = arith.constant 0 : index
      %c0_72 = arith.constant 0 : index
      %149 = vector.load %arg6[%c0_71, %c0_72] : memref<256x256xbf16, #tpu.memory_space<vmem>>, vector<256x256xbf16>
      %cst_73 = arith.constant dense<0.000000e+00> : vector<16x256xf32>
      %150 = tpu.matmul %148, %149, %cst_73 {dimension_numbers = #tpu.dot_dimension_numbers<[1], [0], [0], [1], [0, 0, 1, 1], [], []>} : vector<16x256xbf16>, vector<256x256xbf16>, vector<16x256xf32> -> vector<16x256xf32>
      %c0_74 = arith.constant 0 : index
      %c0_75 = arith.constant 0 : index
      %151 = vector.load %arg7[%c0_74, %c0_75] : memref<1x256xf32, #tpu.memory_space<vmem>>, vector<1x256xf32>
      %152 = vector.broadcast %151 : vector<1x256xf32> to vector<16x256xf32>
      %153 = arith.addf %150, %152 : vector<16x256xf32>
      %c0_76 = arith.constant 0 : index
      %c0_77 = arith.constant 0 : index
      %154 = vector.load %arg8[%c0_76, %c0_77] : memref<256x256xbf16, #tpu.memory_space<vmem>>, vector<256x256xbf16>
      %cst_78 = arith.constant dense<0.000000e+00> : vector<16x256xf32>
      %155 = tpu.matmul %148, %154, %cst_78 {dimension_numbers = #tpu.dot_dimension_numbers<[1], [0], [0], [1], [0, 0, 1, 1], [], []>} : vector<16x256xbf16>, vector<256x256xbf16>, vector<16x256xf32> -> vector<16x256xf32>
      %c0_79 = arith.constant 0 : index
      %c0_80 = arith.constant 0 : index
      %156 = vector.load %arg9[%c0_79, %c0_80] : memref<1x256xf32, #tpu.memory_space<vmem>>, vector<1x256xf32>
      %157 = vector.broadcast %156 : vector<1x256xf32> to vector<16x256xf32>
      %158 = arith.addf %155, %157 : vector<16x256xf32>
      %159 = vector.shape_cast %153 : vector<16x256xf32> to vector<16x2x128xf32>
      %160 = tpu.transpose %159, [1, 0, 2] : vector<16x2x128xf32> -> vector<2x16x128xf32>
      %161 = arith.truncf %160 : vector<2x16x128xf32> to vector<2x16x128xbf16>
      %c0_81 = arith.constant 0 : index
      %c0_82 = arith.constant 0 : index
      %c0_83 = arith.constant 0 : index
      %162 = vector.load %arg21[%c0_81, %c0_82, %c0_83] : memref<2x16x128xbf16, #tpu.memory_space<vmem>>, vector<2x16x128xbf16>
      tpu.vector_store %arg21[%c0_81, %c0_82, %c0_83], %161 {strides = array<i32>} : memref<2x16x128xbf16, #tpu.memory_space<vmem>>, vector<2x16x128xbf16>,
      %163 = vector.shape_cast %158 : vector<16x256xf32> to vector<16x2x128xf32>
      %164 = tpu.transpose %163, [1, 0, 2] : vector<16x2x128xf32> -> vector<2x16x128xf32>
      %165 = arith.truncf %164 : vector<2x16x128xf32> to vector<2x16x128xbf16>
      %c0_84 = arith.constant 0 : index
      %c0_85 = arith.constant 0 : index
      %c0_86 = arith.constant 0 : index
      %166 = vector.load %arg22[%c0_84, %c0_85, %c0_86] : memref<2x16x128xbf16, #tpu.memory_space<vmem>>, vector<2x16x128xbf16>
      tpu.vector_store %arg22[%c0_84, %c0_85, %c0_86], %165 {strides = array<i32>} : memref<2x16x128xbf16, #tpu.memory_space<vmem>>, vector<2x16x128xbf16>,
    } else {
    }
    %c0 = arith.constant 0 : index
    %c0_1 = arith.constant 0 : index
    %c0_2 = arith.constant 0 : index
    %3 = vector.load %arg3[%c0, %c0_1, %c0_2] : memref<1x8x256xf32, #tpu.memory_space<vmem>>, vector<1x8x256xf32>
    %4 = vector.shape_cast %3 : vector<1x8x256xf32> to vector<8x256xf32>
    %5 = arith.truncf %4 : vector<8x256xf32> to vector<8x256xbf16>
    %c0_3 = arith.constant 0 : index
    %c0_4 = arith.constant 0 : index
    %6 = vector.load %arg4[%c0_3, %c0_4] : memref<256x256xbf16, #tpu.memory_space<vmem>>, vector<256x256xbf16>
    %cst = arith.constant dense<0.000000e+00> : vector<8x256xf32>
    %7 = tpu.matmul %5, %6, %cst {dimension_numbers = #tpu.dot_dimension_numbers<[1], [0], [0], [1], [0, 0, 1, 1], [], []>} : vector<8x256xbf16>, vector<256x256xbf16>, vector<8x256xf32> -> vector<8x256xf32>
    %c0_5 = arith.constant 0 : index
    %c0_6 = arith.constant 0 : index
    %8 = vector.load %arg5[%c0_5, %c0_6] : memref<1x256xf32, #tpu.memory_space<vmem>>, vector<1x256xf32>
    %9 = vector.broadcast %8 : vector<1x256xf32> to vector<8x256xf32>
    %10 = arith.addf %7, %9 : vector<8x256xf32>
    %cst_7 = arith.constant 0.0883883461 : f32
    %11 = vector.broadcast %cst_7 : f32 to vector<8x256xf32>
    %12 = arith.mulf %10, %11 : vector<8x256xf32>
    %13 = arith.truncf %12 : vector<8x256xf32> to vector<8x256xbf16>
    %14 = vector.shape_cast %13 : vector<8x256xbf16> to vector<8x2x128xbf16>
    %15 = tpu.transpose %14, [1, 0, 2] : vector<8x2x128xbf16> -> vector<2x8x128xbf16>
    %cst_8 = arith.constant 0xFF800000 : f32
    %16 = vector.broadcast %cst_8 : f32 to vector<2x8x1xf32>
    %cst_9 = arith.constant 0.000000e+00 : f32
    %17 = vector.broadcast %cst_9 : f32 to vector<2x8x1xf32>
    %cst_10 = arith.constant 0.000000e+00 : f32
    %18 = vector.broadcast %cst_10 : f32 to vector<2x8x128xf32>
    %c0_i32_11 = arith.constant 0 : i32
    %c8_i32 = arith.constant 8 : i32
    %19 = arith.muli %c0_i32_11, %c8_i32 : i32
    %20 = tpu.assume_multiple %19, 8 : i32
    %c0_12 = arith.constant 0 : index
    %21 = arith.index_cast %20 : i32 to index
    %c0_13 = arith.constant 0 : index
    %22 = vector.load %arg21[%c0_12, %21, %c0_13] : memref<2x16x128xbf16, #tpu.memory_space<vmem>>, vector<2x8x128xbf16>
    %c0_14 = arith.constant 0 : index
    %23 = arith.index_cast %20 : i32 to index
    %c0_15 = arith.constant 0 : index
    %24 = vector.load %arg22[%c0_14, %23, %c0_15] : memref<2x16x128xbf16, #tpu.memory_space<vmem>>, vector<2x8x128xbf16>
    "tpu.trace_start"() <{level = 10 : i32, message = "hqd,hkd->hqk"}> : () -> ()
    %cst_16 = arith.constant dense<0.000000e+00> : vector<2x8x8xf32>
    %25 = tpu.matmul %15, %22, %cst_16 {dimension_numbers = #tpu.dot_dimension_numbers<[2], [2], [1], [1], [0, 0, 0, 1, 1, 1], [0], [0]>} : vector<2x8x128xbf16>, vector<2x8x128xbf16>, vector<2x8x8xf32> -> vector<2x8x8xf32>
    "tpu.trace_stop"() : () -> ()
    %cst_17 = arith.constant dense<0xFF800000> : vector<2x8xf32>
    %26 = vector.multi_reduction <maximumf>, %25, %cst_17 [2] : vector<2x8x8xf32> to vector<2x8xf32>
    %27 = vector.shape_cast %26 : vector<2x8xf32> to vector<2x8x1xf32>
    %28 = arith.maximumf %16, %27 : vector<2x8x1xf32>
    %29 = arith.subf %16, %28 : vector<2x8x1xf32>
    %30 = math.exp %29 : vector<2x8x1xf32>
    %31 = vector.broadcast %28 : vector<2x8x1xf32> to vector<2x8x8xf32>
    %32 = arith.subf %25, %31 : vector<2x8x8xf32>
    %33 = math.exp %32 : vector<2x8x8xf32>
    %34 = arith.mulf %30, %17 : vector<2x8x1xf32>
    %cst_18 = arith.constant dense<0.000000e+00> : vector<2x8xf32>
    %35 = vector.multi_reduction <add>, %33, %cst_18 [2] : vector<2x8x8xf32> to vector<2x8xf32>
    %36 = vector.shape_cast %35 : vector<2x8xf32> to vector<2x8x1xf32>
    %37 = arith.addf %34, %36 : vector<2x8x1xf32>
    %38 = vector.broadcast %30 : vector<2x8x1xf32> to vector<2x8x128xf32>
    %39 = arith.mulf %38, %18 : vector<2x8x128xf32>
    %40 = arith.truncf %33 : vector<2x8x8xf32> to vector<2x8x8xbf16>
    "tpu.trace_start"() <{level = 10 : i32, message = "hqk,hkd->hqd"}> : () -> ()
    %cst_19 = arith.constant dense<0.000000e+00> : vector<2x8x128xf32>
    %41 = tpu.matmul %40, %24, %cst_19 {dimension_numbers = #tpu.dot_dimension_numbers<[2], [1], [1], [2], [0, 0, 0, 1, 1, 2], [0], [0]>} : vector<2x8x8xbf16>, vector<2x8x128xbf16>, vector<2x8x128xf32> -> vector<2x8x128xf32>
    "tpu.trace_stop"() : () -> ()
    %42 = arith.addf %39, %41 : vector<2x8x128xf32>
    %c1_i32 = arith.constant 1 : i32
    %c8_i32_20 = arith.constant 8 : i32
    %43 = arith.muli %c1_i32, %c8_i32_20 : i32
    %44 = tpu.assume_multiple %43, 8 : i32
    %c0_21 = arith.constant 0 : index
    %45 = arith.index_cast %44 : i32 to index
    %c0_22 = arith.constant 0 : index
    %46 = vector.load %arg21[%c0_21, %45, %c0_22] : memref<2x16x128xbf16, #tpu.memory_space<vmem>>, vector<2x8x128xbf16>
    %c0_23 = arith.constant 0 : index
    %47 = arith.index_cast %44 : i32 to index
    %c0_24 = arith.constant 0 : index
    %48 = vector.load %arg22[%c0_23, %47, %c0_24] : memref<2x16x128xbf16, #tpu.memory_space<vmem>>, vector<2x8x128xbf16>
    "tpu.trace_start"() <{level = 10 : i32, message = "hqd,hkd->hqk"}> : () -> ()
    %cst_25 = arith.constant dense<0.000000e+00> : vector<2x8x8xf32>
    %49 = tpu.matmul %15, %46, %cst_25 {dimension_numbers = #tpu.dot_dimension_numbers<[2], [2], [1], [1], [0, 0, 0, 1, 1, 1], [0], [0]>} : vector<2x8x128xbf16>, vector<2x8x128xbf16>, vector<2x8x8xf32> -> vector<2x8x8xf32>
    "tpu.trace_stop"() : () -> ()
    %cst_26 = arith.constant dense<0xFF800000> : vector<2x8xf32>
    %50 = vector.multi_reduction <maximumf>, %49, %cst_26 [2] : vector<2x8x8xf32> to vector<2x8xf32>
    %51 = vector.shape_cast %50 : vector<2x8xf32> to vector<2x8x1xf32>
    %52 = arith.maximumf %28, %51 : vector<2x8x1xf32>
    %53 = arith.subf %28, %52 : vector<2x8x1xf32>
    %54 = math.exp %53 : vector<2x8x1xf32>
    %55 = vector.broadcast %52 : vector<2x8x1xf32> to vector<2x8x8xf32>
    %56 = arith.subf %49, %55 : vector<2x8x8xf32>
    %57 = math.exp %56 : vector<2x8x8xf32>
    %58 = arith.mulf %54, %37 : vector<2x8x1xf32>
    %cst_27 = arith.constant dense<0.000000e+00> : vector<2x8xf32>
    %59 = vector.multi_reduction <add>, %57, %cst_27 [2] : vector<2x8x8xf32> to vector<2x8xf32>
    %60 = vector.shape_cast %59 : vector<2x8xf32> to vector<2x8x1xf32>
    %61 = arith.addf %58, %60 : vector<2x8x1xf32>
    %62 = vector.broadcast %54 : vector<2x8x1xf32> to vector<2x8x128xf32>
    %63 = arith.mulf %62, %42 : vector<2x8x128xf32>
    %64 = arith.truncf %57 : vector<2x8x8xf32> to vector<2x8x8xbf16>
    "tpu.trace_start"() <{level = 10 : i32, message = "hqk,hkd->hqd"}> : () -> ()
    %cst_28 = arith.constant dense<0.000000e+00> : vector<2x8x128xf32>
    %65 = tpu.matmul %64, %48, %cst_28 {dimension_numbers = #tpu.dot_dimension_numbers<[2], [1], [1], [2], [0, 0, 0, 1, 1, 2], [0], [0]>} : vector<2x8x8xbf16>, vector<2x8x128xbf16>, vector<2x8x128xf32> -> vector<2x8x128xf32>
    "tpu.trace_stop"() : () -> ()
    %66 = arith.addf %63, %65 : vector<2x8x128xf32>
    %c2_i32 = arith.constant 2 : i32
    %67 = tpu.reciprocal %61 {approx = true} : vector<2x8x1xf32> -> vector<2x8x1xf32>
    %68 = vector.broadcast %67 : vector<2x8x1xf32> to vector<2x8x128xf32>
    %69 = arith.mulf %66, %68 : vector<2x8x128xf32>
    %70 = tpu.transpose %69, [1, 0, 2] : vector<2x8x128xf32> -> vector<8x2x128xf32>
    %71 = vector.shape_cast %70 : vector<8x2x128xf32> to vector<8x256xf32>
    %72 = arith.truncf %71 : vector<8x256xf32> to vector<8x256xbf16>
    %c0_29 = arith.constant 0 : index
    %c0_30 = arith.constant 0 : index
    %73 = vector.load %arg10[%c0_29, %c0_30] : memref<256x256xbf16, #tpu.memory_space<vmem>>, vector<256x256xbf16>
    %cst_31 = arith.constant dense<0.000000e+00> : vector<8x256xf32>
    %74 = tpu.matmul %72, %73, %cst_31 {dimension_numbers = #tpu.dot_dimension_numbers<[1], [0], [0], [1], [0, 0, 1, 1], [], []>} : vector<8x256xbf16>, vector<256x256xbf16>, vector<8x256xf32> -> vector<8x256xf32>
    %c0_32 = arith.constant 0 : index
    %c0_33 = arith.constant 0 : index
    %75 = vector.load %arg11[%c0_32, %c0_33] : memref<1x256xf32, #tpu.memory_space<vmem>>, vector<1x256xf32>
    %76 = vector.broadcast %75 : vector<1x256xf32> to vector<8x256xf32>
    %77 = arith.addf %74, %76 : vector<8x256xf32>
    %78 = arith.addf %4, %77 : vector<8x256xf32>
    %c0_34 = arith.constant 0 : index
    %c0_35 = arith.constant 0 : index
    %79 = vector.load %arg12[%c0_34, %c0_35] : memref<1x256xf32, #tpu.memory_space<vmem>>, vector<1x256xf32>
    %c0_36 = arith.constant 0 : index
    %c0_37 = arith.constant 0 : index
    %80 = vector.load %arg13[%c0_36, %c0_37] : memref<1x256xf32, #tpu.memory_space<vmem>>, vector<1x256xf32>
    %cst_38 = arith.constant dense<0.000000e+00> : vector<8xf32>
    %81 = vector.multi_reduction <add>, %78, %cst_38 [1] : vector<8x256xf32> to vector<8xf32>
    %82 = vector.shape_cast %81 : vector<8xf32> to vector<8x1xf32>
    %cst_39 = arith.constant 2.560000e+02 : f32
    %83 = vector.broadcast %cst_39 : f32 to vector<8x1xf32>
    %84 = arith.divf %82, %83 : vector<8x1xf32>
    %85 = vector.broadcast %84 : vector<8x1xf32> to vector<8x256xf32>
    %86 = arith.subf %78, %85 : vector<8x256xf32>
    %87 = arith.mulf %86, %86 : vector<8x256xf32>
    %cst_40 = arith.constant dense<0.000000e+00> : vector<8xf32>
    %88 = vector.multi_reduction <add>, %87, %cst_40 [1] : vector<8x256xf32> to vector<8xf32>
    %89 = vector.shape_cast %88 : vector<8xf32> to vector<8x1xf32>
    %cst_41 = arith.constant 2.560000e+02 : f32
    %90 = vector.broadcast %cst_41 : f32 to vector<8x1xf32>
    %91 = arith.divf %89, %90 : vector<8x1xf32>
    %cst_42 = arith.constant 9.99999974E-6 : f32
    %92 = vector.broadcast %cst_42 : f32 to vector<8x1xf32>
    %93 = arith.addf %91, %92 : vector<8x1xf32>
    %94 = math.rsqrt %93 : vector<8x1xf32>
    %95 = vector.broadcast %94 : vector<8x1xf32> to vector<8x256xf32>
    %96 = arith.mulf %86, %95 : vector<8x256xf32>
    %97 = vector.broadcast %79 : vector<1x256xf32> to vector<8x256xf32>
    %98 = arith.mulf %97, %96 : vector<8x256xf32>
    %99 = vector.broadcast %80 : vector<1x256xf32> to vector<8x256xf32>
    %100 = arith.addf %98, %99 : vector<8x256xf32>
    %101 = arith.truncf %100 : vector<8x256xf32> to vector<8x256xbf16>
    %c0_43 = arith.constant 0 : index
    %c0_44 = arith.constant 0 : index
    %102 = vector.load %arg14[%c0_43, %c0_44] : memref<256x512xbf16, #tpu.memory_space<vmem>>, vector<256x512xbf16>
    %cst_45 = arith.constant dense<0.000000e+00> : vector<8x512xf32>
    %103 = tpu.matmul %101, %102, %cst_45 {dimension_numbers = #tpu.dot_dimension_numbers<[1], [0], [0], [1], [0, 0, 1, 1], [], []>} : vector<8x256xbf16>, vector<256x512xbf16>, vector<8x512xf32> -> vector<8x512xf32>
    %c0_46 = arith.constant 0 : index
    %c0_47 = arith.constant 0 : index
    %104 = vector.load %arg15[%c0_46, %c0_47] : memref<1x512xf32, #tpu.memory_space<vmem>>, vector<1x512xf32>
    %105 = vector.broadcast %104 : vector<1x512xf32> to vector<8x512xf32>
    %106 = arith.addf %103, %105 : vector<8x512xf32>
    %cst_48 = arith.constant 5.000000e-01 : f32
    %107 = vector.broadcast %cst_48 : f32 to vector<8x512xf32>
    %108 = arith.mulf %107, %106 : vector<8x512xf32>
    %cst_49 = arith.constant 0.707106769 : f32
    %109 = vector.broadcast %cst_49 : f32 to vector<8x512xf32>
    %110 = arith.mulf %106, %109 : vector<8x512xf32>
    %111 = math.erf %110 : vector<8x512xf32>
    %cst_50 = arith.constant 1.000000e+00 : f32
    %112 = vector.broadcast %cst_50 : f32 to vector<8x512xf32>
    %113 = arith.addf %112, %111 : vector<8x512xf32>
    %114 = arith.mulf %108, %113 : vector<8x512xf32>
    %115 = arith.truncf %114 : vector<8x512xf32> to vector<8x512xbf16>
    %c0_51 = arith.constant 0 : index
    %c0_52 = arith.constant 0 : index
    %116 = vector.load %arg16[%c0_51, %c0_52] : memref<512x256xbf16, #tpu.memory_space<vmem>>, vector<512x256xbf16>
    %cst_53 = arith.constant dense<0.000000e+00> : vector<8x256xf32>
    %117 = tpu.matmul %115, %116, %cst_53 {dimension_numbers = #tpu.dot_dimension_numbers<[1], [0], [0], [1], [0, 0, 1, 1], [], []>} : vector<8x512xbf16>, vector<512x256xbf16>, vector<8x256xf32> -> vector<8x256xf32>
    %c0_54 = arith.constant 0 : index
    %c0_55 = arith.constant 0 : index
    %118 = vector.load %arg17[%c0_54, %c0_55] : memref<1x256xf32, #tpu.memory_space<vmem>>, vector<1x256xf32>
    %119 = vector.broadcast %118 : vector<1x256xf32> to vector<8x256xf32>
    %120 = arith.addf %117, %119 : vector<8x256xf32>
    %121 = arith.addf %100, %120 : vector<8x256xf32>
    %c0_56 = arith.constant 0 : index
    %c0_57 = arith.constant 0 : index
    %122 = vector.load %arg18[%c0_56, %c0_57] : memref<1x256xf32, #tpu.memory_space<vmem>>, vector<1x256xf32>
    %c0_58 = arith.constant 0 : index
    %c0_59 = arith.constant 0 : index
    %123 = vector.load %arg19[%c0_58, %c0_59] : memref<1x256xf32, #tpu.memory_space<vmem>>, vector<1x256xf32>
    %cst_60 = arith.constant dense<0.000000e+00> : vector<8xf32>
    %124 = vector.multi_reduction <add>, %121, %cst_60 [1] : vector<8x256xf32> to vector<8xf32>
    %125 = vector.shape_cast %124 : vector<8xf32> to vector<8x1xf32>
    %cst_61 = arith.constant 2.560000e+02 : f32
    %126 = vector.broadcast %cst_61 : f32 to vector<8x1xf32>
    %127 = arith.divf %125, %126 : vector<8x1xf32>
    %128 = vector.broadcast %127 : vector<8x1xf32> to vector<8x256xf32>
    %129 = arith.subf %121, %128 : vector<8x256xf32>
    %130 = arith.mulf %129, %129 : vector<8x256xf32>
    %cst_62 = arith.constant dense<0.000000e+00> : vector<8xf32>
    %131 = vector.multi_reduction <add>, %130, %cst_62 [1] : vector<8x256xf32> to vector<8xf32>
    %132 = vector.shape_cast %131 : vector<8xf32> to vector<8x1xf32>
    %cst_63 = arith.constant 2.560000e+02 : f32
    %133 = vector.broadcast %cst_63 : f32 to vector<8x1xf32>
    %134 = arith.divf %132, %133 : vector<8x1xf32>
    %cst_64 = arith.constant 9.99999974E-6 : f32
    %135 = vector.broadcast %cst_64 : f32 to vector<8x1xf32>
    %136 = arith.addf %134, %135 : vector<8x1xf32>
    %137 = math.rsqrt %136 : vector<8x1xf32>
    %138 = vector.broadcast %137 : vector<8x1xf32> to vector<8x256xf32>
    %139 = arith.mulf %129, %138 : vector<8x256xf32>
    %140 = vector.broadcast %122 : vector<1x256xf32> to vector<8x256xf32>
    %141 = arith.mulf %140, %139 : vector<8x256xf32>
    %142 = vector.broadcast %123 : vector<1x256xf32> to vector<8x256xf32>
    %143 = arith.addf %141, %142 : vector<8x256xf32>
    %c0_65 = arith.constant 0 : index
    %c0_66 = arith.constant 0 : index
    %c0_67 = arith.constant 0 : index
    %144 = vector.load %arg20[%c0_65, %c0_66, %c0_67] : memref<1x8x256xf32, #tpu.memory_space<vmem>>, vector<1x8x256xf32>
    %145 = vector.shape_cast %144 : vector<1x8x256xf32> to vector<8x256xf32>
    %146 = vector.shape_cast %143 : vector<8x256xf32> to vector<1x8x256xf32>
    tpu.vector_store %arg20[%c0_65, %c0_66, %c0_67], %146 {strides = array<i32>} : memref<1x8x256xf32, #tpu.memory_space<vmem>>, vector<1x8x256xf32>,
    return
  }
  func.func @transform_0(%arg0: i32, %arg1: i32) -> (i32, i32, i32) {
    %c0_i32 = arith.constant 0 : i32
    %c0_i32_0 = arith.constant 0 : i32
    %c0_i32_1 = arith.constant 0 : i32
    return %arg0, %c0_i32, %c0_i32_0 : i32, i32, i32
  }
  func.func @transform_1(%arg0: i32, %arg1: i32) -> (i32, i32, i32) {
    %c0_i32 = arith.constant 0 : i32
    %c0_i32_0 = arith.constant 0 : i32
    return %arg0, %arg1, %c0_i32 : i32, i32, i32
  }
  func.func @transform_2(%arg0: i32, %arg1: i32) -> (i32, i32) {
    %c0_i32 = arith.constant 0 : i32
    %c0_i32_0 = arith.constant 0 : i32
    %c0_i32_1 = arith.constant 0 : i32
    return %c0_i32, %c0_i32_0 : i32, i32
  }
  func.func @transform_3(%arg0: i32, %arg1: i32) -> (i32, i32) {
    %c0_i32 = arith.constant 0 : i32
    %c0_i32_0 = arith.constant 0 : i32
    %c0_i32_1 = arith.constant 0 : i32
    return %c0_i32, %c0_i32_0 : i32, i32
  }
  func.func @transform_4(%arg0: i32, %arg1: i32) -> (i32, i32) {
    %c0_i32 = arith.constant 0 : i32
    %c0_i32_0 = arith.constant 0 : i32
    %c0_i32_1 = arith.constant 0 : i32
    return %c0_i32, %c0_i32_0 : i32, i32
  }
  func.func @transform_5(%arg0: i32, %arg1: i32) -> (i32, i32) {
    %c0_i32 = arith.constant 0 : i32
    %c0_i32_0 = arith.constant 0 : i32
    %c0_i32_1 = arith.constant 0 : i32
    return %c0_i32, %c0_i32_0 : i32, i32
  }
  func.func @transform_6(%arg0: i32, %arg1: i32) -> (i32, i32) {
    %c0_i32 = arith.constant 0 : i32
    %c0_i32_0 = arith.constant 0 : i32
    %c0_i32_1 = arith.constant 0 : i32
    return %c0_i32, %c0_i32_0 : i32, i32
  }
  func.func @transform_7(%arg0: i32, %arg1: i32) -> (i32, i32) {
    %c0_i32 = arith.constant 0 : i32
    %c0_i32_0 = arith.constant 0 : i32
    %c0_i32_1 = arith.constant 0 : i32
    return %c0_i32, %c0_i32_0 : i32, i32
  }
  func.func @transform_8(%arg0: i32, %arg1: i32) -> (i32, i32) {
    %c0_i32 = arith.constant 0 : i32
    %c0_i32_0 = arith.constant 0 : i32
    %c0_i32_1 = arith.constant 0 : i32
    return %c0_i32, %c0_i32_0 : i32, i32
  }
  func.func @transform_9(%arg0: i32, %arg1: i32) -> (i32, i32) {
    %c0_i32 = arith.constant 0 : i32
    %c0_i32_0 = arith.constant 0 : i32
    %c0_i32_1 = arith.constant 0 : i32
    return %c0_i32, %c0_i32_0 : i32, i32
  }
  func.func @transform_10(%arg0: i32, %arg1: i32) -> (i32, i32) {
    %c0_i32 = arith.constant 0 : i32
    %c0_i32_0 = arith.constant 0 : i32
    %c0_i32_1 = arith.constant 0 : i32
    return %c0_i32, %c0_i32_0 : i32, i32
  }
  func.func @transform_11(%arg0: i32, %arg1: i32) -> (i32, i32) {
    %c0_i32 = arith.constant 0 : i32
    %c0_i32_0 = arith.constant 0 : i32
    %c0_i32_1 = arith.constant 0 : i32
    return %c0_i32, %c0_i32_0 : i32, i32
  }
  func.func @transform_12(%arg0: i32, %arg1: i32) -> (i32, i32) {
    %c0_i32 = arith.constant 0 : i32
    %c0_i32_0 = arith.constant 0 : i32
    %c0_i32_1 = arith.constant 0 : i32
    return %c0_i32, %c0_i32_0 : i32, i32
  }
  func.func @transform_13(%arg0: i32, %arg1: i32) -> (i32, i32) {
    %c0_i32 = arith.constant 0 : i32
    %c0_i32_0 = arith.constant 0 : i32
    %c0_i32_1 = arith.constant 0 : i32
    return %c0_i32, %c0_i32_0 : i32, i32
  }
  func.func @transform_14(%arg0: i32, %arg1: i32) -> (i32, i32) {
    %c0_i32 = arith.constant 0 : i32
    %c0_i32_0 = arith.constant 0 : i32
    %c0_i32_1 = arith.constant 0 : i32
    return %c0_i32, %c0_i32_0 : i32, i32
  }
  func.func @transform_15(%arg0: i32, %arg1: i32) -> (i32, i32) {
    %c0_i32 = arith.constant 0 : i32
    %c0_i32_0 = arith.constant 0 : i32
    %c0_i32_1 = arith.constant 0 : i32
    return %c0_i32, %c0_i32_0 : i32, i32
  }
  func.func @transform_16(%arg0: i32, %arg1: i32) -> (i32, i32) {
    %c0_i32 = arith.constant 0 : i32
    %c0_i32_0 = arith.constant 0 : i32
    %c0_i32_1 = arith.constant 0 : i32
    return %c0_i32, %c0_i32_0 : i32, i32
  }
  func.func @transform_17(%arg0: i32, %arg1: i32) -> (i32, i32) {
    %c0_i32 = arith.constant 0 : i32
    %c0_i32_0 = arith.constant 0 : i32
    %c0_i32_1 = arith.constant 0 : i32
    return %c0_i32, %c0_i32_0 : i32, i32
  }
  func.func @transform_18(%arg0: i32, %arg1: i32) -> (i32, i32, i32) {
    %c0_i32 = arith.constant 0 : i32
    %c0_i32_0 = arith.constant 0 : i32
    return %arg0, %arg1, %c0_i32 : i32, i32, i32
  }
}

</mosaic_0001>

<llo_original>
// kernel: tpu_custom_call.1
$region0: #{tpu_custom_call.1}
  #allocation0 [shape = 'u32[]', space=smem, size = 0x4, offset = 0x4, fixed_abs, tag = 'smem constant byte address 0x4 - core index']
  #allocation1 [shape = 'u32[144,128]{1,0:T(1,128)}', space=vmem, size = 0x12000, scoped, tag = 'internal scratch']
  #allocation2 [shape = 'bf16[2,16,128]{2,1,0:T(8,128)(2,1)}', space=vmem, size = 0x2000, scoped, tag = 'scratch operand']
  #allocation3 [shape = 'bf16[2,16,128]{2,1,0:T(8,128)(2,1)}', space=vmem, size = 0x2000, scoped, tag = 'scratch operand']
  %s0 = inlined_call_operand.hbm [shape: bf16[2,16,256], index: 0, kind: input, shape index: {}]
  %s1 = inlined_call_operand.hbm [shape: f32[2,16,256], index: 1, kind: input, shape index: {}]
  %s2 = inlined_call_operand.hbm [shape: bf16[256,256], index: 2, kind: input, shape index: {}]
  %s3 = inlined_call_operand.vmem [shape: f32[1,256], index: 3, kind: input, shape index: {}]
  %s4 = inlined_call_operand.hbm [shape: bf16[256,256], index: 4, kind: input, shape index: {}]
  %s5 = inlined_call_operand.vmem [shape: f32[1,256], index: 5, kind: input, shape index: {}]
  %s6 = inlined_call_operand.hbm [shape: bf16[256,256], index: 6, kind: input, shape index: {}]
  %s7 = inlined_call_operand.vmem [shape: f32[1,256], index: 7, kind: input, shape index: {}]
  %s8 = inlined_call_operand.hbm [shape: bf16[256,256], index: 8, kind: input, shape index: {}]
  %s9 = inlined_call_operand.vmem [shape: f32[1,256], index: 9, kind: input, shape index: {}]
  %s10 = inlined_call_operand.vmem [shape: f32[1,256], index: 10, kind: input, shape index: {}]
  %s11 = inlined_call_operand.vmem [shape: f32[1,256], index: 11, kind: input, shape index: {}]
  %s12 = inlined_call_operand.hbm [shape: bf16[256,512], index: 12, kind: input, shape index: {}]
  %s13 = inlined_call_operand.vmem [shape: f32[1,512], index: 13, kind: input, shape index: {}]
  %s14 = inlined_call_operand.hbm [shape: bf16[512,256], index: 14, kind: input, shape index: {}]
  %s15 = inlined_call_operand.vmem [shape: f32[1,256], index: 15, kind: input, shape index: {}]
  %s16 = inlined_call_operand.vmem [shape: f32[1,256], index: 16, kind: input, shape index: {}]
  %s17 = inlined_call_operand.vmem [shape: f32[1,256], index: 17, kind: input, shape index: {}]
  %s18 = inlined_call_operand.hbm [shape: f32[2,16,256], index: 18, kind: output, shape index: {}]
  %s19 = sld [smem:[#allocation0]]
  $region141: #{tpu_custom_call.1} parent=0
    _
  %s21 = ssub.s32 1, %s19
  %s22 = scalar_select 0, %s21, %s19
  $region1: #{tpu_custom_call.1} parent=0
    #allocation4 [shape = 'u8[16384]{0}', space=vmem, size = 0x4000, scoped, tag = 'input window, operand 0']
    #allocation5 [shape = 's32[2]{0}', space=sflag, size = 0x8, scoped, tag = 'scoped memory for tpu_custom_call.1']
    #allocation6 [shape = 's32[2]{0}', space=sflag, size = 0x8, scoped, tag = 'scoped memory for tpu_custom_call.1']
    #allocation7 [shape = 'u8[16384]{0}', space=vmem, size = 0x4000, scoped, tag = 'input window, operand 1']
    #allocation8 [shape = 's32[2]{0}', space=sflag, size = 0x8, scoped, tag = 'scoped memory for tpu_custom_call.1']
    #allocation9 [shape = 'u8[131072]{0}', space=vmem, size = 0x20000, scoped, tag = 'input window, operand 2, single buffered']
    #allocation10 [shape = 'u8[131072]{0}', space=vmem, size = 0x20000, scoped, tag = 'input window, operand 4, single buffered']
    #allocation11 [shape = 's32[1]{0}', space=sflag, size = 0x4, scoped, tag = 'scoped memory for tpu_custom_call.1']
    #allocation12 [shape = 'u8[131072]{0}', space=vmem, size = 0x20000, scoped, tag = 'input window, operand 6, single buffered']
    #allocation13 [shape = 'u8[131072]{0}', space=vmem, size = 0x20000, scoped, tag = 'input window, operand 8, single buffered']
    #allocation14 [shape = 's32[1]{0}', space=sflag, size = 0x4, scoped, tag = 'scoped memory for tpu_custom_call.1']
    #allocation15 [shape = 'u8[262144]{0}', space=vmem, size = 0x40000, scoped, tag = 'input window, operand 12, single buffered']
    #allocation16 [shape = 'u8[262144]{0}', space=vmem, size = 0x40000, scoped, tag = 'input window, operand 14, single buffered']
    #allocation17 [shape = 's32[1]{0}', space=sflag, size = 0x4, scoped, tag = 'scoped memory for tpu_custom_call.1']
    #allocation18 [shape = 'u8[16384]{0}', space=vmem, size = 0x4000, scoped, tag = 'output window, operand 0']
    %23 = vsyncpa [#allocation5], 0
    %s24 = scalar_lea.sflag [#allocation5], 1
    %25 = vsyncpa %s24, 0
    %26 = vsyncpa [#allocation8], 0
    %s27 = scalar_lea.sflag [#allocation8], 1
    %28 = vsyncpa %s27, 0
    %29 = vsyncpa [#allocation11], 0
    %30 = vsyncpa [#allocation14], 0
    %31 = vsyncpa [#allocation17], 0
    %32 = vsyncpa [#allocation6], 0
    %s33 = scalar_lea.sflag [#allocation6], 1
    %34 = vsyncpa %s33, 0
    loop: start=0, step=1, limit=6
    $region2: #{tpu_custom_call.1} parent=1 // loop_pre_header
      _
    $region3: #{tpu_custom_call.1} parent=1 // loop_header
      %s36 = sphi 0, %s40
      %p37 = scmp.ge.s32.totalorder %s36, 6
      %s43 = sphi 0, %s55
      %s44 = sphi 0, %s51
      %s45 = sphi 0, %s43
      %s46 = sphi 0, %s44
      %s47 = sphi 0, %s45
      %s48 = sphi 0, %s46
      %s58 = sphi 0, %s60
      %s61 = sphi 0, %s58
      %s62 = sphi 0, %s61
      %s78 = sphi 0, %s62
      %s86 = sphi 0, %s88
      %s89 = sphi 0, %s86
      %s90 = sphi 0, %s89
      %s106 = sphi 0, %s90
      %s110 = sphi 0, %s110
      %s112 = sphi 0, %s110
      %s113 = sphi 0, %s112
      %s127 = sphi 0, %s113
      %s131 = sphi 0, %s131
      %s133 = sphi 0, %s131
      %s134 = sphi 0, %s133
      %s148 = sphi 0, %s134
      %s152 = sphi 0, %s152
      %s154 = sphi 0, %s152
      %s155 = sphi 0, %s154
      %s169 = sphi 0, %s155
      %s173 = sphi 0, %s173
      %s175 = sphi 0, %s173
      %s176 = sphi 0, %s175
      %s190 = sphi 0, %s176
      %s194 = sphi 0, %s194
      %s196 = sphi 0, %s194
      %s197 = sphi 0, %s196
      %s211 = sphi 0, %s197
      %s215 = sphi 0, %s215
      %s217 = sphi 0, %s215
      %s218 = sphi 0, %s217
      %s232 = sphi 0, %s218
      %s236 = sphi 0, %s236
      %s238 = sphi 0, %s236
      %s239 = sphi 0, %s238
      %s253 = sphi 0, %s239
      %s257 = sphi 0, %s257
      %s259 = sphi 0, %s257
      %s260 = sphi 0, %s259
      %s274 = sphi 0, %s260
      %s278 = sphi 0, %s278
      %s280 = sphi 0, %s278
      %s281 = sphi 0, %s280
      %s295 = sphi 0, %s281
      %s299 = sphi 0, %s299
      %s301 = sphi 0, %s299
      %s302 = sphi 0, %s301
      %s316 = sphi 0, %s302
      %s320 = sphi 0, %s320
      %s322 = sphi 0, %s320
      %s323 = sphi 0, %s322
      %s337 = sphi 0, %s323
      %s341 = sphi 0, %s341
      %s343 = sphi 0, %s341
      %s344 = sphi 0, %s343
      %s358 = sphi 0, %s344
      %s362 = sphi 0, %s362
      %s364 = sphi 0, %s362
      %s365 = sphi 0, %s364
      %s379 = sphi 0, %s365
      %s383 = sphi 0, %s383
      %s385 = sphi 0, %s383
      %s386 = sphi 0, %s385
      %s400 = sphi 0, %s386
      %s404 = sphi 0, %s404
      %s406 = sphi 0, %s404
      %s407 = sphi 0, %s406
      %s421 = sphi 0, %s407
      %s425 = sphi 0, %s425
      %s427 = sphi 0, %s425
      %s428 = sphi 0, %s427
      %s442 = sphi 0, %s428
      %s450 = sphi 0, %s452
      %s453 = sphi 0, %s450
      %s454 = sphi 0, %s453
      %s470 = sphi 0, %s454
    $region4: #{tpu_custom_call.1} parent=1 // loop_header_branch
      %39 = sbr.rel (%p37) target = $region8
    $region5: #{tpu_custom_call.1} parent=1 // loop_body
      %s41 = ssub.s32 %s36, 1
      %s42 = ssub.s32 %s36, 2
      %s49 = sadd.s32 1, %s44
      %p50 = scmp.ge.s32.totalorder %s49, 2
      %s51 = scalar_select %p50, 0, %s49
      %s52 = sadd.s32 1, %s43
      %s53 = scalar_select %p50, %s52, %s43
      %p54 = scmp.ge.s32.totalorder %s53, 2
      %s55 = scalar_select %p54, 0, %s53
      %s56 = ssub.s32 %s43, %s55
      %p57 = scmp.eq.s32.totalorder %s56, 0
      %s59 = sadd.s32 %s58, 1
      %s60 = scalar_select %p57, %s58, %s59
      %p63 = pneg %p57
      %p64 = scmp.eq.s32.totalorder %s36, 3
      %p65 = por %p63, %p64
      %p66 = scmp.ne.s32.totalorder %s58, %s61
      %p67 = scmp.eq.s32.totalorder %s36, 0
      %p68 = por %p66, %p67
      %p69 = scmp.ne.s32.totalorder %s58, %s61
      %p70 = scmp.eq.s32.totalorder %s41, 3
      %p71 = por %p69, %p70
      %p72 = scmp.ne.s32.totalorder %s61, %s62
      %p73 = scmp.eq.s32.totalorder %s41, 0
      %p74 = por %p72, %p73
      %p75 = scmp.ne.s32.totalorder %s61, %s62
      %p76 = scmp.eq.s32.totalorder %s42, 3
      %p77 = por %p75, %p76
      %p79 = scmp.ne.s32.totalorder %s62, %s78
      %p80 = scmp.eq.s32.totalorder %s42, 0
      %p81 = por %p79, %p80
      %s82 = ssub.s32 %s43, %s55
      %s83 = ssub.s32 %s44, %s51
      %s84 = sor.u32 %s82, %s83
      %p85 = scmp.eq.s32.totalorder %s84, 0
      %s87 = sadd.s32 %s86, 1
      %s88 = scalar_select %p85, %s86, %s87
      %p91 = pneg %p85
      %p92 = scmp.eq.s32.totalorder %s36, 3
      %p93 = por %p91, %p92
      %p94 = scmp.ne.s32.totalorder %s86, %s89
      %p95 = scmp.eq.s32.totalorder %s36, 0
      %p96 = por %p94, %p95
      %p97 = scmp.ne.s32.totalorder %s86, %s89
      %p98 = scmp.eq.s32.totalorder %s41, 3
      %p99 = por %p97, %p98
      %p100 = scmp.ne.s32.totalorder %s89, %s90
      %p101 = scmp.eq.s32.totalorder %s41, 0
      %p102 = por %p100, %p101
      %p103 = scmp.ne.s32.totalorder %s89, %s90
      %p104 = scmp.eq.s32.totalorder %s42, 3
      %p105 = por %p103, %p104
      %p107 = scmp.ne.s32.totalorder %s90, %s106
      %p108 = scmp.eq.s32.totalorder %s42, 0
      %p109 = por %p107, %p108
      %s111 = sadd.s32 %s110, 1
      %p114 = scmp.eq.s32.totalorder %s36, 3
      %p115 = scmp.ne.s32.totalorder %s110, %s112
      %p116 = scmp.eq.s32.totalorder %s36, 0
      %p117 = por %p115, %p116
      %p118 = scmp.ne.s32.totalorder %s110, %s112
      %p119 = scmp.eq.s32.totalorder %s41, 3
      %p120 = por %p118, %p119
      %p121 = scmp.ne.s32.totalorder %s112, %s113
      %p122 = scmp.eq.s32.totalorder %s41, 0
      %p123 = por %p121, %p122
      %p124 = scmp.ne.s32.totalorder %s112, %s113
      %p125 = scmp.eq.s32.totalorder %s42, 3
      %p126 = por %p124, %p125
      %p128 = scmp.ne.s32.totalorder %s113, %s127
      %p129 = scmp.eq.s32.totalorder %s42, 0
      %p130 = por %p128, %p129
      %s132 = sadd.s32 %s131, 1
      %p135 = scmp.eq.s32.totalorder %s36, 3
      %p136 = scmp.ne.s32.totalorder %s131, %s133
      %p137 = scmp.eq.s32.totalorder %s36, 0
      %p138 = por %p136, %p137
      %p139 = scmp.ne.s32.totalorder %s131, %s133
      %p140 = scmp.eq.s32.totalorder %s41, 3
      %p141 = por %p139, %p140
      %p142 = scmp.ne.s32.totalorder %s133, %s134
      %p143 = scmp.eq.s32.totalorder %s41, 0
      %p144 = por %p142, %p143
      %p145 = scmp.ne.s32.totalorder %s133, %s134
      %p146 = scmp.eq.s32.totalorder %s42, 3
      %p147 = por %p145, %p146
      %p149 = scmp.ne.s32.totalorder %s134, %s148
      %p150 = scmp.eq.s32.totalorder %s42, 0
      %p151 = por %p149, %p150
      %s153 = sadd.s32 %s152, 1
      %p156 = scmp.eq.s32.totalorder %s36, 3
      %p157 = scmp.ne.s32.totalorder %s152, %s154
      %p158 = scmp.eq.s32.totalorder %s36, 0
      %p159 = por %p157, %p158
      %p160 = scmp.ne.s32.totalorder %s152, %s154
      %p161 = scmp.eq.s32.totalorder %s41, 3
      %p162 = por %p160, %p161
      %p163 = scmp.ne.s32.totalorder %s154, %s155
      %p164 = scmp.eq.s32.totalorder %s41, 0
      %p165 = por %p163, %p164
      %p166 = scmp.ne.s32.totalorder %s154, %s155
      %p167 = scmp.eq.s32.totalorder %s42, 3
      %p168 = por %p166, %p167
      %p170 = scmp.ne.s32.totalorder %s155, %s169
      %p171 = scmp.eq.s32.totalorder %s42, 0
      %p172 = por %p170, %p171
      %s174 = sadd.s32 %s173, 1
      %p177 = scmp.eq.s32.totalorder %s36, 3
      %p178 = scmp.ne.s32.totalorder %s173, %s175
      %p179 = scmp.eq.s32.totalorder %s36, 0
      %p180 = por %p178, %p179
      %p181 = scmp.ne.s32.totalorder %s173, %s175
      %p182 = scmp.eq.s32.totalorder %s41, 3
      %p183 = por %p181, %p182
      %p184 = scmp.ne.s32.totalorder %s175, %s176
      %p185 = scmp.eq.s32.totalorder %s41, 0
      %p186 = por %p184, %p185
      %p187 = scmp.ne.s32.totalorder %s175, %s176
      %p188 = scmp.eq.s32.totalorder %s42, 3
      %p189 = por %p187, %p188
      %p191 = scmp.ne.s32.totalorder %s176, %s190
      %p192 = scmp.eq.s32.totalorder %s42, 0
      %p193 = por %p191, %p192
      %s195 = sadd.s32 %s194, 1
      %p198 = scmp.eq.s32.totalorder %s36, 3
      %p199 = scmp.ne.s32.totalorder %s194, %s196
      %p200 = scmp.eq.s32.totalorder %s36, 0
      %p201 = por %p199, %p200
      %p202 = scmp.ne.s32.totalorder %s194, %s196
      %p203 = scmp.eq.s32.totalorder %s41, 3
      %p204 = por %p202, %p203
      %p205 = scmp.ne.s32.totalorder %s196, %s197
      %p206 = scmp.eq.s32.totalorder %s41, 0
      %p207 = por %p205, %p206
      %p208 = scmp.ne.s32.totalorder %s196, %s197
      %p209 = scmp.eq.s32.totalorder %s42, 3
      %p210 = por %p208, %p209
      %p212 = scmp.ne.s32.totalorder %s197, %s211
      %p213 = scmp.eq.s32.totalorder %s42, 0
      %p214 = por %p212, %p213
      %s216 = sadd.s32 %s215, 1
      %p219 = scmp.eq.s32.totalorder %s36, 3
      %p220 = scmp.ne.s32.totalorder %s215, %s217
      %p221 = scmp.eq.s32.totalorder %s36, 0
      %p222 = por %p220, %p221
      %p223 = scmp.ne.s32.totalorder %s215, %s217
      %p224 = scmp.eq.s32.totalorder %s41, 3
      %p225 = por %p223, %p224
      %p226 = scmp.ne.s32.totalorder %s217, %s218
      %p227 = scmp.eq.s32.totalorder %s41, 0
      %p228 = por %p226, %p227
      %p229 = scmp.ne.s32.totalorder %s217, %s218
      %p230 = scmp.eq.s32.totalorder %s42, 3
      %p231 = por %p229, %p230
      %p233 = scmp.ne.s32.totalorder %s218, %s232
      %p234 = scmp.eq.s32.totalorder %s42, 0
      %p235 = por %p233, %p234
      %s237 = sadd.s32 %s236, 1
      %p240 = scmp.eq.s32.totalorder %s36, 3
      %p241 = scmp.ne.s32.totalorder %s236, %s238
      %p242 = scmp.eq.s32.totalorder %s36, 0
      %p243 = por %p241, %p242
      %p244 = scmp.ne.s32.totalorder %s236, %s238
      %p245 = scmp.eq.s32.totalorder %s41, 3
      %p246 = por %p244, %p245
      %p247 = scmp.ne.s32.totalorder %s238, %s239
      %p248 = scmp.eq.s32.totalorder %s41, 0
      %p249 = por %p247, %p248
      %p250 = scmp.ne.s32.totalorder %s238, %s239
      %p251 = scmp.eq.s32.totalorder %s42, 3
      %p252 = por %p250, %p251
      %p254 = scmp.ne.s32.totalorder %s239, %s253
      %p255 = scmp.eq.s32.totalorder %s42, 0
      %p256 = por %p254, %p255
      %s258 = sadd.s32 %s257, 1
      %p261 = scmp.eq.s32.totalorder %s36, 3
      %p262 = scmp.ne.s32.totalorder %s257, %s259
      %p263 = scmp.eq.s32.totalorder %s36, 0
      %p264 = por %p262, %p263
      %p265 = scmp.ne.s32.totalorder %s257, %s259
      %p266 = scmp.eq.s32.totalorder %s41, 3
      %p267 = por %p265, %p266
      %p268 = scmp.ne.s32.totalorder %s259, %s260
      %p269 = scmp.eq.s32.totalorder %s41, 0
      %p270 = por %p268, %p269
      %p271 = scmp.ne.s32.totalorder %s259, %s260
      %p272 = scmp.eq.s32.totalorder %s42, 3
      %p273 = por %p271, %p272
      %p275 = scmp.ne.s32.totalorder %s260, %s274
      %p276 = scmp.eq.s32.totalorder %s42, 0
      %p277 = por %p275, %p276
      %s279 = sadd.s32 %s278, 1
      %p282 = scmp.eq.s32.totalorder %s36, 3
      %p283 = scmp.ne.s32.totalorder %s278, %s280
      %p284 = scmp.eq.s32.totalorder %s36, 0
      %p285 = por %p283, %p284
      %p286 = scmp.ne.s32.totalorder %s278, %s280
      %p287 = scmp.eq.s32.totalorder %s41, 3
      %p288 = por %p286, %p287
      %p289 = scmp.ne.s32.totalorder %s280, %s281
      %p290 = scmp.eq.s32.totalorder %s41, 0
      %p291 = por %p289, %p290
      %p292 = scmp.ne.s32.totalorder %s280, %s281
      %p293 = scmp.eq.s32.totalorder %s42, 3
      %p294 = por %p292, %p293
      %p296 = scmp.ne.s32.totalorder %s281, %s295
      %p297 = scmp.eq.s32.totalorder %s42, 0
      %p298 = por %p296, %p297
      %s300 = sadd.s32 %s299, 1
      %p303 = scmp.eq.s32.totalorder %s36, 3
      %p304 = scmp.ne.s32.totalorder %s299, %s301
      %p305 = scmp.eq.s32.totalorder %s36, 0
      %p306 = por %p304, %p305
      %p307 = scmp.ne.s32.totalorder %s299, %s301
      %p308 = scmp.eq.s32.totalorder %s41, 3
      %p309 = por %p307, %p308
      %p310 = scmp.ne.s32.totalorder %s301, %s302
      %p311 = scmp.eq.s32.totalorder %s41, 0
      %p312 = por %p310, %p311
      %p313 = scmp.ne.s32.totalorder %s301, %s302
      %p314 = scmp.eq.s32.totalorder %s42, 3
      %p315 = por %p313, %p314
      %p317 = scmp.ne.s32.totalorder %s302, %s316
      %p318 = scmp.eq.s32.totalorder %s42, 0
      %p319 = por %p317, %p318
      %s321 = sadd.s32 %s320, 1
      %p324 = scmp.eq.s32.totalorder %s36, 3
      %p325 = scmp.ne.s32.totalorder %s320, %s322
      %p326 = scmp.eq.s32.totalorder %s36, 0
      %p327 = por %p325, %p326
      %p328 = scmp.ne.s32.totalorder %s320, %s322
      %p329 = scmp.eq.s32.totalorder %s41, 3
      %p330 = por %p328, %p329
      %p331 = scmp.ne.s32.totalorder %s322, %s323
      %p332 = scmp.eq.s32.totalorder %s41, 0
      %p333 = por %p331, %p332
      %p334 = scmp.ne.s32.totalorder %s322, %s323
      %p335 = scmp.eq.s32.totalorder %s42, 3
      %p336 = por %p334, %p335
      %p338 = scmp.ne.s32.totalorder %s323, %s337
      %p339 = scmp.eq.s32.totalorder %s42, 0
      %p340 = por %p338, %p339
      %s342 = sadd.s32 %s341, 1
      %p345 = scmp.eq.s32.totalorder %s36, 3
      %p346 = scmp.ne.s32.totalorder %s341, %s343
      %p347 = scmp.eq.s32.totalorder %s36, 0
      %p348 = por %p346, %p347
      %p349 = scmp.ne.s32.totalorder %s341, %s343
      %p350 = scmp.eq.s32.totalorder %s41, 3
      %p351 = por %p349, %p350
      %p352 = scmp.ne.s32.totalorder %s343, %s344
      %p353 = scmp.eq.s32.totalorder %s41, 0
      %p354 = por %p352, %p353
      %p355 = scmp.ne.s32.totalorder %s343, %s344
      %p356 = scmp.eq.s32.totalorder %s42, 3
      %p357 = por %p355, %p356
      %p359 = scmp.ne.s32.totalorder %s344, %s358
      %p360 = scmp.eq.s32.totalorder %s42, 0
      %p361 = por %p359, %p360
      %s363 = sadd.s32 %s362, 1
      %p366 = scmp.eq.s32.totalorder %s36, 3
      %p367 = scmp.ne.s32.totalorder %s362, %s364
      %p368 = scmp.eq.s32.totalorder %s36, 0
      %p369 = por %p367, %p368
      %p370 = scmp.ne.s32.totalorder %s362, %s364
      %p371 = scmp.eq.s32.totalorder %s41, 3
      %p372 = por %p370, %p371
      %p373 = scmp.ne.s32.totalorder %s364, %s365
      %p374 = scmp.eq.s32.totalorder %s41, 0
      %p375 = por %p373, %p374
      %p376 = scmp.ne.s32.totalorder %s364, %s365
      %p377 = scmp.eq.s32.totalorder %s42, 3
      %p378 = por %p376, %p377
      %p380 = scmp.ne.s32.totalorder %s365, %s379
      %p381 = scmp.eq.s32.totalorder %s42, 0
      %p382 = por %p380, %p381
      %s384 = sadd.s32 %s383, 1
      %p387 = scmp.eq.s32.totalorder %s36, 3
      %p388 = scmp.ne.s32.totalorder %s383, %s385
      %p389 = scmp.eq.s32.totalorder %s36, 0
      %p390 = por %p388, %p389
      %p391 = scmp.ne.s32.totalorder %s383, %s385
      %p392 = scmp.eq.s32.totalorder %s41, 3
      %p393 = por %p391, %p392
      %p394 = scmp.ne.s32.totalorder %s385, %s386
      %p395 = scmp.eq.s32.totalorder %s41, 0
      %p396 = por %p394, %p395
      %p397 = scmp.ne.s32.totalorder %s385, %s386
      %p398 = scmp.eq.s32.totalorder %s42, 3
      %p399 = por %p397, %p398
      %p401 = scmp.ne.s32.totalorder %s386, %s400
      %p402 = scmp.eq.s32.totalorder %s42, 0
      %p403 = por %p401, %p402
      %s405 = sadd.s32 %s404, 1
      %p408 = scmp.eq.s32.totalorder %s36, 3
      %p409 = scmp.ne.s32.totalorder %s404, %s406
      %p410 = scmp.eq.s32.totalorder %s36, 0
      %p411 = por %p409, %p410
      %p412 = scmp.ne.s32.totalorder %s404, %s406
      %p413 = scmp.eq.s32.totalorder %s41, 3
      %p414 = por %p412, %p413
      %p415 = scmp.ne.s32.totalorder %s406, %s407
      %p416 = scmp.eq.s32.totalorder %s41, 0
      %p417 = por %p415, %p416
      %p418 = scmp.ne.s32.totalorder %s406, %s407
      %p419 = scmp.eq.s32.totalorder %s42, 3
      %p420 = por %p418, %p419
      %p422 = scmp.ne.s32.totalorder %s407, %s421
      %p423 = scmp.eq.s32.totalorder %s42, 0
      %p424 = por %p422, %p423
      %s426 = sadd.s32 %s425, 1
      %p429 = scmp.eq.s32.totalorder %s36, 3
      %p430 = scmp.ne.s32.totalorder %s425, %s427
      %p431 = scmp.eq.s32.totalorder %s36, 0
      %p432 = por %p430, %p431
      %p433 = scmp.ne.s32.totalorder %s425, %s427
      %p434 = scmp.eq.s32.totalorder %s41, 3
      %p435 = por %p433, %p434
      %p436 = scmp.ne.s32.totalorder %s427, %s428
      %p437 = scmp.eq.s32.totalorder %s41, 0
      %p438 = por %p436, %p437
      %p439 = scmp.ne.s32.totalorder %s427, %s428
      %p440 = scmp.eq.s32.totalorder %s42, 3
      %p441 = por %p439, %p440
      %p443 = scmp.ne.s32.totalorder %s428, %s442
      %p444 = scmp.eq.s32.totalorder %s42, 0
      %p445 = por %p443, %p444
      %s446 = ssub.s32 %s43, %s55
      %s447 = ssub.s32 %s44, %s51
      %s448 = sor.u32 %s446, %s447
      %p449 = scmp.eq.s32.totalorder %s448, 0
      %s451 = sadd.s32 %s450, 1
      %s452 = scalar_select %p449, %s450, %s451
      %p455 = pneg %p449
      %p456 = scmp.eq.s32.totalorder %s36, 3
      %p457 = por %p455, %p456
      %p458 = scmp.ne.s32.totalorder %s450, %s453
      %p459 = scmp.eq.s32.totalorder %s36, 0
      %p460 = por %p458, %p459
      %p461 = scmp.ne.s32.totalorder %s450, %s453
      %p462 = scmp.eq.s32.totalorder %s41, 3
      %p463 = por %p461, %p462
      %p464 = scmp.ne.s32.totalorder %s453, %s454
      %p465 = scmp.eq.s32.totalorder %s41, 0
      %p466 = por %p464, %p465
      %p467 = scmp.ne.s32.totalorder %s453, %s454
      %p468 = scmp.eq.s32.totalorder %s42, 3
      %p469 = por %p467, %p468
      %p471 = scmp.ne.s32.totalorder %s454, %s470
      %p472 = scmp.eq.s32.totalorder %s42, 0
      %p473 = por %p471, %p472
      %p474 = scmp.le.s32.totalorder 1, %s36
      %p475 = scmp.lt.s32.totalorder %s36, 5
      %p476 = pnand %p474, %p475
      %p477 = pneg %p476
      // Predicated region
      $region9: #{tpu_custom_call.1} parent=5 // pred_check
        _
      $region10: #{tpu_custom_call.1} parent=5 // pred_check_branch
        %479 = sbr.rel (%p476) target = $region12
      $region11: #{tpu_custom_call.1} parent=5 // pred_region
        %s480 = ssub.s32 %s36, 1
        // Predicated region
        $region13: #{tpu_custom_call.1} parent=11 // pred_check
          %p481 = pneg %p123
        $region14: #{tpu_custom_call.1} parent=11 // pred_check_branch
          %483 = sbr.rel (%p481) target = $region16
        $region15: #{tpu_custom_call.1} parent=11 // pred_region
          %s485 = ssub.s32 4096, 4096
          %486 = vsyncadd [#allocation8], %s485
          %s487 = sshll.u32 [#allocation9], 4
          %s488 = int_to_ptr.vmem [resolvable:$true] %s487
          %493 = dma.hbm_to_vmem [thread:$0]  %s2, 4096, %s488, [#allocation8], 128, 128, 8
        $region16: #{tpu_custom_call.1} parent=11 // pred_fallthru
          _
        // Predicated region
        $region17: #{tpu_custom_call.1} parent=11 // pred_check
          %p494 = pneg %p144
        $region18: #{tpu_custom_call.1} parent=11 // pred_check_branch
          %496 = sbr.rel (%p494) target = $region20
        $region19: #{tpu_custom_call.1} parent=11 // pred_region
          _
        $region20: #{tpu_custom_call.1} parent=11 // pred_fallthru
          _
        // Predicated region
        $region21: #{tpu_custom_call.1} parent=11 // pred_check
          %p497 = pneg %p165
        $region22: #{tpu_custom_call.1} parent=11 // pred_check_branch
          %499 = sbr.rel (%p497) target = $region24
        $region23: #{tpu_custom_call.1} parent=11 // pred_region
          %s501 = ssub.s32 4096, 4096
          %502 = vsyncadd [#allocation11], %s501
          %s503 = sshll.u32 [#allocation10], 4
          %s504 = int_to_ptr.vmem [resolvable:$true] %s503
          %509 = dma.hbm_to_vmem [thread:$0]  %s4, 4096, %s504, [#allocation11], 128, 128, 8
        $region24: #{tpu_custom_call.1} parent=11 // pred_fallthru
          _
        // Predicated region
        $region25: #{tpu_custom_call.1} parent=11 // pred_check
          %p510 = pneg %p186
        $region26: #{tpu_custom_call.1} parent=11 // pred_check_branch
          %512 = sbr.rel (%p510) target = $region28
        $region27: #{tpu_custom_call.1} parent=11 // pred_region
          _
        $region28: #{tpu_custom_call.1} parent=11 // pred_fallthru
          _
        // Predicated region
        $region29: #{tpu_custom_call.1} parent=11 // pred_check
          %p513 = pneg %p207
        $region30: #{tpu_custom_call.1} parent=11 // pred_check_branch
          %515 = sbr.rel (%p513) target = $region32
        $region31: #{tpu_custom_call.1} parent=11 // pred_region
          %s517 = ssub.s32 4096, 4096
          %518 = vsyncadd [#allocation11], %s517
          %s519 = sshll.u32 [#allocation12], 4
          %s520 = int_to_ptr.vmem [resolvable:$true] %s519
          %525 = dma.hbm_to_vmem [thread:$0]  %s6, 4096, %s520, [#allocation11], 128, 128, 8
        $region32: #{tpu_custom_call.1} parent=11 // pred_fallthru
          _
        // Predicated region
        $region33: #{tpu_custom_call.1} parent=11 // pred_check
          %p526 = pneg %p228
        $region34: #{tpu_custom_call.1} parent=11 // pred_check_branch
          %528 = sbr.rel (%p526) target = $region36
        $region35: #{tpu_custom_call.1} parent=11 // pred_region
          _
        $region36: #{tpu_custom_call.1} parent=11 // pred_fallthru
          _
        // Predicated region
        $region37: #{tpu_custom_call.1} parent=11 // pred_check
          %p529 = pneg %p249
        $region38: #{tpu_custom_call.1} parent=11 // pred_check_branch
          %531 = sbr.rel (%p529) target = $region40
        $region39: #{tpu_custom_call.1} parent=11 // pred_region
          %s533 = ssub.s32 4096, 4096
          %534 = vsyncadd [#allocation14], %s533
          %s535 = sshll.u32 [#allocation13], 4
          %s536 = int_to_ptr.vmem [resolvable:$true] %s535
          %541 = dma.hbm_to_vmem [thread:$0]  %s8, 4096, %s536, [#allocation14], 128, 128, 8
        $region40: #{tpu_custom_call.1} parent=11 // pred_fallthru
          _
        // Predicated region
        $region41: #{tpu_custom_call.1} parent=11 // pred_check
          %p542 = pneg %p270
        $region42: #{tpu_custom_call.1} parent=11 // pred_check_branch
          %544 = sbr.rel (%p542) target = $region44
        $region43: #{tpu_custom_call.1} parent=11 // pred_region
          _
        $region44: #{tpu_custom_call.1} parent=11 // pred_fallthru
          _
        // Predicated region
        $region45: #{tpu_custom_call.1} parent=11 // pred_check
          %p545 = pneg %p291
        $region46: #{tpu_custom_call.1} parent=11 // pred_check_branch
          %547 = sbr.rel (%p545) target = $region48
        $region47: #{tpu_custom_call.1} parent=11 // pred_region
          _
        $region48: #{tpu_custom_call.1} parent=11 // pred_fallthru
          _
        // Predicated region
        $region49: #{tpu_custom_call.1} parent=11 // pred_check
          %p548 = pneg %p312
        $region50: #{tpu_custom_call.1} parent=11 // pred_check_branch
          %550 = sbr.rel (%p548) target = $region52
        $region51: #{tpu_custom_call.1} parent=11 // pred_region
          _
        $region52: #{tpu_custom_call.1} parent=11 // pred_fallthru
          _
        // Predicated region
        $region53: #{tpu_custom_call.1} parent=11 // pred_check
          %p551 = pneg %p333
        $region54: #{tpu_custom_call.1} parent=11 // pred_check_branch
          %553 = sbr.rel (%p551) target = $region56
        $region55: #{tpu_custom_call.1} parent=11 // pred_region
          %s555 = ssub.s32 8192, 8192
          %556 = vsyncadd [#allocation14], %s555
          %s557 = sshll.u32 [#allocation15], 4
          %s558 = int_to_ptr.vmem [resolvable:$true] %s557
          %563 = dma.hbm_to_vmem [thread:$0]  %s12, 8192, %s558, [#allocation14], 256, 256, 16
        $region56: #{tpu_custom_call.1} parent=11 // pred_fallthru
          _
        // Predicated region
        $region57: #{tpu_custom_call.1} parent=11 // pred_check
          %p564 = pneg %p354
        $region58: #{tpu_custom_call.1} parent=11 // pred_check_branch
          %566 = sbr.rel (%p564) target = $region60
        $region59: #{tpu_custom_call.1} parent=11 // pred_region
          _
        $region60: #{tpu_custom_call.1} parent=11 // pred_fallthru
          _
        // Predicated region
        $region61: #{tpu_custom_call.1} parent=11 // pred_check
          %p567 = pneg %p375
        $region62: #{tpu_custom_call.1} parent=11 // pred_check_branch
          %569 = sbr.rel (%p567) target = $region64
        $region63: #{tpu_custom_call.1} parent=11 // pred_region
          %s571 = ssub.s32 8192, 8192
          %572 = vsyncadd [#allocation17], %s571
          %s573 = sshll.u32 [#allocation16], 4
          %s574 = int_to_ptr.vmem [resolvable:$true] %s573
          %579 = dma.hbm_to_vmem [thread:$0]  %s14, 8192, %s574, [#allocation17], 128, 128, 8
        $region64: #{tpu_custom_call.1} parent=11 // pred_fallthru
          _
        // Predicated region
        $region65: #{tpu_custom_call.1} parent=11 // pred_check
          %p580 = pneg %p396
        $region66: #{tpu_custom_call.1} parent=11 // pred_check_branch
          %582 = sbr.rel (%p580) target = $region68
        $region67: #{tpu_custom_call.1} parent=11 // pred_region
          _
        $region68: #{tpu_custom_call.1} parent=11 // pred_fallthru
          _
        // Predicated region
        $region69: #{tpu_custom_call.1} parent=11 // pred_check
          %p583 = pneg %p417
        $region70: #{tpu_custom_call.1} parent=11 // pred_check_branch
          %585 = sbr.rel (%p583) target = $region72
        $region71: #{tpu_custom_call.1} parent=11 // pred_region
          _
        $region72: #{tpu_custom_call.1} parent=11 // pred_fallthru
          _
        // Predicated region
        $region73: #{tpu_custom_call.1} parent=11 // pred_check
          %p586 = pneg %p438
        $region74: #{tpu_custom_call.1} parent=11 // pred_check_branch
          %588 = sbr.rel (%p586) target = $region76
        $region75: #{tpu_custom_call.1} parent=11 // pred_region
          _
        $region76: #{tpu_custom_call.1} parent=11 // pred_fallthru
          _
      $region12: #{tpu_custom_call.1} parent=5 // pred_fallthru
        _
      %p589 = scmp.lt.s32.totalorder %s36, 4
      // Predicated region
      $region77: #{tpu_custom_call.1} parent=5 // pred_check
        %p590 = pneg %p589
      $region78: #{tpu_custom_call.1} parent=5 // pred_check_branch
        %592 = sbr.rel (%p590) target = $region80
      $region79: #{tpu_custom_call.1} parent=5 // pred_region
        // Predicated region
        $region81: #{tpu_custom_call.1} parent=79 // pred_check
          %p593 = pneg %p68
        $region82: #{tpu_custom_call.1} parent=79 // pred_check_branch
          %595 = sbr.rel (%p593) target = $region84
        $region83: #{tpu_custom_call.1} parent=79 // pred_region
          %s596 = sand.u32 %s58, 1
          %s597 = scalar_lea.sflag [#allocation5], %s596
          %s598 = sand.u32 %s58, 1
          %s599 = smul.addr %s598, 16
          %s600 = scalar_lea.vmem [#allocation4], %s599
          %s602 = ssub.s32 256, 256
          %603 = vsyncadd %s597, %s602
          %s604 = smul.addr %s43, 4
          %s605 = smul.addr %s604, 64
          %s606 = scalar_lea.hbm %s0, %s605
          %s607 = sshll.u32 %s600, 4
          %s608 = int_to_ptr.vmem [resolvable:$true] %s607
          %613 = dma.hbm_to_vmem [thread:$0]  %s606, 256, %s608, %s597, 128, 128, 8
        $region84: #{tpu_custom_call.1} parent=79 // pred_fallthru
          _
        // Predicated region
        $region85: #{tpu_custom_call.1} parent=79 // pred_check
          %p614 = pneg %p96
        $region86: #{tpu_custom_call.1} parent=79 // pred_check_branch
          %616 = sbr.rel (%p614) target = $region88
        $region87: #{tpu_custom_call.1} parent=79 // pred_region
          %s617 = sand.u32 %s36, 1
          %s618 = scalar_lea.sflag [#allocation8], %s617
          %s619 = sand.u32 %s86, 1
          %s620 = smul.addr %s619, 16
          %s621 = scalar_lea.vmem [#allocation7], %s620
          %s623 = ssub.s32 256, 256
          %624 = vsyncadd %s618, %s623
          %s625 = smul.addr %s44, 2
          %s626 = smul.addr %s43, 4
          %s627 = sadd.s32 %s625, %s626
          %s628 = smul.addr %s627, 128
          %s629 = scalar_lea.hbm %s1, %s628
          %s631 = sshll.u32 %s621, 4
          %s632 = int_to_ptr.vmem [resolvable:$true] %s631
          %634 = dma.hbm_to_vmem [thread:$0]  %s629, 256, %s632, %s618
        $region88: #{tpu_custom_call.1} parent=79 // pred_fallthru
          _
      $region80: #{tpu_custom_call.1} parent=5 // pred_fallthru
        _
      %p635 = scmp.le.s32.totalorder 1, %s36
      %p636 = scmp.lt.s32.totalorder %s36, 5
      %p637 = pnand %p635, %p636
      %p638 = pneg %p637
      // Predicated region
      $region89: #{tpu_custom_call.1} parent=5 // pred_check
        _
      $region90: #{tpu_custom_call.1} parent=5 // pred_check_branch
        %640 = sbr.rel (%p637) target = $region92
      $region91: #{tpu_custom_call.1} parent=5 // pred_region
        %s641 = ssub.s32 %s36, 1
        %s642 = sand.u32 %s61, 1
        %s643 = scalar_lea.sflag [#allocation5], %s642
        %s644 = sand.u32 %s61, 1
        %s645 = smul.addr %s644, 16
        %s646 = scalar_lea.vmem [#allocation4], %s645
        // Predicated region
        $region93: #{tpu_custom_call.1} parent=91 // pred_check
          %p647 = pneg %p74
        $region94: #{tpu_custom_call.1} parent=91 // pred_check_branch
          %649 = sbr.rel (%p647) target = $region96
        $region95: #{tpu_custom_call.1} parent=91 // pred_region
          %650 = dma.done %s643, 256
        $region96: #{tpu_custom_call.1} parent=91 // pred_fallthru
          _
        %s651 = sand.u32 %s41, 1
        %s652 = scalar_lea.sflag [#allocation8], %s651
        %s653 = sand.u32 %s89, 1
        %s654 = smul.addr %s653, 16
        %s655 = scalar_lea.vmem [#allocation7], %s654
        // Predicated region
        $region97: #{tpu_custom_call.1} parent=91 // pred_check
          %p656 = pneg %p102
        $region98: #{tpu_custom_call.1} parent=91 // pred_check_branch
          %658 = sbr.rel (%p656) target = $region100
        $region99: #{tpu_custom_call.1} parent=91 // pred_region
          %659 = dma.done %s652, 256
        $region100: #{tpu_custom_call.1} parent=91 // pred_fallthru
          _
        // Predicated region
        $region101: #{tpu_custom_call.1} parent=91 // pred_check
          %p660 = pneg %p123
        $region102: #{tpu_custom_call.1} parent=91 // pred_check_branch
          %662 = sbr.rel (%p660) target = $region104
        $region103: #{tpu_custom_call.1} parent=91 // pred_region
          %663 = dma.done [#allocation8], 4096
        $region104: #{tpu_custom_call.1} parent=91 // pred_fallthru
          _
        // Predicated region
        $region105: #{tpu_custom_call.1} parent=91 // pred_check
          %p664 = pneg %p165
        $region106: #{tpu_custom_call.1} parent=91 // pred_check_branch
          %666 = sbr.rel (%p664) target = $region108
        $region107: #{tpu_custom_call.1} parent=91 // pred_region
          %667 = dma.done [#allocation11], 4096
        $region108: #{tpu_custom_call.1} parent=91 // pred_fallthru
          _
        // Predicated region
        $region109: #{tpu_custom_call.1} parent=91 // pred_check
          %p668 = pneg %p207
        $region110: #{tpu_custom_call.1} parent=91 // pred_check_branch
          %670 = sbr.rel (%p668) target = $region112
        $region111: #{tpu_custom_call.1} parent=91 // pred_region
          %671 = dma.done [#allocation11], 4096
        $region112: #{tpu_custom_call.1} parent=91 // pred_fallthru
          _
        // Predicated region
        $region113: #{tpu_custom_call.1} parent=91 // pred_check
          %p672 = pneg %p249
        $region114: #{tpu_custom_call.1} parent=91 // pred_check_branch
          %674 = sbr.rel (%p672) target = $region116
        $region115: #{tpu_custom_call.1} parent=91 // pred_region
          %675 = dma.done [#allocation14], 4096
        $region116: #{tpu_custom_call.1} parent=91 // pred_fallthru
          _
        // Predicated region
        $region117: #{tpu_custom_call.1} parent=91 // pred_check
          %p676 = pneg %p333
        $region118: #{tpu_custom_call.1} parent=91 // pred_check_branch
          %678 = sbr.rel (%p676) target = $region120
        $region119: #{tpu_custom_call.1} parent=91 // pred_region
          %679 = dma.done [#allocation14], 8192
        $region120: #{tpu_custom_call.1} parent=91 // pred_fallthru
          _
        // Predicated region
        $region121: #{tpu_custom_call.1} parent=91 // pred_check
          %p680 = pneg %p375
        $region122: #{tpu_custom_call.1} parent=91 // pred_check_branch
          %682 = sbr.rel (%p680) target = $region124
        $region123: #{tpu_custom_call.1} parent=91 // pred_region
          %683 = dma.done [#allocation17], 8192
        $region124: #{tpu_custom_call.1} parent=91 // pred_fallthru
          _
        %s684 = sand.u32 %s61, 1
        %s685 = scalar_lea.sflag [#allocation5], %s684
        %s686 = sand.u32 %s61, 1
        %s687 = smul.addr %s686, 16
        %s688 = scalar_lea.vmem [#allocation4], %s687
        %p689 = pneg %p74
        %p690 = pneg %p71
        %s691 = sand.u32 %s41, 1
        %s692 = scalar_lea.sflag [#allocation8], %s691
        %s693 = sand.u32 %s89, 1
        %s694 = smul.addr %s693, 16
        %s695 = scalar_lea.vmem [#allocation7], %s694
        %p696 = pneg %p102
        %p697 = pneg %p99
        %p698 = pneg %p123
        %p699 = pneg %p120
        %p700 = pneg %p144
        %p701 = pneg %p141
        %p702 = pneg %p165
        %p703 = pneg %p162
        %p704 = pneg %p186
        %p705 = pneg %p183
        %p706 = pneg %p207
        %p707 = pneg %p204
        %p708 = pneg %p228
        %p709 = pneg %p225
        %p710 = pneg %p249
        %p711 = pneg %p246
        %p712 = pneg %p270
        %p713 = pneg %p267
        %p714 = pneg %p291
        %p715 = pneg %p288
        %p716 = pneg %p312
        %p717 = pneg %p309
        %p718 = pneg %p333
        %p719 = pneg %p330
        %p720 = pneg %p354
        %p721 = pneg %p351
        %p722 = pneg %p375
        %p723 = pneg %p372
        %p724 = pneg %p396
        %p725 = pneg %p393
        %p726 = pneg %p417
        %p727 = pneg %p414
        %p728 = pneg %p438
        %p729 = pneg %p435
        %p730 = pneg %p466
        %p731 = pneg %p463
        %s732 = sand.u32 %s453, 1
        %s733 = scalar_lea.sflag [#allocation6], %s732
        %s734 = sand.u32 %s453, 1
        %s735 = smul.addr %s734, 16
        %s736 = scalar_lea.vmem [#allocation18], %s735
        %p738 = scmp.eq.s32.totalorder %s46, 0
        // Predicated region
        $region125: #{tpu_custom_call.1} parent=91 // pred_check
          %p739 = pneg %p738
        $region126: #{tpu_custom_call.1} parent=91 // pred_check_branch
          %741 = sbr.rel (%p739) target = $region128
        $region127: #{tpu_custom_call.1} parent=91 // pred_region
          %v742 = vld [vmem:[%s646] sm:$0xff]
          %v743 = vld [vmem:[%s646 + $0x8] sm:$0xff]
          %v744 = vld [vmem:[#allocation10] sm:$0xff]
          %v745 = vld [vmem:[#allocation10 + $0x8] sm:$0xff]
          %v746 = vld [vmem:[#allocation10 + $0x10] sm:$0xff]
          %v747 = vld [vmem:[#allocation10 + $0x18] sm:$0xff]
          %v748 = vld [vmem:[#allocation10 + $0x20] sm:$0xff]
          %v749 = vld [vmem:[#allocation10 + $0x28] sm:$0xff]
          %v750 = vld [vmem:[#allocation10 + $0x30] sm:$0xff]
          %v751 = vld [vmem:[#allocation10 + $0x38] sm:$0xff]
          %v752 = vld [vmem:[#allocation10 + $0x40] sm:$0xff]
          %v753 = vld [vmem:[#allocation10 + $0x48] sm:$0xff]
          %v754 = vld [vmem:[#allocation10 + $0x50] sm:$0xff]
          %v755 = vld [vmem:[#allocation10 + $0x58] sm:$0xff]
          %v756 = vld [vmem:[#allocation10 + $0x60] sm:$0xff]
          %v757 = vld [vmem:[#allocation10 + $0x68] sm:$0xff]
          %v758 = vld [vmem:[#allocation10 + $0x70] sm:$0xff]
          %v759 = vld [vmem:[#allocation10 + $0x78] sm:$0xff]
          %v760 = vld [vmem:[#allocation10 + $0x80] sm:$0xff]
          %v761 = vld [vmem:[#allocation10 + $0x88] sm:$0xff]
          %v762 = vld [vmem:[#allocation10 + $0x90] sm:$0xff]
          %v763 = vld [vmem:[#allocation10 + $0x98] sm:$0xff]
          %v764 = vld [vmem:[#allocation10 + $0xa0] sm:$0xff]
          %v765 = vld [vmem:[#allocation10 + $0xa8] sm:$0xff]
          %v766 = vld [vmem:[#allocation10 + $0xb0] sm:$0xff]
          %v767 = vld [vmem:[#allocation10 + $0xb8] sm:$0xff]
          %v768 = vld [vmem:[#allocation10 + $0xc0] sm:$0xff]
          %v769 = vld [vmem:[#allocation10 + $0xc8] sm:$0xff]
          %v770 = vld [vmem:[#allocation10 + $0xd0] sm:$0xff]
          %v771 = vld [vmem:[#allocation10 + $0xd8] sm:$0xff]
          %v772 = vld [vmem:[#allocation10 + $0xe0] sm:$0xff]
          %v773 = vld [vmem:[#allocation10 + $0xe8] sm:$0xff]
          %v774 = vld [vmem:[#allocation10 + $0xf0] sm:$0xff]
          %v775 = vld [vmem:[#allocation10 + $0xf8] sm:$0xff]
          %v776 = vld [vmem:[%s5] sm:$0x3]
          %v778 = vlaneseq
          %v779 = vshrl.u32 %v778, 7
          %v780 = vsub.s32 0, %v779
          %v781 = vrot.slane %v776, %v780
          %v782 = vlaneseq
          %v783 = vshrl.u32 %v782, 7
          %v784 = vsub.s32 1, %v783
          %v785 = vrot.slane %v776, %v784
          %v790 = vunpack.c.l.b16 %v742
          %v791 = vunpack.c.h.b16 %v742
          %v792 = vunpack.c.l.b16 %v743
          %v793 = vunpack.c.h.b16 %v743
          %v794 = vpack.c.b16 %v792, %v790
          %v795 = vpack.c.b16 %v793, %v791
          %v830 = vunpack.c.l.b16 %v744
          %v831 = vunpack.c.h.b16 %v744
          %v832 = vunpack.c.l.b16 %v745
          %v833 = vunpack.c.h.b16 %v745
          %v834 = vunpack.c.l.b16 %v746
          %v835 = vunpack.c.h.b16 %v746
          %v836 = vunpack.c.l.b16 %v747
          %v837 = vunpack.c.h.b16 %v747
          %v838 = vunpack.c.l.b16 %v748
          %v839 = vunpack.c.h.b16 %v748
          %v840 = vunpack.c.l.b16 %v749
          %v841 = vunpack.c.h.b16 %v749
          %v842 = vunpack.c.l.b16 %v750
          %v843 = vunpack.c.h.b16 %v750
          %v844 = vunpack.c.l.b16 %v751
          %v845 = vunpack.c.h.b16 %v751
          %v846 = vunpack.c.l.b16 %v752
          %v847 = vunpack.c.h.b16 %v752
          %v848 = vunpack.c.l.b16 %v753
          %v849 = vunpack.c.h.b16 %v753
          %v850 = vunpack.c.l.b16 %v754
          %v851 = vunpack.c.h.b16 %v754
          %v852 = vunpack.c.l.b16 %v755
          %v853 = vunpack.c.h.b16 %v755
          %v854 = vunpack.c.l.b16 %v756
          %v855 = vunpack.c.h.b16 %v756
          %v856 = vunpack.c.l.b16 %v757
          %v857 = vunpack.c.h.b16 %v757
          %v858 = vunpack.c.l.b16 %v758
          %v859 = vunpack.c.h.b16 %v758
          %v860 = vunpack.c.l.b16 %v759
          %v861 = vunpack.c.h.b16 %v759
          %v862 = vunpack.c.l.b16 %v760
          %v863 = vunpack.c.h.b16 %v760
          %v864 = vunpack.c.l.b16 %v761
          %v865 = vunpack.c.h.b16 %v761
          %v866 = vunpack.c.l.b16 %v762
          %v867 = vunpack.c.h.b16 %v762
          %v868 = vunpack.c.l.b16 %v763
          %v869 = vunpack.c.h.b16 %v763
          %v870 = vunpack.c.l.b16 %v764
          %v871 = vunpack.c.h.b16 %v764
          %v872 = vunpack.c.l.b16 %v765
          %v873 = vunpack.c.h.b16 %v765
          %v874 = vunpack.c.l.b16 %v766
          %v875 = vunpack.c.h.b16 %v766
          %v876 = vunpack.c.l.b16 %v767
          %v877 = vunpack.c.h.b16 %v767
          %v878 = vunpack.c.l.b16 %v768
          %v879 = vunpack.c.h.b16 %v768
          %v880 = vunpack.c.l.b16 %v769
          %v881 = vunpack.c.h.b16 %v769
          %v882 = vunpack.c.l.b16 %v770
          %v883 = vunpack.c.h.b16 %v770
          %v884 = vunpack.c.l.b16 %v771
          %v885 = vunpack.c.h.b16 %v771
          %v886 = vunpack.c.l.b16 %v772
          %v887 = vunpack.c.h.b16 %v772
          %v888 = vunpack.c.l.b16 %v773
          %v889 = vunpack.c.h.b16 %v773
          %v890 = vunpack.c.l.b16 %v774
          %v891 = vunpack.c.h.b16 %v774
          %v892 = vunpack.c.l.b16 %v775
          %v893 = vunpack.c.h.b16 %v775
          %v894 = vpack.c.b16 %v832, %v830
          %v895 = vpack.c.b16 %v833, %v831
          %v896 = vpack.c.b16 %v836, %v834
          %v897 = vpack.c.b16 %v837, %v835
          %v898 = vpack.c.b16 %v840, %v838
          %v899 = vpack.c.b16 %v841, %v839
          %v900 = vpack.c.b16 %v844, %v842
          %v901 = vpack.c.b16 %v845, %v843
          %v902 = vpack.c.b16 %v848, %v846
          %v903 = vpack.c.b16 %v849, %v847
          %v904 = vpack.c.b16 %v852, %v850
          %v905 = vpack.c.b16 %v853, %v851
          %v906 = vpack.c.b16 %v856, %v854
          %v907 = vpack.c.b16 %v857, %v855
          %v908 = vpack.c.b16 %v860, %v858
          %v909 = vpack.c.b16 %v861, %v859
          %v910 = vpack.c.b16 %v864, %v862
          %v911 = vpack.c.b16 %v865, %v863
          %v912 = vpack.c.b16 %v868, %v866
          %v913 = vpack.c.b16 %v869, %v867
          %v914 = vpack.c.b16 %v872, %v870
          %v915 = vpack.c.b16 %v873, %v871
          %v916 = vpack.c.b16 %v876, %v874
          %v917 = vpack.c.b16 %v877, %v875
          %v918 = vpack.c.b16 %v880, %v878
          %v919 = vpack.c.b16 %v881, %v879
          %v920 = vpack.c.b16 %v884, %v882
          %v921 = vpack.c.b16 %v885, %v883
          %v922 = vpack.c.b16 %v888, %v886
          %v923 = vpack.c.b16 %v889, %v887
          %v924 = vpack.c.b16 %v892, %v890
          %v925 = vpack.c.b16 %v893, %v891
          %958 = vmatprep.subr.bf16.mxu0 %v909
          %959 = vmatpush1.bf16.msra.mxu0 %v908
          %960 = vmatprep.subr.bf16.mxu0 %v907
          %961 = vmatpush1.bf16.msra.mxu0 %v906
          %962 = vmatprep.subr.bf16.mxu0 %v905
          %963 = vmatpush1.bf16.msra.mxu0 %v904
          %964 = vmatprep.subr.bf16.mxu0 %v903
          %965 = vmatpush1.bf16.msra.mxu0 %v902
          %966 = vmatprep.subr.bf16.mxu0 %v901
          %967 = vmatpush1.bf16.msra.mxu0 %v900
          %968 = vmatprep.subr.bf16.mxu0 %v899
          %969 = vmatpush1.bf16.msra.mxu0 %v898
          %970 = vmatprep.subr.bf16.mxu0 %v897
          %971 = vmatpush1.bf16.msra.mxu0 %v896
          %972 = vmatprep.subr.bf16.mxu0 %v895
          %973 = vmatpush1.bf16.msra.mxu0 %v894
          %974 = vmatprep.subr.bf16.mxu0 %v925
          %975 = vmatpush2.bf16.msra.mxu0 %v924
          %976 = vmatprep.subr.bf16.mxu0 %v923
          %977 = vmatpush2.bf16.msra.mxu0 %v922
          %978 = vmatprep.subr.bf16.mxu0 %v921
          %979 = vmatpush2.bf16.msra.mxu0 %v920
          %980 = vmatprep.subr.bf16.mxu0 %v919
          %981 = vmatpush2.bf16.msra.mxu0 %v918
          %982 = vmatprep.subr.bf16.mxu0 %v917
          %983 = vmatpush2.bf16.msra.mxu0 %v916
          %984 = vmatprep.subr.bf16.mxu0 %v915
          %985 = vmatpush2.bf16.msra.mxu0 %v914
          %986 = vmatprep.subr.bf16.mxu0 %v913
          %987 = vmatpush2.bf16.msra.mxu0 %v912
          %988 = vmatprep.subr.bf16.mxu0 %v911
          %989 = vmatpush2.bf16.msra.mxu0 %v910
          %990 = vmatprep.mubr.bf16.mxu0 %v795
          %991 = vmatmul.mubr.bf16.gmra.mxu0 %v794
          %v992 = vpop.f32.mrf.mxu0
          %v993 = vadd.f32 %v781, %v992
          %v994 = vpop.f32.mrf.mxu0
          %v995 = vadd.f32 %v785, %v994
          %v996 = vpop.f32.mrf.mxu0
          %v997 = vadd.f32 %v781, %v996
          %v998 = vpop.f32.mrf.mxu0
          %v999 = vadd.f32 %v785, %v998
          %1000 = vdwg.mxu0
          %v1001 = vld [vmem:[#allocation12] sm:$0xff]
          %v1002 = vld [vmem:[#allocation12 + $0x8] sm:$0xff]
          %v1003 = vld [vmem:[#allocation12 + $0x10] sm:$0xff]
          %v1004 = vld [vmem:[#allocation12 + $0x18] sm:$0xff]
          %v1005 = vld [vmem:[#allocation12 + $0x20] sm:$0xff]
          %v1006 = vld [vmem:[#allocation12 + $0x28] sm:$0xff]
          %v1007 = vld [vmem:[#allocation12 + $0x30] sm:$0xff]
          %v1008 = vld [vmem:[#allocation12 + $0x38] sm:$0xff]
          %v1009 = vld [vmem:[#allocation12 + $0x40] sm:$0xff]
          %v1010 = vld [vmem:[#allocation12 + $0x48] sm:$0xff]
          %v1011 = vld [vmem:[#allocation12 + $0x50] sm:$0xff]
          %v1012 = vld [vmem:[#allocation12 + $0x58] sm:$0xff]
          %v1013 = vld [vmem:[#allocation12 + $0x60] sm:$0xff]
          %v1014 = vld [vmem:[#allocation12 + $0x68] sm:$0xff]
          %v1015 = vld [vmem:[#allocation12 + $0x70] sm:$0xff]
          %v1016 = vld [vmem:[#allocation12 + $0x78] sm:$0xff]
          %v1017 = vld [vmem:[#allocation12 + $0x80] sm:$0xff]
          %v1018 = vld [vmem:[#allocation12 + $0x88] sm:$0xff]
          %v1019 = vld [vmem:[#allocation12 + $0x90] sm:$0xff]
          %v1020 = vld [vmem:[#allocation12 + $0x98] sm:$0xff]
          %v1021 = vld [vmem:[#allocation12 + $0xa0] sm:$0xff]
          %v1022 = vld [vmem:[#allocation12 + $0xa8] sm:$0xff]
          %v1023 = vld [vmem:[#allocation12 + $0xb0] sm:$0xff]
          %v1024 = vld [vmem:[#allocation12 + $0xb8] sm:$0xff]
          %v1025 = vld [vmem:[#allocation12 + $0xc0] sm:$0xff]
          %v1026 = vld [vmem:[#allocation12 + $0xc8] sm:$0xff]
          %v1027 = vld [vmem:[#allocation12 + $0xd0] sm:$0xff]
          %v1028 = vld [vmem:[#allocation12 + $0xd8] sm:$0xff]
          %v1029 = vld [vmem:[#allocation12 + $0xe0] sm:$0xff]
          %v1030 = vld [vmem:[#allocation12 + $0xe8] sm:$0xff]
          %v1031 = vld [vmem:[#allocation12 + $0xf0] sm:$0xff]
          %v1032 = vld [vmem:[#allocation12 + $0xf8] sm:$0xff]
          %v1033 = vld [vmem:[%s7] sm:$0x3]
          %v1035 = vlaneseq
          %v1036 = vshrl.u32 %v1035, 7
          %v1037 = vsub.s32 0, %v1036
          %v1038 = vrot.slane %v1033, %v1037
          %v1039 = vlaneseq
          %v1040 = vshrl.u32 %v1039, 7
          %v1041 = vsub.s32 1, %v1040
          %v1042 = vrot.slane %v1033, %v1041
          %v1077 = vunpack.c.l.b16 %v1001
          %v1078 = vunpack.c.h.b16 %v1001
          %v1079 = vunpack.c.l.b16 %v1002
          %v1080 = vunpack.c.h.b16 %v1002
          %v1081 = vunpack.c.l.b16 %v1003
          %v1082 = vunpack.c.h.b16 %v1003
          %v1083 = vunpack.c.l.b16 %v1004
          %v1084 = vunpack.c.h.b16 %v1004
          %v1085 = vunpack.c.l.b16 %v1005
          %v1086 = vunpack.c.h.b16 %v1005
          %v1087 = vunpack.c.l.b16 %v1006
          %v1088 = vunpack.c.h.b16 %v1006
          %v1089 = vunpack.c.l.b16 %v1007
          %v1090 = vunpack.c.h.b16 %v1007
          %v1091 = vunpack.c.l.b16 %v1008
          %v1092 = vunpack.c.h.b16 %v1008
          %v1093 = vunpack.c.l.b16 %v1009
          %v1094 = vunpack.c.h.b16 %v1009
          %v1095 = vunpack.c.l.b16 %v1010
          %v1096 = vunpack.c.h.b16 %v1010
          %v1097 = vunpack.c.l.b16 %v1011
          %v1098 = vunpack.c.h.b16 %v1011
          %v1099 = vunpack.c.l.b16 %v1012
          %v1100 = vunpack.c.h.b16 %v1012
          %v1101 = vunpack.c.l.b16 %v1013
          %v1102 = vunpack.c.h.b16 %v1013
          %v1103 = vunpack.c.l.b16 %v1014
          %v1104 = vunpack.c.h.b16 %v1014
          %v1105 = vunpack.c.l.b16 %v1015
          %v1106 = vunpack.c.h.b16 %v1015
          %v1107 = vunpack.c.l.b16 %v1016
          %v1108 = vunpack.c.h.b16 %v1016
          %v1109 = vunpack.c.l.b16 %v1017
          %v1110 = vunpack.c.h.b16 %v1017
          %v1111 = vunpack.c.l.b16 %v1018
          %v1112 = vunpack.c.h.b16 %v1018
          %v1113 = vunpack.c.l.b16 %v1019
          %v1114 = vunpack.c.h.b16 %v1019
          %v1115 = vunpack.c.l.b16 %v1020
          %v1116 = vunpack.c.h.b16 %v1020
          %v1117 = vunpack.c.l.b16 %v1021
          %v1118 = vunpack.c.h.b16 %v1021
          %v1119 = vunpack.c.l.b16 %v1022
          %v1120 = vunpack.c.h.b16 %v1022
          %v1121 = vunpack.c.l.b16 %v1023
          %v1122 = vunpack.c.h.b16 %v1023
          %v1123 = vunpack.c.l.b16 %v1024
          %v1124 = vunpack.c.h.b16 %v1024
          %v1125 = vunpack.c.l.b16 %v1025
          %v1126 = vunpack.c.h.b16 %v1025
          %v1127 = vunpack.c.l.b16 %v1026
          %v1128 = vunpack.c.h.b16 %v1026
          %v1129 = vunpack.c.l.b16 %v1027
          %v1130 = vunpack.c.h.b16 %v1027
          %v1131 = vunpack.c.l.b16 %v1028
          %v1132 = vunpack.c.h.b16 %v1028
          %v1133 = vunpack.c.l.b16 %v1029
          %v1134 = vunpack.c.h.b16 %v1029
          %v1135 = vunpack.c.l.b16 %v1030
          %v1136 = vunpack.c.h.b16 %v1030
          %v1137 = vunpack.c.l.b16 %v1031
          %v1138 = vunpack.c.h.b16 %v1031
          %v1139 = vunpack.c.l.b16 %v1032
          %v1140 = vunpack.c.h.b16 %v1032
          %v1141 = vpack.c.b16 %v1079, %v1077
          %v1142 = vpack.c.b16 %v1080, %v1078
          %v1143 = vpack.c.b16 %v1083, %v1081
          %v1144 = vpack.c.b16 %v1084, %v1082
          %v1145 = vpack.c.b16 %v1087, %v1085
          %v1146 = vpack.c.b16 %v1088, %v1086
          %v1147 = vpack.c.b16 %v1091, %v1089
          %v1148 = vpack.c.b16 %v1092, %v1090
          %v1149 = vpack.c.b16 %v1095, %v1093
          %v1150 = vpack.c.b16 %v1096, %v1094
          %v1151 = vpack.c.b16 %v1099, %v1097
          %v1152 = vpack.c.b16 %v1100, %v1098
          %v1153 = vpack.c.b16 %v1103, %v1101
          %v1154 = vpack.c.b16 %v1104, %v1102
          %v1155 = vpack.c.b16 %v1107, %v1105
          %v1156 = vpack.c.b16 %v1108, %v1106
          %v1157 = vpack.c.b16 %v1111, %v1109
          %v1158 = vpack.c.b16 %v1112, %v1110
          %v1159 = vpack.c.b16 %v1115, %v1113
          %v1160 = vpack.c.b16 %v1116, %v1114
          %v1161 = vpack.c.b16 %v1119, %v1117
          %v1162 = vpack.c.b16 %v1120, %v1118
          %v1163 = vpack.c.b16 %v1123, %v1121
          %v1164 = vpack.c.b16 %v1124, %v1122
          %v1165 = vpack.c.b16 %v1127, %v1125
          %v1166 = vpack.c.b16 %v1128, %v1126
          %v1167 = vpack.c.b16 %v1131, %v1129
          %v1168 = vpack.c.b16 %v1132, %v1130
          %v1169 = vpack.c.b16 %v1135, %v1133
          %v1170 = vpack.c.b16 %v1136, %v1134
          %v1171 = vpack.c.b16 %v1139, %v1137
          %v1172 = vpack.c.b16 %v1140, %v1138
          %1205 = vmatprep.subr.bf16.mxu0 %v1156
          %1206 = vmatpush1.bf16.msra.mxu0 %v1155
          %1207 = vmatprep.subr.bf16.mxu0 %v1154
          %1208 = vmatpush1.bf16.msra.mxu0 %v1153
          %1209 = vmatprep.subr.bf16.mxu0 %v1152
          %1210 = vmatpush1.bf16.msra.mxu0 %v1151
          %1211 = vmatprep.subr.bf16.mxu0 %v1150
          %1212 = vmatpush1.bf16.msra.mxu0 %v1149
          %1213 = vmatprep.subr.bf16.mxu0 %v1148
          %1214 = vmatpush1.bf16.msra.mxu0 %v1147
          %1215 = vmatprep.subr.bf16.mxu0 %v1146
          %1216 = vmatpush1.bf16.msra.mxu0 %v1145
          %1217 = vmatprep.subr.bf16.mxu0 %v1144
          %1218 = vmatpush1.bf16.msra.mxu0 %v1143
          %1219 = vmatprep.subr.bf16.mxu0 %v1142
          %1220 = vmatpush1.bf16.msra.mxu0 %v1141
          %1221 = vmatprep.subr.bf16.mxu0 %v1172
          %1222 = vmatpush2.bf16.msra.mxu0 %v1171
          %1223 = vmatprep.subr.bf16.mxu0 %v1170
          %1224 = vmatpush2.bf16.msra.mxu0 %v1169
          %1225 = vmatprep.subr.bf16.mxu0 %v1168
          %1226 = vmatpush2.bf16.msra.mxu0 %v1167
          %1227 = vmatprep.subr.bf16.mxu0 %v1166
          %1228 = vmatpush2.bf16.msra.mxu0 %v1165
          %1229 = vmatprep.subr.bf16.mxu0 %v1164
          %1230 = vmatpush2.bf16.msra.mxu0 %v1163
          %1231 = vmatprep.subr.bf16.mxu0 %v1162
          %1232 = vmatpush2.bf16.msra.mxu0 %v1161
          %1233 = vmatprep.subr.bf16.mxu0 %v1160
          %1234 = vmatpush2.bf16.msra.mxu0 %v1159
          %1235 = vmatprep.subr.bf16.mxu0 %v1158
          %1236 = vmatpush2.bf16.msra.mxu0 %v1157
          %1237 = vmatprep.mubr.bf16.mxu0 %v795
          %1238 = vmatmul.mubr.bf16.gmra.mxu0 %v794
          %v1239 = vpop.f32.mrf.mxu0
          %v1240 = vadd.f32 %v1038, %v1239
          %v1241 = vpop.f32.mrf.mxu0
          %v1242 = vadd.f32 %v1042, %v1241
          %v1243 = vpop.f32.mrf.mxu0
          %v1244 = vadd.f32 %v1038, %v1243
          %v1245 = vpop.f32.mrf.mxu0
          %v1246 = vadd.f32 %v1042, %v1245
          %1247 = vdwg.mxu0
          %v1248 = vcombine.high %v993, 0.0
          %v1250 = vunpack.c.l.s4 1983009808
          %v1251 = vunpack.c.0.s8 %v1250
          %v1252 = vlaneseq
          %v1253 = vshrl.u32 %v1252, 7
          %v1254 = vsub.s32 %v1251, %v1253
          %v1255 = vrot.slane %v993, %v1254
          %v1257 = vunpack.c.l.s4 1983009808
          %v1258 = vunpack.c.0.s8 %v1257
          %v1259 = vlaneseq
          %v1260 = vshrl.u32 %v1259, 7
          %v1261 = vsub.s32 %v1258, %v1260
          %v1262 = vrot.slane %v1248, %v1261
          %v1263 = vcombine.high %v995, 0.0
          %v1265 = vunpack.c.l.s4 1983009808
          %v1266 = vunpack.c.0.s8 %v1265
          %v1267 = vlaneseq
          %v1268 = vshrl.u32 %v1267, 7
          %v1269 = vsub.s32 %v1266, %v1268
          %v1270 = vrot.slane %v995, %v1269
          %v1272 = vunpack.c.l.s4 1983009808
          %v1273 = vunpack.c.0.s8 %v1272
          %v1274 = vlaneseq
          %v1275 = vshrl.u32 %v1274, 7
          %v1276 = vsub.s32 %v1273, %v1275
          %v1277 = vrot.slane %v1263, %v1276
          %v1278 = vcombine.low %v1255, %v1270
          %v1279 = vcombine.high %v1255, %v1270
          %v1281 = vunpack.c.l.s4 1934713408
          %v1282 = vunpack.c.0.s8 %v1281
          %v1283 = vlaneseq
          %v1284 = vshrl.u32 %v1283, 7
          %v1285 = vsub.s32 %v1282, %v1284
          %v1286 = vrot.slane %v1278, %v1285
          %v1288 = vunpack.c.l.s4 1934713408
          %v1289 = vunpack.c.0.s8 %v1288
          %v1290 = vlaneseq
          %v1291 = vshrl.u32 %v1290, 7
          %v1292 = vsub.s32 %v1289, %v1291
          %v1293 = vrot.slane %v1279, %v1292
          %v1294 = vcombine.low %v1262, %v1277
          %v1295 = vcombine.high %v1262, %v1277
          %v1297 = vunpack.c.l.s4 1934713408
          %v1298 = vunpack.c.0.s8 %v1297
          %v1299 = vlaneseq
          %v1300 = vshrl.u32 %v1299, 7
          %v1301 = vsub.s32 %v1298, %v1300
          %v1302 = vrot.slane %v1294, %v1301
          %v1304 = vunpack.c.l.s4 1934713408
          %v1305 = vunpack.c.0.s8 %v1304
          %v1306 = vlaneseq
          %v1307 = vshrl.u32 %v1306, 7
          %v1308 = vsub.s32 %v1305, %v1307
          %v1309 = vrot.slane %v1295, %v1308
          %v1310 = vcombine.high %v1286, 0.0
          %v1311 = vcombine.high %v1293, 0.0
          %v1312 = vcombine.high %v1302, 0.0
          %v1313 = vcombine.high %v1309, 0.0
          %v1314 = vcombine.high %v997, 0.0
          %v1316 = vunpack.c.l.s4 1983009808
          %v1317 = vunpack.c.0.s8 %v1316
          %v1318 = vlaneseq
          %v1319 = vshrl.u32 %v1318, 7
          %v1320 = vsub.s32 %v1317, %v1319
          %v1321 = vrot.slane %v997, %v1320
          %v1323 = vunpack.c.l.s4 1983009808
          %v1324 = vunpack.c.0.s8 %v1323
          %v1325 = vlaneseq
          %v1326 = vshrl.u32 %v1325, 7
          %v1327 = vsub.s32 %v1324, %v1326
          %v1328 = vrot.slane %v1314, %v1327
          %v1329 = vcombine.high %v999, 0.0
          %v1331 = vunpack.c.l.s4 1983009808
          %v1332 = vunpack.c.0.s8 %v1331
          %v1333 = vlaneseq
          %v1334 = vshrl.u32 %v1333, 7
          %v1335 = vsub.s32 %v1332, %v1334
          %v1336 = vrot.slane %v999, %v1335
          %v1338 = vunpack.c.l.s4 1983009808
          %v1339 = vunpack.c.0.s8 %v1338
          %v1340 = vlaneseq
          %v1341 = vshrl.u32 %v1340, 7
          %v1342 = vsub.s32 %v1339, %v1341
          %v1343 = vrot.slane %v1329, %v1342
          %v1344 = vcombine.low %v1321, %v1336
          %v1345 = vcombine.high %v1321, %v1336
          %v1347 = vunpack.c.l.s4 1934713408
          %v1348 = vunpack.c.0.s8 %v1347
          %v1349 = vlaneseq
          %v1350 = vshrl.u32 %v1349, 7
          %v1351 = vsub.s32 %v1348, %v1350
          %v1352 = vrot.slane %v1344, %v1351
          %v1354 = vunpack.c.l.s4 1934713408
          %v1355 = vunpack.c.0.s8 %v1354
          %v1356 = vlaneseq
          %v1357 = vshrl.u32 %v1356, 7
          %v1358 = vsub.s32 %v1355, %v1357
          %v1359 = vrot.slane %v1345, %v1358
          %v1360 = vcombine.low %v1328, %v1343
          %v1361 = vcombine.high %v1328, %v1343
          %v1363 = vunpack.c.l.s4 1934713408
          %v1364 = vunpack.c.0.s8 %v1363
          %v1365 = vlaneseq
          %v1366 = vshrl.u32 %v1365, 7
          %v1367 = vsub.s32 %v1364, %v1366
          %v1368 = vrot.slane %v1360, %v1367
          %v1370 = vunpack.c.l.s4 1934713408
          %v1371 = vunpack.c.0.s8 %v1370
          %v1372 = vlaneseq
          %v1373 = vshrl.u32 %v1372, 7
          %v1374 = vsub.s32 %v1371, %v1373
          %v1375 = vrot.slane %v1361, %v1374
          %v1376 = vcombine.high %v1352, 0.0
          %v1377 = vcombine.high %v1359, 0.0
          %v1378 = vcombine.high %v1368, 0.0
          %v1379 = vcombine.high %v1375, 0.0
          %v1380 = vcombine.low %v1286, %v1293
          %v1382 = vunpack.c.l.s4 1983009808
          %v1383 = vunpack.c.0.s8 %v1382
          %v1384 = vlaneseq
          %v1385 = vshrl.u32 %v1384, 7
          %v1386 = vsub.s32 %v1383, %v1385
          %v1387 = vrot.slane %v1380, %v1386
          %v1388 = vcombine.low %v1310, %v1311
          %v1390 = vunpack.c.l.s4 1983009808
          %v1391 = vunpack.c.0.s8 %v1390
          %v1392 = vlaneseq
          %v1393 = vshrl.u32 %v1392, 7
          %v1394 = vsub.s32 %v1391, %v1393
          %v1395 = vrot.slane %v1388, %v1394
          %v1396 = vcombine.low %v1302, %v1309
          %v1398 = vunpack.c.l.s4 1983009808
          %v1399 = vunpack.c.0.s8 %v1398
          %v1400 = vlaneseq
          %v1401 = vshrl.u32 %v1400, 7
          %v1402 = vsub.s32 %v1399, %v1401
          %v1403 = vrot.slane %v1396, %v1402
          %v1404 = vcombine.low %v1312, %v1313
          %v1406 = vunpack.c.l.s4 1983009808
          %v1407 = vunpack.c.0.s8 %v1406
          %v1408 = vlaneseq
          %v1409 = vshrl.u32 %v1408, 7
          %v1410 = vsub.s32 %v1407, %v1409
          %v1411 = vrot.slane %v1404, %v1410
          %v1412 = vcombine.low %v1387, %v1395
          %v1414 = vunpack.c.l.s4 1934713408
          %v1415 = vunpack.c.0.s8 %v1414
          %v1416 = vlaneseq
          %v1417 = vshrl.u32 %v1416, 7
          %v1418 = vsub.s32 %v1415, %v1417
          %v1419 = vrot.slane %v1412, %v1418
          %v1420 = vcombine.low %v1403, %v1411
          %v1422 = vunpack.c.l.s4 1934713408
          %v1423 = vunpack.c.0.s8 %v1422
          %v1424 = vlaneseq
          %v1425 = vshrl.u32 %v1424, 7
          %v1426 = vsub.s32 %v1423, %v1425
          %v1427 = vrot.slane %v1420, %v1426
          %v1428 = vcombine.low %v1419, %v1427
          %v1429 = vcombine.high %v1419, %v1427
          %v1430 = vcombine.low %v1352, %v1359
          %v1432 = vunpack.c.l.s4 1983009808
          %v1433 = vunpack.c.0.s8 %v1432
          %v1434 = vlaneseq
          %v1435 = vshrl.u32 %v1434, 7
          %v1436 = vsub.s32 %v1433, %v1435
          %v1437 = vrot.slane %v1430, %v1436
          %v1438 = vcombine.low %v1376, %v1377
          %v1440 = vunpack.c.l.s4 1983009808
          %v1441 = vunpack.c.0.s8 %v1440
          %v1442 = vlaneseq
          %v1443 = vshrl.u32 %v1442, 7
          %v1444 = vsub.s32 %v1441, %v1443
          %v1445 = vrot.slane %v1438, %v1444
          %v1446 = vcombine.low %v1368, %v1375
          %v1448 = vunpack.c.l.s4 1983009808
          %v1449 = vunpack.c.0.s8 %v1448
          %v1450 = vlaneseq
          %v1451 = vshrl.u32 %v1450, 7
          %v1452 = vsub.s32 %v1449, %v1451
          %v1453 = vrot.slane %v1446, %v1452
          %v1454 = vcombine.low %v1378, %v1379
          %v1456 = vunpack.c.l.s4 1983009808
          %v1457 = vunpack.c.0.s8 %v1456
          %v1458 = vlaneseq
          %v1459 = vshrl.u32 %v1458, 7
          %v1460 = vsub.s32 %v1457, %v1459
          %v1461 = vrot.slane %v1454, %v1460
          %v1462 = vcombine.low %v1437, %v1445
          %v1464 = vunpack.c.l.s4 1934713408
          %v1465 = vunpack.c.0.s8 %v1464
          %v1466 = vlaneseq
          %v1467 = vshrl.u32 %v1466, 7
          %v1468 = vsub.s32 %v1465, %v1467
          %v1469 = vrot.slane %v1462, %v1468
          %v1470 = vcombine.low %v1453, %v1461
          %v1472 = vunpack.c.l.s4 1934713408
          %v1473 = vunpack.c.0.s8 %v1472
          %v1474 = vlaneseq
          %v1475 = vshrl.u32 %v1474, 7
          %v1476 = vsub.s32 %v1473, %v1475
          %v1477 = vrot.slane %v1470, %v1476
          %v1478 = vcombine.low %v1469, %v1477
          %v1479 = vcombine.high %v1469, %v1477
          %v1480 = vpack.c.bf16 %v1478, %v1428
          %v1481 = vpack.c.bf16 %v1479, %v1429
          %v1484 = vunpack.c.l.b16 %v1480
          %v1485 = vunpack.c.h.b16 %v1480
          %v1486 = vunpack.c.l.b16 %v1481
          %v1487 = vunpack.c.h.b16 %v1481
          %v1488 = vpack.c.b16 %v1484, %v1484
          %v1489 = vpack.c.b16 %v1485, %v1485
          %v1490 = vpack.c.b16 %v1486, %v1486
          %v1491 = vpack.c.b16 %v1487, %v1487
          %1496 = vst [vmem:[#allocation2] sm:$0xf] %v1488
          %1497 = vst [vmem:[#allocation2 + $0x4] sm:$0xf] %v1489
          %1498 = vst [vmem:[#allocation2 + $0x8] sm:$0xf] %v1490
          %1499 = vst [vmem:[#allocation2 + $0xc] sm:$0xf] %v1491
          %v1500 = vcombine.high %v1240, 0.0
          %v1502 = vunpack.c.l.s4 1983009808
          %v1503 = vunpack.c.0.s8 %v1502
          %v1504 = vlaneseq
          %v1505 = vshrl.u32 %v1504, 7
          %v1506 = vsub.s32 %v1503, %v1505
          %v1507 = vrot.slane %v1240, %v1506
          %v1509 = vunpack.c.l.s4 1983009808
          %v1510 = vunpack.c.0.s8 %v1509
          %v1511 = vlaneseq
          %v1512 = vshrl.u32 %v1511, 7
          %v1513 = vsub.s32 %v1510, %v1512
          %v1514 = vrot.slane %v1500, %v1513
          %v1515 = vcombine.high %v1242, 0.0
          %v1517 = vunpack.c.l.s4 1983009808
          %v1518 = vunpack.c.0.s8 %v1517
          %v1519 = vlaneseq
          %v1520 = vshrl.u32 %v1519, 7
          %v1521 = vsub.s32 %v1518, %v1520
          %v1522 = vrot.slane %v1242, %v1521
          %v1524 = vunpack.c.l.s4 1983009808
          %v1525 = vunpack.c.0.s8 %v1524
          %v1526 = vlaneseq
          %v1527 = vshrl.u32 %v1526, 7
          %v1528 = vsub.s32 %v1525, %v1527
          %v1529 = vrot.slane %v1515, %v1528
          %v1530 = vcombine.low %v1507, %v1522
          %v1531 = vcombine.high %v1507, %v1522
          %v1533 = vunpack.c.l.s4 1934713408
          %v1534 = vunpack.c.0.s8 %v1533
          %v1535 = vlaneseq
          %v1536 = vshrl.u32 %v1535, 7
          %v1537 = vsub.s32 %v1534, %v1536
          %v1538 = vrot.slane %v1530, %v1537
          %v1540 = vunpack.c.l.s4 1934713408
          %v1541 = vunpack.c.0.s8 %v1540
          %v1542 = vlaneseq
          %v1543 = vshrl.u32 %v1542, 7
          %v1544 = vsub.s32 %v1541, %v1543
          %v1545 = vrot.slane %v1531, %v1544
          %v1546 = vcombine.low %v1514, %v1529
          %v1547 = vcombine.high %v1514, %v1529
          %v1549 = vunpack.c.l.s4 1934713408
          %v1550 = vunpack.c.0.s8 %v1549
          %v1551 = vlaneseq
          %v1552 = vshrl.u32 %v1551, 7
          %v1553 = vsub.s32 %v1550, %v1552
          %v1554 = vrot.slane %v1546, %v1553
          %v1556 = vunpack.c.l.s4 1934713408
          %v1557 = vunpack.c.0.s8 %v1556
          %v1558 = vlaneseq
          %v1559 = vshrl.u32 %v1558, 7
          %v1560 = vsub.s32 %v1557, %v1559
          %v1561 = vrot.slane %v1547, %v1560
          %v1562 = vcombine.high %v1538, 0.0
          %v1563 = vcombine.high %v1545, 0.0
          %v1564 = vcombine.high %v1554, 0.0
          %v1565 = vcombine.high %v1561, 0.0
          %v1566 = vcombine.high %v1244, 0.0
          %v1568 = vunpack.c.l.s4 1983009808
          %v1569 = vunpack.c.0.s8 %v1568
          %v1570 = vlaneseq
          %v1571 = vshrl.u32 %v1570, 7
          %v1572 = vsub.s32 %v1569, %v1571
          %v1573 = vrot.slane %v1244, %v1572
          %v1575 = vunpack.c.l.s4 1983009808
          %v1576 = vunpack.c.0.s8 %v1575
          %v1577 = vlaneseq
          %v1578 = vshrl.u32 %v1577, 7
          %v1579 = vsub.s32 %v1576, %v1578
          %v1580 = vrot.slane %v1566, %v1579
          %v1581 = vcombine.high %v1246, 0.0
          %v1583 = vunpack.c.l.s4 1983009808
          %v1584 = vunpack.c.0.s8 %v1583
          %v1585 = vlaneseq
          %v1586 = vshrl.u32 %v1585, 7
          %v1587 = vsub.s32 %v1584, %v1586
          %v1588 = vrot.slane %v1246, %v1587
          %v1590 = vunpack.c.l.s4 1983009808
          %v1591 = vunpack.c.0.s8 %v1590
          %v1592 = vlaneseq
          %v1593 = vshrl.u32 %v1592, 7
          %v1594 = vsub.s32 %v1591, %v1593
          %v1595 = vrot.slane %v1581, %v1594
          %v1596 = vcombine.low %v1573, %v1588
          %v1597 = vcombine.high %v1573, %v1588
          %v1599 = vunpack.c.l.s4 1934713408
          %v1600 = vunpack.c.0.s8 %v1599
          %v1601 = vlaneseq
          %v1602 = vshrl.u32 %v1601, 7
          %v1603 = vsub.s32 %v1600, %v1602
          %v1604 = vrot.slane %v1596, %v1603
          %v1606 = vunpack.c.l.s4 1934713408
          %v1607 = vunpack.c.0.s8 %v1606
          %v1608 = vlaneseq
          %v1609 = vshrl.u32 %v1608, 7
          %v1610 = vsub.s32 %v1607, %v1609
          %v1611 = vrot.slane %v1597, %v1610
          %v1612 = vcombine.low %v1580, %v1595
          %v1613 = vcombine.high %v1580, %v1595
          %v1615 = vunpack.c.l.s4 1934713408
          %v1616 = vunpack.c.0.s8 %v1615
          %v1617 = vlaneseq
          %v1618 = vshrl.u32 %v1617, 7
          %v1619 = vsub.s32 %v1616, %v1618
          %v1620 = vrot.slane %v1612, %v1619
          %v1622 = vunpack.c.l.s4 1934713408
          %v1623 = vunpack.c.0.s8 %v1622
          %v1624 = vlaneseq
          %v1625 = vshrl.u32 %v1624, 7
          %v1626 = vsub.s32 %v1623, %v1625
          %v1627 = vrot.slane %v1613, %v1626
          %v1628 = vcombine.high %v1604, 0.0
          %v1629 = vcombine.high %v1611, 0.0
          %v1630 = vcombine.high %v1620, 0.0
          %v1631 = vcombine.high %v1627, 0.0
          %v1632 = vcombine.low %v1538, %v1545
          %v1634 = vunpack.c.l.s4 1983009808
          %v1635 = vunpack.c.0.s8 %v1634
          %v1636 = vlaneseq
          %v1637 = vshrl.u32 %v1636, 7
          %v1638 = vsub.s32 %v1635, %v1637
          %v1639 = vrot.slane %v1632, %v1638
          %v1640 = vcombine.low %v1562, %v1563
          %v1642 = vunpack.c.l.s4 1983009808
          %v1643 = vunpack.c.0.s8 %v1642
          %v1644 = vlaneseq
          %v1645 = vshrl.u32 %v1644, 7
          %v1646 = vsub.s32 %v1643, %v1645
          %v1647 = vrot.slane %v1640, %v1646
          %v1648 = vcombine.low %v1554, %v1561
          %v1650 = vunpack.c.l.s4 1983009808
          %v1651 = vunpack.c.0.s8 %v1650
          %v1652 = vlaneseq
          %v1653 = vshrl.u32 %v1652, 7
          %v1654 = vsub.s32 %v1651, %v1653
          %v1655 = vrot.slane %v1648, %v1654
          %v1656 = vcombine.low %v1564, %v1565
          %v1658 = vunpack.c.l.s4 1983009808
          %v1659 = vunpack.c.0.s8 %v1658
          %v1660 = vlaneseq
          %v1661 = vshrl.u32 %v1660, 7
          %v1662 = vsub.s32 %v1659, %v1661
          %v1663 = vrot.slane %v1656, %v1662
          %v1664 = vcombine.low %v1639, %v1647
          %v1666 = vunpack.c.l.s4 1934713408
          %v1667 = vunpack.c.0.s8 %v1666
          %v1668 = vlaneseq
          %v1669 = vshrl.u32 %v1668, 7
          %v1670 = vsub.s32 %v1667, %v1669
          %v1671 = vrot.slane %v1664, %v1670
          %v1672 = vcombine.low %v1655, %v1663
          %v1674 = vunpack.c.l.s4 1934713408
          %v1675 = vunpack.c.0.s8 %v1674
          %v1676 = vlaneseq
          %v1677 = vshrl.u32 %v1676, 7
          %v1678 = vsub.s32 %v1675, %v1677
          %v1679 = vrot.slane %v1672, %v1678
          %v1680 = vcombine.low %v1671, %v1679
          %v1681 = vcombine.high %v1671, %v1679
          %v1682 = vcombine.low %v1604, %v1611
          %v1684 = vunpack.c.l.s4 1983009808
          %v1685 = vunpack.c.0.s8 %v1684
          %v1686 = vlaneseq
          %v1687 = vshrl.u32 %v1686, 7
          %v1688 = vsub.s32 %v1685, %v1687
          %v1689 = vrot.slane %v1682, %v1688
          %v1690 = vcombine.low %v1628, %v1629
          %v1692 = vunpack.c.l.s4 1983009808
          %v1693 = vunpack.c.0.s8 %v1692
          %v1694 = vlaneseq
          %v1695 = vshrl.u32 %v1694, 7
          %v1696 = vsub.s32 %v1693, %v1695
          %v1697 = vrot.slane %v1690, %v1696
          %v1698 = vcombine.low %v1620, %v1627
          %v1700 = vunpack.c.l.s4 1983009808
          %v1701 = vunpack.c.0.s8 %v1700
          %v1702 = vlaneseq
          %v1703 = vshrl.u32 %v1702, 7
          %v1704 = vsub.s32 %v1701, %v1703
          %v1705 = vrot.slane %v1698, %v1704
          %v1706 = vcombine.low %v1630, %v1631
          %v1708 = vunpack.c.l.s4 1983009808
          %v1709 = vunpack.c.0.s8 %v1708
          %v1710 = vlaneseq
          %v1711 = vshrl.u32 %v1710, 7
          %v1712 = vsub.s32 %v1709, %v1711
          %v1713 = vrot.slane %v1706, %v1712
          %v1714 = vcombine.low %v1689, %v1697
          %v1716 = vunpack.c.l.s4 1934713408
          %v1717 = vunpack.c.0.s8 %v1716
          %v1718 = vlaneseq
          %v1719 = vshrl.u32 %v1718, 7
          %v1720 = vsub.s32 %v1717, %v1719
          %v1721 = vrot.slane %v1714, %v1720
          %v1722 = vcombine.low %v1705, %v1713
          %v1724 = vunpack.c.l.s4 1934713408
          %v1725 = vunpack.c.0.s8 %v1724
          %v1726 = vlaneseq
          %v1727 = vshrl.u32 %v1726, 7
          %v1728 = vsub.s32 %v1725, %v1727
          %v1729 = vrot.slane %v1722, %v1728
          %v1730 = vcombine.low %v1721, %v1729
          %v1731 = vcombine.high %v1721, %v1729
          %v1732 = vpack.c.bf16 %v1730, %v1680
          %v1733 = vpack.c.bf16 %v1731, %v1681
          %v1736 = vunpack.c.l.b16 %v1732
          %v1737 = vunpack.c.h.b16 %v1732
          %v1738 = vunpack.c.l.b16 %v1733
          %v1739 = vunpack.c.h.b16 %v1733
          %v1740 = vpack.c.b16 %v1736, %v1736
          %v1741 = vpack.c.b16 %v1737, %v1737
          %v1742 = vpack.c.b16 %v1738, %v1738
          %v1743 = vpack.c.b16 %v1739, %v1739
          %1748 = vst [vmem:[#allocation3] sm:$0xf] %v1740
          %1749 = vst [vmem:[#allocation3 + $0x4] sm:$0xf] %v1741
          %1750 = vst [vmem:[#allocation3 + $0x8] sm:$0xf] %v1742
          %1751 = vst [vmem:[#allocation3 + $0xc] sm:$0xf] %v1743
        $region128: #{tpu_custom_call.1} parent=91 // pred_fallthru
          _
        %v1752 = vld [vmem:[%s655] sm:$0xff]
        %v1753 = vld [vmem:[%s655 + $0x8] sm:$0xff]
        %v1754 = vpack.c.bf16 %v1752, %v1752
        %v1755 = vpack.c.bf16 %v1753, %v1753
        %v1756 = vld [vmem:[#allocation9] sm:$0xff]
        %v1757 = vld [vmem:[#allocation9 + $0x8] sm:$0xff]
        %v1758 = vld [vmem:[#allocation9 + $0x10] sm:$0xff]
        %v1759 = vld [vmem:[#allocation9 + $0x18] sm:$0xff]
        %v1760 = vld [vmem:[#allocation9 + $0x20] sm:$0xff]
        %v1761 = vld [vmem:[#allocation9 + $0x28] sm:$0xff]
        %v1762 = vld [vmem:[#allocation9 + $0x30] sm:$0xff]
        %v1763 = vld [vmem:[#allocation9 + $0x38] sm:$0xff]
        %v1764 = vld [vmem:[#allocation9 + $0x40] sm:$0xff]
        %v1765 = vld [vmem:[#allocation9 + $0x48] sm:$0xff]
        %v1766 = vld [vmem:[#allocation9 + $0x50] sm:$0xff]
        %v1767 = vld [vmem:[#allocation9 + $0x58] sm:$0xff]
        %v1768 = vld [vmem:[#allocation9 + $0x60] sm:$0xff]
        %v1769 = vld [vmem:[#allocation9 + $0x68] sm:$0xff]
        %v1770 = vld [vmem:[#allocation9 + $0x70] sm:$0xff]
        %v1771 = vld [vmem:[#allocation9 + $0x78] sm:$0xff]
        %v1772 = vld [vmem:[#allocation9 + $0x80] sm:$0xff]
        %v1773 = vld [vmem:[#allocation9 + $0x88] sm:$0xff]
        %v1774 = vld [vmem:[#allocation9 + $0x90] sm:$0xff]
        %v1775 = vld [vmem:[#allocation9 + $0x98] sm:$0xff]
        %v1776 = vld [vmem:[#allocation9 + $0xa0] sm:$0xff]
        %v1777 = vld [vmem:[#allocation9 + $0xa8] sm:$0xff]
        %v1778 = vld [vmem:[#allocation9 + $0xb0] sm:$0xff]
        %v1779 = vld [vmem:[#allocation9 + $0xb8] sm:$0xff]
        %v1780 = vld [vmem:[#allocation9 + $0xc0] sm:$0xff]
        %v1781 = vld [vmem:[#allocation9 + $0xc8] sm:$0xff]
        %v1782 = vld [vmem:[#allocation9 + $0xd0] sm:$0xff]
        %v1783 = vld [vmem:[#allocation9 + $0xd8] sm:$0xff]
        %v1784 = vld [vmem:[#allocation9 + $0xe0] sm:$0xff]
        %v1785 = vld [vmem:[#allocation9 + $0xe8] sm:$0xff]
        %v1786 = vld [vmem:[#allocation9 + $0xf0] sm:$0xff]
        %v1787 = vld [vmem:[#allocation9 + $0xf8] sm:$0xff]
        %v1788 = vld [vmem:[%s3] sm:$0x3]
        %v1790 = vlaneseq
        %v1791 = vshrl.u32 %v1790, 7
        %v1792 = vsub.s32 0, %v1791
        %v1793 = vrot.slane %v1788, %v1792
        %v1794 = vlaneseq
        %v1795 = vshrl.u32 %v1794, 7
        %v1796 = vsub.s32 1, %v1795
        %v1797 = vrot.slane %v1788, %v1796
        %v1832 = vunpack.c.l.b16 %v1756
        %v1833 = vunpack.c.h.b16 %v1756
        %v1834 = vunpack.c.l.b16 %v1757
        %v1835 = vunpack.c.h.b16 %v1757
        %v1836 = vunpack.c.l.b16 %v1758
        %v1837 = vunpack.c.h.b16 %v1758
        %v1838 = vunpack.c.l.b16 %v1759
        %v1839 = vunpack.c.h.b16 %v1759
        %v1840 = vunpack.c.l.b16 %v1760
        %v1841 = vunpack.c.h.b16 %v1760
        %v1842 = vunpack.c.l.b16 %v1761
        %v1843 = vunpack.c.h.b16 %v1761
        %v1844 = vunpack.c.l.b16 %v1762
        %v1845 = vunpack.c.h.b16 %v1762
        %v1846 = vunpack.c.l.b16 %v1763
        %v1847 = vunpack.c.h.b16 %v1763
        %v1848 = vunpack.c.l.b16 %v1764
        %v1849 = vunpack.c.h.b16 %v1764
        %v1850 = vunpack.c.l.b16 %v1765
        %v1851 = vunpack.c.h.b16 %v1765
        %v1852 = vunpack.c.l.b16 %v1766
        %v1853 = vunpack.c.h.b16 %v1766
        %v1854 = vunpack.c.l.b16 %v1767
        %v1855 = vunpack.c.h.b16 %v1767
        %v1856 = vunpack.c.l.b16 %v1768
        %v1857 = vunpack.c.h.b16 %v1768
        %v1858 = vunpack.c.l.b16 %v1769
        %v1859 = vunpack.c.h.b16 %v1769
        %v1860 = vunpack.c.l.b16 %v1770
        %v1861 = vunpack.c.h.b16 %v1770
        %v1862 = vunpack.c.l.b16 %v1771
        %v1863 = vunpack.c.h.b16 %v1771
        %v1864 = vunpack.c.l.b16 %v1772
        %v1865 = vunpack.c.h.b16 %v1772
        %v1866 = vunpack.c.l.b16 %v1773
        %v1867 = vunpack.c.h.b16 %v1773
        %v1868 = vunpack.c.l.b16 %v1774
        %v1869 = vunpack.c.h.b16 %v1774
        %v1870 = vunpack.c.l.b16 %v1775
        %v1871 = vunpack.c.h.b16 %v1775
        %v1872 = vunpack.c.l.b16 %v1776
        %v1873 = vunpack.c.h.b16 %v1776
        %v1874 = vunpack.c.l.b16 %v1777
        %v1875 = vunpack.c.h.b16 %v1777
        %v1876 = vunpack.c.l.b16 %v1778
        %v1877 = vunpack.c.h.b16 %v1778
        %v1878 = vunpack.c.l.b16 %v1779
        %v1879 = vunpack.c.h.b16 %v1779
        %v1880 = vunpack.c.l.b16 %v1780
        %v1881 = vunpack.c.h.b16 %v1780
        %v1882 = vunpack.c.l.b16 %v1781
        %v1883 = vunpack.c.h.b16 %v1781
        %v1884 = vunpack.c.l.b16 %v1782
        %v1885 = vunpack.c.h.b16 %v1782
        %v1886 = vunpack.c.l.b16 %v1783
        %v1887 = vunpack.c.h.b16 %v1783
        %v1888 = vunpack.c.l.b16 %v1784
        %v1889 = vunpack.c.h.b16 %v1784
        %v1890 = vunpack.c.l.b16 %v1785
        %v1891 = vunpack.c.h.b16 %v1785
        %v1892 = vunpack.c.l.b16 %v1786
        %v1893 = vunpack.c.h.b16 %v1786
        %v1894 = vunpack.c.l.b16 %v1787
        %v1895 = vunpack.c.h.b16 %v1787
        %v1896 = vpack.c.b16 %v1834, %v1832
        %v1897 = vpack.c.b16 %v1835, %v1833
        %v1898 = vpack.c.b16 %v1838, %v1836
        %v1899 = vpack.c.b16 %v1839, %v1837
        %v1900 = vpack.c.b16 %v1842, %v1840
        %v1901 = vpack.c.b16 %v1843, %v1841
        %v1902 = vpack.c.b16 %v1846, %v1844
        %v1903 = vpack.c.b16 %v1847, %v1845
        %v1904 = vpack.c.b16 %v1850, %v1848
        %v1905 = vpack.c.b16 %v1851, %v1849
        %v1906 = vpack.c.b16 %v1854, %v1852
        %v1907 = vpack.c.b16 %v1855, %v1853
        %v1908 = vpack.c.b16 %v1858, %v1856
        %v1909 = vpack.c.b16 %v1859, %v1857
        %v1910 = vpack.c.b16 %v1862, %v1860
        %v1911 = vpack.c.b16 %v1863, %v1861
        %v1912 = vpack.c.b16 %v1866, %v1864
        %v1913 = vpack.c.b16 %v1867, %v1865
        %v1914 = vpack.c.b16 %v1870, %v1868
        %v1915 = vpack.c.b16 %v1871, %v1869
        %v1916 = vpack.c.b16 %v1874, %v1872
        %v1917 = vpack.c.b16 %v1875, %v1873
        %v1918 = vpack.c.b16 %v1878, %v1876
        %v1919 = vpack.c.b16 %v1879, %v1877
        %v1920 = vpack.c.b16 %v1882, %v1880
        %v1921 = vpack.c.b16 %v1883, %v1881
        %v1922 = vpack.c.b16 %v1886, %v1884
        %v1923 = vpack.c.b16 %v1887, %v1885
        %v1924 = vpack.c.b16 %v1890, %v1888
        %v1925 = vpack.c.b16 %v1891, %v1889
        %v1926 = vpack.c.b16 %v1894, %v1892
        %v1927 = vpack.c.b16 %v1895, %v1893
        %1960 = vmatprep.subr.bf16.mxu0 %v1911
        %1961 = vmatpush1.bf16.msra.mxu0 %v1910
        %1962 = vmatprep.subr.bf16.mxu0 %v1909
        %1963 = vmatpush1.bf16.msra.mxu0 %v1908
        %1964 = vmatprep.subr.bf16.mxu0 %v1907
        %1965 = vmatpush1.bf16.msra.mxu0 %v1906
        %1966 = vmatprep.subr.bf16.mxu0 %v1905
        %1967 = vmatpush1.bf16.msra.mxu0 %v1904
        %1968 = vmatprep.subr.bf16.mxu0 %v1903
        %1969 = vmatpush1.bf16.msra.mxu0 %v1902
        %1970 = vmatprep.subr.bf16.mxu0 %v1901
        %1971 = vmatpush1.bf16.msra.mxu0 %v1900
        %1972 = vmatprep.subr.bf16.mxu0 %v1899
        %1973 = vmatpush1.bf16.msra.mxu0 %v1898
        %1974 = vmatprep.subr.bf16.mxu0 %v1897
        %1975 = vmatpush1.bf16.msra.mxu0 %v1896
        %1976 = vmatprep.subr.bf16.mxu0 %v1927
        %1977 = vmatpush2.bf16.msra.mxu0 %v1926
        %1978 = vmatprep.subr.bf16.mxu0 %v1925
        %1979 = vmatpush2.bf16.msra.mxu0 %v1924
        %1980 = vmatprep.subr.bf16.mxu0 %v1923
        %1981 = vmatpush2.bf16.msra.mxu0 %v1922
        %1982 = vmatprep.subr.bf16.mxu0 %v1921
        %1983 = vmatpush2.bf16.msra.mxu0 %v1920
        %1984 = vmatprep.subr.bf16.mxu0 %v1919
        %1985 = vmatpush2.bf16.msra.mxu0 %v1918
        %1986 = vmatprep.subr.bf16.mxu0 %v1917
        %1987 = vmatpush2.bf16.msra.mxu0 %v1916
        %1988 = vmatprep.subr.bf16.mxu0 %v1915
        %1989 = vmatpush2.bf16.msra.mxu0 %v1914
        %1990 = vmatprep.subr.bf16.mxu0 %v1913
        %1991 = vmatpush2.bf16.msra.mxu0 %v1912
        %1992 = vmatprep.mubr.bf16.mxu0 %v1755
        %1993 = vmatmul.mubr.bf16.gmra.mxu0 %v1754
        %v1994 = vpop.f32.mrf.mxu0
        %v1995 = vadd.f32 %v1793, %v1994
        %v1996 = vpop.f32.mrf.mxu0
        %v1997 = vadd.f32 %v1797, %v1996
        %v1998 = vpop.f32.mrf.mxu0
        %v1999 = vpop.f32.mrf.mxu0
        %2000 = vdwg.mxu0
        %v2001 = vmul.f32 %v1995, 0.088388346
        %v2002 = vmul.f32 %v1997, 0.088388346
        %v2003 = vpack.c.bf16 %v2001, %v2001
        %v2005 = vunpack.c.l.s4 1983009808
        %v2006 = vunpack.c.0.s8 %v2005
        %v2007 = vlaneseq
        %v2008 = vshrl.u32 %v2007, 7
        %v2009 = vsub.s32 %v2006, %v2008
        %v2010 = vrot.slane %v2003, %v2009
        %v2011 = vcombine.high %v2010, 0
        %v2013 = vunpack.c.l.s4 1934713408
        %v2014 = vunpack.c.0.s8 %v2013
        %v2015 = vlaneseq
        %v2016 = vshrl.u32 %v2015, 7
        %v2017 = vsub.s32 %v2014, %v2016
        %v2018 = vrot.slane %v2010, %v2017
        %v2020 = vunpack.c.l.s4 1934713408
        %v2021 = vunpack.c.0.s8 %v2020
        %v2022 = vlaneseq
        %v2023 = vshrl.u32 %v2022, 7
        %v2024 = vsub.s32 %v2021, %v2023
        %v2025 = vrot.slane %v2011, %v2024
        %v2026 = vcombine.high %v2018, 0
        %v2027 = vcombine.high %v2025, 0
        %v2028 = vpack.c.bf16 %v2002, %v2002
        %v2030 = vunpack.c.l.s4 1983009808
        %v2031 = vunpack.c.0.s8 %v2030
        %v2032 = vlaneseq
        %v2033 = vshrl.u32 %v2032, 7
        %v2034 = vsub.s32 %v2031, %v2033
        %v2035 = vrot.slane %v2028, %v2034
        %v2036 = vcombine.high %v2035, 0
        %v2038 = vunpack.c.l.s4 1934713408
        %v2039 = vunpack.c.0.s8 %v2038
        %v2040 = vlaneseq
        %v2041 = vshrl.u32 %v2040, 7
        %v2042 = vsub.s32 %v2039, %v2041
        %v2043 = vrot.slane %v2035, %v2042
        %v2045 = vunpack.c.l.s4 1934713408
        %v2046 = vunpack.c.0.s8 %v2045
        %v2047 = vlaneseq
        %v2048 = vshrl.u32 %v2047, 7
        %v2049 = vsub.s32 %v2046, %v2048
        %v2050 = vrot.slane %v2036, %v2049
        %v2051 = vcombine.high %v2043, 0
        %v2052 = vcombine.high %v2050, 0
        %v2055 = vpack.i.b16 %v2043, %v2018
        %v2057 = vshrl.u32 %v2018, 16
        %v2058 = vshrl.u32 %v2043, 16
        %v2059 = vpack.i.b16 %v2058, %v2057
        %v2063 = vpack.i.b16 %v2051, %v2026
        %v2065 = vshrl.u32 %v2026, 16
        %v2066 = vshrl.u32 %v2051, 16
        %v2067 = vpack.i.b16 %v2066, %v2065
        %v2071 = vpack.i.b16 %v2050, %v2025
        %v2073 = vshrl.u32 %v2025, 16
        %v2074 = vshrl.u32 %v2050, 16
        %v2075 = vpack.i.b16 %v2074, %v2073
        %v2079 = vpack.i.b16 %v2052, %v2027
        %v2081 = vshrl.u32 %v2027, 16
        %v2082 = vshrl.u32 %v2052, 16
        %v2083 = vpack.i.b16 %v2082, %v2081
        %v2085 = vcombine.low %v2055, %v2071
        %v2087 = vunpack.c.l.s4 1983009808
        %v2088 = vunpack.c.0.s8 %v2087
        %v2089 = vlaneseq
        %v2090 = vshrl.u32 %v2089, 7
        %v2091 = vsub.s32 %v2088, %v2090
        %v2092 = vrot.slane %v2085, %v2091
        %v2093 = vcombine.low %v2063, %v2079
        %v2095 = vunpack.c.l.s4 1983009808
        %v2096 = vunpack.c.0.s8 %v2095
        %v2097 = vlaneseq
        %v2098 = vshrl.u32 %v2097, 7
        %v2099 = vsub.s32 %v2096, %v2098
        %v2100 = vrot.slane %v2093, %v2099
        %v2101 = vcombine.low %v2092, %v2100
        %v2103 = vunpack.c.l.s4 1934713408
        %v2104 = vunpack.c.0.s8 %v2103
        %v2105 = vlaneseq
        %v2106 = vshrl.u32 %v2105, 7
        %v2107 = vsub.s32 %v2104, %v2106
        %v2108 = vrot.slane %v2101, %v2107
        %v2109 = vcombine.low %v2059, %v2075
        %v2111 = vunpack.c.l.s4 1983009808
        %v2112 = vunpack.c.0.s8 %v2111
        %v2113 = vlaneseq
        %v2114 = vshrl.u32 %v2113, 7
        %v2115 = vsub.s32 %v2112, %v2114
        %v2116 = vrot.slane %v2109, %v2115
        %v2117 = vcombine.low %v2067, %v2083
        %v2119 = vunpack.c.l.s4 1983009808
        %v2120 = vunpack.c.0.s8 %v2119
        %v2121 = vlaneseq
        %v2122 = vshrl.u32 %v2121, 7
        %v2123 = vsub.s32 %v2120, %v2122
        %v2124 = vrot.slane %v2117, %v2123
        %v2125 = vcombine.low %v2116, %v2124
        %v2127 = vunpack.c.l.s4 1934713408
        %v2128 = vunpack.c.0.s8 %v2127
        %v2129 = vlaneseq
        %v2130 = vshrl.u32 %v2129, 7
        %v2131 = vsub.s32 %v2128, %v2130
        %v2132 = vrot.slane %v2125, %v2131
        %v2135 = vpack.i.b16 %v2132, %v2108
        %v2137 = vshrl.u32 %v2108, 16
        %v2138 = vshrl.u32 %v2132, 16
        %v2139 = vpack.i.b16 %v2138, %v2137
        %v2141 = vld [vmem:[#allocation2] sm:$0xf]
        %v2142 = vld [vmem:[#allocation2 + $0x8] sm:$0xf]
        %v2143 = vld [vmem:[#allocation3] sm:$0xf]
        %v2144 = vld [vmem:[#allocation3 + $0x8] sm:$0xf]
        %2145 = vmatprep.subr.bf16.mxu0 0
        %2146 = vmatpush1.bf16.xpose.msra.mxu0 0
        %2147 = vmatprep.subr.bf16.mxu0 0
        %2148 = vmatpush1.bf16.xpose.msra.mxu0 0
        %2149 = vmatprep.subr.bf16.mxu0 0
        %2150 = vmatpush1.bf16.xpose.msra.mxu0 0
        %2151 = vmatprep.subr.bf16.mxu0 0
        %2152 = vmatpush1.bf16.xpose.msra.mxu0 0
        %2153 = vmatprep.subr.bf16.mxu0 0
        %2154 = vmatpush1.bf16.xpose.msra.mxu0 0
        %2155 = vmatprep.subr.bf16.mxu0 0
        %2156 = vmatpush1.bf16.xpose.msra.mxu0 0
        %2157 = vmatprep.subr.bf16.mxu0 0
        %2158 = vmatpush1.bf16.xpose.msra.mxu0 0
        %2159 = vmatprep.subr.bf16.mxu0 0
        %2160 = vmatpush1.bf16.xpose.msra.mxu0 %v2141
        %2161 = vmatprep.subr.bf16.mxu0 0
        %2162 = vmatpush2.bf16.xpose.msra.mxu0 0
        %2163 = vmatprep.subr.bf16.mxu0 0
        %2164 = vmatpush2.bf16.xpose.msra.mxu0 0
        %2165 = vmatprep.subr.bf16.mxu0 0
        %2166 = vmatpush2.bf16.xpose.msra.mxu0 0
        %2167 = vmatprep.subr.bf16.mxu0 0
        %2168 = vmatpush2.bf16.xpose.msra.mxu0 0
        %2169 = vmatprep.subr.bf16.mxu0 0
        %2170 = vmatpush2.bf16.xpose.msra.mxu0 0
        %2171 = vmatprep.subr.bf16.mxu0 0
        %2172 = vmatpush2.bf16.xpose.msra.mxu0 0
        %2173 = vmatprep.subr.bf16.mxu0 0
        %2174 = vmatpush2.bf16.xpose.msra.mxu0 0
        %2175 = vmatprep.subr.bf16.mxu0 0
        %2176 = vmatpush2.bf16.xpose.msra.mxu0 0
        %2177 = vmatprep.mubr.bf16.mxu0 0
        %2178 = vmatmul.mubr.bf16.gmra.mxu0 %v2135
        %v2179 = vpop.f32.mrf.mxu0
        %v2180 = vadd.f32 0.0, %v2179
        %v2181 = vpop.f32.mrf.mxu0
        %v2182 = vpop.f32.mrf.mxu0
        %v2183 = vpop.f32.mrf.mxu0
        %2184 = vdwg.mxu0
        %2185 = vmatprep.subr.bf16.mxu0 0
        %2186 = vmatpush1.bf16.xpose.msra.mxu0 0
        %2187 = vmatprep.subr.bf16.mxu0 0
        %2188 = vmatpush1.bf16.xpose.msra.mxu0 0
        %2189 = vmatprep.subr.bf16.mxu0 0
        %2190 = vmatpush1.bf16.xpose.msra.mxu0 0
        %2191 = vmatprep.subr.bf16.mxu0 0
        %2192 = vmatpush1.bf16.xpose.msra.mxu0 0
        %2193 = vmatprep.subr.bf16.mxu0 0
        %2194 = vmatpush1.bf16.xpose.msra.mxu0 0
        %2195 = vmatprep.subr.bf16.mxu0 0
        %2196 = vmatpush1.bf16.xpose.msra.mxu0 0
        %2197 = vmatprep.subr.bf16.mxu0 0
        %2198 = vmatpush1.bf16.xpose.msra.mxu0 0
        %2199 = vmatprep.subr.bf16.mxu0 0
        %2200 = vmatpush1.bf16.xpose.msra.mxu0 %v2142
        %2201 = vmatprep.subr.bf16.mxu0 0
        %2202 = vmatpush2.bf16.xpose.msra.mxu0 0
        %2203 = vmatprep.subr.bf16.mxu0 0
        %2204 = vmatpush2.bf16.xpose.msra.mxu0 0
        %2205 = vmatprep.subr.bf16.mxu0 0
        %2206 = vmatpush2.bf16.xpose.msra.mxu0 0
        %2207 = vmatprep.subr.bf16.mxu0 0
        %2208 = vmatpush2.bf16.xpose.msra.mxu0 0
        %2209 = vmatprep.subr.bf16.mxu0 0
        %2210 = vmatpush2.bf16.xpose.msra.mxu0 0
        %2211 = vmatprep.subr.bf16.mxu0 0
        %2212 = vmatpush2.bf16.xpose.msra.mxu0 0
        %2213 = vmatprep.subr.bf16.mxu0 0
        %2214 = vmatpush2.bf16.xpose.msra.mxu0 0
        %2215 = vmatprep.subr.bf16.mxu0 0
        %2216 = vmatpush2.bf16.xpose.msra.mxu0 0
        %2217 = vmatprep.mubr.bf16.mxu0 0
        %2218 = vmatmul.mubr.bf16.gmra.mxu0 %v2139
        %v2219 = vpop.f32.mrf.mxu0
        %v2220 = vadd.f32 0.0, %v2219
        %v2221 = vpop.f32.mrf.mxu0
        %v2222 = vpop.f32.mrf.mxu0
        %v2223 = vpop.f32.mrf.mxu0
        %2224 = vdwg.mxu0
        %vm2225 = vcmask 64512
        %v2226 = vsel %vm2225, %v2180, -inf
        %2227 = vmax.xlane.f32.xlu0 %v2226
        %v2228 = vpop.xlane.xlu0 %2227
        %v2229 = vsel %vm2225, %v2220, -inf
        %2230 = vmax.xlane.f32.xlu0 %v2229
        %v2231 = vpop.xlane.xlu0 %2230
        %v2232 = vsub.f32 -inf, %v2228
        %v2233 = vsub.f32 -inf, %v2231
        %v2234 = vmul.f32 %v2232, 1.442695
        %v2235 = vpow.pop %v2234
        %v2236 = vmul.f32 %v2233, 1.442695
        %v2237 = vpow.pop %v2236
        %v2238 = vsub.f32 %v2180, %v2228
        %v2239 = vsub.f32 %v2220, %v2231
        %v2240 = vmul.f32 %v2238, 1.442695
        %v2241 = vpow.pop %v2240
        %v2242 = vmul.f32 %v2239, 1.442695
        %v2243 = vpow.pop %v2242
        %v2244 = vmul.f32 %v2235, 0.0
        %v2245 = vmul.f32 %v2237, 0.0
        %v2246 = vsel %vm2225, %v2241, 0.0
        %2247 = vadd.xlane.f32.xlu0 %v2246
        %v2248 = vpop.xlane.xlu0 %2247
        %v2249 = vsel %vm2225, %v2243, 0.0
        %2250 = vadd.xlane.f32.xlu0 %v2249
        %v2251 = vpop.xlane.xlu0 %2250
        %v2252 = vadd.f32 %v2244, %v2248
        %v2253 = vadd.f32 %v2245, %v2251
        %v2254 = vpack.c.bf16 %v2241, %v2241
        %v2255 = vpack.c.bf16 %v2243, %v2243
        %v2257 = vsel %vm2225, %v2254, 0
        %vm2259 = vcmask 1043456
        %v2261 = vsel %vm2259, %v2143, 0
        %2263 = vmatprep.subr.bf16.mxu0 0
        %2264 = vmatpush1.bf16.msra.mxu0 0
        %2265 = vmatprep.subr.bf16.mxu0 0
        %2266 = vmatpush1.bf16.msra.mxu0 0
        %2267 = vmatprep.subr.bf16.mxu0 0
        %2268 = vmatpush1.bf16.msra.mxu0 0
        %2269 = vmatprep.subr.bf16.mxu0 0
        %2270 = vmatpush1.bf16.msra.mxu0 0
        %2271 = vmatprep.subr.bf16.mxu0 0
        %2272 = vmatpush1.bf16.msra.mxu0 0
        %2273 = vmatprep.subr.bf16.mxu0 0
        %2274 = vmatpush1.bf16.msra.mxu0 0
        %2275 = vmatprep.subr.bf16.mxu0 0
        %2276 = vmatpush1.bf16.msra.mxu0 0
        %2277 = vmatprep.subr.bf16.mxu0 0
        %2278 = vmatpush1.bf16.msra.mxu0 %v2261
        %2279 = vmatprep.subr.bf16.mxu0 0
        %2280 = vmatpush2.bf16.msra.mxu0 0
        %2281 = vmatprep.subr.bf16.mxu0 0
        %2282 = vmatpush2.bf16.msra.mxu0 0
        %2283 = vmatprep.subr.bf16.mxu0 0
        %2284 = vmatpush2.bf16.msra.mxu0 0
        %2285 = vmatprep.subr.bf16.mxu0 0
        %2286 = vmatpush2.bf16.msra.mxu0 0
        %2287 = vmatprep.subr.bf16.mxu0 0
        %2288 = vmatpush2.bf16.msra.mxu0 0
        %2289 = vmatprep.subr.bf16.mxu0 0
        %2290 = vmatpush2.bf16.msra.mxu0 0
        %2291 = vmatprep.subr.bf16.mxu0 0
        %2292 = vmatpush2.bf16.msra.mxu0 0
        %2293 = vmatprep.subr.bf16.mxu0 0
        %2294 = vmatpush2.bf16.msra.mxu0 0
        %2295 = vmatprep.mubr.bf16.mxu0 0
        %2296 = vmatmul.mubr.bf16.gmra.mxu0 %v2257
        %v2297 = vpop.f32.mrf.mxu0
        %v2298 = vadd.f32 0.0, %v2297
        %v2299 = vpop.f32.mrf.mxu0
        %v2300 = vpop.f32.mrf.mxu0
        %v2301 = vpop.f32.mrf.mxu0
        %2302 = vdwg.mxu0
        %v2304 = vsel %vm2225, %v2255, 0
        %v2307 = vsel %vm2259, %v2144, 0
        %2309 = vmatprep.subr.bf16.mxu0 0
        %2310 = vmatpush1.bf16.msra.mxu0 0
        %2311 = vmatprep.subr.bf16.mxu0 0
        %2312 = vmatpush1.bf16.msra.mxu0 0
        %2313 = vmatprep.subr.bf16.mxu0 0
        %2314 = vmatpush1.bf16.msra.mxu0 0
        %2315 = vmatprep.subr.bf16.mxu0 0
        %2316 = vmatpush1.bf16.msra.mxu0 0
        %2317 = vmatprep.subr.bf16.mxu0 0
        %2318 = vmatpush1.bf16.msra.mxu0 0
        %2319 = vmatprep.subr.bf16.mxu0 0
        %2320 = vmatpush1.bf16.msra.mxu0 0
        %2321 = vmatprep.subr.bf16.mxu0 0
        %2322 = vmatpush1.bf16.msra.mxu0 0
        %2323 = vmatprep.subr.bf16.mxu0 0
        %2324 = vmatpush1.bf16.msra.mxu0 %v2307
        %2325 = vmatprep.subr.bf16.mxu0 0
        %2326 = vmatpush2.bf16.msra.mxu0 0
        %2327 = vmatprep.subr.bf16.mxu0 0
        %2328 = vmatpush2.bf16.msra.mxu0 0
        %2329 = vmatprep.subr.bf16.mxu0 0
        %2330 = vmatpush2.bf16.msra.mxu0 0
        %2331 = vmatprep.subr.bf16.mxu0 0
        %2332 = vmatpush2.bf16.msra.mxu0 0
        %2333 = vmatprep.subr.bf16.mxu0 0
        %2334 = vmatpush2.bf16.msra.mxu0 0
        %2335 = vmatprep.subr.bf16.mxu0 0
        %2336 = vmatpush2.bf16.msra.mxu0 0
        %2337 = vmatprep.subr.bf16.mxu0 0
        %2338 = vmatpush2.bf16.msra.mxu0 0
        %2339 = vmatprep.subr.bf16.mxu0 0
        %2340 = vmatpush2.bf16.msra.mxu0 0
        %2341 = vmatprep.mubr.bf16.mxu0 0
        %2342 = vmatmul.mubr.bf16.gmra.mxu0 %v2304
        %v2343 = vpop.f32.mrf.mxu0
        %v2344 = vadd.f32 0.0, %v2343
        %v2345 = vpop.f32.mrf.mxu0
        %v2346 = vpop.f32.mrf.mxu0
        %v2347 = vpop.f32.mrf.mxu0
        %2348 = vdwg.mxu0
        %v2349 = vadd.f32 %v2244, %v2298
        %v2350 = vadd.f32 %v2245, %v2344
        %s2351 = scalar_lea.vmem [#allocation2], 4
        %v2352 = vld [vmem:[%s2351] sm:$0xf]
        %v2353 = vld [vmem:[%s2351 + $0x8] sm:$0xf]
        %s2354 = scalar_lea.vmem [#allocation3], 4
        %v2355 = vld [vmem:[%s2354] sm:$0xf]
        %v2356 = vld [vmem:[%s2354 + $0x8] sm:$0xf]
        %2357 = vmatprep.subr.bf16.mxu0 0
        %2358 = vmatpush1.bf16.xpose.msra.mxu0 0
        %2359 = vmatprep.subr.bf16.mxu0 0
        %2360 = vmatpush1.bf16.xpose.msra.mxu0 0
        %2361 = vmatprep.subr.bf16.mxu0 0
        %2362 = vmatpush1.bf16.xpose.msra.mxu0 0
        %2363 = vmatprep.subr.bf16.mxu0 0
        %2364 = vmatpush1.bf16.xpose.msra.mxu0 0
        %2365 = vmatprep.subr.bf16.mxu0 0
        %2366 = vmatpush1.bf16.xpose.msra.mxu0 0
        %2367 = vmatprep.subr.bf16.mxu0 0
        %2368 = vmatpush1.bf16.xpose.msra.mxu0 0
        %2369 = vmatprep.subr.bf16.mxu0 0
        %2370 = vmatpush1.bf16.xpose.msra.mxu0 0
        %2371 = vmatprep.subr.bf16.mxu0 0
        %2372 = vmatpush1.bf16.xpose.msra.mxu0 %v2352
        %2373 = vmatprep.subr.bf16.mxu0 0
        %2374 = vmatpush2.bf16.xpose.msra.mxu0 0
        %2375 = vmatprep.subr.bf16.mxu0 0
        %2376 = vmatpush2.bf16.xpose.msra.mxu0 0
        %2377 = vmatprep.subr.bf16.mxu0 0
        %2378 = vmatpush2.bf16.xpose.msra.mxu0 0
        %2379 = vmatprep.subr.bf16.mxu0 0
        %2380 = vmatpush2.bf16.xpose.msra.mxu0 0
        %2381 = vmatprep.subr.bf16.mxu0 0
        %2382 = vmatpush2.bf16.xpose.msra.mxu0 0
        %2383 = vmatprep.subr.bf16.mxu0 0
        %2384 = vmatpush2.bf16.xpose.msra.mxu0 0
        %2385 = vmatprep.subr.bf16.mxu0 0
        %2386 = vmatpush2.bf16.xpose.msra.mxu0 0
        %2387 = vmatprep.subr.bf16.mxu0 0
        %2388 = vmatpush2.bf16.xpose.msra.mxu0 0
        %2389 = vmatprep.mubr.bf16.mxu0 0
        %2390 = vmatmul.mubr.bf16.gmra.mxu0 %v2135
        %v2391 = vpop.f32.mrf.mxu0
        %v2392 = vadd.f32 0.0, %v2391
        %v2393 = vpop.f32.mrf.mxu0
        %v2394 = vpop.f32.mrf.mxu0
        %v2395 = vpop.f32.mrf.mxu0
        %2396 = vdwg.mxu0
        %2397 = vmatprep.subr.bf16.mxu0 0
        %2398 = vmatpush1.bf16.xpose.msra.mxu0 0
        %2399 = vmatprep.subr.bf16.mxu0 0
        %2400 = vmatpush1.bf16.xpose.msra.mxu0 0
        %2401 = vmatprep.subr.bf16.mxu0 0
        %2402 = vmatpush1.bf16.xpose.msra.mxu0 0
        %2403 = vmatprep.subr.bf16.mxu0 0
        %2404 = vmatpush1.bf16.xpose.msra.mxu0 0
        %2405 = vmatprep.subr.bf16.mxu0 0
        %2406 = vmatpush1.bf16.xpose.msra.mxu0 0
        %2407 = vmatprep.subr.bf16.mxu0 0
        %2408 = vmatpush1.bf16.xpose.msra.mxu0 0
        %2409 = vmatprep.subr.bf16.mxu0 0
        %2410 = vmatpush1.bf16.xpose.msra.mxu0 0
        %2411 = vmatprep.subr.bf16.mxu0 0
        %2412 = vmatpush1.bf16.xpose.msra.mxu0 %v2353
        %2413 = vmatprep.subr.bf16.mxu0 0
        %2414 = vmatpush2.bf16.xpose.msra.mxu0 0
        %2415 = vmatprep.subr.bf16.mxu0 0
        %2416 = vmatpush2.bf16.xpose.msra.mxu0 0
        %2417 = vmatprep.subr.bf16.mxu0 0
        %2418 = vmatpush2.bf16.xpose.msra.mxu0 0
        %2419 = vmatprep.subr.bf16.mxu0 0
        %2420 = vmatpush2.bf16.xpose.msra.mxu0 0
        %2421 = vmatprep.subr.bf16.mxu0 0
        %2422 = vmatpush2.bf16.xpose.msra.mxu0 0
        %2423 = vmatprep.subr.bf16.mxu0 0
        %2424 = vmatpush2.bf16.xpose.msra.mxu0 0
        %2425 = vmatprep.subr.bf16.mxu0 0
        %2426 = vmatpush2.bf16.xpose.msra.mxu0 0
        %2427 = vmatprep.subr.bf16.mxu0 0
        %2428 = vmatpush2.bf16.xpose.msra.mxu0 0
        %2429 = vmatprep.mubr.bf16.mxu0 0
        %2430 = vmatmul.mubr.bf16.gmra.mxu0 %v2139
        %v2431 = vpop.f32.mrf.mxu0
        %v2432 = vadd.f32 0.0, %v2431
        %v2433 = vpop.f32.mrf.mxu0
        %v2434 = vpop.f32.mrf.mxu0
        %v2435 = vpop.f32.mrf.mxu0
        %2436 = vdwg.mxu0
        %v2437 = vsel %vm2225, %v2392, -inf
        %2438 = vmax.xlane.f32.xlu0 %v2437
        %v2439 = vpop.xlane.xlu0 %2438
        %v2440 = vsel %vm2225, %v2432, -inf
        %2441 = vmax.xlane.f32.xlu0 %v2440
        %v2442 = vpop.xlane.xlu0 %2441
        %v2443 = vmax.f32 %v2228, %v2439
        %v2444 = vmax.f32 %v2231, %v2442
        %v2445 = vsub.f32 %v2228, %v2443
        %v2446 = vsub.f32 %v2231, %v2444
        %v2447 = vmul.f32 %v2445, 1.442695
        %v2448 = vpow.pop %v2447
        %v2449 = vmul.f32 %v2446, 1.442695
        %v2450 = vpow.pop %v2449
        %v2451 = vsub.f32 %v2392, %v2443
        %v2452 = vsub.f32 %v2432, %v2444
        %v2453 = vmul.f32 %v2451, 1.442695
        %v2454 = vpow.pop %v2453
        %v2455 = vmul.f32 %v2452, 1.442695
        %v2456 = vpow.pop %v2455
        %v2457 = vmul.f32 %v2448, %v2252
        %v2458 = vmul.f32 %v2450, %v2253
        %v2459 = vsel %vm2225, %v2454, 0.0
        %2460 = vadd.xlane.f32.xlu0 %v2459
        %v2461 = vpop.xlane.xlu0 %2460
        %v2462 = vsel %vm2225, %v2456, 0.0
        %2463 = vadd.xlane.f32.xlu0 %v2462
        %v2464 = vpop.xlane.xlu0 %2463
        %v2465 = vadd.f32 %v2457, %v2461
        %v2466 = vadd.f32 %v2458, %v2464
        %v2467 = vmul.f32 %v2448, %v2349
        %v2468 = vmul.f32 %v2450, %v2350
        %v2469 = vpack.c.bf16 %v2454, %v2454
        %v2470 = vpack.c.bf16 %v2456, %v2456
        %v2472 = vsel %vm2225, %v2469, 0
        %v2475 = vsel %vm2259, %v2355, 0
        %2477 = vmatprep.subr.bf16.mxu0 0
        %2478 = vmatpush1.bf16.msra.mxu0 0
        %2479 = vmatprep.subr.bf16.mxu0 0
        %2480 = vmatpush1.bf16.msra.mxu0 0
        %2481 = vmatprep.subr.bf16.mxu0 0
        %2482 = vmatpush1.bf16.msra.mxu0 0
        %2483 = vmatprep.subr.bf16.mxu0 0
        %2484 = vmatpush1.bf16.msra.mxu0 0
        %2485 = vmatprep.subr.bf16.mxu0 0
        %2486 = vmatpush1.bf16.msra.mxu0 0
        %2487 = vmatprep.subr.bf16.mxu0 0
        %2488 = vmatpush1.bf16.msra.mxu0 0
        %2489 = vmatprep.subr.bf16.mxu0 0
        %2490 = vmatpush1.bf16.msra.mxu0 0
        %2491 = vmatprep.subr.bf16.mxu0 0
        %2492 = vmatpush1.bf16.msra.mxu0 %v2475
        %2493 = vmatprep.subr.bf16.mxu0 0
        %2494 = vmatpush2.bf16.msra.mxu0 0
        %2495 = vmatprep.subr.bf16.mxu0 0
        %2496 = vmatpush2.bf16.msra.mxu0 0
        %2497 = vmatprep.subr.bf16.mxu0 0
        %2498 = vmatpush2.bf16.msra.mxu0 0
        %2499 = vmatprep.subr.bf16.mxu0 0
        %2500 = vmatpush2.bf16.msra.mxu0 0
        %2501 = vmatprep.subr.bf16.mxu0 0
        %2502 = vmatpush2.bf16.msra.mxu0 0
        %2503 = vmatprep.subr.bf16.mxu0 0
        %2504 = vmatpush2.bf16.msra.mxu0 0
        %2505 = vmatprep.subr.bf16.mxu0 0
        %2506 = vmatpush2.bf16.msra.mxu0 0
        %2507 = vmatprep.subr.bf16.mxu0 0
        %2508 = vmatpush2.bf16.msra.mxu0 0
        %2509 = vmatprep.mubr.bf16.mxu0 0
        %2510 = vmatmul.mubr.bf16.gmra.mxu0 %v2472
        %v2511 = vpop.f32.mrf.mxu0
        %v2512 = vadd.f32 0.0, %v2511
        %v2513 = vpop.f32.mrf.mxu0
        %v2514 = vpop.f32.mrf.mxu0
        %v2515 = vpop.f32.mrf.mxu0
        %2516 = vdwg.mxu0
        %v2518 = vsel %vm2225, %v2470, 0
        %v2521 = vsel %vm2259, %v2356, 0
        %2523 = vmatprep.subr.bf16.mxu0 0
        %2524 = vmatpush1.bf16.msra.mxu0 0
        %2525 = vmatprep.subr.bf16.mxu0 0
        %2526 = vmatpush1.bf16.msra.mxu0 0
        %2527 = vmatprep.subr.bf16.mxu0 0
        %2528 = vmatpush1.bf16.msra.mxu0 0
        %2529 = vmatprep.subr.bf16.mxu0 0
        %2530 = vmatpush1.bf16.msra.mxu0 0
        %2531 = vmatprep.subr.bf16.mxu0 0
        %2532 = vmatpush1.bf16.msra.mxu0 0
        %2533 = vmatprep.subr.bf16.mxu0 0
        %2534 = vmatpush1.bf16.msra.mxu0 0
        %2535 = vmatprep.subr.bf16.mxu0 0
        %2536 = vmatpush1.bf16.msra.mxu0 0
        %2537 = vmatprep.subr.bf16.mxu0 0
        %2538 = vmatpush1.bf16.msra.mxu0 %v2521
        %2539 = vmatprep.subr.bf16.mxu0 0
        %2540 = vmatpush2.bf16.msra.mxu0 0
        %2541 = vmatprep.subr.bf16.mxu0 0
        %2542 = vmatpush2.bf16.msra.mxu0 0
        %2543 = vmatprep.subr.bf16.mxu0 0
        %2544 = vmatpush2.bf16.msra.mxu0 0
        %2545 = vmatprep.subr.bf16.mxu0 0
        %2546 = vmatpush2.bf16.msra.mxu0 0
        %2547 = vmatprep.subr.bf16.mxu0 0
        %2548 = vmatpush2.bf16.msra.mxu0 0
        %2549 = vmatprep.subr.bf16.mxu0 0
        %2550 = vmatpush2.bf16.msra.mxu0 0
        %2551 = vmatprep.subr.bf16.mxu0 0
        %2552 = vmatpush2.bf16.msra.mxu0 0
        %2553 = vmatprep.subr.bf16.mxu0 0
        %2554 = vmatpush2.bf16.msra.mxu0 0
        %2555 = vmatprep.mubr.bf16.mxu0 0
        %2556 = vmatmul.mubr.bf16.gmra.mxu0 %v2518
        %v2557 = vpop.f32.mrf.mxu0
        %v2558 = vadd.f32 0.0, %v2557
        %v2559 = vpop.f32.mrf.mxu0
        %v2560 = vpop.f32.mrf.mxu0
        %v2561 = vpop.f32.mrf.mxu0
        %2562 = vdwg.mxu0
        %v2563 = vadd.f32 %v2467, %v2512
        %v2564 = vadd.f32 %v2468, %v2558
        %v2565 = vrcp.pop %v2465
        %v2566 = vrcp.pop %v2466
        %v2567 = vmul.f32 %v2563, %v2565
        %v2568 = vmul.f32 %v2564, %v2566
        %v2569 = vcombine.high %v2567, 0.0
        %v2571 = vunpack.c.l.s4 1983009808
        %v2572 = vunpack.c.0.s8 %v2571
        %v2573 = vlaneseq
        %v2574 = vshrl.u32 %v2573, 7
        %v2575 = vsub.s32 %v2572, %v2574
        %v2576 = vrot.slane %v2567, %v2575
        %v2578 = vunpack.c.l.s4 1983009808
        %v2579 = vunpack.c.0.s8 %v2578
        %v2580 = vlaneseq
        %v2581 = vshrl.u32 %v2580, 7
        %v2582 = vsub.s32 %v2579, %v2581
        %v2583 = vrot.slane %v2569, %v2582
        %v2584 = vcombine.high %v2568, 0.0
        %v2586 = vunpack.c.l.s4 1983009808
        %v2587 = vunpack.c.0.s8 %v2586
        %v2588 = vlaneseq
        %v2589 = vshrl.u32 %v2588, 7
        %v2590 = vsub.s32 %v2587, %v2589
        %v2591 = vrot.slane %v2568, %v2590
        %v2593 = vunpack.c.l.s4 1983009808
        %v2594 = vunpack.c.0.s8 %v2593
        %v2595 = vlaneseq
        %v2596 = vshrl.u32 %v2595, 7
        %v2597 = vsub.s32 %v2594, %v2596
        %v2598 = vrot.slane %v2584, %v2597
        %v2599 = vcombine.low %v2576, %v2591
        %v2600 = vcombine.high %v2576, %v2591
        %v2602 = vunpack.c.l.s4 1934713408
        %v2603 = vunpack.c.0.s8 %v2602
        %v2604 = vlaneseq
        %v2605 = vshrl.u32 %v2604, 7
        %v2606 = vsub.s32 %v2603, %v2605
        %v2607 = vrot.slane %v2599, %v2606
        %v2609 = vunpack.c.l.s4 1934713408
        %v2610 = vunpack.c.0.s8 %v2609
        %v2611 = vlaneseq
        %v2612 = vshrl.u32 %v2611, 7
        %v2613 = vsub.s32 %v2610, %v2612
        %v2614 = vrot.slane %v2600, %v2613
        %v2615 = vcombine.low %v2583, %v2598
        %v2616 = vcombine.high %v2583, %v2598
        %v2618 = vunpack.c.l.s4 1934713408
        %v2619 = vunpack.c.0.s8 %v2618
        %v2620 = vlaneseq
        %v2621 = vshrl.u32 %v2620, 7
        %v2622 = vsub.s32 %v2619, %v2621
        %v2623 = vrot.slane %v2615, %v2622
        %v2625 = vunpack.c.l.s4 1934713408
        %v2626 = vunpack.c.0.s8 %v2625
        %v2627 = vlaneseq
        %v2628 = vshrl.u32 %v2627, 7
        %v2629 = vsub.s32 %v2626, %v2628
        %v2630 = vrot.slane %v2616, %v2629
        %v2631 = vcombine.high %v2607, 0.0
        %v2632 = vcombine.high %v2614, 0.0
        %v2633 = vcombine.high %v2623, 0.0
        %v2634 = vcombine.high %v2630, 0.0
        %v2635 = vcombine.low %v2607, %v2614
        %v2637 = vunpack.c.l.s4 1983009808
        %v2638 = vunpack.c.0.s8 %v2637
        %v2639 = vlaneseq
        %v2640 = vshrl.u32 %v2639, 7
        %v2641 = vsub.s32 %v2638, %v2640
        %v2642 = vrot.slane %v2635, %v2641
        %v2643 = vcombine.low %v2631, %v2632
        %v2645 = vunpack.c.l.s4 1983009808
        %v2646 = vunpack.c.0.s8 %v2645
        %v2647 = vlaneseq
        %v2648 = vshrl.u32 %v2647, 7
        %v2649 = vsub.s32 %v2646, %v2648
        %v2650 = vrot.slane %v2643, %v2649
        %v2651 = vcombine.low %v2623, %v2630
        %v2653 = vunpack.c.l.s4 1983009808
        %v2654 = vunpack.c.0.s8 %v2653
        %v2655 = vlaneseq
        %v2656 = vshrl.u32 %v2655, 7
        %v2657 = vsub.s32 %v2654, %v2656
        %v2658 = vrot.slane %v2651, %v2657
        %v2659 = vcombine.low %v2633, %v2634
        %v2661 = vunpack.c.l.s4 1983009808
        %v2662 = vunpack.c.0.s8 %v2661
        %v2663 = vlaneseq
        %v2664 = vshrl.u32 %v2663, 7
        %v2665 = vsub.s32 %v2662, %v2664
        %v2666 = vrot.slane %v2659, %v2665
        %v2667 = vcombine.low %v2642, %v2650
        %v2669 = vunpack.c.l.s4 1934713408
        %v2670 = vunpack.c.0.s8 %v2669
        %v2671 = vlaneseq
        %v2672 = vshrl.u32 %v2671, 7
        %v2673 = vsub.s32 %v2670, %v2672
        %v2674 = vrot.slane %v2667, %v2673
        %v2675 = vcombine.low %v2658, %v2666
        %v2677 = vunpack.c.l.s4 1934713408
        %v2678 = vunpack.c.0.s8 %v2677
        %v2679 = vlaneseq
        %v2680 = vshrl.u32 %v2679, 7
        %v2681 = vsub.s32 %v2678, %v2680
        %v2682 = vrot.slane %v2675, %v2681
        %v2683 = vcombine.low %v2674, %v2682
        %v2684 = vcombine.high %v2674, %v2682
        %v2685 = vpack.c.bf16 %v2683, %v2683
        %v2686 = vpack.c.bf16 %v2684, %v2684
        %v2687 = vld [vmem:[#allocation13] sm:$0xff]
        %v2688 = vld [vmem:[#allocation13 + $0x8] sm:$0xff]
        %v2689 = vld [vmem:[#allocation13 + $0x10] sm:$0xff]
        %v2690 = vld [vmem:[#allocation13 + $0x18] sm:$0xff]
        %v2691 = vld [vmem:[#allocation13 + $0x20] sm:$0xff]
        %v2692 = vld [vmem:[#allocation13 + $0x28] sm:$0xff]
        %v2693 = vld [vmem:[#allocation13 + $0x30] sm:$0xff]
        %v2694 = vld [vmem:[#allocation13 + $0x38] sm:$0xff]
        %v2695 = vld [vmem:[#allocation13 + $0x40] sm:$0xff]
        %v2696 = vld [vmem:[#allocation13 + $0x48] sm:$0xff]
        %v2697 = vld [vmem:[#allocation13 + $0x50] sm:$0xff]
        %v2698 = vld [vmem:[#allocation13 + $0x58] sm:$0xff]
        %v2699 = vld [vmem:[#allocation13 + $0x60] sm:$0xff]
        %v2700 = vld [vmem:[#allocation13 + $0x68] sm:$0xff]
        %v2701 = vld [vmem:[#allocation13 + $0x70] sm:$0xff]
        %v2702 = vld [vmem:[#allocation13 + $0x78] sm:$0xff]
        %v2703 = vld [vmem:[#allocation13 + $0x80] sm:$0xff]
        %v2704 = vld [vmem:[#allocation13 + $0x88] sm:$0xff]
        %v2705 = vld [vmem:[#allocation13 + $0x90] sm:$0xff]
        %v2706 = vld [vmem:[#allocation13 + $0x98] sm:$0xff]
        %v2707 = vld [vmem:[#allocation13 + $0xa0] sm:$0xff]
        %v2708 = vld [vmem:[#allocation13 + $0xa8] sm:$0xff]
        %v2709 = vld [vmem:[#allocation13 + $0xb0] sm:$0xff]
        %v2710 = vld [vmem:[#allocation13 + $0xb8] sm:$0xff]
        %v2711 = vld [vmem:[#allocation13 + $0xc0] sm:$0xff]
        %v2712 = vld [vmem:[#allocation13 + $0xc8] sm:$0xff]
        %v2713 = vld [vmem:[#allocation13 + $0xd0] sm:$0xff]
        %v2714 = vld [vmem:[#allocation13 + $0xd8] sm:$0xff]
        %v2715 = vld [vmem:[#allocation13 + $0xe0] sm:$0xff]
        %v2716 = vld [vmem:[#allocation13 + $0xe8] sm:$0xff]
        %v2717 = vld [vmem:[#allocation13 + $0xf0] sm:$0xff]
        %v2718 = vld [vmem:[#allocation13 + $0xf8] sm:$0xff]
        %v2719 = vld [vmem:[%s9] sm:$0x3]
        %v2721 = vlaneseq
        %v2722 = vshrl.u32 %v2721, 7
        %v2723 = vsub.s32 0, %v2722
        %v2724 = vrot.slane %v2719, %v2723
        %v2725 = vlaneseq
        %v2726 = vshrl.u32 %v2725, 7
        %v2727 = vsub.s32 1, %v2726
        %v2728 = vrot.slane %v2719, %v2727
        %v2763 = vunpack.c.l.b16 %v2687
        %v2764 = vunpack.c.h.b16 %v2687
        %v2765 = vunpack.c.l.b16 %v2688
        %v2766 = vunpack.c.h.b16 %v2688
        %v2767 = vunpack.c.l.b16 %v2689
        %v2768 = vunpack.c.h.b16 %v2689
        %v2769 = vunpack.c.l.b16 %v2690
        %v2770 = vunpack.c.h.b16 %v2690
        %v2771 = vunpack.c.l.b16 %v2691
        %v2772 = vunpack.c.h.b16 %v2691
        %v2773 = vunpack.c.l.b16 %v2692
        %v2774 = vunpack.c.h.b16 %v2692
        %v2775 = vunpack.c.l.b16 %v2693
        %v2776 = vunpack.c.h.b16 %v2693
        %v2777 = vunpack.c.l.b16 %v2694
        %v2778 = vunpack.c.h.b16 %v2694
        %v2779 = vunpack.c.l.b16 %v2695
        %v2780 = vunpack.c.h.b16 %v2695
        %v2781 = vunpack.c.l.b16 %v2696
        %v2782 = vunpack.c.h.b16 %v2696
        %v2783 = vunpack.c.l.b16 %v2697
        %v2784 = vunpack.c.h.b16 %v2697
        %v2785 = vunpack.c.l.b16 %v2698
        %v2786 = vunpack.c.h.b16 %v2698
        %v2787 = vunpack.c.l.b16 %v2699
        %v2788 = vunpack.c.h.b16 %v2699
        %v2789 = vunpack.c.l.b16 %v2700
        %v2790 = vunpack.c.h.b16 %v2700
        %v2791 = vunpack.c.l.b16 %v2701
        %v2792 = vunpack.c.h.b16 %v2701
        %v2793 = vunpack.c.l.b16 %v2702
        %v2794 = vunpack.c.h.b16 %v2702
        %v2795 = vunpack.c.l.b16 %v2703
        %v2796 = vunpack.c.h.b16 %v2703
        %v2797 = vunpack.c.l.b16 %v2704
        %v2798 = vunpack.c.h.b16 %v2704
        %v2799 = vunpack.c.l.b16 %v2705
        %v2800 = vunpack.c.h.b16 %v2705
        %v2801 = vunpack.c.l.b16 %v2706
        %v2802 = vunpack.c.h.b16 %v2706
        %v2803 = vunpack.c.l.b16 %v2707
        %v2804 = vunpack.c.h.b16 %v2707
        %v2805 = vunpack.c.l.b16 %v2708
        %v2806 = vunpack.c.h.b16 %v2708
        %v2807 = vunpack.c.l.b16 %v2709
        %v2808 = vunpack.c.h.b16 %v2709
        %v2809 = vunpack.c.l.b16 %v2710
        %v2810 = vunpack.c.h.b16 %v2710
        %v2811 = vunpack.c.l.b16 %v2711
        %v2812 = vunpack.c.h.b16 %v2711
        %v2813 = vunpack.c.l.b16 %v2712
        %v2814 = vunpack.c.h.b16 %v2712
        %v2815 = vunpack.c.l.b16 %v2713
        %v2816 = vunpack.c.h.b16 %v2713
        %v2817 = vunpack.c.l.b16 %v2714
        %v2818 = vunpack.c.h.b16 %v2714
        %v2819 = vunpack.c.l.b16 %v2715
        %v2820 = vunpack.c.h.b16 %v2715
        %v2821 = vunpack.c.l.b16 %v2716
        %v2822 = vunpack.c.h.b16 %v2716
        %v2823 = vunpack.c.l.b16 %v2717
        %v2824 = vunpack.c.h.b16 %v2717
        %v2825 = vunpack.c.l.b16 %v2718
        %v2826 = vunpack.c.h.b16 %v2718
        %v2827 = vpack.c.b16 %v2765, %v2763
        %v2828 = vpack.c.b16 %v2766, %v2764
        %v2829 = vpack.c.b16 %v2769, %v2767
        %v2830 = vpack.c.b16 %v2770, %v2768
        %v2831 = vpack.c.b16 %v2773, %v2771
        %v2832 = vpack.c.b16 %v2774, %v2772
        %v2833 = vpack.c.b16 %v2777, %v2775
        %v2834 = vpack.c.b16 %v2778, %v2776
        %v2835 = vpack.c.b16 %v2781, %v2779
        %v2836 = vpack.c.b16 %v2782, %v2780
        %v2837 = vpack.c.b16 %v2785, %v2783
        %v2838 = vpack.c.b16 %v2786, %v2784
        %v2839 = vpack.c.b16 %v2789, %v2787
        %v2840 = vpack.c.b16 %v2790, %v2788
        %v2841 = vpack.c.b16 %v2793, %v2791
        %v2842 = vpack.c.b16 %v2794, %v2792
        %v2843 = vpack.c.b16 %v2797, %v2795
        %v2844 = vpack.c.b16 %v2798, %v2796
        %v2845 = vpack.c.b16 %v2801, %v2799
        %v2846 = vpack.c.b16 %v2802, %v2800
        %v2847 = vpack.c.b16 %v2805, %v2803
        %v2848 = vpack.c.b16 %v2806, %v2804
        %v2849 = vpack.c.b16 %v2809, %v2807
        %v2850 = vpack.c.b16 %v2810, %v2808
        %v2851 = vpack.c.b16 %v2813, %v2811
        %v2852 = vpack.c.b16 %v2814, %v2812
        %v2853 = vpack.c.b16 %v2817, %v2815
        %v2854 = vpack.c.b16 %v2818, %v2816
        %v2855 = vpack.c.b16 %v2821, %v2819
        %v2856 = vpack.c.b16 %v2822, %v2820
        %v2857 = vpack.c.b16 %v2825, %v2823
        %v2858 = vpack.c.b16 %v2826, %v2824
        %2891 = vmatprep.subr.bf16.mxu0 %v2842
        %2892 = vmatpush1.bf16.msra.mxu0 %v2841
        %2893 = vmatprep.subr.bf16.mxu0 %v2840
        %2894 = vmatpush1.bf16.msra.mxu0 %v2839
        %2895 = vmatprep.subr.bf16.mxu0 %v2838
        %2896 = vmatpush1.bf16.msra.mxu0 %v2837
        %2897 = vmatprep.subr.bf16.mxu0 %v2836
        %2898 = vmatpush1.bf16.msra.mxu0 %v2835
        %2899 = vmatprep.subr.bf16.mxu0 %v2834
        %2900 = vmatpush1.bf16.msra.mxu0 %v2833
        %2901 = vmatprep.subr.bf16.mxu0 %v2832
        %2902 = vmatpush1.bf16.msra.mxu0 %v2831
        %2903 = vmatprep.subr.bf16.mxu0 %v2830
        %2904 = vmatpush1.bf16.msra.mxu0 %v2829
        %2905 = vmatprep.subr.bf16.mxu0 %v2828
        %2906 = vmatpush1.bf16.msra.mxu0 %v2827
        %2907 = vmatprep.subr.bf16.mxu0 %v2858
        %2908 = vmatpush2.bf16.msra.mxu0 %v2857
        %2909 = vmatprep.subr.bf16.mxu0 %v2856
        %2910 = vmatpush2.bf16.msra.mxu0 %v2855
        %2911 = vmatprep.subr.bf16.mxu0 %v2854
        %2912 = vmatpush2.bf16.msra.mxu0 %v2853
        %2913 = vmatprep.subr.bf16.mxu0 %v2852
        %2914 = vmatpush2.bf16.msra.mxu0 %v2851
        %2915 = vmatprep.subr.bf16.mxu0 %v2850
        %2916 = vmatpush2.bf16.msra.mxu0 %v2849
        %2917 = vmatprep.subr.bf16.mxu0 %v2848
        %2918 = vmatpush2.bf16.msra.mxu0 %v2847
        %2919 = vmatprep.subr.bf16.mxu0 %v2846
        %2920 = vmatpush2.bf16.msra.mxu0 %v2845
        %2921 = vmatprep.subr.bf16.mxu0 %v2844
        %2922 = vmatpush2.bf16.msra.mxu0 %v2843
        %2923 = vmatprep.mubr.bf16.mxu0 %v2686
        %2924 = vmatmul.mubr.bf16.gmra.mxu0 %v2685
        %v2925 = vpop.f32.mrf.mxu0
        %v2926 = vadd.f32 %v2724, %v2925
        %v2927 = vpop.f32.mrf.mxu0
        %v2928 = vadd.f32 %v2728, %v2927
        %v2929 = vpop.f32.mrf.mxu0
        %v2930 = vpop.f32.mrf.mxu0
        %2931 = vdwg.mxu0
        %v2932 = vadd.f32 %v1752, %v2926
        %v2933 = vadd.f32 %v1753, %v2928
        %v2934 = vld [vmem:[%s10] sm:$0x3]
        %v2935 = vld [vmem:[%s11] sm:$0x3]
        %v2936 = vadd.f32 %v2932, %v2933
        %2937 = vadd.xlane.f32.xlu0 %v2936
        %v2938 = vpop.xlane.xlu0 %2937
        %v2939 = vrcp.pop 256.0
        %v2940 = vmul.f32 %v2938, %v2939
        %v2941 = vsub.f32 %v2932, %v2940
        %v2942 = vsub.f32 %v2933, %v2940
        %v2943 = vmul.f32 %v2941, %v2941
        %v2944 = vmul.f32 %v2942, %v2942
        %v2945 = vadd.f32 %v2943, %v2944
        %2946 = vadd.xlane.f32.xlu0 %v2945
        %v2947 = vpop.xlane.xlu0 %2946
        %v2948 = vmul.f32 %v2947, %v2939
        %v2949 = vadd.f32 %v2948, 1e-05
        %v2950 = vrsqrt.pop %v2949
        %v2951 = vmul.f32 %v2941, %v2950
        %v2952 = vmul.f32 %v2942, %v2950
        %v2954 = vlaneseq
        %v2955 = vshrl.u32 %v2954, 7
        %v2956 = vsub.s32 0, %v2955
        %v2957 = vrot.slane %v2934, %v2956
        %v2958 = vlaneseq
        %v2959 = vshrl.u32 %v2958, 7
        %v2960 = vsub.s32 1, %v2959
        %v2961 = vrot.slane %v2934, %v2960
        %v2964 = vmul.f32 %v2957, %v2951
        %v2965 = vmul.f32 %v2961, %v2952
        %v2967 = vlaneseq
        %v2968 = vshrl.u32 %v2967, 7
        %v2969 = vsub.s32 0, %v2968
        %v2970 = vrot.slane %v2935, %v2969
        %v2971 = vlaneseq
        %v2972 = vshrl.u32 %v2971, 7
        %v2973 = vsub.s32 1, %v2972
        %v2974 = vrot.slane %v2935, %v2973
        %v2977 = vadd.f32 %v2964, %v2970
        %v2978 = vadd.f32 %v2965, %v2974
        %v2979 = vpack.c.bf16 %v2977, %v2977
        %v2980 = vpack.c.bf16 %v2978, %v2978
        %v2981 = vld [vmem:[#allocation15] sm:$0xff]
        %v2982 = vld [vmem:[#allocation15 + $0x8] sm:$0xff]
        %v2983 = vld [vmem:[#allocation15 + $0x10] sm:$0xff]
        %v2984 = vld [vmem:[#allocation15 + $0x18] sm:$0xff]
        %v2985 = vld [vmem:[#allocation15 + $0x20] sm:$0xff]
        %v2986 = vld [vmem:[#allocation15 + $0x28] sm:$0xff]
        %v2987 = vld [vmem:[#allocation15 + $0x30] sm:$0xff]
        %v2988 = vld [vmem:[#allocation15 + $0x38] sm:$0xff]
        %v2989 = vld [vmem:[#allocation15 + $0x40] sm:$0xff]
        %v2990 = vld [vmem:[#allocation15 + $0x48] sm:$0xff]
        %v2991 = vld [vmem:[#allocation15 + $0x50] sm:$0xff]
        %v2992 = vld [vmem:[#allocation15 + $0x58] sm:$0xff]
        %v2993 = vld [vmem:[#allocation15 + $0x60] sm:$0xff]
        %v2994 = vld [vmem:[#allocation15 + $0x68] sm:$0xff]
        %v2995 = vld [vmem:[#allocation15 + $0x70] sm:$0xff]
        %v2996 = vld [vmem:[#allocation15 + $0x78] sm:$0xff]
        %v2997 = vld [vmem:[#allocation15 + $0x80] sm:$0xff]
        %v2998 = vld [vmem:[#allocation15 + $0x88] sm:$0xff]
        %v2999 = vld [vmem:[#allocation15 + $0x90] sm:$0xff]
        %v3000 = vld [vmem:[#allocation15 + $0x98] sm:$0xff]
        %v3001 = vld [vmem:[#allocation15 + $0xa0] sm:$0xff]
        %v3002 = vld [vmem:[#allocation15 + $0xa8] sm:$0xff]
        %v3003 = vld [vmem:[#allocation15 + $0xb0] sm:$0xff]
        %v3004 = vld [vmem:[#allocation15 + $0xb8] sm:$0xff]
        %v3005 = vld [vmem:[#allocation15 + $0xc0] sm:$0xff]
        %v3006 = vld [vmem:[#allocation15 + $0xc8] sm:$0xff]
        %v3007 = vld [vmem:[#allocation15 + $0xd0] sm:$0xff]
        %v3008 = vld [vmem:[#allocation15 + $0xd8] sm:$0xff]
        %v3009 = vld [vmem:[#allocation15 + $0xe0] sm:$0xff]
        %v3010 = vld [vmem:[#allocation15 + $0xe8] sm:$0xff]
        %v3011 = vld [vmem:[#allocation15 + $0xf0] sm:$0xff]
        %v3012 = vld [vmem:[#allocation15 + $0xf8] sm:$0xff]
        %v3013 = vld [vmem:[#allocation15 + $0x100] sm:$0xff]
        %v3014 = vld [vmem:[#allocation15 + $0x108] sm:$0xff]
        %v3015 = vld [vmem:[#allocation15 + $0x110] sm:$0xff]
        %v3016 = vld [vmem:[#allocation15 + $0x118] sm:$0xff]
        %v3017 = vld [vmem:[#allocation15 + $0x120] sm:$0xff]
        %v3018 = vld [vmem:[#allocation15 + $0x128] sm:$0xff]
        %v3019 = vld [vmem:[#allocation15 + $0x130] sm:$0xff]
        %v3020 = vld [vmem:[#allocation15 + $0x138] sm:$0xff]
        %v3021 = vld [vmem:[#allocation15 + $0x140] sm:$0xff]
        %v3022 = vld [vmem:[#allocation15 + $0x148] sm:$0xff]
        %v3023 = vld [vmem:[#allocation15 + $0x150] sm:$0xff]
        %v3024 = vld [vmem:[#allocation15 + $0x158] sm:$0xff]
        %v3025 = vld [vmem:[#allocation15 + $0x160] sm:$0xff]
        %v3026 = vld [vmem:[#allocation15 + $0x168] sm:$0xff]
        %v3027 = vld [vmem:[#allocation15 + $0x170] sm:$0xff]
        %v3028 = vld [vmem:[#allocation15 + $0x178] sm:$0xff]
        %v3029 = vld [vmem:[#allocation15 + $0x180] sm:$0xff]
        %v3030 = vld [vmem:[#allocation15 + $0x188] sm:$0xff]
        %v3031 = vld [vmem:[#allocation15 + $0x190] sm:$0xff]
        %v3032 = vld [vmem:[#allocation15 + $0x198] sm:$0xff]
        %v3033 = vld [vmem:[#allocation15 + $0x1a0] sm:$0xff]
        %v3034 = vld [vmem:[#allocation15 + $0x1a8] sm:$0xff]
        %v3035 = vld [vmem:[#allocation15 + $0x1b0] sm:$0xff]
        %v3036 = vld [vmem:[#allocation15 + $0x1b8] sm:$0xff]
        %v3037 = vld [vmem:[#allocation15 + $0x1c0] sm:$0xff]
        %v3038 = vld [vmem:[#allocation15 + $0x1c8] sm:$0xff]
        %v3039 = vld [vmem:[#allocation15 + $0x1d0] sm:$0xff]
        %v3040 = vld [vmem:[#allocation15 + $0x1d8] sm:$0xff]
        %v3041 = vld [vmem:[#allocation15 + $0x1e0] sm:$0xff]
        %v3042 = vld [vmem:[#allocation15 + $0x1e8] sm:$0xff]
        %v3043 = vld [vmem:[#allocation15 + $0x1f0] sm:$0xff]
        %v3044 = vld [vmem:[#allocation15 + $0x1f8] sm:$0xff]
        %v3045 = vld [vmem:[%s13] sm:$0xf]
        %v3047 = vlaneseq
        %v3048 = vshrl.u32 %v3047, 7
        %v3049 = vsub.s32 0, %v3048
        %v3050 = vrot.slane %v3045, %v3049
        %v3051 = vlaneseq
        %v3052 = vshrl.u32 %v3051, 7
        %v3053 = vsub.s32 1, %v3052
        %v3054 = vrot.slane %v3045, %v3053
        %v3055 = vlaneseq
        %v3056 = vshrl.u32 %v3055, 7
        %v3057 = vsub.s32 2, %v3056
        %v3058 = vrot.slane %v3045, %v3057
        %v3059 = vlaneseq
        %v3060 = vshrl.u32 %v3059, 7
        %v3061 = vsub.s32 3, %v3060
        %v3062 = vrot.slane %v3045, %v3061
        %v3131 = vunpack.c.l.b16 %v2981
        %v3132 = vunpack.c.h.b16 %v2981
        %v3133 = vunpack.c.l.b16 %v2982
        %v3134 = vunpack.c.h.b16 %v2982
        %v3135 = vunpack.c.l.b16 %v2983
        %v3136 = vunpack.c.h.b16 %v2983
        %v3137 = vunpack.c.l.b16 %v2984
        %v3138 = vunpack.c.h.b16 %v2984
        %v3139 = vunpack.c.l.b16 %v2985
        %v3140 = vunpack.c.h.b16 %v2985
        %v3141 = vunpack.c.l.b16 %v2986
        %v3142 = vunpack.c.h.b16 %v2986
        %v3143 = vunpack.c.l.b16 %v2987
        %v3144 = vunpack.c.h.b16 %v2987
        %v3145 = vunpack.c.l.b16 %v2988
        %v3146 = vunpack.c.h.b16 %v2988
        %v3147 = vunpack.c.l.b16 %v2989
        %v3148 = vunpack.c.h.b16 %v2989
        %v3149 = vunpack.c.l.b16 %v2990
        %v3150 = vunpack.c.h.b16 %v2990
        %v3151 = vunpack.c.l.b16 %v2991
        %v3152 = vunpack.c.h.b16 %v2991
        %v3153 = vunpack.c.l.b16 %v2992
        %v3154 = vunpack.c.h.b16 %v2992
        %v3155 = vunpack.c.l.b16 %v2993
        %v3156 = vunpack.c.h.b16 %v2993
        %v3157 = vunpack.c.l.b16 %v2994
        %v3158 = vunpack.c.h.b16 %v2994
        %v3159 = vunpack.c.l.b16 %v2995
        %v3160 = vunpack.c.h.b16 %v2995
        %v3161 = vunpack.c.l.b16 %v2996
        %v3162 = vunpack.c.h.b16 %v2996
        %v3163 = vunpack.c.l.b16 %v2997
        %v3164 = vunpack.c.h.b16 %v2997
        %v3165 = vunpack.c.l.b16 %v2998
        %v3166 = vunpack.c.h.b16 %v2998
        %v3167 = vunpack.c.l.b16 %v2999
        %v3168 = vunpack.c.h.b16 %v2999
        %v3169 = vunpack.c.l.b16 %v3000
        %v3170 = vunpack.c.h.b16 %v3000
        %v3171 = vunpack.c.l.b16 %v3001
        %v3172 = vunpack.c.h.b16 %v3001
        %v3173 = vunpack.c.l.b16 %v3002
        %v3174 = vunpack.c.h.b16 %v3002
        %v3175 = vunpack.c.l.b16 %v3003
        %v3176 = vunpack.c.h.b16 %v3003
        %v3177 = vunpack.c.l.b16 %v3004
        %v3178 = vunpack.c.h.b16 %v3004
        %v3179 = vunpack.c.l.b16 %v3005
        %v3180 = vunpack.c.h.b16 %v3005
        %v3181 = vunpack.c.l.b16 %v3006
        %v3182 = vunpack.c.h.b16 %v3006
        %v3183 = vunpack.c.l.b16 %v3007
        %v3184 = vunpack.c.h.b16 %v3007
        %v3185 = vunpack.c.l.b16 %v3008
        %v3186 = vunpack.c.h.b16 %v3008
        %v3187 = vunpack.c.l.b16 %v3009
        %v3188 = vunpack.c.h.b16 %v3009
        %v3189 = vunpack.c.l.b16 %v3010
        %v3190 = vunpack.c.h.b16 %v3010
        %v3191 = vunpack.c.l.b16 %v3011
        %v3192 = vunpack.c.h.b16 %v3011
        %v3193 = vunpack.c.l.b16 %v3012
        %v3194 = vunpack.c.h.b16 %v3012
        %v3195 = vunpack.c.l.b16 %v3013
        %v3196 = vunpack.c.h.b16 %v3013
        %v3197 = vunpack.c.l.b16 %v3014
        %v3198 = vunpack.c.h.b16 %v3014
        %v3199 = vunpack.c.l.b16 %v3015
        %v3200 = vunpack.c.h.b16 %v3015
        %v3201 = vunpack.c.l.b16 %v3016
        %v3202 = vunpack.c.h.b16 %v3016
        %v3203 = vunpack.c.l.b16 %v3017
        %v3204 = vunpack.c.h.b16 %v3017
        %v3205 = vunpack.c.l.b16 %v3018
        %v3206 = vunpack.c.h.b16 %v3018
        %v3207 = vunpack.c.l.b16 %v3019
        %v3208 = vunpack.c.h.b16 %v3019
        %v3209 = vunpack.c.l.b16 %v3020
        %v3210 = vunpack.c.h.b16 %v3020
        %v3211 = vunpack.c.l.b16 %v3021
        %v3212 = vunpack.c.h.b16 %v3021
        %v3213 = vunpack.c.l.b16 %v3022
        %v3214 = vunpack.c.h.b16 %v3022
        %v3215 = vunpack.c.l.b16 %v3023
        %v3216 = vunpack.c.h.b16 %v3023
        %v3217 = vunpack.c.l.b16 %v3024
        %v3218 = vunpack.c.h.b16 %v3024
        %v3219 = vunpack.c.l.b16 %v3025
        %v3220 = vunpack.c.h.b16 %v3025
        %v3221 = vunpack.c.l.b16 %v3026
        %v3222 = vunpack.c.h.b16 %v3026
        %v3223 = vunpack.c.l.b16 %v3027
        %v3224 = vunpack.c.h.b16 %v3027
        %v3225 = vunpack.c.l.b16 %v3028
        %v3226 = vunpack.c.h.b16 %v3028
        %v3227 = vunpack.c.l.b16 %v3029
        %v3228 = vunpack.c.h.b16 %v3029
        %v3229 = vunpack.c.l.b16 %v3030
        %v3230 = vunpack.c.h.b16 %v3030
        %v3231 = vunpack.c.l.b16 %v3031
        %v3232 = vunpack.c.h.b16 %v3031
        %v3233 = vunpack.c.l.b16 %v3032
        %v3234 = vunpack.c.h.b16 %v3032
        %v3235 = vunpack.c.l.b16 %v3033
        %v3236 = vunpack.c.h.b16 %v3033
        %v3237 = vunpack.c.l.b16 %v3034
        %v3238 = vunpack.c.h.b16 %v3034
        %v3239 = vunpack.c.l.b16 %v3035
        %v3240 = vunpack.c.h.b16 %v3035
        %v3241 = vunpack.c.l.b16 %v3036
        %v3242 = vunpack.c.h.b16 %v3036
        %v3243 = vunpack.c.l.b16 %v3037
        %v3244 = vunpack.c.h.b16 %v3037
        %v3245 = vunpack.c.l.b16 %v3038
        %v3246 = vunpack.c.h.b16 %v3038
        %v3247 = vunpack.c.l.b16 %v3039
        %v3248 = vunpack.c.h.b16 %v3039
        %v3249 = vunpack.c.l.b16 %v3040
        %v3250 = vunpack.c.h.b16 %v3040
        %v3251 = vunpack.c.l.b16 %v3041
        %v3252 = vunpack.c.h.b16 %v3041
        %v3253 = vunpack.c.l.b16 %v3042
        %v3254 = vunpack.c.h.b16 %v3042
        %v3255 = vunpack.c.l.b16 %v3043
        %v3256 = vunpack.c.h.b16 %v3043
        %v3257 = vunpack.c.l.b16 %v3044
        %v3258 = vunpack.c.h.b16 %v3044
        %v3259 = vpack.c.b16 %v3135, %v3131
        %v3260 = vpack.c.b16 %v3136, %v3132
        %v3261 = vpack.c.b16 %v3137, %v3133
        %v3262 = vpack.c.b16 %v3138, %v3134
        %v3263 = vpack.c.b16 %v3143, %v3139
        %v3264 = vpack.c.b16 %v3144, %v3140
        %v3265 = vpack.c.b16 %v3145, %v3141
        %v3266 = vpack.c.b16 %v3146, %v3142
        %v3267 = vpack.c.b16 %v3151, %v3147
        %v3268 = vpack.c.b16 %v3152, %v3148
        %v3269 = vpack.c.b16 %v3153, %v3149
        %v3270 = vpack.c.b16 %v3154, %v3150
        %v3271 = vpack.c.b16 %v3159, %v3155
        %v3272 = vpack.c.b16 %v3160, %v3156
        %v3273 = vpack.c.b16 %v3161, %v3157
        %v3274 = vpack.c.b16 %v3162, %v3158
        %v3275 = vpack.c.b16 %v3167, %v3163
        %v3276 = vpack.c.b16 %v3168, %v3164
        %v3277 = vpack.c.b16 %v3169, %v3165
        %v3278 = vpack.c.b16 %v3170, %v3166
        %v3279 = vpack.c.b16 %v3175, %v3171
        %v3280 = vpack.c.b16 %v3176, %v3172
        %v3281 = vpack.c.b16 %v3177, %v3173
        %v3282 = vpack.c.b16 %v3178, %v3174
        %v3283 = vpack.c.b16 %v3183, %v3179
        %v3284 = vpack.c.b16 %v3184, %v3180
        %v3285 = vpack.c.b16 %v3185, %v3181
        %v3286 = vpack.c.b16 %v3186, %v3182
        %v3287 = vpack.c.b16 %v3191, %v3187
        %v3288 = vpack.c.b16 %v3192, %v3188
        %v3289 = vpack.c.b16 %v3193, %v3189
        %v3290 = vpack.c.b16 %v3194, %v3190
        %v3291 = vpack.c.b16 %v3199, %v3195
        %v3292 = vpack.c.b16 %v3200, %v3196
        %v3293 = vpack.c.b16 %v3201, %v3197
        %v3294 = vpack.c.b16 %v3202, %v3198
        %v3295 = vpack.c.b16 %v3207, %v3203
        %v3296 = vpack.c.b16 %v3208, %v3204
        %v3297 = vpack.c.b16 %v3209, %v3205
        %v3298 = vpack.c.b16 %v3210, %v3206
        %v3299 = vpack.c.b16 %v3215, %v3211
        %v3300 = vpack.c.b16 %v3216, %v3212
        %v3301 = vpack.c.b16 %v3217, %v3213
        %v3302 = vpack.c.b16 %v3218, %v3214
        %v3303 = vpack.c.b16 %v3223, %v3219
        %v3304 = vpack.c.b16 %v3224, %v3220
        %v3305 = vpack.c.b16 %v3225, %v3221
        %v3306 = vpack.c.b16 %v3226, %v3222
        %v3307 = vpack.c.b16 %v3231, %v3227
        %v3308 = vpack.c.b16 %v3232, %v3228
        %v3309 = vpack.c.b16 %v3233, %v3229
        %v3310 = vpack.c.b16 %v3234, %v3230
        %v3311 = vpack.c.b16 %v3239, %v3235
        %v3312 = vpack.c.b16 %v3240, %v3236
        %v3313 = vpack.c.b16 %v3241, %v3237
        %v3314 = vpack.c.b16 %v3242, %v3238
        %v3315 = vpack.c.b16 %v3247, %v3243
        %v3316 = vpack.c.b16 %v3248, %v3244
        %v3317 = vpack.c.b16 %v3249, %v3245
        %v3318 = vpack.c.b16 %v3250, %v3246
        %v3319 = vpack.c.b16 %v3255, %v3251
        %v3320 = vpack.c.b16 %v3256, %v3252
        %v3321 = vpack.c.b16 %v3257, %v3253
        %v3322 = vpack.c.b16 %v3258, %v3254
        %3387 = vmatprep.subr.bf16.mxu0 %v3288
        %3388 = vmatpush1.bf16.msra.mxu0 %v3287
        %3389 = vmatprep.subr.bf16.mxu0 %v3284
        %3390 = vmatpush1.bf16.msra.mxu0 %v3283
        %3391 = vmatprep.subr.bf16.mxu0 %v3280
        %3392 = vmatpush1.bf16.msra.mxu0 %v3279
        %3393 = vmatprep.subr.bf16.mxu0 %v3276
        %3394 = vmatpush1.bf16.msra.mxu0 %v3275
        %3395 = vmatprep.subr.bf16.mxu0 %v3272
        %3396 = vmatpush1.bf16.msra.mxu0 %v3271
        %3397 = vmatprep.subr.bf16.mxu0 %v3268
        %3398 = vmatpush1.bf16.msra.mxu0 %v3267
        %3399 = vmatprep.subr.bf16.mxu0 %v3264
        %3400 = vmatpush1.bf16.msra.mxu0 %v3263
        %3401 = vmatprep.subr.bf16.mxu0 %v3260
        %3402 = vmatpush1.bf16.msra.mxu0 %v3259
        %3403 = vmatprep.subr.bf16.mxu0 %v3320
        %3404 = vmatpush2.bf16.msra.mxu0 %v3319
        %3405 = vmatprep.subr.bf16.mxu0 %v3316
        %3406 = vmatpush2.bf16.msra.mxu0 %v3315
        %3407 = vmatprep.subr.bf16.mxu0 %v3312
        %3408 = vmatpush2.bf16.msra.mxu0 %v3311
        %3409 = vmatprep.subr.bf16.mxu0 %v3308
        %3410 = vmatpush2.bf16.msra.mxu0 %v3307
        %3411 = vmatprep.subr.bf16.mxu0 %v3304
        %3412 = vmatpush2.bf16.msra.mxu0 %v3303
        %3413 = vmatprep.subr.bf16.mxu0 %v3300
        %3414 = vmatpush2.bf16.msra.mxu0 %v3299
        %3415 = vmatprep.subr.bf16.mxu0 %v3296
        %3416 = vmatpush2.bf16.msra.mxu0 %v3295
        %3417 = vmatprep.subr.bf16.mxu0 %v3292
        %3418 = vmatpush2.bf16.msra.mxu0 %v3291
        %3419 = vmatprep.mubr.bf16.mxu0 %v2980
        %3420 = vmatmul.mubr.bf16.gmra.mxu0 %v2979
        %v3421 = vpop.f32.mrf.mxu0
        %v3422 = vadd.f32 %v3050, %v3421
        %v3423 = vpop.f32.mrf.mxu0
        %v3424 = vadd.f32 %v3054, %v3423
        %v3425 = vpop.f32.mrf.mxu0
        %v3426 = vpop.f32.mrf.mxu0
        %3427 = vdwg.mxu0
        %3428 = vmatprep.subr.bf16.mxu0 %v3290
        %3429 = vmatpush1.bf16.msra.mxu0 %v3289
        %3430 = vmatprep.subr.bf16.mxu0 %v3286
        %3431 = vmatpush1.bf16.msra.mxu0 %v3285
        %3432 = vmatprep.subr.bf16.mxu0 %v3282
        %3433 = vmatpush1.bf16.msra.mxu0 %v3281
        %3434 = vmatprep.subr.bf16.mxu0 %v3278
        %3435 = vmatpush1.bf16.msra.mxu0 %v3277
        %3436 = vmatprep.subr.bf16.mxu0 %v3274
        %3437 = vmatpush1.bf16.msra.mxu0 %v3273
        %3438 = vmatprep.subr.bf16.mxu0 %v3270
        %3439 = vmatpush1.bf16.msra.mxu0 %v3269
        %3440 = vmatprep.subr.bf16.mxu0 %v3266
        %3441 = vmatpush1.bf16.msra.mxu0 %v3265
        %3442 = vmatprep.subr.bf16.mxu0 %v3262
        %3443 = vmatpush1.bf16.msra.mxu0 %v3261
        %3444 = vmatprep.subr.bf16.mxu0 %v3322
        %3445 = vmatpush2.bf16.msra.mxu0 %v3321
        %3446 = vmatprep.subr.bf16.mxu0 %v3318
        %3447 = vmatpush2.bf16.msra.mxu0 %v3317
        %3448 = vmatprep.subr.bf16.mxu0 %v3314
        %3449 = vmatpush2.bf16.msra.mxu0 %v3313
        %3450 = vmatprep.subr.bf16.mxu0 %v3310
        %3451 = vmatpush2.bf16.msra.mxu0 %v3309
        %3452 = vmatprep.subr.bf16.mxu0 %v3306
        %3453 = vmatpush2.bf16.msra.mxu0 %v3305
        %3454 = vmatprep.subr.bf16.mxu0 %v3302
        %3455 = vmatpush2.bf16.msra.mxu0 %v3301
        %3456 = vmatprep.subr.bf16.mxu0 %v3298
        %3457 = vmatpush2.bf16.msra.mxu0 %v3297
        %3458 = vmatprep.subr.bf16.mxu0 %v3294
        %3459 = vmatpush2.bf16.msra.mxu0 %v3293
        %3460 = vmatprep.mubr.bf16.mxu0 %v2980
        %3461 = vmatmul.mubr.bf16.gmra.mxu0 %v2979
        %v3462 = vpop.f32.mrf.mxu0
        %v3463 = vadd.f32 %v3058, %v3462
        %v3464 = vpop.f32.mrf.mxu0
        %v3465 = vadd.f32 %v3062, %v3464
        %v3466 = vpop.f32.mrf.mxu0
        %v3467 = vpop.f32.mrf.mxu0
        %3468 = vdwg.mxu0
        %v3469 = vmul.f32 %v3422, 0.5
        %v3470 = vmul.f32 %v3424, 0.5
        %v3471 = vmul.f32 %v3463, 0.5
        %v3472 = vmul.f32 %v3465, 0.5
        %v3473 = vmul.f32 %v3422, 0.70710677
        %v3474 = vmul.f32 %v3424, 0.70710677
        %v3475 = vmul.f32 %v3463, 0.70710677
        %v3476 = vmul.f32 %v3465, 0.70710677
        %v3477 = verf.f32.pop %v3473
        %v3478 = verf.f32.pop %v3474
        %v3479 = verf.f32.pop %v3475
        %v3480 = verf.f32.pop %v3476
        %v3481 = vadd.f32 %v3477, 1.0
        %v3482 = vadd.f32 %v3478, 1.0
        %v3483 = vadd.f32 %v3479, 1.0
        %v3484 = vadd.f32 %v3480, 1.0
        %v3485 = vmul.f32 %v3469, %v3481
        %v3486 = vmul.f32 %v3470, %v3482
        %v3487 = vmul.f32 %v3471, %v3483
        %v3488 = vmul.f32 %v3472, %v3484
        %v3489 = vpack.c.bf16 %v3485, %v3485
        %v3490 = vpack.c.bf16 %v3486, %v3486
        %v3491 = vpack.c.bf16 %v3487, %v3487
        %v3492 = vpack.c.bf16 %v3488, %v3488
        %v3493 = vld [vmem:[#allocation16] sm:$0xff]
        %v3494 = vld [vmem:[#allocation16 + $0x8] sm:$0xff]
        %v3495 = vld [vmem:[#allocation16 + $0x10] sm:$0xff]
        %v3496 = vld [vmem:[#allocation16 + $0x18] sm:$0xff]
        %v3497 = vld [vmem:[#allocation16 + $0x20] sm:$0xff]
        %v3498 = vld [vmem:[#allocation16 + $0x28] sm:$0xff]
        %v3499 = vld [vmem:[#allocation16 + $0x30] sm:$0xff]
        %v3500 = vld [vmem:[#allocation16 + $0x38] sm:$0xff]
        %v3501 = vld [vmem:[#allocation16 + $0x40] sm:$0xff]
        %v3502 = vld [vmem:[#allocation16 + $0x48] sm:$0xff]
        %v3503 = vld [vmem:[#allocation16 + $0x50] sm:$0xff]
        %v3504 = vld [vmem:[#allocation16 + $0x58] sm:$0xff]
        %v3505 = vld [vmem:[#allocation16 + $0x60] sm:$0xff]
        %v3506 = vld [vmem:[#allocation16 + $0x68] sm:$0xff]
        %v3507 = vld [vmem:[#allocation16 + $0x70] sm:$0xff]
        %v3508 = vld [vmem:[#allocation16 + $0x78] sm:$0xff]
        %v3509 = vld [vmem:[#allocation16 + $0x80] sm:$0xff]
        %v3510 = vld [vmem:[#allocation16 + $0x88] sm:$0xff]
        %v3511 = vld [vmem:[#allocation16 + $0x90] sm:$0xff]
        %v3512 = vld [vmem:[#allocation16 + $0x98] sm:$0xff]
        %v3513 = vld [vmem:[#allocation16 + $0xa0] sm:$0xff]
        %v3514 = vld [vmem:[#allocation16 + $0xa8] sm:$0xff]
        %v3515 = vld [vmem:[#allocation16 + $0xb0] sm:$0xff]
        %v3516 = vld [vmem:[#allocation16 + $0xb8] sm:$0xff]
        %v3517 = vld [vmem:[#allocation16 + $0xc0] sm:$0xff]
        %v3518 = vld [vmem:[#allocation16 + $0xc8] sm:$0xff]
        %v3519 = vld [vmem:[#allocation16 + $0xd0] sm:$0xff]
        %v3520 = vld [vmem:[#allocation16 + $0xd8] sm:$0xff]
        %v3521 = vld [vmem:[#allocation16 + $0xe0] sm:$0xff]
        %v3522 = vld [vmem:[#allocation16 + $0xe8] sm:$0xff]
        %v3523 = vld [vmem:[#allocation16 + $0xf0] sm:$0xff]
        %v3524 = vld [vmem:[#allocation16 + $0xf8] sm:$0xff]
        %v3525 = vld [vmem:[#allocation16 + $0x100] sm:$0xff]
        %v3526 = vld [vmem:[#allocation16 + $0x108] sm:$0xff]
        %v3527 = vld [vmem:[#allocation16 + $0x110] sm:$0xff]
        %v3528 = vld [vmem:[#allocation16 + $0x118] sm:$0xff]
        %v3529 = vld [vmem:[#allocation16 + $0x120] sm:$0xff]
        %v3530 = vld [vmem:[#allocation16 + $0x128] sm:$0xff]
        %v3531 = vld [vmem:[#allocation16 + $0x130] sm:$0xff]
        %v3532 = vld [vmem:[#allocation16 + $0x138] sm:$0xff]
        %v3533 = vld [vmem:[#allocation16 + $0x140] sm:$0xff]
        %v3534 = vld [vmem:[#allocation16 + $0x148] sm:$0xff]
        %v3535 = vld [vmem:[#allocation16 + $0x150] sm:$0xff]
        %v3536 = vld [vmem:[#allocation16 + $0x158] sm:$0xff]
        %v3537 = vld [vmem:[#allocation16 + $0x160] sm:$0xff]
        %v3538 = vld [vmem:[#allocation16 + $0x168] sm:$0xff]
        %v3539 = vld [vmem:[#allocation16 + $0x170] sm:$0xff]
        %v3540 = vld [vmem:[#allocation16 + $0x178] sm:$0xff]
        %v3541 = vld [vmem:[#allocation16 + $0x180] sm:$0xff]
        %v3542 = vld [vmem:[#allocation16 + $0x188] sm:$0xff]
        %v3543 = vld [vmem:[#allocation16 + $0x190] sm:$0xff]
        %v3544 = vld [vmem:[#allocation16 + $0x198] sm:$0xff]
        %v3545 = vld [vmem:[#allocation16 + $0x1a0] sm:$0xff]
        %v3546 = vld [vmem:[#allocation16 + $0x1a8] sm:$0xff]
        %v3547 = vld [vmem:[#allocation16 + $0x1b0] sm:$0xff]
        %v3548 = vld [vmem:[#allocation16 + $0x1b8] sm:$0xff]
        %v3549 = vld [vmem:[#allocation16 + $0x1c0] sm:$0xff]
        %v3550 = vld [vmem:[#allocation16 + $0x1c8] sm:$0xff]
        %v3551 = vld [vmem:[#allocation16 + $0x1d0] sm:$0xff]
        %v3552 = vld [vmem:[#allocation16 + $0x1d8] sm:$0xff]
        %v3553 = vld [vmem:[#allocation16 + $0x1e0] sm:$0xff]
        %v3554 = vld [vmem:[#allocation16 + $0x1e8] sm:$0xff]
        %v3555 = vld [vmem:[#allocation16 + $0x1f0] sm:$0xff]
        %v3556 = vld [vmem:[#allocation16 + $0x1f8] sm:$0xff]
        %v3557 = vld [vmem:[%s15] sm:$0x3]
        %v3559 = vlaneseq
        %v3560 = vshrl.u32 %v3559, 7
        %v3561 = vsub.s32 0, %v3560
        %v3562 = vrot.slane %v3557, %v3561
        %v3563 = vlaneseq
        %v3564 = vshrl.u32 %v3563, 7
        %v3565 = vsub.s32 1, %v3564
        %v3566 = vrot.slane %v3557, %v3565
        %v3633 = vunpack.c.l.b16 %v3493
        %v3634 = vunpack.c.h.b16 %v3493
        %v3635 = vunpack.c.l.b16 %v3494
        %v3636 = vunpack.c.h.b16 %v3494
        %v3637 = vunpack.c.l.b16 %v3495
        %v3638 = vunpack.c.h.b16 %v3495
        %v3639 = vunpack.c.l.b16 %v3496
        %v3640 = vunpack.c.h.b16 %v3496
        %v3641 = vunpack.c.l.b16 %v3497
        %v3642 = vunpack.c.h.b16 %v3497
        %v3643 = vunpack.c.l.b16 %v3498
        %v3644 = vunpack.c.h.b16 %v3498
        %v3645 = vunpack.c.l.b16 %v3499
        %v3646 = vunpack.c.h.b16 %v3499
        %v3647 = vunpack.c.l.b16 %v3500
        %v3648 = vunpack.c.h.b16 %v3500
        %v3649 = vunpack.c.l.b16 %v3501
        %v3650 = vunpack.c.h.b16 %v3501
        %v3651 = vunpack.c.l.b16 %v3502
        %v3652 = vunpack.c.h.b16 %v3502
        %v3653 = vunpack.c.l.b16 %v3503
        %v3654 = vunpack.c.h.b16 %v3503
        %v3655 = vunpack.c.l.b16 %v3504
        %v3656 = vunpack.c.h.b16 %v3504
        %v3657 = vunpack.c.l.b16 %v3505
        %v3658 = vunpack.c.h.b16 %v3505
        %v3659 = vunpack.c.l.b16 %v3506
        %v3660 = vunpack.c.h.b16 %v3506
        %v3661 = vunpack.c.l.b16 %v3507
        %v3662 = vunpack.c.h.b16 %v3507
        %v3663 = vunpack.c.l.b16 %v3508
        %v3664 = vunpack.c.h.b16 %v3508
        %v3665 = vunpack.c.l.b16 %v3509
        %v3666 = vunpack.c.h.b16 %v3509
        %v3667 = vunpack.c.l.b16 %v3510
        %v3668 = vunpack.c.h.b16 %v3510
        %v3669 = vunpack.c.l.b16 %v3511
        %v3670 = vunpack.c.h.b16 %v3511
        %v3671 = vunpack.c.l.b16 %v3512
        %v3672 = vunpack.c.h.b16 %v3512
        %v3673 = vunpack.c.l.b16 %v3513
        %v3674 = vunpack.c.h.b16 %v3513
        %v3675 = vunpack.c.l.b16 %v3514
        %v3676 = vunpack.c.h.b16 %v3514
        %v3677 = vunpack.c.l.b16 %v3515
        %v3678 = vunpack.c.h.b16 %v3515
        %v3679 = vunpack.c.l.b16 %v3516
        %v3680 = vunpack.c.h.b16 %v3516
        %v3681 = vunpack.c.l.b16 %v3517
        %v3682 = vunpack.c.h.b16 %v3517
        %v3683 = vunpack.c.l.b16 %v3518
        %v3684 = vunpack.c.h.b16 %v3518
        %v3685 = vunpack.c.l.b16 %v3519
        %v3686 = vunpack.c.h.b16 %v3519
        %v3687 = vunpack.c.l.b16 %v3520
        %v3688 = vunpack.c.h.b16 %v3520
        %v3689 = vunpack.c.l.b16 %v3521
        %v3690 = vunpack.c.h.b16 %v3521
        %v3691 = vunpack.c.l.b16 %v3522
        %v3692 = vunpack.c.h.b16 %v3522
        %v3693 = vunpack.c.l.b16 %v3523
        %v3694 = vunpack.c.h.b16 %v3523
        %v3695 = vunpack.c.l.b16 %v3524
        %v3696 = vunpack.c.h.b16 %v3524
        %v3697 = vunpack.c.l.b16 %v3525
        %v3698 = vunpack.c.h.b16 %v3525
        %v3699 = vunpack.c.l.b16 %v3526
        %v3700 = vunpack.c.h.b16 %v3526
        %v3701 = vunpack.c.l.b16 %v3527
        %v3702 = vunpack.c.h.b16 %v3527
        %v3703 = vunpack.c.l.b16 %v3528
        %v3704 = vunpack.c.h.b16 %v3528
        %v3705 = vunpack.c.l.b16 %v3529
        %v3706 = vunpack.c.h.b16 %v3529
        %v3707 = vunpack.c.l.b16 %v3530
        %v3708 = vunpack.c.h.b16 %v3530
        %v3709 = vunpack.c.l.b16 %v3531
        %v3710 = vunpack.c.h.b16 %v3531
        %v3711 = vunpack.c.l.b16 %v3532
        %v3712 = vunpack.c.h.b16 %v3532
        %v3713 = vunpack.c.l.b16 %v3533
        %v3714 = vunpack.c.h.b16 %v3533
        %v3715 = vunpack.c.l.b16 %v3534
        %v3716 = vunpack.c.h.b16 %v3534
        %v3717 = vunpack.c.l.b16 %v3535
        %v3718 = vunpack.c.h.b16 %v3535
        %v3719 = vunpack.c.l.b16 %v3536
        %v3720 = vunpack.c.h.b16 %v3536
        %v3721 = vunpack.c.l.b16 %v3537
        %v3722 = vunpack.c.h.b16 %v3537
        %v3723 = vunpack.c.l.b16 %v3538
        %v3724 = vunpack.c.h.b16 %v3538
        %v3725 = vunpack.c.l.b16 %v3539
        %v3726 = vunpack.c.h.b16 %v3539
        %v3727 = vunpack.c.l.b16 %v3540
        %v3728 = vunpack.c.h.b16 %v3540
        %v3729 = vunpack.c.l.b16 %v3541
        %v3730 = vunpack.c.h.b16 %v3541
        %v3731 = vunpack.c.l.b16 %v3542
        %v3732 = vunpack.c.h.b16 %v3542
        %v3733 = vunpack.c.l.b16 %v3543
        %v3734 = vunpack.c.h.b16 %v3543
        %v3735 = vunpack.c.l.b16 %v3544
        %v3736 = vunpack.c.h.b16 %v3544
        %v3737 = vunpack.c.l.b16 %v3545
        %v3738 = vunpack.c.h.b16 %v3545
        %v3739 = vunpack.c.l.b16 %v3546
        %v3740 = vunpack.c.h.b16 %v3546
        %v3741 = vunpack.c.l.b16 %v3547
        %v3742 = vunpack.c.h.b16 %v3547
        %v3743 = vunpack.c.l.b16 %v3548
        %v3744 = vunpack.c.h.b16 %v3548
        %v3745 = vunpack.c.l.b16 %v3549
        %v3746 = vunpack.c.h.b16 %v3549
        %v3747 = vunpack.c.l.b16 %v3550
        %v3748 = vunpack.c.h.b16 %v3550
        %v3749 = vunpack.c.l.b16 %v3551
        %v3750 = vunpack.c.h.b16 %v3551
        %v3751 = vunpack.c.l.b16 %v3552
        %v3752 = vunpack.c.h.b16 %v3552
        %v3753 = vunpack.c.l.b16 %v3553
        %v3754 = vunpack.c.h.b16 %v3553
        %v3755 = vunpack.c.l.b16 %v3554
        %v3756 = vunpack.c.h.b16 %v3554
        %v3757 = vunpack.c.l.b16 %v3555
        %v3758 = vunpack.c.h.b16 %v3555
        %v3759 = vunpack.c.l.b16 %v3556
        %v3760 = vunpack.c.h.b16 %v3556
        %v3761 = vpack.c.b16 %v3635, %v3633
        %v3762 = vpack.c.b16 %v3636, %v3634
        %v3763 = vpack.c.b16 %v3639, %v3637
        %v3764 = vpack.c.b16 %v3640, %v3638
        %v3765 = vpack.c.b16 %v3643, %v3641
        %v3766 = vpack.c.b16 %v3644, %v3642
        %v3767 = vpack.c.b16 %v3647, %v3645
        %v3768 = vpack.c.b16 %v3648, %v3646
        %v3769 = vpack.c.b16 %v3651, %v3649
        %v3770 = vpack.c.b16 %v3652, %v3650
        %v3771 = vpack.c.b16 %v3655, %v3653
        %v3772 = vpack.c.b16 %v3656, %v3654
        %v3773 = vpack.c.b16 %v3659, %v3657
        %v3774 = vpack.c.b16 %v3660, %v3658
        %v3775 = vpack.c.b16 %v3663, %v3661
        %v3776 = vpack.c.b16 %v3664, %v3662
        %v3777 = vpack.c.b16 %v3667, %v3665
        %v3778 = vpack.c.b16 %v3668, %v3666
        %v3779 = vpack.c.b16 %v3671, %v3669
        %v3780 = vpack.c.b16 %v3672, %v3670
        %v3781 = vpack.c.b16 %v3675, %v3673
        %v3782 = vpack.c.b16 %v3676, %v3674
        %v3783 = vpack.c.b16 %v3679, %v3677
        %v3784 = vpack.c.b16 %v3680, %v3678
        %v3785 = vpack.c.b16 %v3683, %v3681
        %v3786 = vpack.c.b16 %v3684, %v3682
        %v3787 = vpack.c.b16 %v3687, %v3685
        %v3788 = vpack.c.b16 %v3688, %v3686
        %v3789 = vpack.c.b16 %v3691, %v3689
        %v3790 = vpack.c.b16 %v3692, %v3690
        %v3791 = vpack.c.b16 %v3695, %v3693
        %v3792 = vpack.c.b16 %v3696, %v3694
        %v3793 = vpack.c.b16 %v3699, %v3697
        %v3794 = vpack.c.b16 %v3700, %v3698
        %v3795 = vpack.c.b16 %v3703, %v3701
        %v3796 = vpack.c.b16 %v3704, %v3702
        %v3797 = vpack.c.b16 %v3707, %v3705
        %v3798 = vpack.c.b16 %v3708, %v3706
        %v3799 = vpack.c.b16 %v3711, %v3709
        %v3800 = vpack.c.b16 %v3712, %v3710
        %v3801 = vpack.c.b16 %v3715, %v3713
        %v3802 = vpack.c.b16 %v3716, %v3714
        %v3803 = vpack.c.b16 %v3719, %v3717
        %v3804 = vpack.c.b16 %v3720, %v3718
        %v3805 = vpack.c.b16 %v3723, %v3721
        %v3806 = vpack.c.b16 %v3724, %v3722
        %v3807 = vpack.c.b16 %v3727, %v3725
        %v3808 = vpack.c.b16 %v3728, %v3726
        %v3809 = vpack.c.b16 %v3731, %v3729
        %v3810 = vpack.c.b16 %v3732, %v3730
        %v3811 = vpack.c.b16 %v3735, %v3733
        %v3812 = vpack.c.b16 %v3736, %v3734
        %v3813 = vpack.c.b16 %v3739, %v3737
        %v3814 = vpack.c.b16 %v3740, %v3738
        %v3815 = vpack.c.b16 %v3743, %v3741
        %v3816 = vpack.c.b16 %v3744, %v3742
        %v3817 = vpack.c.b16 %v3747, %v3745
        %v3818 = vpack.c.b16 %v3748, %v3746
        %v3819 = vpack.c.b16 %v3751, %v3749
        %v3820 = vpack.c.b16 %v3752, %v3750
        %v3821 = vpack.c.b16 %v3755, %v3753
        %v3822 = vpack.c.b16 %v3756, %v3754
        %v3823 = vpack.c.b16 %v3759, %v3757
        %v3824 = vpack.c.b16 %v3760, %v3758
        %3889 = vmatprep.subr.bf16.mxu0 %v3776
        %3890 = vmatpush1.bf16.msra.mxu0 %v3775
        %3891 = vmatprep.subr.bf16.mxu0 %v3774
        %3892 = vmatpush1.bf16.msra.mxu0 %v3773
        %3893 = vmatprep.subr.bf16.mxu0 %v3772
        %3894 = vmatpush1.bf16.msra.mxu0 %v3771
        %3895 = vmatprep.subr.bf16.mxu0 %v3770
        %3896 = vmatpush1.bf16.msra.mxu0 %v3769
        %3897 = vmatprep.subr.bf16.mxu0 %v3768
        %3898 = vmatpush1.bf16.msra.mxu0 %v3767
        %3899 = vmatprep.subr.bf16.mxu0 %v3766
        %3900 = vmatpush1.bf16.msra.mxu0 %v3765
        %3901 = vmatprep.subr.bf16.mxu0 %v3764
        %3902 = vmatpush1.bf16.msra.mxu0 %v3763
        %3903 = vmatprep.subr.bf16.mxu0 %v3762
        %3904 = vmatpush1.bf16.msra.mxu0 %v3761
        %3905 = vmatprep.subr.bf16.mxu0 %v3792
        %3906 = vmatpush2.bf16.msra.mxu0 %v3791
        %3907 = vmatprep.subr.bf16.mxu0 %v3790
        %3908 = vmatpush2.bf16.msra.mxu0 %v3789
        %3909 = vmatprep.subr.bf16.mxu0 %v3788
        %3910 = vmatpush2.bf16.msra.mxu0 %v3787
        %3911 = vmatprep.subr.bf16.mxu0 %v3786
        %3912 = vmatpush2.bf16.msra.mxu0 %v3785
        %3913 = vmatprep.subr.bf16.mxu0 %v3784
        %3914 = vmatpush2.bf16.msra.mxu0 %v3783
        %3915 = vmatprep.subr.bf16.mxu0 %v3782
        %3916 = vmatpush2.bf16.msra.mxu0 %v3781
        %3917 = vmatprep.subr.bf16.mxu0 %v3780
        %3918 = vmatpush2.bf16.msra.mxu0 %v3779
        %3919 = vmatprep.subr.bf16.mxu0 %v3778
        %3920 = vmatpush2.bf16.msra.mxu0 %v3777
        %3921 = vmatprep.mubr.bf16.mxu0 %v3490
        %3922 = vmatmul.mubr.bf16.gmra.mxu0 %v3489
        %v3923 = vpop.f32.mrf.mxu0
        %v3924 = vadd.f32 %v3562, %v3923
        %v3925 = vpop.f32.mrf.mxu0
        %v3926 = vadd.f32 %v3566, %v3925
        %v3927 = vpop.f32.mrf.mxu0
        %v3928 = vpop.f32.mrf.mxu0
        %3929 = vdwg.mxu0
        %3930 = vmatprep.subr.bf16.mxu0 %v3808
        %3931 = vmatpush1.bf16.msra.mxu0 %v3807
        %3932 = vmatprep.subr.bf16.mxu0 %v3806
        %3933 = vmatpush1.bf16.msra.mxu0 %v3805
        %3934 = vmatprep.subr.bf16.mxu0 %v3804
        %3935 = vmatpush1.bf16.msra.mxu0 %v3803
        %3936 = vmatprep.subr.bf16.mxu0 %v3802
        %3937 = vmatpush1.bf16.msra.mxu0 %v3801
        %3938 = vmatprep.subr.bf16.mxu0 %v3800
        %3939 = vmatpush1.bf16.msra.mxu0 %v3799
        %3940 = vmatprep.subr.bf16.mxu0 %v3798
        %3941 = vmatpush1.bf16.msra.mxu0 %v3797
        %3942 = vmatprep.subr.bf16.mxu0 %v3796
        %3943 = vmatpush1.bf16.msra.mxu0 %v3795
        %3944 = vmatprep.subr.bf16.mxu0 %v3794
        %3945 = vmatpush1.bf16.msra.mxu0 %v3793
        %3946 = vmatprep.subr.bf16.mxu0 %v3824
        %3947 = vmatpush2.bf16.msra.mxu0 %v3823
        %3948 = vmatprep.subr.bf16.mxu0 %v3822
        %3949 = vmatpush2.bf16.msra.mxu0 %v3821
        %3950 = vmatprep.subr.bf16.mxu0 %v3820
        %3951 = vmatpush2.bf16.msra.mxu0 %v3819
        %3952 = vmatprep.subr.bf16.mxu0 %v3818
        %3953 = vmatpush2.bf16.msra.mxu0 %v3817
        %3954 = vmatprep.subr.bf16.mxu0 %v3816
        %3955 = vmatpush2.bf16.msra.mxu0 %v3815
        %3956 = vmatprep.subr.bf16.mxu0 %v3814
        %3957 = vmatpush2.bf16.msra.mxu0 %v3813
        %3958 = vmatprep.subr.bf16.mxu0 %v3812
        %3959 = vmatpush2.bf16.msra.mxu0 %v3811
        %3960 = vmatprep.subr.bf16.mxu0 %v3810
        %3961 = vmatpush2.bf16.msra.mxu0 %v3809
        %3962 = vmatprep.mubr.bf16.mxu0 %v3492
        %3963 = vmatmul.mubr.bf16.gmra.mxu0 %v3491
        %v3964 = vpop.f32.mrf.mxu0
        %v3965 = vadd.f32 %v3924, %v3964
        %v3966 = vpop.f32.mrf.mxu0
        %v3967 = vadd.f32 %v3926, %v3966
        %v3968 = vpop.f32.mrf.mxu0
        %v3969 = vpop.f32.mrf.mxu0
        %3970 = vdwg.mxu0
        %v3971 = vadd.f32 %v2977, %v3965
        %v3972 = vadd.f32 %v2978, %v3967
        %v3973 = vld [vmem:[%s16] sm:$0x3]
        %v3974 = vld [vmem:[%s17] sm:$0x3]
        %v3975 = vadd.f32 %v3971, %v3972
        %3976 = vadd.xlane.f32.xlu0 %v3975
        %v3977 = vpop.xlane.xlu0 %3976
        %v3978 = vmul.f32 %v3977, %v2939
        %v3979 = vsub.f32 %v3971, %v3978
        %v3980 = vsub.f32 %v3972, %v3978
        %v3981 = vmul.f32 %v3979, %v3979
        %v3982 = vmul.f32 %v3980, %v3980
        %v3983 = vadd.f32 %v3981, %v3982
        %3984 = vadd.xlane.f32.xlu0 %v3983
        %v3985 = vpop.xlane.xlu0 %3984
        %v3986 = vmul.f32 %v3985, %v2939
        %v3987 = vadd.f32 %v3986, 1e-05
        %v3988 = vrsqrt.pop %v3987
        %v3989 = vmul.f32 %v3979, %v3988
        %v3990 = vmul.f32 %v3980, %v3988
        %v3992 = vlaneseq
        %v3993 = vshrl.u32 %v3992, 7
        %v3994 = vsub.s32 0, %v3993
        %v3995 = vrot.slane %v3973, %v3994
        %v3996 = vlaneseq
        %v3997 = vshrl.u32 %v3996, 7
        %v3998 = vsub.s32 1, %v3997
        %v3999 = vrot.slane %v3973, %v3998
        %v4002 = vmul.f32 %v3995, %v3989
        %v4003 = vmul.f32 %v3999, %v3990
        %v4005 = vlaneseq
        %v4006 = vshrl.u32 %v4005, 7
        %v4007 = vsub.s32 0, %v4006
        %v4008 = vrot.slane %v3974, %v4007
        %v4009 = vlaneseq
        %v4010 = vshrl.u32 %v4009, 7
        %v4011 = vsub.s32 1, %v4010
        %v4012 = vrot.slane %v3974, %v4011
        %v4015 = vadd.f32 %v4002, %v4008
        %v4016 = vadd.f32 %v4003, %v4012
        %4017 = vst [vmem:[%s736] sm:$0xff] %v4015
        %4018 = vst [vmem:[%s736 + $0x8] sm:$0xff] %v4016
        %s4019 = sand.u32 %s453, 1
        %s4020 = scalar_lea.sflag [#allocation6], %s4019
        %s4021 = sand.u32 %s453, 1
        %s4022 = smul.addr %s4021, 16
        %s4023 = scalar_lea.vmem [#allocation18], %s4022
        // Predicated region
        $region129: #{tpu_custom_call.1} parent=91 // pred_check
          %p4024 = pneg %p463
        $region130: #{tpu_custom_call.1} parent=91 // pred_check_branch
          %4026 = sbr.rel (%p4024) target = $region132
        $region131: #{tpu_custom_call.1} parent=91 // pred_region
          %s4028 = ssub.s32 256, 256
          %4029 = vsyncadd %s4020, %s4028
          %s4030 = smul.addr %s46, 2
          %s4031 = smul.addr %s45, 4
          %s4032 = sadd.s32 %s4030, %s4031
          %s4033 = smul.addr %s4032, 128
          %s4034 = scalar_lea.hbm %s18, %s4033
          %s4036 = sshll.u32 %s4023, 4
          %s4037 = int_to_ptr.vmem [resolvable:$true] %s4036
          %4039 = dma.vmem_to_hbm [thread:$0]  %s4037, 256, %s4034, %s4020
        $region132: #{tpu_custom_call.1} parent=91 // pred_fallthru
          _
      $region92: #{tpu_custom_call.1} parent=5 // pred_fallthru
        _
      %p4040 = scmp.le.s32.totalorder 2, %s36
      // Predicated region
      $region133: #{tpu_custom_call.1} parent=5 // pred_check
        %p4041 = pneg %p4040
      $region134: #{tpu_custom_call.1} parent=5 // pred_check_branch
        %4043 = sbr.rel (%p4041) target = $region136
      $region135: #{tpu_custom_call.1} parent=5 // pred_region
        %s4044 = ssub.s32 %s36, 2
        // Predicated region
        $region137: #{tpu_custom_call.1} parent=135 // pred_check
          %p4045 = pneg %p469
        $region138: #{tpu_custom_call.1} parent=135 // pred_check_branch
          %4047 = sbr.rel (%p4045) target = $region140
        $region139: #{tpu_custom_call.1} parent=135 // pred_region
          %s4048 = sand.u32 %s454, 1
          %s4049 = scalar_lea.sflag [#allocation6], %s4048
          %s4050 = sand.u32 %s454, 1
          %s4051 = smul.addr %s4050, 16
          %s4052 = scalar_lea.vmem [#allocation18], %s4051
          %4053 = dma.done %s4049, 256
        $region140: #{tpu_custom_call.1} parent=135 // pred_fallthru
          _
      $region136: #{tpu_custom_call.1} parent=5 // pred_fallthru
        _
    $region6: #{tpu_custom_call.1} parent=1 // loop_footer
      %s40 = sadd.s32 1, %s36
    $region7: #{tpu_custom_call.1} parent=1 // loop_footer_branch
      %35 = sbr.rel target = $region3
    $region8: #{tpu_custom_call.1} parent=1 // loop_exit
      _
    %4054 = vsyncpa [#allocation5], 1
    %s4055 = scalar_lea.sflag [#allocation5], 1
    %4056 = vsyncpa %s4055, 1
    %4057 = vsyncpa [#allocation8], 1
    %s4058 = scalar_lea.sflag [#allocation8], 1
    %4059 = vsyncpa %s4058, 1
    %4060 = vsyncpa [#allocation11], 1
    %4061 = vsyncpa [#allocation14], 1
    %4062 = vsyncpa [#allocation17], 1
    %4063 = vsyncpa [#allocation6], 1
    %s4064 = scalar_lea.sflag [#allocation6], 1
    %4065 = vsyncpa %s4064, 1

// kernel: tpu_custom_call.1
$region0: #{tpu_custom_call.1}
  #allocation0 [shape = 'u32[]', space=smem, size = 0x4, offset = 0x4, fixed_abs, tag = 'smem constant byte address 0x4 - core index']
  #allocation1 [shape = 'u32[144,128]{1,0:T(1,128)}', space=vmem, size = 0x12000, scoped, tag = 'internal scratch']
  #allocation2 [shape = 'bf16[2,16,128]{2,1,0:T(8,128)(2,1)}', space=vmem, size = 0x2000, scoped, tag = 'scratch operand']
  #allocation3 [shape = 'bf16[2,16,128]{2,1,0:T(8,128)(2,1)}', space=vmem, size = 0x2000, scoped, tag = 'scratch operand']
  %s0 = inlined_call_operand.hbm [shape: bf16[2,16,256], index: 0, kind: input, shape index: {}]
  %s1 = inlined_call_operand.hbm [shape: f32[2,16,256], index: 1, kind: input, shape index: {}]
  %s2 = inlined_call_operand.hbm [shape: bf16[256,256], index: 2, kind: input, shape index: {}]
  %s3 = inlined_call_operand.vmem [shape: f32[1,256], index: 3, kind: input, shape index: {}]
  %s4 = inlined_call_operand.hbm [shape: bf16[256,256], index: 4, kind: input, shape index: {}]
  %s5 = inlined_call_operand.vmem [shape: f32[1,256], index: 5, kind: input, shape index: {}]
  %s6 = inlined_call_operand.hbm [shape: bf16[256,256], index: 6, kind: input, shape index: {}]
  %s7 = inlined_call_operand.vmem [shape: f32[1,256], index: 7, kind: input, shape index: {}]
  %s8 = inlined_call_operand.hbm [shape: bf16[256,256], index: 8, kind: input, shape index: {}]
  %s9 = inlined_call_operand.vmem [shape: f32[1,256], index: 9, kind: input, shape index: {}]
  %s10 = inlined_call_operand.vmem [shape: f32[1,256], index: 10, kind: input, shape index: {}]
  %s11 = inlined_call_operand.vmem [shape: f32[1,256], index: 11, kind: input, shape index: {}]
  %s12 = inlined_call_operand.hbm [shape: bf16[256,512], index: 12, kind: input, shape index: {}]
  %s13 = inlined_call_operand.vmem [shape: f32[1,512], index: 13, kind: input, shape index: {}]
  %s14 = inlined_call_operand.hbm [shape: bf16[512,256], index: 14, kind: input, shape index: {}]
  %s15 = inlined_call_operand.vmem [shape: f32[1,256], index: 15, kind: input, shape index: {}]
  %s16 = inlined_call_operand.vmem [shape: f32[1,256], index: 16, kind: input, shape index: {}]
  %s17 = inlined_call_operand.vmem [shape: f32[1,256], index: 17, kind: input, shape index: {}]
  %s18 = inlined_call_operand.hbm [shape: f32[2,16,256], index: 18, kind: output, shape index: {}]
  %s19 = sld [smem:[#allocation0]]
  $region141: #{tpu_custom_call.1} parent=0
    _
  %s21 = ssub.s32 1, %s19
  %s22 = scalar_select 0, %s21, %s19
  $region1: #{tpu_custom_call.1} parent=0
    #allocation4 [shape = 'u8[16384]{0}', space=vmem, size = 0x4000, scoped, tag = 'input window, operand 0']
    #allocation5 [shape = 's32[2]{0}', space=sflag, size = 0x8, scoped, tag = 'scoped memory for tpu_custom_call.1']
    #allocation6 [shape = 's32[2]{0}', space=sflag, size = 0x8, scoped, tag = 'scoped memory for tpu_custom_call.1']
    #allocation7 [shape = 'u8[16384]{0}', space=vmem, size = 0x4000, scoped, tag = 'input window, operand 1']
    #allocation8 [shape = 's32[2]{0}', space=sflag, size = 0x8, scoped, tag = 'scoped memory for tpu_custom_call.1']
    #allocation9 [shape = 'u8[131072]{0}', space=vmem, size = 0x20000, scoped, tag = 'input window, operand 2, single buffered']
    #allocation10 [shape = 'u8[131072]{0}', space=vmem, size = 0x20000, scoped, tag = 'input window, operand 4, single buffered']
    #allocation11 [shape = 's32[1]{0}', space=sflag, size = 0x4, scoped, tag = 'scoped memory for tpu_custom_call.1']
    #allocation12 [shape = 'u8[131072]{0}', space=vmem, size = 0x20000, scoped, tag = 'input window, operand 6, single buffered']
    #allocation13 [shape = 'u8[131072]{0}', space=vmem, size = 0x20000, scoped, tag = 'input window, operand 8, single buffered']
    #allocation14 [shape = 's32[1]{0}', space=sflag, size = 0x4, scoped, tag = 'scoped memory for tpu_custom_call.1']
    #allocation15 [shape = 'u8[262144]{0}', space=vmem, size = 0x40000, scoped, tag = 'input window, operand 12, single buffered']
    #allocation16 [shape = 'u8[262144]{0}', space=vmem, size = 0x40000, scoped, tag = 'input window, operand 14, single buffered']
    #allocation17 [shape = 's32[1]{0}', space=sflag, size = 0x4, scoped, tag = 'scoped memory for tpu_custom_call.1']
    #allocation18 [shape = 'u8[16384]{0}', space=vmem, size = 0x4000, scoped, tag = 'output window, operand 0']
    %23 = vsyncpa [#allocation5], 0
    %s24 = scalar_lea.sflag [#allocation5], 1
    %25 = vsyncpa %s24, 0
    %26 = vsyncpa [#allocation8], 0
    %s27 = scalar_lea.sflag [#allocation8], 1
    %28 = vsyncpa %s27, 0
    %29 = vsyncpa [#allocation11], 0
    %30 = vsyncpa [#allocation14], 0
    %31 = vsyncpa [#allocation17], 0
    %32 = vsyncpa [#allocation6], 0
    %s33 = scalar_lea.sflag [#allocation6], 1
    %34 = vsyncpa %s33, 0
    loop: start=0, step=1, limit=6
    $region2: #{tpu_custom_call.1} parent=1 // loop_pre_header
      _
    $region3: #{tpu_custom_call.1} parent=1 // loop_header
      %s36 = sphi 0, %s40
      %p37 = scmp.ge.s32.totalorder %s36, 6
      %s43 = sphi 0, %s55
      %s44 = sphi 0, %s51
      %s45 = sphi 0, %s43
      %s46 = sphi 0, %s44
      %s47 = sphi 0, %s45
      %s48 = sphi 0, %s46
      %s58 = sphi 0, %s60
      %s61 = sphi 0, %s58
      %s62 = sphi 0, %s61
      %s78 = sphi 0, %s62
      %s86 = sphi 0, %s88
      %s89 = sphi 0, %s86
      %s90 = sphi 0, %s89
      %s106 = sphi 0, %s90
      %s110 = sphi 0, %s110
      %s112 = sphi 0, %s110
      %s113 = sphi 0, %s112
      %s127 = sphi 0, %s113
      %s131 = sphi 0, %s131
      %s133 = sphi 0, %s131
      %s134 = sphi 0, %s133
      %s148 = sphi 0, %s134
      %s152 = sphi 0, %s152
      %s154 = sphi 0, %s152
      %s155 = sphi 0, %s154
      %s169 = sphi 0, %s155
      %s173 = sphi 0, %s173
      %s175 = sphi 0, %s173
      %s176 = sphi 0, %s175
      %s190 = sphi 0, %s176
      %s194 = sphi 0, %s194
      %s196 = sphi 0, %s194
      %s197 = sphi 0, %s196
      %s211 = sphi 0, %s197
      %s215 = sphi 0, %s215
      %s217 = sphi 0, %s215
      %s218 = sphi 0, %s217
      %s232 = sphi 0, %s218
      %s236 = sphi 0, %s236
      %s238 = sphi 0, %s236
      %s239 = sphi 0, %s238
      %s253 = sphi 0, %s239
      %s257 = sphi 0, %s257
      %s259 = sphi 0, %s257
      %s260 = sphi 0, %s259
      %s274 = sphi 0, %s260
      %s278 = sphi 0, %s278
      %s280 = sphi 0, %s278
      %s281 = sphi 0, %s280
      %s295 = sphi 0, %s281
      %s299 = sphi 0, %s299
      %s301 = sphi 0, %s299
      %s302 = sphi 0, %s301
      %s316 = sphi 0, %s302
      %s320 = sphi 0, %s320
      %s322 = sphi 0, %s320
      %s323 = sphi 0, %s322
      %s337 = sphi 0, %s323
      %s341 = sphi 0, %s341
      %s343 = sphi 0, %s341
      %s344 = sphi 0, %s343
      %s358 = sphi 0, %s344
      %s362 = sphi 0, %s362
      %s364 = sphi 0, %s362
      %s365 = sphi 0, %s364
      %s379 = sphi 0, %s365
      %s383 = sphi 0, %s383
      %s385 = sphi 0, %s383
      %s386 = sphi 0, %s385
      %s400 = sphi 0, %s386
      %s404 = sphi 0, %s404
      %s406 = sphi 0, %s404
      %s407 = sphi 0, %s406
      %s421 = sphi 0, %s407
      %s425 = sphi 0, %s425
      %s427 = sphi 0, %s425
      %s428 = sphi 0, %s427
      %s442 = sphi 0, %s428
      %s450 = sphi 0, %s452
      %s453 = sphi 0, %s450
      %s454 = sphi 0, %s453
      %s470 = sphi 0, %s454
    $region4: #{tpu_custom_call.1} parent=1 // loop_header_branch
      %39 = sbr.rel (%p37) target = $region8
    $region5: #{tpu_custom_call.1} parent=1 // loop_body
      %s41 = ssub.s32 %s36, 1
      %s42 = ssub.s32 %s36, 2
      %s49 = sadd.s32 1, %s44
      %p50 = scmp.ge.s32.totalorder %s49, 2
      %s51 = scalar_select %p50, 0, %s49
      %s52 = sadd.s32 1, %s43
      %s53 = scalar_select %p50, %s52, %s43
      %p54 = scmp.ge.s32.totalorder %s53, 2
      %s55 = scalar_select %p54, 0, %s53
      %s56 = ssub.s32 %s43, %s55
      %p57 = scmp.eq.s32.totalorder %s56, 0
      %s59 = sadd.s32 %s58, 1
      %s60 = scalar_select %p57, %s58, %s59
      %p63 = pneg %p57
      %p64 = scmp.eq.s32.totalorder %s36, 3
      %p65 = por %p63, %p64
      %p66 = scmp.ne.s32.totalorder %s58, %s61
      %p67 = scmp.eq.s32.totalorder %s36, 0
      %p68 = por %p66, %p67
      %p69 = scmp.ne.s32.totalorder %s58, %s61
      %p70 = scmp.eq.s32.totalorder %s41, 3
      %p71 = por %p69, %p70
      %p72 = scmp.ne.s32.totalorder %s61, %s62
      %p73 = scmp.eq.s32.totalorder %s41, 0
      %p74 = por %p72, %p73
      %p75 = scmp.ne.s32.totalorder %s61, %s62
      %p76 = scmp.eq.s32.totalorder %s42, 3
      %p77 = por %p75, %p76
      %p79 = scmp.ne.s32.totalorder %s62, %s78
      %p80 = scmp.eq.s32.totalorder %s42, 0
      %p81 = por %p79, %p80
      %s82 = ssub.s32 %s43, %s55
      %s83 = ssub.s32 %s44, %s51
      %s84 = sor.u32 %s82, %s83
      %p85 = scmp.eq.s32.totalorder %s84, 0
      %s87 = sadd.s32 %s86, 1
      %s88 = scalar_select %p85, %s86, %s87
      %p91 = pneg %p85
      %p92 = scmp.eq.s32.totalorder %s36, 3
      %p93 = por %p91, %p92
      %p94 = scmp.ne.s32.totalorder %s86, %s89
      %p95 = scmp.eq.s32.totalorder %s36, 0
      %p96 = por %p94, %p95
      %p97 = scmp.ne.s32.totalorder %s86, %s89
      %p98 = scmp.eq.s32.totalorder %s41, 3
      %p99 = por %p97, %p98
      %p100 = scmp.ne.s32.totalorder %s89, %s90
      %p101 = scmp.eq.s32.totalorder %s41, 0
      %p102 = por %p100, %p101
      %p103 = scmp.ne.s32.totalorder %s89, %s90
      %p104 = scmp.eq.s32.totalorder %s42, 3
      %p105 = por %p103, %p104
      %p107 = scmp.ne.s32.totalorder %s90, %s106
      %p108 = scmp.eq.s32.totalorder %s42, 0
      %p109 = por %p107, %p108
      %s111 = sadd.s32 %s110, 1
      %p114 = scmp.eq.s32.totalorder %s36, 3
      %p115 = scmp.ne.s32.totalorder %s110, %s112
      %p116 = scmp.eq.s32.totalorder %s36, 0
      %p117 = por %p115, %p116
      %p118 = scmp.ne.s32.totalorder %s110, %s112
      %p119 = scmp.eq.s32.totalorder %s41, 3
      %p120 = por %p118, %p119
      %p121 = scmp.ne.s32.totalorder %s112, %s113
      %p122 = scmp.eq.s32.totalorder %s41, 0
      %p123 = por %p121, %p122
      %p124 = scmp.ne.s32.totalorder %s112, %s113
      %p125 = scmp.eq.s32.totalorder %s42, 3
      %p126 = por %p124, %p125
      %p128 = scmp.ne.s32.totalorder %s113, %s127
      %p129 = scmp.eq.s32.totalorder %s42, 0
      %p130 = por %p128, %p129
      %s132 = sadd.s32 %s131, 1
      %p135 = scmp.eq.s32.totalorder %s36, 3
      %p136 = scmp.ne.s32.totalorder %s131, %s133
      %p137 = scmp.eq.s32.totalorder %s36, 0
      %p138 = por %p136, %p137
      %p139 = scmp.ne.s32.totalorder %s131, %s133
      %p140 = scmp.eq.s32.totalorder %s41, 3
      %p141 = por %p139, %p140
      %p142 = scmp.ne.s32.totalorder %s133, %s134
      %p143 = scmp.eq.s32.totalorder %s41, 0
      %p144 = por %p142, %p143
      %p145 = scmp.ne.s32.totalorder %s133, %s134
      %p146 = scmp.eq.s32.totalorder %s42, 3
      %p147 = por %p145, %p146
      %p149 = scmp.ne.s32.totalorder %s134, %s148
      %p150 = scmp.eq.s32.totalorder %s42, 0
      %p151 = por %p149, %p150
      %s153 = sadd.s32 %s152, 1
      %p156 = scmp.eq.s32.totalorder %s36, 3
      %p157 = scmp.ne.s32.totalorder %s152, %s154
      %p158 = scmp.eq.s32.totalorder %s36, 0
      %p159 = por %p157, %p158
      %p160 = scmp.ne.s32.totalorder %s152, %s154
      %p161 = scmp.eq.s32.totalorder %s41, 3
      %p162 = por %p160, %p161
      %p163 = scmp.ne.s32.totalorder %s154, %s155
      %p164 = scmp.eq.s32.totalorder %s41, 0
      %p165 = por %p163, %p164
      %p166 = scmp.ne.s32.totalorder %s154, %s155
      %p167 = scmp.eq.s32.totalorder %s42, 3
      %p168 = por %p166, %p167
      %p170 = scmp.ne.s32.totalorder %s155, %s169
      %p171 = scmp.eq.s32.totalorder %s42, 0
      %p172 = por %p170, %p171
      %s174 = sadd.s32 %s173, 1
      %p177 = scmp.eq.s32.totalorder %s36, 3
      %p178 = scmp.ne.s32.totalorder %s173, %s175
      %p179 = scmp.eq.s32.totalorder %s36, 0
      %p180 = por %p178, %p179
      %p181 = scmp.ne.s32.totalorder %s173, %s175
      %p182 = scmp.eq.s32.totalorder %s41, 3
      %p183 = por %p181, %p182
      %p184 = scmp.ne.s32.totalorder %s175, %s176
      %p185 = scmp.eq.s32.totalorder %s41, 0
      %p186 = por %p184, %p185
      %p187 = scmp.ne.s32.totalorder %s175, %s176
      %p188 = scmp.eq.s32.totalorder %s42, 3
      %p189 = por %p187, %p188
      %p191 = scmp.ne.s32.totalorder %s176, %s190
      %p192 = scmp.eq.s32.totalorder %s42, 0
      %p193 = por %p191, %p192
      %s195 = sadd.s32 %s194, 1
      %p198 = scmp.eq.s32.totalorder %s36, 3
      %p199 = scmp.ne.s32.totalorder %s194, %s196
      %p200 = scmp.eq.s32.totalorder %s36, 0
      %p201 = por %p199, %p200
      %p202 = scmp.ne.s32.totalorder %s194, %s196
      %p203 = scmp.eq.s32.totalorder %s41, 3
      %p204 = por %p202, %p203
      %p205 = scmp.ne.s32.totalorder %s196, %s197
      %p206 = scmp.eq.s32.totalorder %s41, 0
      %p207 = por %p205, %p206
      %p208 = scmp.ne.s32.totalorder %s196, %s197
      %p209 = scmp.eq.s32.totalorder %s42, 3
      %p210 = por %p208, %p209
      %p212 = scmp.ne.s32.totalorder %s197, %s211
      %p213 = scmp.eq.s32.totalorder %s42, 0
      %p214 = por %p212, %p213
      %s216 = sadd.s32 %s215, 1
      %p219 = scmp.eq.s32.totalorder %s36, 3
      %p220 = scmp.ne.s32.totalorder %s215, %s217
      %p221 = scmp.eq.s32.totalorder %s36, 0
      %p222 = por %p220, %p221
      %p223 = scmp.ne.s32.totalorder %s215, %s217
      %p224 = scmp.eq.s32.totalorder %s41, 3
      %p225 = por %p223, %p224
      %p226 = scmp.ne.s32.totalorder %s217, %s218
      %p227 = scmp.eq.s32.totalorder %s41, 0
      %p228 = por %p226, %p227
      %p229 = scmp.ne.s32.totalorder %s217, %s218
      %p230 = scmp.eq.s32.totalorder %s42, 3
      %p231 = por %p229, %p230
      %p233 = scmp.ne.s32.totalorder %s218, %s232
      %p234 = scmp.eq.s32.totalorder %s42, 0
      %p235 = por %p233, %p234
      %s237 = sadd.s32 %s236, 1
      %p240 = scmp.eq.s32.totalorder %s36, 3
      %p241 = scmp.ne.s32.totalorder %s236, %s238
      %p242 = scmp.eq.s32.totalorder %s36, 0
      %p243 = por %p241, %p242
      %p244 = scmp.ne.s32.totalorder %s236, %s238
      %p245 = scmp.eq.s32.totalorder %s41, 3
      %p246 = por %p244, %p245
      %p247 = scmp.ne.s32.totalorder %s238, %s239
      %p248 = scmp.eq.s32.totalorder %s41, 0
      %p249 = por %p247, %p248
      %p250 = scmp.ne.s32.totalorder %s238, %s239
      %p251 = scmp.eq.s32.totalorder %s42, 3
      %p252 = por %p250, %p251
      %p254 = scmp.ne.s32.totalorder %s239, %s253
      %p255 = scmp.eq.s32.totalorder %s42, 0
      %p256 = por %p254, %p255
      %s258 = sadd.s32 %s257, 1
      %p261 = scmp.eq.s32.totalorder %s36, 3
      %p262 = scmp.ne.s32.totalorder %s257, %s259
      %p263 = scmp.eq.s32.totalorder %s36, 0
      %p264 = por %p262, %p263
      %p265 = scmp.ne.s32.totalorder %s257, %s259
      %p266 = scmp.eq.s32.totalorder %s41, 3
      %p267 = por %p265, %p266
      %p268 = scmp.ne.s32.totalorder %s259, %s260
      %p269 = scmp.eq.s32.totalorder %s41, 0
      %p270 = por %p268, %p269
      %p271 = scmp.ne.s32.totalorder %s259, %s260
      %p272 = scmp.eq.s32.totalorder %s42, 3
      %p273 = por %p271, %p272
      %p275 = scmp.ne.s32.totalorder %s260, %s274
      %p276 = scmp.eq.s32.totalorder %s42, 0
      %p277 = por %p275, %p276
      %s279 = sadd.s32 %s278, 1
      %p282 = scmp.eq.s32.totalorder %s36, 3
      %p283 = scmp.ne.s32.totalorder %s278, %s280
      %p284 = scmp.eq.s32.totalorder %s36, 0
      %p285 = por %p283, %p284
      %p286 = scmp.ne.s32.totalorder %s278, %s280
      %p287 = scmp.eq.s32.totalorder %s41, 3
      %p288 = por %p286, %p287
      %p289 = scmp.ne.s32.totalorder %s280, %s281
      %p290 = scmp.eq.s32.totalorder %s41, 0
      %p291 = por %p289, %p290
      %p292 = scmp.ne.s32.totalorder %s280, %s281
      %p293 = scmp.eq.s32.totalorder %s42, 3
      %p294 = por %p292, %p293
      %p296 = scmp.ne.s32.totalorder %s281, %s295
      %p297 = scmp.eq.s32.totalorder %s42, 0
      %p298 = por %p296, %p297
      %s300 = sadd.s32 %s299, 1
      %p303 = scmp.eq.s32.totalorder %s36, 3
      %p304 = scmp.ne.s32.totalorder %s299, %s301
      %p305 = scmp.eq.s32.totalorder %s36, 0
      %p306 = por %p304, %p305
      %p307 = scmp.ne.s32.totalorder %s299, %s301
      %p308 = scmp.eq.s32.totalorder %s41, 3
      %p309 = por %p307, %p308
      %p310 = scmp.ne.s32.totalorder %s301, %s302
      %p311 = scmp.eq.s32.totalorder %s41, 0
      %p312 = por %p310, %p311
      %p313 = scmp.ne.s32.totalorder %s301, %s302
      %p314 = scmp.eq.s32.totalorder %s42, 3
      %p315 = por %p313, %p314
      %p317 = scmp.ne.s32.totalorder %s302, %s316
      %p318 = scmp.eq.s32.totalorder %s42, 0
      %p319 = por %p317, %p318
      %s321 = sadd.s32 %s320, 1
      %p324 = scmp.eq.s32.totalorder %s36, 3
      %p325 = scmp.ne.s32.totalorder %s320, %s322
      %p326 = scmp.eq.s32.totalorder %s36, 0
      %p327 = por %p325, %p326
      %p328 = scmp.ne.s32.totalorder %s320, %s322
      %p329 = scmp.eq.s32.totalorder %s41, 3
      %p330 = por %p328, %p329
      %p331 = scmp.ne.s32.totalorder %s322, %s323
      %p332 = scmp.eq.s32.totalorder %s41, 0
      %p333 = por %p331, %p332
      %p334 = scmp.ne.s32.totalorder %s322, %s323
      %p335 = scmp.eq.s32.totalorder %s42, 3
      %p336 = por %p334, %p335
      %p338 = scmp.ne.s32.totalorder %s323, %s337
      %p339 = scmp.eq.s32.totalorder %s42, 0
      %p340 = por %p338, %p339
      %s342 = sadd.s32 %s341, 1
      %p345 = scmp.eq.s32.totalorder %s36, 3
      %p346 = scmp.ne.s32.totalorder %s341, %s343
      %p347 = scmp.eq.s32.totalorder %s36, 0
      %p348 = por %p346, %p347
      %p349 = scmp.ne.s32.totalorder %s341, %s343
      %p350 = scmp.eq.s32.totalorder %s41, 3
      %p351 = por %p349, %p350
      %p352 = scmp.ne.s32.totalorder %s343, %s344
      %p353 = scmp.eq.s32.totalorder %s41, 0
      %p354 = por %p352, %p353
      %p355 = scmp.ne.s32.totalorder %s343, %s344
      %p356 = scmp.eq.s32.totalorder %s42, 3
      %p357 = por %p355, %p356
      %p359 = scmp.ne.s32.totalorder %s344, %s358
      %p360 = scmp.eq.s32.totalorder %s42, 0
      %p361 = por %p359, %p360
      %s363 = sadd.s32 %s362, 1
      %p366 = scmp.eq.s32.totalorder %s36, 3
      %p367 = scmp.ne.s32.totalorder %s362, %s364
      %p368 = scmp.eq.s32.totalorder %s36, 0
      %p369 = por %p367, %p368
      %p370 = scmp.ne.s32.totalorder %s362, %s364
      %p371 = scmp.eq.s32.totalorder %s41, 3
      %p372 = por %p370, %p371
      %p373 = scmp.ne.s32.totalorder %s364, %s365
      %p374 = scmp.eq.s32.totalorder %s41, 0
      %p375 = por %p373, %p374
      %p376 = scmp.ne.s32.totalorder %s364, %s365
      %p377 = scmp.eq.s32.totalorder %s42, 3
      %p378 = por %p376, %p377
      %p380 = scmp.ne.s32.totalorder %s365, %s379
      %p381 = scmp.eq.s32.totalorder %s42, 0
      %p382 = por %p380, %p381
      %s384 = sadd.s32 %s383, 1
      %p387 = scmp.eq.s32.totalorder %s36, 3
      %p388 = scmp.ne.s32.totalorder %s383, %s385
      %p389 = scmp.eq.s32.totalorder %s36, 0
      %p390 = por %p388, %p389
      %p391 = scmp.ne.s32.totalorder %s383, %s385
      %p392 = scmp.eq.s32.totalorder %s41, 3
      %p393 = por %p391, %p392
      %p394 = scmp.ne.s32.totalorder %s385, %s386
      %p395 = scmp.eq.s32.totalorder %s41, 0
      %p396 = por %p394, %p395
      %p397 = scmp.ne.s32.totalorder %s385, %s386
      %p398 = scmp.eq.s32.totalorder %s42, 3
      %p399 = por %p397, %p398
      %p401 = scmp.ne.s32.totalorder %s386, %s400
      %p402 = scmp.eq.s32.totalorder %s42, 0
      %p403 = por %p401, %p402
      %s405 = sadd.s32 %s404, 1
      %p408 = scmp.eq.s32.totalorder %s36, 3
      %p409 = scmp.ne.s32.totalorder %s404, %s406
      %p410 = scmp.eq.s32.totalorder %s36, 0
      %p411 = por %p409, %p410
      %p412 = scmp.ne.s32.totalorder %s404, %s406
      %p413 = scmp.eq.s32.totalorder %s41, 3
      %p414 = por %p412, %p413
      %p415 = scmp.ne.s32.totalorder %s406, %s407
      %p416 = scmp.eq.s32.totalorder %s41, 0
      %p417 = por %p415, %p416
      %p418 = scmp.ne.s32.totalorder %s406, %s407
      %p419 = scmp.eq.s32.totalorder %s42, 3
      %p420 = por %p418, %p419
      %p422 = scmp.ne.s32.totalorder %s407, %s421
      %p423 = scmp.eq.s32.totalorder %s42, 0
      %p424 = por %p422, %p423
      %s426 = sadd.s32 %s425, 1
      %p429 = scmp.eq.s32.totalorder %s36, 3
      %p430 = scmp.ne.s32.totalorder %s425, %s427
      %p431 = scmp.eq.s32.totalorder %s36, 0
      %p432 = por %p430, %p431
      %p433 = scmp.ne.s32.totalorder %s425, %s427
      %p434 = scmp.eq.s32.totalorder %s41, 3
      %p435 = por %p433, %p434
      %p436 = scmp.ne.s32.totalorder %s427, %s428
      %p437 = scmp.eq.s32.totalorder %s41, 0
      %p438 = por %p436, %p437
      %p439 = scmp.ne.s32.totalorder %s427, %s428
      %p440 = scmp.eq.s32.totalorder %s42, 3
      %p441 = por %p439, %p440
      %p443 = scmp.ne.s32.totalorder %s428, %s442
      %p444 = scmp.eq.s32.totalorder %s42, 0
      %p445 = por %p443, %p444
      %s446 = ssub.s32 %s43, %s55
      %s447 = ssub.s32 %s44, %s51
      %s448 = sor.u32 %s446, %s447
      %p449 = scmp.eq.s32.totalorder %s448, 0
      %s451 = sadd.s32 %s450, 1
      %s452 = scalar_select %p449, %s450, %s451
      %p455 = pneg %p449
      %p456 = scmp.eq.s32.totalorder %s36, 3
      %p457 = por %p455, %p456
      %p458 = scmp.ne.s32.totalorder %s450, %s453
      %p459 = scmp.eq.s32.totalorder %s36, 0
      %p460 = por %p458, %p459
      %p461 = scmp.ne.s32.totalorder %s450, %s453
      %p462 = scmp.eq.s32.totalorder %s41, 3
      %p463 = por %p461, %p462
      %p464 = scmp.ne.s32.totalorder %s453, %s454
      %p465 = scmp.eq.s32.totalorder %s41, 0
      %p466 = por %p464, %p465
      %p467 = scmp.ne.s32.totalorder %s453, %s454
      %p468 = scmp.eq.s32.totalorder %s42, 3
      %p469 = por %p467, %p468
      %p471 = scmp.ne.s32.totalorder %s454, %s470
      %p472 = scmp.eq.s32.totalorder %s42, 0
      %p473 = por %p471, %p472
      %p474 = scmp.le.s32.totalorder 1, %s36
      %p475 = scmp.lt.s32.totalorder %s36, 5
      %p476 = pnand %p474, %p475
      %p477 = pneg %p476
      // Predicated region
      $region9: #{tpu_custom_call.1} parent=5 // pred_check
        _
      $region10: #{tpu_custom_call.1} parent=5 // pred_check_branch
        %479 = sbr.rel (%p476) target = $region12
      $region11: #{tpu_custom_call.1} parent=5 // pred_region
        %s480 = ssub.s32 %s36, 1
        // Predicated region
        $region13: #{tpu_custom_call.1} parent=11 // pred_check
          %p481 = pneg %p123
        $region14: #{tpu_custom_call.1} parent=11 // pred_check_branch
          %483 = sbr.rel (%p481) target = $region16
        $region15: #{tpu_custom_call.1} parent=11 // pred_region
          %s485 = ssub.s32 4096, 4096
          %486 = vsyncadd [#allocation8], %s485
          %s487 = sshll.u32 [#allocation9], 4
          %s488 = int_to_ptr.vmem [resolvable:$true] %s487
          %493 = dma.hbm_to_vmem [thread:$0]  %s2, 4096, %s488, [#allocation8], 128, 128, 8
        $region16: #{tpu_custom_call.1} parent=11 // pred_fallthru
          _
        // Predicated region
        $region17: #{tpu_custom_call.1} parent=11 // pred_check
          %p494 = pneg %p144
        $region18: #{tpu_custom_call.1} parent=11 // pred_check_branch
          %496 = sbr.rel (%p494) target = $region20
        $region19: #{tpu_custom_call.1} parent=11 // pred_region
          _
        $region20: #{tpu_custom_call.1} parent=11 // pred_fallthru
          _
        // Predicated region
        $region21: #{tpu_custom_call.1} parent=11 // pred_check
          %p497 = pneg %p165
        $region22: #{tpu_custom_call.1} parent=11 // pred_check_branch
          %499 = sbr.rel (%p497) target = $region24
        $region23: #{tpu_custom_call.1} parent=11 // pred_region
          %s501 = ssub.s32 4096, 4096
          %502 = vsyncadd [#allocation11], %s501
          %s503 = sshll.u32 [#allocation10], 4
          %s504 = int_to_ptr.vmem [resolvable:$true] %s503
          %509 = dma.hbm_to_vmem [thread:$0]  %s4, 4096, %s504, [#allocation11], 128, 128, 8
        $region24: #{tpu_custom_call.1} parent=11 // pred_fallthru
          _
        // Predicated region
        $region25: #{tpu_custom_call.1} parent=11 // pred_check
          %p510 = pneg %p186
        $region26: #{tpu_custom_call.1} parent=11 // pred_check_branch
          %512 = sbr.rel (%p510) target = $region28
        $region27: #{tpu_custom_call.1} parent=11 // pred_region
          _
        $region28: #{tpu_custom_call.1} parent=11 // pred_fallthru
          _
        // Predicated region
        $region29: #{tpu_custom_call.1} parent=11 // pred_check
          %p513 = pneg %p207
        $region30: #{tpu_custom_call.1} parent=11 // pred_check_branch
          %515 = sbr.rel (%p513) target = $region32
        $region31: #{tpu_custom_call.1} parent=11 // pred_region
          %s517 = ssub.s32 4096, 4096
          %518 = vsyncadd [#allocation11], %s517
          %s519 = sshll.u32 [#allocation12], 4
          %s520 = int_to_ptr.vmem [resolvable:$true] %s519
          %525 = dma.hbm_to_vmem [thread:$0]  %s6, 4096, %s520, [#allocation11], 128, 128, 8
        $region32: #{tpu_custom_call.1} parent=11 // pred_fallthru
          _
        // Predicated region
        $region33: #{tpu_custom_call.1} parent=11 // pred_check
          %p526 = pneg %p228
        $region34: #{tpu_custom_call.1} parent=11 // pred_check_branch
          %528 = sbr.rel (%p526) target = $region36
        $region35: #{tpu_custom_call.1} parent=11 // pred_region
          _
        $region36: #{tpu_custom_call.1} parent=11 // pred_fallthru
          _
        // Predicated region
        $region37: #{tpu_custom_call.1} parent=11 // pred_check
          %p529 = pneg %p249
        $region38: #{tpu_custom_call.1} parent=11 // pred_check_branch
          %531 = sbr.rel (%p529) target = $region40
        $region39: #{tpu_custom_call.1} parent=11 // pred_region
          %s533 = ssub.s32 4096, 4096
          %534 = vsyncadd [#allocation14], %s533
          %s535 = sshll.u32 [#allocation13], 4
          %s536 = int_to_ptr.vmem [resolvable:$true] %s535
          %541 = dma.hbm_to_vmem [thread:$0]  %s8, 4096, %s536, [#allocation14], 128, 128, 8
        $region40: #{tpu_custom_call.1} parent=11 // pred_fallthru
          _
        // Predicated region
        $region41: #{tpu_custom_call.1} parent=11 // pred_check
          %p542 = pneg %p270
        $region42: #{tpu_custom_call.1} parent=11 // pred_check_branch
          %544 = sbr.rel (%p542) target = $region44
        $region43: #{tpu_custom_call.1} parent=11 // pred_region
          _
        $region44: #{tpu_custom_call.1} parent=11 // pred_fallthru
          _
        // Predicated region
        $region45: #{tpu_custom_call.1} parent=11 // pred_check
          %p545 = pneg %p291
        $region46: #{tpu_custom_call.1} parent=11 // pred_check_branch
          %547 = sbr.rel (%p545) target = $region48
        $region47: #{tpu_custom_call.1} parent=11 // pred_region
          _
        $region48: #{tpu_custom_call.1} parent=11 // pred_fallthru
          _
        // Predicated region
        $region49: #{tpu_custom_call.1} parent=11 // pred_check
          %p548 = pneg %p312
        $region50: #{tpu_custom_call.1} parent=11 // pred_check_branch
          %550 = sbr.rel (%p548) target = $region52
        $region51: #{tpu_custom_call.1} parent=11 // pred_region
          _
        $region52: #{tpu_custom_call.1} parent=11 // pred_fallthru
          _
        // Predicated region
        $region53: #{tpu_custom_call.1} parent=11 // pred_check
          %p551 = pneg %p333
        $region54: #{tpu_custom_call.1} parent=11 // pred_check_branch
          %553 = sbr.rel (%p551) target = $region56
        $region55: #{tpu_custom_call.1} parent=11 // pred_region
          %s555 = ssub.s32 8192, 8192
          %556 = vsyncadd [#allocation14], %s555
          %s557 = sshll.u32 [#allocation15], 4
          %s558 = int_to_ptr.vmem [resolvable:$true] %s557
          %563 = dma.hbm_to_vmem [thread:$0]  %s12, 8192, %s558, [#allocation14], 256, 256, 16
        $region56: #{tpu_custom_call.1} parent=11 // pred_fallthru
          _
        // Predicated region
        $region57: #{tpu_custom_call.1} parent=11 // pred_check
          %p564 = pneg %p354
        $region58: #{tpu_custom_call.1} parent=11 // pred_check_branch
          %566 = sbr.rel (%p564) target = $region60
        $region59: #{tpu_custom_call.1} parent=11 // pred_region
          _
        $region60: #{tpu_custom_call.1} parent=11 // pred_fallthru
          _
        // Predicated region
        $region61: #{tpu_custom_call.1} parent=11 // pred_check
          %p567 = pneg %p375
        $region62: #{tpu_custom_call.1} parent=11 // pred_check_branch
          %569 = sbr.rel (%p567) target = $region64
        $region63: #{tpu_custom_call.1} parent=11 // pred_region
          %s571 = ssub.s32 8192, 8192
          %572 = vsyncadd [#allocation17], %s571
          %s573 = sshll.u32 [#allocation16], 4
          %s574 = int_to_ptr.vmem [resolvable:$true] %s573
          %579 = dma.hbm_to_vmem [thread:$0]  %s14, 8192, %s574, [#allocation17], 128, 128, 8
        $region64: #{tpu_custom_call.1} parent=11 // pred_fallthru
          _
        // Predicated region
        $region65: #{tpu_custom_call.1} parent=11 // pred_check
          %p580 = pneg %p396
        $region66: #{tpu_custom_call.1} parent=11 // pred_check_branch
          %582 = sbr.rel (%p580) target = $region68
        $region67: #{tpu_custom_call.1} parent=11 // pred_region
          _
        $region68: #{tpu_custom_call.1} parent=11 // pred_fallthru
          _
        // Predicated region
        $region69: #{tpu_custom_call.1} parent=11 // pred_check
          %p583 = pneg %p417
        $region70: #{tpu_custom_call.1} parent=11 // pred_check_branch
          %585 = sbr.rel (%p583) target = $region72
        $region71: #{tpu_custom_call.1} parent=11 // pred_region
          _
        $region72: #{tpu_custom_call.1} parent=11 // pred_fallthru
          _
        // Predicated region
        $region73: #{tpu_custom_call.1} parent=11 // pred_check
          %p586 = pneg %p438
        $region74: #{tpu_custom_call.1} parent=11 // pred_check_branch
          %588 = sbr.rel (%p586) target = $region76
        $region75: #{tpu_custom_call.1} parent=11 // pred_region
          _
        $region76: #{tpu_custom_call.1} parent=11 // pred_fallthru
          _
      $region12: #{tpu_custom_call.1} parent=5 // pred_fallthru
        _
      %p589 = scmp.lt.s32.totalorder %s36, 4
      // Predicated region
      $region77: #{tpu_custom_call.1} parent=5 // pred_check
        %p590 = pneg %p589
      $region78: #{tpu_custom_call.1} parent=5 // pred_check_branch
        %592 = sbr.rel (%p590) target = $region80
      $region79: #{tpu_custom_call.1} parent=5 // pred_region
        // Predicated region
        $region81: #{tpu_custom_call.1} parent=79 // pred_check
          %p593 = pneg %p68
        $region82: #{tpu_custom_call.1} parent=79 // pred_check_branch
          %595 = sbr.rel (%p593) target = $region84
        $region83: #{tpu_custom_call.1} parent=79 // pred_region
          %s596 = sand.u32 %s58, 1
          %s597 = scalar_lea.sflag [#allocation5], %s596
          %s598 = sand.u32 %s58, 1
          %s599 = smul.addr %s598, 16
          %s600 = scalar_lea.vmem [#allocation4], %s599
          %s602 = ssub.s32 256, 256
          %603 = vsyncadd %s597, %s602
          %s604 = smul.addr %s43, 4
          %s605 = smul.addr %s604, 64
          %s606 = scalar_lea.hbm %s0, %s605
          %s607 = sshll.u32 %s600, 4
          %s608 = int_to_ptr.vmem [resolvable:$true] %s607
          %613 = dma.hbm_to_vmem [thread:$0]  %s606, 256, %s608, %s597, 128, 128, 8
        $region84: #{tpu_custom_call.1} parent=79 // pred_fallthru
          _
        // Predicated region
        $region85: #{tpu_custom_call.1} parent=79 // pred_check
          %p614 = pneg %p96
        $region86: #{tpu_custom_call.1} parent=79 // pred_check_branch
          %616 = sbr.rel (%p614) target = $region88
        $region87: #{tpu_custom_call.1} parent=79 // pred_region
          %s617 = sand.u32 %s36, 1
          %s618 = scalar_lea.sflag [#allocation8], %s617
          %s619 = sand.u32 %s86, 1
          %s620 = smul.addr %s619, 16
          %s621 = scalar_lea.vmem [#allocation7], %s620
          %s623 = ssub.s32 256, 256
          %624 = vsyncadd %s618, %s623
          %s625 = smul.addr %s44, 2
          %s626 = smul.addr %s43, 4
          %s627 = sadd.s32 %s625, %s626
          %s628 = smul.addr %s627, 128
          %s629 = scalar_lea.hbm %s1, %s628
          %s631 = sshll.u32 %s621, 4
          %s632 = int_to_ptr.vmem [resolvable:$true] %s631
          %634 = dma.hbm_to_vmem [thread:$0]  %s629, 256, %s632, %s618
        $region88: #{tpu_custom_call.1} parent=79 // pred_fallthru
          _
      $region80: #{tpu_custom_call.1} parent=5 // pred_fallthru
        _
      %p635 = scmp.le.s32.totalorder 1, %s36
      %p636 = scmp.lt.s32.totalorder %s36, 5
      %p637 = pnand %p635, %p636
      %p638 = pneg %p637
      // Predicated region
      $region89: #{tpu_custom_call.1} parent=5 // pred_check
        _
      $region90: #{tpu_custom_call.1} parent=5 // pred_check_branch
        %640 = sbr.rel (%p637) target = $region92
      $region91: #{tpu_custom_call.1} parent=5 // pred_region
        %s641 = ssub.s32 %s36, 1
        %s642 = sand.u32 %s61, 1
        %s643 = scalar_lea.sflag [#allocation5], %s642
        %s644 = sand.u32 %s61, 1
        %s645 = smul.addr %s644, 16
        %s646 = scalar_lea.vmem [#allocation4], %s645
        // Predicated region
        $region93: #{tpu_custom_call.1} parent=91 // pred_check
          %p647 = pneg %p74
        $region94: #{tpu_custom_call.1} parent=91 // pred_check_branch
          %649 = sbr.rel (%p647) target = $region96
        $region95: #{tpu_custom_call.1} parent=91 // pred_region
          %650 = dma.done %s643, 256
        $region96: #{tpu_custom_call.1} parent=91 // pred_fallthru
          _
        %s651 = sand.u32 %s41, 1
        %s652 = scalar_lea.sflag [#allocation8], %s651
        %s653 = sand.u32 %s89, 1
        %s654 = smul.addr %s653, 16
        %s655 = scalar_lea.vmem [#allocation7], %s654
        // Predicated region
        $region97: #{tpu_custom_call.1} parent=91 // pred_check
          %p656 = pneg %p102
        $region98: #{tpu_custom_call.1} parent=91 // pred_check_branch
          %658 = sbr.rel (%p656) target = $region100
        $region99: #{tpu_custom_call.1} parent=91 // pred_region
          %659 = dma.done %s652, 256
        $region100: #{tpu_custom_call.1} parent=91 // pred_fallthru
          _
        // Predicated region
        $region101: #{tpu_custom_call.1} parent=91 // pred_check
          %p660 = pneg %p123
        $region102: #{tpu_custom_call.1} parent=91 // pred_check_branch
          %662 = sbr.rel (%p660) target = $region104
        $region103: #{tpu_custom_call.1} parent=91 // pred_region
          %663 = dma.done [#allocation8], 4096
        $region104: #{tpu_custom_call.1} parent=91 // pred_fallthru
          _
        // Predicated region
        $region105: #{tpu_custom_call.1} parent=91 // pred_check
          %p664 = pneg %p165
        $region106: #{tpu_custom_call.1} parent=91 // pred_check_branch
          %666 = sbr.rel (%p664) target = $region108
        $region107: #{tpu_custom_call.1} parent=91 // pred_region
          %667 = dma.done [#allocation11], 4096
        $region108: #{tpu_custom_call.1} parent=91 // pred_fallthru
          _
        // Predicated region
        $region109: #{tpu_custom_call.1} parent=91 // pred_check
          %p668 = pneg %p207
        $region110: #{tpu_custom_call.1} parent=91 // pred_check_branch
          %670 = sbr.rel (%p668) target = $region112
        $region111: #{tpu_custom_call.1} parent=91 // pred_region
          %671 = dma.done [#allocation11], 4096
        $region112: #{tpu_custom_call.1} parent=91 // pred_fallthru
          _
        // Predicated region
        $region113: #{tpu_custom_call.1} parent=91 // pred_check
          %p672 = pneg %p249
        $region114: #{tpu_custom_call.1} parent=91 // pred_check_branch
          %674 = sbr.rel (%p672) target = $region116
        $region115: #{tpu_custom_call.1} parent=91 // pred_region
          %675 = dma.done [#allocation14], 4096
        $region116: #{tpu_custom_call.1} parent=91 // pred_fallthru
          _
        // Predicated region
        $region117: #{tpu_custom_call.1} parent=91 // pred_check
          %p676 = pneg %p333
        $region118: #{tpu_custom_call.1} parent=91 // pred_check_branch
          %678 = sbr.rel (%p676) target = $region120
        $region119: #{tpu_custom_call.1} parent=91 // pred_region
          %679 = dma.done [#allocation14], 8192
        $region120: #{tpu_custom_call.1} parent=91 // pred_fallthru
          _
        // Predicated region
        $region121: #{tpu_custom_call.1} parent=91 // pred_check
          %p680 = pneg %p375
        $region122: #{tpu_custom_call.1} parent=91 // pred_check_branch
          %682 = sbr.rel (%p680) target = $region124
        $region123: #{tpu_custom_call.1} parent=91 // pred_region
          %683 = dma.done [#allocation17], 8192
        $region124: #{tpu_custom_call.1} parent=91 // pred_fallthru
          _
        %s684 = sand.u32 %s61, 1
        %s685 = scalar_lea.sflag [#allocation5], %s684
        %s686 = sand.u32 %s61, 1
        %s687 = smul.addr %s686, 16
        %s688 = scalar_lea.vmem [#allocation4], %s687
        %p689 = pneg %p74
        %p690 = pneg %p71
        %s691 = sand.u32 %s41, 1
        %s692 = scalar_lea.sflag [#allocation8], %s691
        %s693 = sand.u32 %s89, 1
        %s694 = smul.addr %s693, 16
        %s695 = scalar_lea.vmem [#allocation7], %s694
        %p696 = pneg %p102
        %p697 = pneg %p99
        %p698 = pneg %p123
        %p699 = pneg %p120
        %p700 = pneg %p144
        %p701 = pneg %p141
        %p702 = pneg %p165
        %p703 = pneg %p162
        %p704 = pneg %p186
        %p705 = pneg %p183
        %p706 = pneg %p207
        %p707 = pneg %p204
        %p708 = pneg %p228
        %p709 = pneg %p225
        %p710 = pneg %p249
        %p711 = pneg %p246
        %p712 = pneg %p270
        %p713 = pneg %p267
        %p714 = pneg %p291
        %p715 = pneg %p288
        %p716 = pneg %p312
        %p717 = pneg %p309
        %p718 = pneg %p333
        %p719 = pneg %p330
        %p720 = pneg %p354
        %p721 = pneg %p351
        %p722 = pneg %p375
        %p723 = pneg %p372
        %p724 = pneg %p396
        %p725 = pneg %p393
        %p726 = pneg %p417
        %p727 = pneg %p414
        %p728 = pneg %p438
        %p729 = pneg %p435
        %p730 = pneg %p466
        %p731 = pneg %p463
        %s732 = sand.u32 %s453, 1
        %s733 = scalar_lea.sflag [#allocation6], %s732
        %s734 = sand.u32 %s453, 1
        %s735 = smul.addr %s734, 16
        %s736 = scalar_lea.vmem [#allocation18], %s735
        %p738 = scmp.eq.s32.totalorder %s46, 0
        // Predicated region
        $region125: #{tpu_custom_call.1} parent=91 // pred_check
          %p739 = pneg %p738
        $region126: #{tpu_custom_call.1} parent=91 // pred_check_branch
          %741 = sbr.rel (%p739) target = $region128
        $region127: #{tpu_custom_call.1} parent=91 // pred_region
          %v742 = vld [vmem:[%s646] sm:$0xff]
          %v743 = vld [vmem:[%s646 + $0x8] sm:$0xff]
          %v744 = vld [vmem:[#allocation10] sm:$0xff]
          %v745 = vld [vmem:[#allocation10 + $0x8] sm:$0xff]
          %v746 = vld [vmem:[#allocation10 + $0x10] sm:$0xff]
          %v747 = vld [vmem:[#allocation10 + $0x18] sm:$0xff]
          %v748 = vld [vmem:[#allocation10 + $0x20] sm:$0xff]
          %v749 = vld [vmem:[#allocation10 + $0x28] sm:$0xff]
          %v750 = vld [vmem:[#allocation10 + $0x30] sm:$0xff]
          %v751 = vld [vmem:[#allocation10 + $0x38] sm:$0xff]
          %v752 = vld [vmem:[#allocation10 + $0x40] sm:$0xff]
          %v753 = vld [vmem:[#allocation10 + $0x48] sm:$0xff]
          %v754 = vld [vmem:[#allocation10 + $0x50] sm:$0xff]
          %v755 = vld [vmem:[#allocation10 + $0x58] sm:$0xff]
          %v756 = vld [vmem:[#allocation10 + $0x60] sm:$0xff]
          %v757 = vld [vmem:[#allocation10 + $0x68] sm:$0xff]
          %v758 = vld [vmem:[#allocation10 + $0x70] sm:$0xff]
          %v759 = vld [vmem:[#allocation10 + $0x78] sm:$0xff]
          %v760 = vld [vmem:[#allocation10 + $0x80] sm:$0xff]
          %v761 = vld [vmem:[#allocation10 + $0x88] sm:$0xff]
          %v762 = vld [vmem:[#allocation10 + $0x90] sm:$0xff]
          %v763 = vld [vmem:[#allocation10 + $0x98] sm:$0xff]
          %v764 = vld [vmem:[#allocation10 + $0xa0] sm:$0xff]
          %v765 = vld [vmem:[#allocation10 + $0xa8] sm:$0xff]
          %v766 = vld [vmem:[#allocation10 + $0xb0] sm:$0xff]
          %v767 = vld [vmem:[#allocation10 + $0xb8] sm:$0xff]
          %v768 = vld [vmem:[#allocation10 + $0xc0] sm:$0xff]
          %v769 = vld [vmem:[#allocation10 + $0xc8] sm:$0xff]
          %v770 = vld [vmem:[#allocation10 + $0xd0] sm:$0xff]
          %v771 = vld [vmem:[#allocation10 + $0xd8] sm:$0xff]
          %v772 = vld [vmem:[#allocation10 + $0xe0] sm:$0xff]
          %v773 = vld [vmem:[#allocation10 + $0xe8] sm:$0xff]
          %v774 = vld [vmem:[#allocation10 + $0xf0] sm:$0xff]
          %v775 = vld [vmem:[#allocation10 + $0xf8] sm:$0xff]
          %v776 = vld [vmem:[%s5] sm:$0x3]
          %v778 = vlaneseq
          %v779 = vshrl.u32 %v778, 7
          %v780 = vsub.s32 0, %v779
          %v781 = vrot.slane %v776, %v780
          %v782 = vlaneseq
          %v783 = vshrl.u32 %v782, 7
          %v784 = vsub.s32 1, %v783
          %v785 = vrot.slane %v776, %v784
          %v790 = vunpack.c.l.b16 %v742
          %v791 = vunpack.c.h.b16 %v742
          %v792 = vunpack.c.l.b16 %v743
          %v793 = vunpack.c.h.b16 %v743
          %v794 = vpack.c.b16 %v792, %v790
          %v795 = vpack.c.b16 %v793, %v791
          %v830 = vunpack.c.l.b16 %v744
          %v831 = vunpack.c.h.b16 %v744
          %v832 = vunpack.c.l.b16 %v745
          %v833 = vunpack.c.h.b16 %v745
          %v834 = vunpack.c.l.b16 %v746
          %v835 = vunpack.c.h.b16 %v746
          %v836 = vunpack.c.l.b16 %v747
          %v837 = vunpack.c.h.b16 %v747
          %v838 = vunpack.c.l.b16 %v748
          %v839 = vunpack.c.h.b16 %v748
          %v840 = vunpack.c.l.b16 %v749
          %v841 = vunpack.c.h.b16 %v749
          %v842 = vunpack.c.l.b16 %v750
          %v843 = vunpack.c.h.b16 %v750
          %v844 = vunpack.c.l.b16 %v751
          %v845 = vunpack.c.h.b16 %v751
          %v846 = vunpack.c.l.b16 %v752
          %v847 = vunpack.c.h.b16 %v752
          %v848 = vunpack.c.l.b16 %v753
          %v849 = vunpack.c.h.b16 %v753
          %v850 = vunpack.c.l.b16 %v754
          %v851 = vunpack.c.h.b16 %v754
          %v852 = vunpack.c.l.b16 %v755
          %v853 = vunpack.c.h.b16 %v755
          %v854 = vunpack.c.l.b16 %v756
          %v855 = vunpack.c.h.b16 %v756
          %v856 = vunpack.c.l.b16 %v757
          %v857 = vunpack.c.h.b16 %v757
          %v858 = vunpack.c.l.b16 %v758
          %v859 = vunpack.c.h.b16 %v758
          %v860 = vunpack.c.l.b16 %v759
          %v861 = vunpack.c.h.b16 %v759
          %v862 = vunpack.c.l.b16 %v760
          %v863 = vunpack.c.h.b16 %v760
          %v864 = vunpack.c.l.b16 %v761
          %v865 = vunpack.c.h.b16 %v761
          %v866 = vunpack.c.l.b16 %v762
          %v867 = vunpack.c.h.b16 %v762
          %v868 = vunpack.c.l.b16 %v763
          %v869 = vunpack.c.h.b16 %v763
          %v870 = vunpack.c.l.b16 %v764
          %v871 = vunpack.c.h.b16 %v764
          %v872 = vunpack.c.l.b16 %v765
          %v873 = vunpack.c.h.b16 %v765
          %v874 = vunpack.c.l.b16 %v766
          %v875 = vunpack.c.h.b16 %v766
          %v876 = vunpack.c.l.b16 %v767
          %v877 = vunpack.c.h.b16 %v767
          %v878 = vunpack.c.l.b16 %v768
          %v879 = vunpack.c.h.b16 %v768
          %v880 = vunpack.c.l.b16 %v769
          %v881 = vunpack.c.h.b16 %v769
          %v882 = vunpack.c.l.b16 %v770
          %v883 = vunpack.c.h.b16 %v770
          %v884 = vunpack.c.l.b16 %v771
          %v885 = vunpack.c.h.b16 %v771
          %v886 = vunpack.c.l.b16 %v772
          %v887 = vunpack.c.h.b16 %v772
          %v888 = vunpack.c.l.b16 %v773
          %v889 = vunpack.c.h.b16 %v773
          %v890 = vunpack.c.l.b16 %v774
          %v891 = vunpack.c.h.b16 %v774
          %v892 = vunpack.c.l.b16 %v775
          %v893 = vunpack.c.h.b16 %v775
          %v894 = vpack.c.b16 %v832, %v830
          %v895 = vpack.c.b16 %v833, %v831
          %v896 = vpack.c.b16 %v836, %v834
          %v897 = vpack.c.b16 %v837, %v835
          %v898 = vpack.c.b16 %v840, %v838
          %v899 = vpack.c.b16 %v841, %v839
          %v900 = vpack.c.b16 %v844, %v842
          %v901 = vpack.c.b16 %v845, %v843
          %v902 = vpack.c.b16 %v848, %v846
          %v903 = vpack.c.b16 %v849, %v847
          %v904 = vpack.c.b16 %v852, %v850
          %v905 = vpack.c.b16 %v853, %v851
          %v906 = vpack.c.b16 %v856, %v854
          %v907 = vpack.c.b16 %v857, %v855
          %v908 = vpack.c.b16 %v860, %v858
          %v909 = vpack.c.b16 %v861, %v859
          %v910 = vpack.c.b16 %v864, %v862
          %v911 = vpack.c.b16 %v865, %v863
          %v912 = vpack.c.b16 %v868, %v866
          %v913 = vpack.c.b16 %v869, %v867
          %v914 = vpack.c.b16 %v872, %v870
          %v915 = vpack.c.b16 %v873, %v871
          %v916 = vpack.c.b16 %v876, %v874
          %v917 = vpack.c.b16 %v877, %v875
          %v918 = vpack.c.b16 %v880, %v878
          %v919 = vpack.c.b16 %v881, %v879
          %v920 = vpack.c.b16 %v884, %v882
          %v921 = vpack.c.b16 %v885, %v883
          %v922 = vpack.c.b16 %v888, %v886
          %v923 = vpack.c.b16 %v889, %v887
          %v924 = vpack.c.b16 %v892, %v890
          %v925 = vpack.c.b16 %v893, %v891
          %958 = vmatprep.subr.bf16.mxu0 %v909
          %959 = vmatpush1.bf16.msra.mxu0 %v908
          %960 = vmatprep.subr.bf16.mxu0 %v907
          %961 = vmatpush1.bf16.msra.mxu0 %v906
          %962 = vmatprep.subr.bf16.mxu0 %v905
          %963 = vmatpush1.bf16.msra.mxu0 %v904
          %964 = vmatprep.subr.bf16.mxu0 %v903
          %965 = vmatpush1.bf16.msra.mxu0 %v902
          %966 = vmatprep.subr.bf16.mxu0 %v901
          %967 = vmatpush1.bf16.msra.mxu0 %v900
          %968 = vmatprep.subr.bf16.mxu0 %v899
          %969 = vmatpush1.bf16.msra.mxu0 %v898
          %970 = vmatprep.subr.bf16.mxu0 %v897
          %971 = vmatpush1.bf16.msra.mxu0 %v896
          %972 = vmatprep.subr.bf16.mxu0 %v895
          %973 = vmatpush1.bf16.msra.mxu0 %v894
          %974 = vmatprep.subr.bf16.mxu0 %v925
          %975 = vmatpush2.bf16.msra.mxu0 %v924
          %976 = vmatprep.subr.bf16.mxu0 %v923
          %977 = vmatpush2.bf16.msra.mxu0 %v922
          %978 = vmatprep.subr.bf16.mxu0 %v921
          %979 = vmatpush2.bf16.msra.mxu0 %v920
          %980 = vmatprep.subr.bf16.mxu0 %v919
          %981 = vmatpush2.bf16.msra.mxu0 %v918
          %982 = vmatprep.subr.bf16.mxu0 %v917
          %983 = vmatpush2.bf16.msra.mxu0 %v916
          %984 = vmatprep.subr.bf16.mxu0 %v915
          %985 = vmatpush2.bf16.msra.mxu0 %v914
          %986 = vmatprep.subr.bf16.mxu0 %v913
          %987 = vmatpush2.bf16.msra.mxu0 %v912
          %988 = vmatprep.subr.bf16.mxu0 %v911
          %989 = vmatpush2.bf16.msra.mxu0 %v910
          %990 = vmatprep.mubr.bf16.mxu0 %v795
          %991 = vmatmul.mubr.bf16.gmra.mxu0 %v794
          %v992 = vpop.f32.mrf.mxu0
          %v993 = vadd.f32 %v781, %v992
          %v994 = vpop.f32.mrf.mxu0
          %v995 = vadd.f32 %v785, %v994
          %v996 = vpop.f32.mrf.mxu0
          %v997 = vadd.f32 %v781, %v996
          %v998 = vpop.f32.mrf.mxu0
          %v999 = vadd.f32 %v785, %v998
          %1000 = vdwg.mxu0
          %v1001 = vld [vmem:[#allocation12] sm:$0xff]
          %v1002 = vld [vmem:[#allocation12 + $0x8] sm:$0xff]
          %v1003 = vld [vmem:[#allocation12 + $0x10] sm:$0xff]
          %v1004 = vld [vmem:[#allocation12 + $0x18] sm:$0xff]
          %v1005 = vld [vmem:[#allocation12 + $0x20] sm:$0xff]
          %v1006 = vld [vmem:[#allocation12 + $0x28] sm:$0xff]
          %v1007 = vld [vmem:[#allocation12 + $0x30] sm:$0xff]
          %v1008 = vld [vmem:[#allocation12 + $0x38] sm:$0xff]
          %v1009 = vld [vmem:[#allocation12 + $0x40] sm:$0xff]
          %v1010 = vld [vmem:[#allocation12 + $0x48] sm:$0xff]
          %v1011 = vld [vmem:[#allocation12 + $0x50] sm:$0xff]
          %v1012 = vld [vmem:[#allocation12 + $0x58] sm:$0xff]
          %v1013 = vld [vmem:[#allocation12 + $0x60] sm:$0xff]
          %v1014 = vld [vmem:[#allocation12 + $0x68] sm:$0xff]
          %v1015 = vld [vmem:[#allocation12 + $0x70] sm:$0xff]
          %v1016 = vld [vmem:[#allocation12 + $0x78] sm:$0xff]
          %v1017 = vld [vmem:[#allocation12 + $0x80] sm:$0xff]
          %v1018 = vld [vmem:[#allocation12 + $0x88] sm:$0xff]
          %v1019 = vld [vmem:[#allocation12 + $0x90] sm:$0xff]
          %v1020 = vld [vmem:[#allocation12 + $0x98] sm:$0xff]
          %v1021 = vld [vmem:[#allocation12 + $0xa0] sm:$0xff]
          %v1022 = vld [vmem:[#allocation12 + $0xa8] sm:$0xff]
          %v1023 = vld [vmem:[#allocation12 + $0xb0] sm:$0xff]
          %v1024 = vld [vmem:[#allocation12 + $0xb8] sm:$0xff]
          %v1025 = vld [vmem:[#allocation12 + $0xc0] sm:$0xff]
          %v1026 = vld [vmem:[#allocation12 + $0xc8] sm:$0xff]
          %v1027 = vld [vmem:[#allocation12 + $0xd0] sm:$0xff]
          %v1028 = vld [vmem:[#allocation12 + $0xd8] sm:$0xff]
          %v1029 = vld [vmem:[#allocation12 + $0xe0] sm:$0xff]
          %v1030 = vld [vmem:[#allocation12 + $0xe8] sm:$0xff]
          %v1031 = vld [vmem:[#allocation12 + $0xf0] sm:$0xff]
          %v1032 = vld [vmem:[#allocation12 + $0xf8] sm:$0xff]
          %v1033 = vld [vmem:[%s7] sm:$0x3]
          %v1035 = vlaneseq
          %v1036 = vshrl.u32 %v1035, 7
          %v1037 = vsub.s32 0, %v1036
          %v1038 = vrot.slane %v1033, %v1037
          %v1039 = vlaneseq
          %v1040 = vshrl.u32 %v1039, 7
          %v1041 = vsub.s32 1, %v1040
          %v1042 = vrot.slane %v1033, %v1041
          %v1077 = vunpack.c.l.b16 %v1001
          %v1078 = vunpack.c.h.b16 %v1001
          %v1079 = vunpack.c.l.b16 %v1002
          %v1080 = vunpack.c.h.b16 %v1002
          %v1081 = vunpack.c.l.b16 %v1003
          %v1082 = vunpack.c.h.b16 %v1003
          %v1083 = vunpack.c.l.b16 %v1004
          %v1084 = vunpack.c.h.b16 %v1004
          %v1085 = vunpack.c.l.b16 %v1005
          %v1086 = vunpack.c.h.b16 %v1005
          %v1087 = vunpack.c.l.b16 %v1006
          %v1088 = vunpack.c.h.b16 %v1006
          %v1089 = vunpack.c.l.b16 %v1007
          %v1090 = vunpack.c.h.b16 %v1007
          %v1091 = vunpack.c.l.b16 %v1008
          %v1092 = vunpack.c.h.b16 %v1008
          %v1093 = vunpack.c.l.b16 %v1009
          %v1094 = vunpack.c.h.b16 %v1009
          %v1095 = vunpack.c.l.b16 %v1010
          %v1096 = vunpack.c.h.b16 %v1010
          %v1097 = vunpack.c.l.b16 %v1011
          %v1098 = vunpack.c.h.b16 %v1011
          %v1099 = vunpack.c.l.b16 %v1012
          %v1100 = vunpack.c.h.b16 %v1012
          %v1101 = vunpack.c.l.b16 %v1013
          %v1102 = vunpack.c.h.b16 %v1013
          %v1103 = vunpack.c.l.b16 %v1014
          %v1104 = vunpack.c.h.b16 %v1014
          %v1105 = vunpack.c.l.b16 %v1015
          %v1106 = vunpack.c.h.b16 %v1015
          %v1107 = vunpack.c.l.b16 %v1016
          %v1108 = vunpack.c.h.b16 %v1016
          %v1109 = vunpack.c.l.b16 %v1017
          %v1110 = vunpack.c.h.b16 %v1017
          %v1111 = vunpack.c.l.b16 %v1018
          %v1112 = vunpack.c.h.b16 %v1018
          %v1113 = vunpack.c.l.b16 %v1019
          %v1114 = vunpack.c.h.b16 %v1019
          %v1115 = vunpack.c.l.b16 %v1020
          %v1116 = vunpack.c.h.b16 %v1020
          %v1117 = vunpack.c.l.b16 %v1021
          %v1118 = vunpack.c.h.b16 %v1021
          %v1119 = vunpack.c.l.b16 %v1022
          %v1120 = vunpack.c.h.b16 %v1022
          %v1121 = vunpack.c.l.b16 %v1023
          %v1122 = vunpack.c.h.b16 %v1023
          %v1123 = vunpack.c.l.b16 %v1024
          %v1124 = vunpack.c.h.b16 %v1024
          %v1125 = vunpack.c.l.b16 %v1025
          %v1126 = vunpack.c.h.b16 %v1025
          %v1127 = vunpack.c.l.b16 %v1026
          %v1128 = vunpack.c.h.b16 %v1026
          %v1129 = vunpack.c.l.b16 %v1027
          %v1130 = vunpack.c.h.b16 %v1027
          %v1131 = vunpack.c.l.b16 %v1028
          %v1132 = vunpack.c.h.b16 %v1028
          %v1133 = vunpack.c.l.b16 %v1029
          %v1134 = vunpack.c.h.b16 %v1029
          %v1135 = vunpack.c.l.b16 %v1030
          %v1136 = vunpack.c.h.b16 %v1030
          %v1137 = vunpack.c.l.b16 %v1031
          %v1138 = vunpack.c.h.b16 %v1031
          %v1139 = vunpack.c.l.b16 %v1032
          %v1140 = vunpack.c.h.b16 %v1032
          %v1141 = vpack.c.b16 %v1079, %v1077
          %v1142 = vpack.c.b16 %v1080, %v1078
          %v1143 = vpack.c.b16 %v1083, %v1081
          %v1144 = vpack.c.b16 %v1084, %v1082
          %v1145 = vpack.c.b16 %v1087, %v1085
          %v1146 = vpack.c.b16 %v1088, %v1086
          %v1147 = vpack.c.b16 %v1091, %v1089
          %v1148 = vpack.c.b16 %v1092, %v1090
          %v1149 = vpack.c.b16 %v1095, %v1093
          %v1150 = vpack.c.b16 %v1096, %v1094
          %v1151 = vpack.c.b16 %v1099, %v1097
          %v1152 = vpack.c.b16 %v1100, %v1098
          %v1153 = vpack.c.b16 %v1103, %v1101
          %v1154 = vpack.c.b16 %v1104, %v1102
          %v1155 = vpack.c.b16 %v1107, %v1105
          %v1156 = vpack.c.b16 %v1108, %v1106
          %v1157 = vpack.c.b16 %v1111, %v1109
          %v1158 = vpack.c.b16 %v1112, %v1110
          %v1159 = vpack.c.b16 %v1115, %v1113
          %v1160 = vpack.c.b16 %v1116, %v1114
          %v1161 = vpack.c.b16 %v1119, %v1117
          %v1162 = vpack.c.b16 %v1120, %v1118
          %v1163 = vpack.c.b16 %v1123, %v1121
          %v1164 = vpack.c.b16 %v1124, %v1122
          %v1165 = vpack.c.b16 %v1127, %v1125
          %v1166 = vpack.c.b16 %v1128, %v1126
          %v1167 = vpack.c.b16 %v1131, %v1129
          %v1168 = vpack.c.b16 %v1132, %v1130
          %v1169 = vpack.c.b16 %v1135, %v1133
          %v1170 = vpack.c.b16 %v1136, %v1134
          %v1171 = vpack.c.b16 %v1139, %v1137
          %v1172 = vpack.c.b16 %v1140, %v1138
          %1205 = vmatprep.subr.bf16.mxu0 %v1156
          %1206 = vmatpush1.bf16.msra.mxu0 %v1155
          %1207 = vmatprep.subr.bf16.mxu0 %v1154
          %1208 = vmatpush1.bf16.msra.mxu0 %v1153
          %1209 = vmatprep.subr.bf16.mxu0 %v1152
          %1210 = vmatpush1.bf16.msra.mxu0 %v1151
          %1211 = vmatprep.subr.bf16.mxu0 %v1150
          %1212 = vmatpush1.bf16.msra.mxu0 %v1149
          %1213 = vmatprep.subr.bf16.mxu0 %v1148
          %1214 = vmatpush1.bf16.msra.mxu0 %v1147
          %1215 = vmatprep.subr.bf16.mxu0 %v1146
          %1216 = vmatpush1.bf16.msra.mxu0 %v1145
          %1217 = vmatprep.subr.bf16.mxu0 %v1144
          %1218 = vmatpush1.bf16.msra.mxu0 %v1143
          %1219 = vmatprep.subr.bf16.mxu0 %v1142
          %1220 = vmatpush1.bf16.msra.mxu0 %v1141
          %1221 = vmatprep.subr.bf16.mxu0 %v1172
          %1222 = vmatpush2.bf16.msra.mxu0 %v1171
          %1223 = vmatprep.subr.bf16.mxu0 %v1170
          %1224 = vmatpush2.bf16.msra.mxu0 %v1169
          %1225 = vmatprep.subr.bf16.mxu0 %v1168
          %1226 = vmatpush2.bf16.msra.mxu0 %v1167
          %1227 = vmatprep.subr.bf16.mxu0 %v1166
          %1228 = vmatpush2.bf16.msra.mxu0 %v1165
          %1229 = vmatprep.subr.bf16.mxu0 %v1164
          %1230 = vmatpush2.bf16.msra.mxu0 %v1163
          %1231 = vmatprep.subr.bf16.mxu0 %v1162
          %1232 = vmatpush2.bf16.msra.mxu0 %v1161
          %1233 = vmatprep.subr.bf16.mxu0 %v1160
          %1234 = vmatpush2.bf16.msra.mxu0 %v1159
          %1235 = vmatprep.subr.bf16.mxu0 %v1158
          %1236 = vmatpush2.bf16.msra.mxu0 %v1157
          %1237 = vmatprep.mubr.bf16.mxu0 %v795
          %1238 = vmatmul.mubr.bf16.gmra.mxu0 %v794
          %v1239 = vpop.f32.mrf.mxu0
          %v1240 = vadd.f32 %v1038, %v1239
          %v1241 = vpop.f32.mrf.mxu0
          %v1242 = vadd.f32 %v1042, %v1241
          %v1243 = vpop.f32.mrf.mxu0
          %v1244 = vadd.f32 %v1038, %v1243
          %v1245 = vpop.f32.mrf.mxu0
          %v1246 = vadd.f32 %v1042, %v1245
          %1247 = vdwg.mxu0
          %v1248 = vcombine.high %v993, 0.0
          %v1250 = vunpack.c.l.s4 1983009808
          %v1251 = vunpack.c.0.s8 %v1250
          %v1252 = vlaneseq
          %v1253 = vshrl.u32 %v1252, 7
          %v1254 = vsub.s32 %v1251, %v1253
          %v1255 = vrot.slane %v993, %v1254
          %v1257 = vunpack.c.l.s4 1983009808
          %v1258 = vunpack.c.0.s8 %v1257
          %v1259 = vlaneseq
          %v1260 = vshrl.u32 %v1259, 7
          %v1261 = vsub.s32 %v1258, %v1260
          %v1262 = vrot.slane %v1248, %v1261
          %v1263 = vcombine.high %v995, 0.0
          %v1265 = vunpack.c.l.s4 1983009808
          %v1266 = vunpack.c.0.s8 %v1265
          %v1267 = vlaneseq
          %v1268 = vshrl.u32 %v1267, 7
          %v1269 = vsub.s32 %v1266, %v1268
          %v1270 = vrot.slane %v995, %v1269
          %v1272 = vunpack.c.l.s4 1983009808
          %v1273 = vunpack.c.0.s8 %v1272
          %v1274 = vlaneseq
          %v1275 = vshrl.u32 %v1274, 7
          %v1276 = vsub.s32 %v1273, %v1275
          %v1277 = vrot.slane %v1263, %v1276
          %v1278 = vcombine.low %v1255, %v1270
          %v1279 = vcombine.high %v1255, %v1270
          %v1281 = vunpack.c.l.s4 1934713408
          %v1282 = vunpack.c.0.s8 %v1281
          %v1283 = vlaneseq
          %v1284 = vshrl.u32 %v1283, 7
          %v1285 = vsub.s32 %v1282, %v1284
          %v1286 = vrot.slane %v1278, %v1285
          %v1288 = vunpack.c.l.s4 1934713408
          %v1289 = vunpack.c.0.s8 %v1288
          %v1290 = vlaneseq
          %v1291 = vshrl.u32 %v1290, 7
          %v1292 = vsub.s32 %v1289, %v1291
          %v1293 = vrot.slane %v1279, %v1292
          %v1294 = vcombine.low %v1262, %v1277
          %v1295 = vcombine.high %v1262, %v1277
          %v1297 = vunpack.c.l.s4 1934713408
          %v1298 = vunpack.c.0.s8 %v1297
          %v1299 = vlaneseq
          %v1300 = vshrl.u32 %v1299, 7
          %v1301 = vsub.s32 %v1298, %v1300
          %v1302 = vrot.slane %v1294, %v1301
          %v1304 = vunpack.c.l.s4 1934713408
          %v1305 = vunpack.c.0.s8 %v1304
          %v1306 = vlaneseq
          %v1307 = vshrl.u32 %v1306, 7
          %v1308 = vsub.s32 %v1305, %v1307
          %v1309 = vrot.slane %v1295, %v1308
          %v1310 = vcombine.high %v1286, 0.0
          %v1311 = vcombine.high %v1293, 0.0
          %v1312 = vcombine.high %v1302, 0.0
          %v1313 = vcombine.high %v1309, 0.0
          %v1314 = vcombine.high %v997, 0.0
          %v1316 = vunpack.c.l.s4 1983009808
          %v1317 = vunpack.c.0.s8 %v1316
          %v1318 = vlaneseq
          %v1319 = vshrl.u32 %v1318, 7
          %v1320 = vsub.s32 %v1317, %v1319
          %v1321 = vrot.slane %v997, %v1320
          %v1323 = vunpack.c.l.s4 1983009808
          %v1324 = vunpack.c.0.s8 %v1323
          %v1325 = vlaneseq
          %v1326 = vshrl.u32 %v1325, 7
          %v1327 = vsub.s32 %v1324, %v1326
          %v1328 = vrot.slane %v1314, %v1327
          %v1329 = vcombine.high %v999, 0.0
          %v1331 = vunpack.c.l.s4 1983009808
          %v1332 = vunpack.c.0.s8 %v1331
          %v1333 = vlaneseq
          %v1334 = vshrl.u32 %v1333, 7
          %v1335 = vsub.s32 %v1332, %v1334
          %v1336 = vrot.slane %v999, %v1335
          %v1338 = vunpack.c.l.s4 1983009808
          %v1339 = vunpack.c.0.s8 %v1338
          %v1340 = vlaneseq
          %v1341 = vshrl.u32 %v1340, 7
          %v1342 = vsub.s32 %v1339, %v1341
          %v1343 = vrot.slane %v1329, %v1342
          %v1344 = vcombine.low %v1321, %v1336
          %v1345 = vcombine.high %v1321, %v1336
          %v1347 = vunpack.c.l.s4 1934713408
          %v1348 = vunpack.c.0.s8 %v1347
          %v1349 = vlaneseq
          %v1350 = vshrl.u32 %v1349, 7
          %v1351 = vsub.s32 %v1348, %v1350
          %v1352 = vrot.slane %v1344, %v1351
          %v1354 = vunpack.c.l.s4 1934713408
          %v1355 = vunpack.c.0.s8 %v1354
          %v1356 = vlaneseq
          %v1357 = vshrl.u32 %v1356, 7
          %v1358 = vsub.s32 %v1355, %v1357
          %v1359 = vrot.slane %v1345, %v1358
          %v1360 = vcombine.low %v1328, %v1343
          %v1361 = vcombine.high %v1328, %v1343
          %v1363 = vunpack.c.l.s4 1934713408
          %v1364 = vunpack.c.0.s8 %v1363
          %v1365 = vlaneseq
          %v1366 = vshrl.u32 %v1365, 7
          %v1367 = vsub.s32 %v1364, %v1366
          %v1368 = vrot.slane %v1360, %v1367
          %v1370 = vunpack.c.l.s4 1934713408
          %v1371 = vunpack.c.0.s8 %v1370
          %v1372 = vlaneseq
          %v1373 = vshrl.u32 %v1372, 7
          %v1374 = vsub.s32 %v1371, %v1373
          %v1375 = vrot.slane %v1361, %v1374
          %v1376 = vcombine.high %v1352, 0.0
          %v1377 = vcombine.high %v1359, 0.0
          %v1378 = vcombine.high %v1368, 0.0
          %v1379 = vcombine.high %v1375, 0.0
          %v1380 = vcombine.low %v1286, %v1293
          %v1382 = vunpack.c.l.s4 1983009808
          %v1383 = vunpack.c.0.s8 %v1382
          %v1384 = vlaneseq
          %v1385 = vshrl.u32 %v1384, 7
          %v1386 = vsub.s32 %v1383, %v1385
          %v1387 = vrot.slane %v1380, %v1386
          %v1388 = vcombine.low %v1310, %v1311
          %v1390 = vunpack.c.l.s4 1983009808
          %v1391 = vunpack.c.0.s8 %v1390
          %v1392 = vlaneseq
          %v1393 = vshrl.u32 %v1392, 7
          %v1394 = vsub.s32 %v1391, %v1393
          %v1395 = vrot.slane %v1388, %v1394
          %v1396 = vcombine.low %v1302, %v1309
          %v1398 = vunpack.c.l.s4 1983009808
          %v1399 = vunpack.c.0.s8 %v1398
          %v1400 = vlaneseq
          %v1401 = vshrl.u32 %v1400, 7
          %v1402 = vsub.s32 %v1399, %v1401
          %v1403 = vrot.slane %v1396, %v1402
          %v1404 = vcombine.low %v1312, %v1313
          %v1406 = vunpack.c.l.s4 1983009808
          %v1407 = vunpack.c.0.s8 %v1406
          %v1408 = vlaneseq
          %v1409 = vshrl.u32 %v1408, 7
          %v1410 = vsub.s32 %v1407, %v1409
          %v1411 = vrot.slane %v1404, %v1410
          %v1412 = vcombine.low %v1387, %v1395
          %v1414 = vunpack.c.l.s4 1934713408
          %v1415 = vunpack.c.0.s8 %v1414
          %v1416 = vlaneseq
          %v1417 = vshrl.u32 %v1416, 7
          %v1418 = vsub.s32 %v1415, %v1417
          %v1419 = vrot.slane %v1412, %v1418
          %v1420 = vcombine.low %v1403, %v1411
          %v1422 = vunpack.c.l.s4 1934713408
          %v1423 = vunpack.c.0.s8 %v1422
          %v1424 = vlaneseq
          %v1425 = vshrl.u32 %v1424, 7
          %v1426 = vsub.s32 %v1423, %v1425
          %v1427 = vrot.slane %v1420, %v1426
          %v1428 = vcombine.low %v1419, %v1427
          %v1429 = vcombine.high %v1419, %v1427
          %v1430 = vcombine.low %v1352, %v1359
          %v1432 = vunpack.c.l.s4 1983009808
          %v1433 = vunpack.c.0.s8 %v1432
          %v1434 = vlaneseq
          %v1435 = vshrl.u32 %v1434, 7
          %v1436 = vsub.s32 %v1433, %v1435
          %v1437 = vrot.slane %v1430, %v1436
          %v1438 = vcombine.low %v1376, %v1377
          %v1440 = vunpack.c.l.s4 1983009808
          %v1441 = vunpack.c.0.s8 %v1440
          %v1442 = vlaneseq
          %v1443 = vshrl.u32 %v1442, 7
          %v1444 = vsub.s32 %v1441, %v1443
          %v1445 = vrot.slane %v1438, %v1444
          %v1446 = vcombine.low %v1368, %v1375
          %v1448 = vunpack.c.l.s4 1983009808
          %v1449 = vunpack.c.0.s8 %v1448
          %v1450 = vlaneseq
          %v1451 = vshrl.u32 %v1450, 7
          %v1452 = vsub.s32 %v1449, %v1451
          %v1453 = vrot.slane %v1446, %v1452
          %v1454 = vcombine.low %v1378, %v1379
          %v1456 = vunpack.c.l.s4 1983009808
          %v1457 = vunpack.c.0.s8 %v1456
          %v1458 = vlaneseq
          %v1459 = vshrl.u32 %v1458, 7
          %v1460 = vsub.s32 %v1457, %v1459
          %v1461 = vrot.slane %v1454, %v1460
          %v1462 = vcombine.low %v1437, %v1445
          %v1464 = vunpack.c.l.s4 1934713408
          %v1465 = vunpack.c.0.s8 %v1464
          %v1466 = vlaneseq
          %v1467 = vshrl.u32 %v1466, 7
          %v1468 = vsub.s32 %v1465, %v1467
          %v1469 = vrot.slane %v1462, %v1468
          %v1470 = vcombine.low %v1453, %v1461
          %v1472 = vunpack.c.l.s4 1934713408
          %v1473 = vunpack.c.0.s8 %v1472
          %v1474 = vlaneseq
          %v1475 = vshrl.u32 %v1474, 7
          %v1476 = vsub.s32 %v1473, %v1475
          %v1477 = vrot.slane %v1470, %v1476
          %v1478 = vcombine.low %v1469, %v1477
          %v1479 = vcombine.high %v1469, %v1477
          %v1480 = vpack.c.bf16 %v1478, %v1428
          %v1481 = vpack.c.bf16 %v1479, %v1429
          %v1484 = vunpack.c.l.b16 %v1480
          %v1485 = vunpack.c.h.b16 %v1480
          %v1486 = vunpack.c.l.b16 %v1481
          %v1487 = vunpack.c.h.b16 %v1481
          %v1488 = vpack.c.b16 %v1484, %v1484
          %v1489 = vpack.c.b16 %v1485, %v1485
          %v1490 = vpack.c.b16 %v1486, %v1486
          %v1491 = vpack.c.b16 %v1487, %v1487
          %1496 = vst [vmem:[#allocation2] sm:$0xf] %v1488
          %1497 = vst [vmem:[#allocation2 + $0x4] sm:$0xf] %v1489
          %1498 = vst [vmem:[#allocation2 + $0x8] sm:$0xf] %v1490
          %1499 = vst [vmem:[#allocation2 + $0xc] sm:$0xf] %v1491
          %v1500 = vcombine.high %v1240, 0.0
          %v1502 = vunpack.c.l.s4 1983009808
          %v1503 = vunpack.c.0.s8 %v1502
          %v1504 = vlaneseq
          %v1505 = vshrl.u32 %v1504, 7
          %v1506 = vsub.s32 %v1503, %v1505
          %v1507 = vrot.slane %v1240, %v1506
          %v1509 = vunpack.c.l.s4 1983009808
          %v1510 = vunpack.c.0.s8 %v1509
          %v1511 = vlaneseq
          %v1512 = vshrl.u32 %v1511, 7
          %v1513 = vsub.s32 %v1510, %v1512
          %v1514 = vrot.slane %v1500, %v1513
          %v1515 = vcombine.high %v1242, 0.0
          %v1517 = vunpack.c.l.s4 1983009808
          %v1518 = vunpack.c.0.s8 %v1517
          %v1519 = vlaneseq
          %v1520 = vshrl.u32 %v1519, 7
          %v1521 = vsub.s32 %v1518, %v1520
          %v1522 = vrot.slane %v1242, %v1521
          %v1524 = vunpack.c.l.s4 1983009808
          %v1525 = vunpack.c.0.s8 %v1524
          %v1526 = vlaneseq
          %v1527 = vshrl.u32 %v1526, 7
          %v1528 = vsub.s32 %v1525, %v1527
          %v1529 = vrot.slane %v1515, %v1528
          %v1530 = vcombine.low %v1507, %v1522
          %v1531 = vcombine.high %v1507, %v1522
          %v1533 = vunpack.c.l.s4 1934713408
          %v1534 = vunpack.c.0.s8 %v1533
          %v1535 = vlaneseq
          %v1536 = vshrl.u32 %v1535, 7
          %v1537 = vsub.s32 %v1534, %v1536
          %v1538 = vrot.slane %v1530, %v1537
          %v1540 = vunpack.c.l.s4 1934713408
          %v1541 = vunpack.c.0.s8 %v1540
          %v1542 = vlaneseq
          %v1543 = vshrl.u32 %v1542, 7
          %v1544 = vsub.s32 %v1541, %v1543
          %v1545 = vrot.slane %v1531, %v1544
          %v1546 = vcombine.low %v1514, %v1529
          %v1547 = vcombine.high %v1514, %v1529
          %v1549 = vunpack.c.l.s4 1934713408
          %v1550 = vunpack.c.0.s8 %v1549
          %v1551 = vlaneseq
          %v1552 = vshrl.u32 %v1551, 7
          %v1553 = vsub.s32 %v1550, %v1552
          %v1554 = vrot.slane %v1546, %v1553
          %v1556 = vunpack.c.l.s4 1934713408
          %v1557 = vunpack.c.0.s8 %v1556
          %v1558 = vlaneseq
          %v1559 = vshrl.u32 %v1558, 7
          %v1560 = vsub.s32 %v1557, %v1559
          %v1561 = vrot.slane %v1547, %v1560
          %v1562 = vcombine.high %v1538, 0.0
          %v1563 = vcombine.high %v1545, 0.0
          %v1564 = vcombine.high %v1554, 0.0
          %v1565 = vcombine.high %v1561, 0.0
          %v1566 = vcombine.high %v1244, 0.0
          %v1568 = vunpack.c.l.s4 1983009808
          %v1569 = vunpack.c.0.s8 %v1568
          %v1570 = vlaneseq
          %v1571 = vshrl.u32 %v1570, 7
          %v1572 = vsub.s32 %v1569, %v1571
          %v1573 = vrot.slane %v1244, %v1572
          %v1575 = vunpack.c.l.s4 1983009808
          %v1576 = vunpack.c.0.s8 %v1575
          %v1577 = vlaneseq
          %v1578 = vshrl.u32 %v1577, 7
          %v1579 = vsub.s32 %v1576, %v1578
          %v1580 = vrot.slane %v1566, %v1579
          %v1581 = vcombine.high %v1246, 0.0
          %v1583 = vunpack.c.l.s4 1983009808
          %v1584 = vunpack.c.0.s8 %v1583
          %v1585 = vlaneseq
          %v1586 = vshrl.u32 %v1585, 7
          %v1587 = vsub.s32 %v1584, %v1586
          %v1588 = vrot.slane %v1246, %v1587
          %v1590 = vunpack.c.l.s4 1983009808
          %v1591 = vunpack.c.0.s8 %v1590
          %v1592 = vlaneseq
          %v1593 = vshrl.u32 %v1592, 7
          %v1594 = vsub.s32 %v1591, %v1593
          %v1595 = vrot.slane %v1581, %v1594
          %v1596 = vcombine.low %v1573, %v1588
          %v1597 = vcombine.high %v1573, %v1588
          %v1599 = vunpack.c.l.s4 1934713408
          %v1600 = vunpack.c.0.s8 %v1599
          %v1601 = vlaneseq
          %v1602 = vshrl.u32 %v1601, 7
          %v1603 = vsub.s32 %v1600, %v1602
          %v1604 = vrot.slane %v1596, %v1603
          %v1606 = vunpack.c.l.s4 1934713408
          %v1607 = vunpack.c.0.s8 %v1606
          %v1608 = vlaneseq
          %v1609 = vshrl.u32 %v1608, 7
          %v1610 = vsub.s32 %v1607, %v1609
          %v1611 = vrot.slane %v1597, %v1610
          %v1612 = vcombine.low %v1580, %v1595
          %v1613 = vcombine.high %v1580, %v1595
          %v1615 = vunpack.c.l.s4 1934713408
          %v1616 = vunpack.c.0.s8 %v1615
          %v1617 = vlaneseq
          %v1618 = vshrl.u32 %v1617, 7
          %v1619 = vsub.s32 %v1616, %v1618
          %v1620 = vrot.slane %v1612, %v1619
          %v1622 = vunpack.c.l.s4 1934713408
          %v1623 = vunpack.c.0.s8 %v1622
          %v1624 = vlaneseq
          %v1625 = vshrl.u32 %v1624, 7
          %v1626 = vsub.s32 %v1623, %v1625
          %v1627 = vrot.slane %v1613, %v1626
          %v1628 = vcombine.high %v1604, 0.0
          %v1629 = vcombine.high %v1611, 0.0
          %v1630 = vcombine.high %v1620, 0.0
          %v1631 = vcombine.high %v1627, 0.0
          %v1632 = vcombine.low %v1538, %v1545
          %v1634 = vunpack.c.l.s4 1983009808
          %v1635 = vunpack.c.0.s8 %v1634
          %v1636 = vlaneseq
          %v1637 = vshrl.u32 %v1636, 7
          %v1638 = vsub.s32 %v1635, %v1637
          %v1639 = vrot.slane %v1632, %v1638
          %v1640 = vcombine.low %v1562, %v1563
          %v1642 = vunpack.c.l.s4 1983009808
          %v1643 = vunpack.c.0.s8 %v1642
          %v1644 = vlaneseq
          %v1645 = vshrl.u32 %v1644, 7
          %v1646 = vsub.s32 %v1643, %v1645
          %v1647 = vrot.slane %v1640, %v1646
          %v1648 = vcombine.low %v1554, %v1561
          %v1650 = vunpack.c.l.s4 1983009808
          %v1651 = vunpack.c.0.s8 %v1650
          %v1652 = vlaneseq
          %v1653 = vshrl.u32 %v1652, 7
          %v1654 = vsub.s32 %v1651, %v1653
          %v1655 = vrot.slane %v1648, %v1654
          %v1656 = vcombine.low %v1564, %v1565
          %v1658 = vunpack.c.l.s4 1983009808
          %v1659 = vunpack.c.0.s8 %v1658
          %v1660 = vlaneseq
          %v1661 = vshrl.u32 %v1660, 7
          %v1662 = vsub.s32 %v1659, %v1661
          %v1663 = vrot.slane %v1656, %v1662
          %v1664 = vcombine.low %v1639, %v1647
          %v1666 = vunpack.c.l.s4 1934713408
          %v1667 = vunpack.c.0.s8 %v1666
          %v1668 = vlaneseq
          %v1669 = vshrl.u32 %v1668, 7
          %v1670 = vsub.s32 %v1667, %v1669
          %v1671 = vrot.slane %v1664, %v1670
          %v1672 = vcombine.low %v1655, %v1663
          %v1674 = vunpack.c.l.s4 1934713408
          %v1675 = vunpack.c.0.s8 %v1674
          %v1676 = vlaneseq
          %v1677 = vshrl.u32 %v1676, 7
          %v1678 = vsub.s32 %v1675, %v1677
          %v1679 = vrot.slane %v1672, %v1678
          %v1680 = vcombine.low %v1671, %v1679
          %v1681 = vcombine.high %v1671, %v1679
          %v1682 = vcombine.low %v1604, %v1611
          %v1684 = vunpack.c.l.s4 1983009808
          %v1685 = vunpack.c.0.s8 %v1684
          %v1686 = vlaneseq
          %v1687 = vshrl.u32 %v1686, 7
          %v1688 = vsub.s32 %v1685, %v1687
          %v1689 = vrot.slane %v1682, %v1688
          %v1690 = vcombine.low %v1628, %v1629
          %v1692 = vunpack.c.l.s4 1983009808
          %v1693 = vunpack.c.0.s8 %v1692
          %v1694 = vlaneseq
          %v1695 = vshrl.u32 %v1694, 7
          %v1696 = vsub.s32 %v1693, %v1695
          %v1697 = vrot.slane %v1690, %v1696
          %v1698 = vcombine.low %v1620, %v1627
          %v1700 = vunpack.c.l.s4 1983009808
          %v1701 = vunpack.c.0.s8 %v1700
          %v1702 = vlaneseq
          %v1703 = vshrl.u32 %v1702, 7
          %v1704 = vsub.s32 %v1701, %v1703
          %v1705 = vrot.slane %v1698, %v1704
          %v1706 = vcombine.low %v1630, %v1631
          %v1708 = vunpack.c.l.s4 1983009808
          %v1709 = vunpack.c.0.s8 %v1708
          %v1710 = vlaneseq
          %v1711 = vshrl.u32 %v1710, 7
          %v1712 = vsub.s32 %v1709, %v1711
          %v1713 = vrot.slane %v1706, %v1712
          %v1714 = vcombine.low %v1689, %v1697
          %v1716 = vunpack.c.l.s4 1934713408
          %v1717 = vunpack.c.0.s8 %v1716
          %v1718 = vlaneseq
          %v1719 = vshrl.u32 %v1718, 7
          %v1720 = vsub.s32 %v1717, %v1719
          %v1721 = vrot.slane %v1714, %v1720
          %v1722 = vcombine.low %v1705, %v1713
          %v1724 = vunpack.c.l.s4 1934713408
          %v1725 = vunpack.c.0.s8 %v1724
          %v1726 = vlaneseq
          %v1727 = vshrl.u32 %v1726, 7
          %v1728 = vsub.s32 %v1725, %v1727
          %v1729 = vrot.slane %v1722, %v1728
          %v1730 = vcombine.low %v1721, %v1729
          %v1731 = vcombine.high %v1721, %v1729
          %v1732 = vpack.c.bf16 %v1730, %v1680
          %v1733 = vpack.c.bf16 %v1731, %v1681
          %v1736 = vunpack.c.l.b16 %v1732
          %v1737 = vunpack.c.h.b16 %v1732
          %v1738 = vunpack.c.l.b16 %v1733
          %v1739 = vunpack.c.h.b16 %v1733
          %v1740 = vpack.c.b16 %v1736, %v1736
          %v1741 = vpack.c.b16 %v1737, %v1737
          %v1742 = vpack.c.b16 %v1738, %v1738
          %v1743 = vpack.c.b16 %v1739, %v1739
          %1748 = vst [vmem:[#allocation3] sm:$0xf] %v1740
          %1749 = vst [vmem:[#allocation3 + $0x4] sm:$0xf] %v1741
          %1750 = vst [vmem:[#allocation3 + $0x8] sm:$0xf] %v1742
          %1751 = vst [vmem:[#allocation3 + $0xc] sm:$0xf] %v1743
        $region128: #{tpu_custom_call.1} parent=91 // pred_fallthru
          _
        %v1752 = vld [vmem:[%s655] sm:$0xff]
        %v1753 = vld [vmem:[%s655 + $0x8] sm:$0xff]
        %v1754 = vpack.c.bf16 %v1752, %v1752
        %v1755 = vpack.c.bf16 %v1753, %v1753
        %v1756 = vld [vmem:[#allocation9] sm:$0xff]
        %v1757 = vld [vmem:[#allocation9 + $0x8] sm:$0xff]
        %v1758 = vld [vmem:[#allocation9 + $0x10] sm:$0xff]
        %v1759 = vld [vmem:[#allocation9 + $0x18] sm:$0xff]
        %v1760 = vld [vmem:[#allocation9 + $0x20] sm:$0xff]
        %v1761 = vld [vmem:[#allocation9 + $0x28] sm:$0xff]
        %v1762 = vld [vmem:[#allocation9 + $0x30] sm:$0xff]
        %v1763 = vld [vmem:[#allocation9 + $0x38] sm:$0xff]
        %v1764 = vld [vmem:[#allocation9 + $0x40] sm:$0xff]
        %v1765 = vld [vmem:[#allocation9 + $0x48] sm:$0xff]
        %v1766 = vld [vmem:[#allocation9 + $0x50] sm:$0xff]
        %v1767 = vld [vmem:[#allocation9 + $0x58] sm:$0xff]
        %v1768 = vld [vmem:[#allocation9 + $0x60] sm:$0xff]
        %v1769 = vld [vmem:[#allocation9 + $0x68] sm:$0xff]
        %v1770 = vld [vmem:[#allocation9 + $0x70] sm:$0xff]
        %v1771 = vld [vmem:[#allocation9 + $0x78] sm:$0xff]
        %v1772 = vld [vmem:[#allocation9 + $0x80] sm:$0xff]
        %v1773 = vld [vmem:[#allocation9 + $0x88] sm:$0xff]
        %v1774 = vld [vmem:[#allocation9 + $0x90] sm:$0xff]
        %v1775 = vld [vmem:[#allocation9 + $0x98] sm:$0xff]
        %v1776 = vld [vmem:[#allocation9 + $0xa0] sm:$0xff]
        %v1777 = vld [vmem:[#allocation9 + $0xa8] sm:$0xff]
        %v1778 = vld [vmem:[#allocation9 + $0xb0] sm:$0xff]
        %v1779 = vld [vmem:[#allocation9 + $0xb8] sm:$0xff]
        %v1780 = vld [vmem:[#allocation9 + $0xc0] sm:$0xff]
        %v1781 = vld [vmem:[#allocation9 + $0xc8] sm:$0xff]
        %v1782 = vld [vmem:[#allocation9 + $0xd0] sm:$0xff]
        %v1783 = vld [vmem:[#allocation9 + $0xd8] sm:$0xff]
        %v1784 = vld [vmem:[#allocation9 + $0xe0] sm:$0xff]
        %v1785 = vld [vmem:[#allocation9 + $0xe8] sm:$0xff]
        %v1786 = vld [vmem:[#allocation9 + $0xf0] sm:$0xff]
        %v1787 = vld [vmem:[#allocation9 + $0xf8] sm:$0xff]
        %v1788 = vld [vmem:[%s3] sm:$0x3]
        %v1790 = vlaneseq
        %v1791 = vshrl.u32 %v1790, 7
        %v1792 = vsub.s32 0, %v1791
        %v1793 = vrot.slane %v1788, %v1792
        %v1794 = vlaneseq
        %v1795 = vshrl.u32 %v1794, 7
        %v1796 = vsub.s32 1, %v1795
        %v1797 = vrot.slane %v1788, %v1796
        %v1832 = vunpack.c.l.b16 %v1756
        %v1833 = vunpack.c.h.b16 %v1756
        %v1834 = vunpack.c.l.b16 %v1757
        %v1835 = vunpack.c.h.b16 %v1757
        %v1836 = vunpack.c.l.b16 %v1758
        %v1837 = vunpack.c.h.b16 %v1758
        %v1838 = vunpack.c.l.b16 %v1759
        %v1839 = vunpack.c.h.b16 %v1759
        %v1840 = vunpack.c.l.b16 %v1760
        %v1841 = vunpack.c.h.b16 %v1760
        %v1842 = vunpack.c.l.b16 %v1761
        %v1843 = vunpack.c.h.b16 %v1761
        %v1844 = vunpack.c.l.b16 %v1762
        %v1845 = vunpack.c.h.b16 %v1762
        %v1846 = vunpack.c.l.b16 %v1763
        %v1847 = vunpack.c.h.b16 %v1763
        %v1848 = vunpack.c.l.b16 %v1764
        %v1849 = vunpack.c.h.b16 %v1764
        %v1850 = vunpack.c.l.b16 %v1765
        %v1851 = vunpack.c.h.b16 %v1765
        %v1852 = vunpack.c.l.b16 %v1766
        %v1853 = vunpack.c.h.b16 %v1766
        %v1854 = vunpack.c.l.b16 %v1767
        %v1855 = vunpack.c.h.b16 %v1767
        %v1856 = vunpack.c.l.b16 %v1768
        %v1857 = vunpack.c.h.b16 %v1768
        %v1858 = vunpack.c.l.b16 %v1769
        %v1859 = vunpack.c.h.b16 %v1769
        %v1860 = vunpack.c.l.b16 %v1770
        %v1861 = vunpack.c.h.b16 %v1770
        %v1862 = vunpack.c.l.b16 %v1771
        %v1863 = vunpack.c.h.b16 %v1771
        %v1864 = vunpack.c.l.b16 %v1772
        %v1865 = vunpack.c.h.b16 %v1772
        %v1866 = vunpack.c.l.b16 %v1773
        %v1867 = vunpack.c.h.b16 %v1773
        %v1868 = vunpack.c.l.b16 %v1774
        %v1869 = vunpack.c.h.b16 %v1774
        %v1870 = vunpack.c.l.b16 %v1775
        %v1871 = vunpack.c.h.b16 %v1775
        %v1872 = vunpack.c.l.b16 %v1776
        %v1873 = vunpack.c.h.b16 %v1776
        %v1874 = vunpack.c.l.b16 %v1777
        %v1875 = vunpack.c.h.b16 %v1777
        %v1876 = vunpack.c.l.b16 %v1778
        %v1877 = vunpack.c.h.b16 %v1778
        %v1878 = vunpack.c.l.b16 %v1779
        %v1879 = vunpack.c.h.b16 %v1779
        %v1880 = vunpack.c.l.b16 %v1780
        %v1881 = vunpack.c.h.b16 %v1780
        %v1882 = vunpack.c.l.b16 %v1781
        %v1883 = vunpack.c.h.b16 %v1781
        %v1884 = vunpack.c.l.b16 %v1782
        %v1885 = vunpack.c.h.b16 %v1782
        %v1886 = vunpack.c.l.b16 %v1783
        %v1887 = vunpack.c.h.b16 %v1783
        %v1888 = vunpack.c.l.b16 %v1784
        %v1889 = vunpack.c.h.b16 %v1784
        %v1890 = vunpack.c.l.b16 %v1785
        %v1891 = vunpack.c.h.b16 %v1785
        %v1892 = vunpack.c.l.b16 %v1786
        %v1893 = vunpack.c.h.b16 %v1786
        %v1894 = vunpack.c.l.b16 %v1787
        %v1895 = vunpack.c.h.b16 %v1787
        %v1896 = vpack.c.b16 %v1834, %v1832
        %v1897 = vpack.c.b16 %v1835, %v1833
        %v1898 = vpack.c.b16 %v1838, %v1836
        %v1899 = vpack.c.b16 %v1839, %v1837
        %v1900 = vpack.c.b16 %v1842, %v1840
        %v1901 = vpack.c.b16 %v1843, %v1841
        %v1902 = vpack.c.b16 %v1846, %v1844
        %v1903 = vpack.c.b16 %v1847, %v1845
        %v1904 = vpack.c.b16 %v1850, %v1848
        %v1905 = vpack.c.b16 %v1851, %v1849
        %v1906 = vpack.c.b16 %v1854, %v1852
        %v1907 = vpack.c.b16 %v1855, %v1853
        %v1908 = vpack.c.b16 %v1858, %v1856
        %v1909 = vpack.c.b16 %v1859, %v1857
        %v1910 = vpack.c.b16 %v1862, %v1860
        %v1911 = vpack.c.b16 %v1863, %v1861
        %v1912 = vpack.c.b16 %v1866, %v1864
        %v1913 = vpack.c.b16 %v1867, %v1865
        %v1914 = vpack.c.b16 %v1870, %v1868
        %v1915 = vpack.c.b16 %v1871, %v1869
        %v1916 = vpack.c.b16 %v1874, %v1872
        %v1917 = vpack.c.b16 %v1875, %v1873
        %v1918 = vpack.c.b16 %v1878, %v1876
        %v1919 = vpack.c.b16 %v1879, %v1877
        %v1920 = vpack.c.b16 %v1882, %v1880
        %v1921 = vpack.c.b16 %v1883, %v1881
        %v1922 = vpack.c.b16 %v1886, %v1884
        %v1923 = vpack.c.b16 %v1887, %v1885
        %v1924 = vpack.c.b16 %v1890, %v1888
        %v1925 = vpack.c.b16 %v1891, %v1889
        %v1926 = vpack.c.b16 %v1894, %v1892
        %v1927 = vpack.c.b16 %v1895, %v1893
        %1960 = vmatprep.subr.bf16.mxu0 %v1911
        %1961 = vmatpush1.bf16.msra.mxu0 %v1910
        %1962 = vmatprep.subr.bf16.mxu0 %v1909
        %1963 = vmatpush1.bf16.msra.mxu0 %v1908
        %1964 = vmatprep.subr.bf16.mxu0 %v1907
        %1965 = vmatpush1.bf16.msra.mxu0 %v1906
        %1966 = vmatprep.subr.bf16.mxu0 %v1905
        %1967 = vmatpush1.bf16.msra.mxu0 %v1904
        %1968 = vmatprep.subr.bf16.mxu0 %v1903
        %1969 = vmatpush1.bf16.msra.mxu0 %v1902
        %1970 = vmatprep.subr.bf16.mxu0 %v1901
        %1971 = vmatpush1.bf16.msra.mxu0 %v1900
        %1972 = vmatprep.subr.bf16.mxu0 %v1899
        %1973 = vmatpush1.bf16.msra.mxu0 %v1898
        %1974 = vmatprep.subr.bf16.mxu0 %v1897
        %1975 = vmatpush1.bf16.msra.mxu0 %v1896
        %1976 = vmatprep.subr.bf16.mxu0 %v1927
        %1977 = vmatpush2.bf16.msra.mxu0 %v1926
        %1978 = vmatprep.subr.bf16.mxu0 %v1925
        %1979 = vmatpush2.bf16.msra.mxu0 %v1924
        %1980 = vmatprep.subr.bf16.mxu0 %v1923
        %1981 = vmatpush2.bf16.msra.mxu0 %v1922
        %1982 = vmatprep.subr.bf16.mxu0 %v1921
        %1983 = vmatpush2.bf16.msra.mxu0 %v1920
        %1984 = vmatprep.subr.bf16.mxu0 %v1919
        %1985 = vmatpush2.bf16.msra.mxu0 %v1918
        %1986 = vmatprep.subr.bf16.mxu0 %v1917
        %1987 = vmatpush2.bf16.msra.mxu0 %v1916
        %1988 = vmatprep.subr.bf16.mxu0 %v1915
        %1989 = vmatpush2.bf16.msra.mxu0 %v1914
        %1990 = vmatprep.subr.bf16.mxu0 %v1913
        %1991 = vmatpush2.bf16.msra.mxu0 %v1912
        %1992 = vmatprep.mubr.bf16.mxu0 %v1755
        %1993 = vmatmul.mubr.bf16.gmra.mxu0 %v1754
        %v1994 = vpop.f32.mrf.mxu0
        %v1995 = vadd.f32 %v1793, %v1994
        %v1996 = vpop.f32.mrf.mxu0
        %v1997 = vadd.f32 %v1797, %v1996
        %v1998 = vpop.f32.mrf.mxu0
        %v1999 = vpop.f32.mrf.mxu0
        %2000 = vdwg.mxu0
        %v2001 = vmul.f32 %v1995, 0.088388346
        %v2002 = vmul.f32 %v1997, 0.088388346
        %v2003 = vpack.c.bf16 %v2001, %v2001
        %v2005 = vunpack.c.l.s4 1983009808
        %v2006 = vunpack.c.0.s8 %v2005
        %v2007 = vlaneseq
        %v2008 = vshrl.u32 %v2007, 7
        %v2009 = vsub.s32 %v2006, %v2008
        %v2010 = vrot.slane %v2003, %v2009
        %v2011 = vcombine.high %v2010, 0
        %v2013 = vunpack.c.l.s4 1934713408
        %v2014 = vunpack.c.0.s8 %v2013
        %v2015 = vlaneseq
        %v2016 = vshrl.u32 %v2015, 7
        %v2017 = vsub.s32 %v2014, %v2016
        %v2018 = vrot.slane %v2010, %v2017
        %v2020 = vunpack.c.l.s4 1934713408
        %v2021 = vunpack.c.0.s8 %v2020
        %v2022 = vlaneseq
        %v2023 = vshrl.u32 %v2022, 7
        %v2024 = vsub.s32 %v2021, %v2023
        %v2025 = vrot.slane %v2011, %v2024
        %v2026 = vcombine.high %v2018, 0
        %v2027 = vcombine.high %v2025, 0
        %v2028 = vpack.c.bf16 %v2002, %v2002
        %v2030 = vunpack.c.l.s4 1983009808
        %v2031 = vunpack.c.0.s8 %v2030
        %v2032 = vlaneseq
        %v2033 = vshrl.u32 %v2032, 7
        %v2034 = vsub.s32 %v2031, %v2033
        %v2035 = vrot.slane %v2028, %v2034
        %v2036 = vcombine.high %v2035, 0
        %v2038 = vunpack.c.l.s4 1934713408
        %v2039 = vunpack.c.0.s8 %v2038
        %v2040 = vlaneseq
        %v2041 = vshrl.u32 %v2040, 7
        %v2042 = vsub.s32 %v2039, %v2041
        %v2043 = vrot.slane %v2035, %v2042
        %v2045 = vunpack.c.l.s4 1934713408
        %v2046 = vunpack.c.0.s8 %v2045
        %v2047 = vlaneseq
        %v2048 = vshrl.u32 %v2047, 7
        %v2049 = vsub.s32 %v2046, %v2048
        %v2050 = vrot.slane %v2036, %v2049
        %v2051 = vcombine.high %v2043, 0
        %v2052 = vcombine.high %v2050, 0
        %v2055 = vpack.i.b16 %v2043, %v2018
        %v2057 = vshrl.u32 %v2018, 16
        %v2058 = vshrl.u32 %v2043, 16
        %v2059 = vpack.i.b16 %v2058, %v2057
        %v2063 = vpack.i.b16 %v2051, %v2026
        %v2065 = vshrl.u32 %v2026, 16
        %v2066 = vshrl.u32 %v2051, 16
        %v2067 = vpack.i.b16 %v2066, %v2065
        %v2071 = vpack.i.b16 %v2050, %v2025
        %v2073 = vshrl.u32 %v2025, 16
        %v2074 = vshrl.u32 %v2050, 16
        %v2075 = vpack.i.b16 %v2074, %v2073
        %v2079 = vpack.i.b16 %v2052, %v2027
        %v2081 = vshrl.u32 %v2027, 16
        %v2082 = vshrl.u32 %v2052, 16
        %v2083 = vpack.i.b16 %v2082, %v2081
        %v2085 = vcombine.low %v2055, %v2071
        %v2087 = vunpack.c.l.s4 1983009808
        %v2088 = vunpack.c.0.s8 %v2087
        %v2089 = vlaneseq
        %v2090 = vshrl.u32 %v2089, 7
        %v2091 = vsub.s32 %v2088, %v2090
        %v2092 = vrot.slane %v2085, %v2091
        %v2093 = vcombine.low %v2063, %v2079
        %v2095 = vunpack.c.l.s4 1983009808
        %v2096 = vunpack.c.0.s8 %v2095
        %v2097 = vlaneseq
        %v2098 = vshrl.u32 %v2097, 7
        %v2099 = vsub.s32 %v2096, %v2098
        %v2100 = vrot.slane %v2093, %v2099
        %v2101 = vcombine.low %v2092, %v2100
        %v2103 = vunpack.c.l.s4 1934713408
        %v2104 = vunpack.c.0.s8 %v2103
        %v2105 = vlaneseq
        %v2106 = vshrl.u32 %v2105, 7
        %v2107 = vsub.s32 %v2104, %v2106
        %v2108 = vrot.slane %v2101, %v2107
        %v2109 = vcombine.low %v2059, %v2075
        %v2111 = vunpack.c.l.s4 1983009808
        %v2112 = vunpack.c.0.s8 %v2111
        %v2113 = vlaneseq
        %v2114 = vshrl.u32 %v2113, 7
        %v2115 = vsub.s32 %v2112, %v2114
        %v2116 = vrot.slane %v2109, %v2115
        %v2117 = vcombine.low %v2067, %v2083
        %v2119 = vunpack.c.l.s4 1983009808
        %v2120 = vunpack.c.0.s8 %v2119
        %v2121 = vlaneseq
        %v2122 = vshrl.u32 %v2121, 7
        %v2123 = vsub.s32 %v2120, %v2122
        %v2124 = vrot.slane %v2117, %v2123
        %v2125 = vcombine.low %v2116, %v2124
        %v2127 = vunpack.c.l.s4 1934713408
        %v2128 = vunpack.c.0.s8 %v2127
        %v2129 = vlaneseq
        %v2130 = vshrl.u32 %v2129, 7
        %v2131 = vsub.s32 %v2128, %v2130
        %v2132 = vrot.slane %v2125, %v2131
        %v2135 = vpack.i.b16 %v2132, %v2108
        %v2137 = vshrl.u32 %v2108, 16
        %v2138 = vshrl.u32 %v2132, 16
        %v2139 = vpack.i.b16 %v2138, %v2137
        %v2141 = vld [vmem:[#allocation2] sm:$0xf]
        %v2142 = vld [vmem:[#allocation2 + $0x8] sm:$0xf]
        %v2143 = vld [vmem:[#allocation3] sm:$0xf]
        %v2144 = vld [vmem:[#allocation3 + $0x8] sm:$0xf]
        %2145 = vmatprep.subr.bf16.mxu0 0
        %2146 = vmatpush1.bf16.xpose.msra.mxu0 0
        %2147 = vmatprep.subr.bf16.mxu0 0
        %2148 = vmatpush1.bf16.xpose.msra.mxu0 0
        %2149 = vmatprep.subr.bf16.mxu0 0
        %2150 = vmatpush1.bf16.xpose.msra.mxu0 0
        %2151 = vmatprep.subr.bf16.mxu0 0
        %2152 = vmatpush1.bf16.xpose.msra.mxu0 0
        %2153 = vmatprep.subr.bf16.mxu0 0
        %2154 = vmatpush1.bf16.xpose.msra.mxu0 0
        %2155 = vmatprep.subr.bf16.mxu0 0
        %2156 = vmatpush1.bf16.xpose.msra.mxu0 0
        %2157 = vmatprep.subr.bf16.mxu0 0
        %2158 = vmatpush1.bf16.xpose.msra.mxu0 0
        %2159 = vmatprep.subr.bf16.mxu0 0
        %2160 = vmatpush1.bf16.xpose.msra.mxu0 %v2141
        %2161 = vmatprep.subr.bf16.mxu0 0
        %2162 = vmatpush2.bf16.xpose.msra.mxu0 0
        %2163 = vmatprep.subr.bf16.mxu0 0
        %2164 = vmatpush2.bf16.xpose.msra.mxu0 0
        %2165 = vmatprep.subr.bf16.mxu0 0
        %2166 = vmatpush2.bf16.xpose.msra.mxu0 0
        %2167 = vmatprep.subr.bf16.mxu0 0
        %2168 = vmatpush2.bf16.xpose.msra.mxu0 0
        %2169 = vmatprep.subr.bf16.mxu0 0
        %2170 = vmatpush2.bf16.xpose.msra.mxu0 0
        %2171 = vmatprep.subr.bf16.mxu0 0
        %2172 = vmatpush2.bf16.xpose.msra.mxu0 0
        %2173 = vmatprep.subr.bf16.mxu0 0
        %2174 = vmatpush2.bf16.xpose.msra.mxu0 0
        %2175 = vmatprep.subr.bf16.mxu0 0
        %2176 = vmatpush2.bf16.xpose.msra.mxu0 0
        %2177 = vmatprep.mubr.bf16.mxu0 0
        %2178 = vmatmul.mubr.bf16.gmra.mxu0 %v2135
        %v2179 = vpop.f32.mrf.mxu0
        %v2180 = vadd.f32 0.0, %v2179
        %v2181 = vpop.f32.mrf.mxu0
        %v2182 = vpop.f32.mrf.mxu0
        %v2183 = vpop.f32.mrf.mxu0
        %2184 = vdwg.mxu0
        %2185 = vmatprep.subr.bf16.mxu0 0
        %2186 = vmatpush1.bf16.xpose.msra.mxu0 0
        %2187 = vmatprep.subr.bf16.mxu0 0
        %2188 = vmatpush1.bf16.xpose.msra.mxu0 0
        %2189 = vmatprep.subr.bf16.mxu0 0
        %2190 = vmatpush1.bf16.xpose.msra.mxu0 0
        %2191 = vmatprep.subr.bf16.mxu0 0
        %2192 = vmatpush1.bf16.xpose.msra.mxu0 0
        %2193 = vmatprep.subr.bf16.mxu0 0
        %2194 = vmatpush1.bf16.xpose.msra.mxu0 0
        %2195 = vmatprep.subr.bf16.mxu0 0
        %2196 = vmatpush1.bf16.xpose.msra.mxu0 0
        %2197 = vmatprep.subr.bf16.mxu0 0
        %2198 = vmatpush1.bf16.xpose.msra.mxu0 0
        %2199 = vmatprep.subr.bf16.mxu0 0
        %2200 = vmatpush1.bf16.xpose.msra.mxu0 %v2142
        %2201 = vmatprep.subr.bf16.mxu0 0
        %2202 = vmatpush2.bf16.xpose.msra.mxu0 0
        %2203 = vmatprep.subr.bf16.mxu0 0
        %2204 = vmatpush2.bf16.xpose.msra.mxu0 0
        %2205 = vmatprep.subr.bf16.mxu0 0
        %2206 = vmatpush2.bf16.xpose.msra.mxu0 0
        %2207 = vmatprep.subr.bf16.mxu0 0
        %2208 = vmatpush2.bf16.xpose.msra.mxu0 0
        %2209 = vmatprep.subr.bf16.mxu0 0
        %2210 = vmatpush2.bf16.xpose.msra.mxu0 0
        %2211 = vmatprep.subr.bf16.mxu0 0
        %2212 = vmatpush2.bf16.xpose.msra.mxu0 0
        %2213 = vmatprep.subr.bf16.mxu0 0
        %2214 = vmatpush2.bf16.xpose.msra.mxu0 0
        %2215 = vmatprep.subr.bf16.mxu0 0
        %2216 = vmatpush2.bf16.xpose.msra.mxu0 0
        %2217 = vmatprep.mubr.bf16.mxu0 0
        %2218 = vmatmul.mubr.bf16.gmra.mxu0 %v2139
        %v2219 = vpop.f32.mrf.mxu0
        %v2220 = vadd.f32 0.0, %v2219
        %v2221 = vpop.f32.mrf.mxu0
        %v2222 = vpop.f32.mrf.mxu0
        %v2223 = vpop.f32.mrf.mxu0
        %2224 = vdwg.mxu0
        %vm2225 = vcmask 64512
        %v2226 = vsel %vm2225, %v2180, -inf
        %2227 = vmax.xlane.f32.xlu0 %v2226
        %v2228 = vpop.xlane.xlu0 %2227
        %v2229 = vsel %vm2225, %v2220, -inf
        %2230 = vmax.xlane.f32.xlu0 %v2229
        %v2231 = vpop.xlane.xlu0 %2230
        %v2232 = vsub.f32 -inf, %v2228
        %v2233 = vsub.f32 -inf, %v2231
        %v2234 = vmul.f32 %v2232, 1.442695
        %v2235 = vpow.pop %v2234
        %v2236 = vmul.f32 %v2233, 1.442695
        %v2237 = vpow.pop %v2236
        %v2238 = vsub.f32 %v2180, %v2228
        %v2239 = vsub.f32 %v2220, %v2231
        %v2240 = vmul.f32 %v2238, 1.442695
        %v2241 = vpow.pop %v2240
        %v2242 = vmul.f32 %v2239, 1.442695
        %v2243 = vpow.pop %v2242
        %v2244 = vmul.f32 %v2235, 0.0
        %v2245 = vmul.f32 %v2237, 0.0
        %v2246 = vsel %vm2225, %v2241, 0.0
        %2247 = vadd.xlane.f32.xlu0 %v2246
        %v2248 = vpop.xlane.xlu0 %2247
        %v2249 = vsel %vm2225, %v2243, 0.0
        %2250 = vadd.xlane.f32.xlu0 %v2249
        %v2251 = vpop.xlane.xlu0 %2250
        %v2252 = vadd.f32 %v2244, %v2248
        %v2253 = vadd.f32 %v2245, %v2251
        %v2254 = vpack.c.bf16 %v2241, %v2241
        %v2255 = vpack.c.bf16 %v2243, %v2243
        %v2257 = vsel %vm2225, %v2254, 0
        %vm2259 = vcmask 1043456
        %v2261 = vsel %vm2259, %v2143, 0
        %2263 = vmatprep.subr.bf16.mxu0 0
        %2264 = vmatpush1.bf16.msra.mxu0 0
        %2265 = vmatprep.subr.bf16.mxu0 0
        %2266 = vmatpush1.bf16.msra.mxu0 0
        %2267 = vmatprep.subr.bf16.mxu0 0
        %2268 = vmatpush1.bf16.msra.mxu0 0
        %2269 = vmatprep.subr.bf16.mxu0 0
        %2270 = vmatpush1.bf16.msra.mxu0 0
        %2271 = vmatprep.subr.bf16.mxu0 0
        %2272 = vmatpush1.bf16.msra.mxu0 0
        %2273 = vmatprep.subr.bf16.mxu0 0
        %2274 = vmatpush1.bf16.msra.mxu0 0
        %2275 = vmatprep.subr.bf16.mxu0 0
        %2276 = vmatpush1.bf16.msra.mxu0 0
        %2277 = vmatprep.subr.bf16.mxu0 0
        %2278 = vmatpush1.bf16.msra.mxu0 %v2261
        %2279 = vmatprep.subr.bf16.mxu0 0
        %2280 = vmatpush2.bf16.msra.mxu0 0
        %2281 = vmatprep.subr.bf16.mxu0 0
        %2282 = vmatpush2.bf16.msra.mxu0 0
        %2283 = vmatprep.subr.bf16.mxu0 0
        %2284 = vmatpush2.bf16.msra.mxu0 0
        %2285 = vmatprep.subr.bf16.mxu0 0
        %2286 = vmatpush2.bf16.msra.mxu0 0
        %2287 = vmatprep.subr.bf16.mxu0 0
        %2288 = vmatpush2.bf16.msra.mxu0 0
        %2289 = vmatprep.subr.bf16.mxu0 0
        %2290 = vmatpush2.bf16.msra.mxu0 0
        %2291 = vmatprep.subr.bf16.mxu0 0
        %2292 = vmatpush2.bf16.msra.mxu0 0
        %2293 = vmatprep.subr.bf16.mxu0 0
        %2294 = vmatpush2.bf16.msra.mxu0 0
        %2295 = vmatprep.mubr.bf16.mxu0 0
        %2296 = vmatmul.mubr.bf16.gmra.mxu0 %v2257
        %v2297 = vpop.f32.mrf.mxu0
        %v2298 = vadd.f32 0.0, %v2297
        %v2299 = vpop.f32.mrf.mxu0
        %v2300 = vpop.f32.mrf.mxu0
        %v2301 = vpop.f32.mrf.mxu0
        %2302 = vdwg.mxu0
        %v2304 = vsel %vm2225, %v2255, 0
        %v2307 = vsel %vm2259, %v2144, 0
        %2309 = vmatprep.subr.bf16.mxu0 0
        %2310 = vmatpush1.bf16.msra.mxu0 0
        %2311 = vmatprep.subr.bf16.mxu0 0
        %2312 = vmatpush1.bf16.msra.mxu0 0
        %2313 = vmatprep.subr.bf16.mxu0 0
        %2314 = vmatpush1.bf16.msra.mxu0 0
        %2315 = vmatprep.subr.bf16.mxu0 0
        %2316 = vmatpush1.bf16.msra.mxu0 0
        %2317 = vmatprep.subr.bf16.mxu0 0
        %2318 = vmatpush1.bf16.msra.mxu0 0
        %2319 = vmatprep.subr.bf16.mxu0 0
        %2320 = vmatpush1.bf16.msra.mxu0 0
        %2321 = vmatprep.subr.bf16.mxu0 0
        %2322 = vmatpush1.bf16.msra.mxu0 0
        %2323 = vmatprep.subr.bf16.mxu0 0
        %2324 = vmatpush1.bf16.msra.mxu0 %v2307
        %2325 = vmatprep.subr.bf16.mxu0 0
        %2326 = vmatpush2.bf16.msra.mxu0 0
        %2327 = vmatprep.subr.bf16.mxu0 0
        %2328 = vmatpush2.bf16.msra.mxu0 0
        %2329 = vmatprep.subr.bf16.mxu0 0
        %2330 = vmatpush2.bf16.msra.mxu0 0
        %2331 = vmatprep.subr.bf16.mxu0 0
        %2332 = vmatpush2.bf16.msra.mxu0 0
        %2333 = vmatprep.subr.bf16.mxu0 0
        %2334 = vmatpush2.bf16.msra.mxu0 0
        %2335 = vmatprep.subr.bf16.mxu0 0
        %2336 = vmatpush2.bf16.msra.mxu0 0
        %2337 = vmatprep.subr.bf16.mxu0 0
        %2338 = vmatpush2.bf16.msra.mxu0 0
        %2339 = vmatprep.subr.bf16.mxu0 0
        %2340 = vmatpush2.bf16.msra.mxu0 0
        %2341 = vmatprep.mubr.bf16.mxu0 0
        %2342 = vmatmul.mubr.bf16.gmra.mxu0 %v2304
        %v2343 = vpop.f32.mrf.mxu0
        %v2344 = vadd.f32 0.0, %v2343
        %v2345 = vpop.f32.mrf.mxu0
        %v2346 = vpop.f32.mrf.mxu0
        %v2347 = vpop.f32.mrf.mxu0
        %2348 = vdwg.mxu0
        %v2349 = vadd.f32 %v2244, %v2298
        %v2350 = vadd.f32 %v2245, %v2344
        %s2351 = scalar_lea.vmem [#allocation2], 4
        %v2352 = vld [vmem:[%s2351] sm:$0xf]
        %v2353 = vld [vmem:[%s2351 + $0x8] sm:$0xf]
        %s2354 = scalar_lea.vmem [#allocation3], 4
        %v2355 = vld [vmem:[%s2354] sm:$0xf]
        %v2356 = vld [vmem:[%s2354 + $0x8] sm:$0xf]
        %2357 = vmatprep.subr.bf16.mxu0 0
        %2358 = vmatpush1.bf16.xpose.msra.mxu0 0
        %2359 = vmatprep.subr.bf16.mxu0 0
        %2360 = vmatpush1.bf16.xpose.msra.mxu0 0
        %2361 = vmatprep.subr.bf16.mxu0 0
        %2362 = vmatpush1.bf16.xpose.msra.mxu0 0
        %2363 = vmatprep.subr.bf16.mxu0 0
        %2364 = vmatpush1.bf16.xpose.msra.mxu0 0
        %2365 = vmatprep.subr.bf16.mxu0 0
        %2366 = vmatpush1.bf16.xpose.msra.mxu0 0
        %2367 = vmatprep.subr.bf16.mxu0 0
        %2368 = vmatpush1.bf16.xpose.msra.mxu0 0
        %2369 = vmatprep.subr.bf16.mxu0 0
        %2370 = vmatpush1.bf16.xpose.msra.mxu0 0
        %2371 = vmatprep.subr.bf16.mxu0 0
        %2372 = vmatpush1.bf16.xpose.msra.mxu0 %v2352
        %2373 = vmatprep.subr.bf16.mxu0 0
        %2374 = vmatpush2.bf16.xpose.msra.mxu0 0
        %2375 = vmatprep.subr.bf16.mxu0 0
        %2376 = vmatpush2.bf16.xpose.msra.mxu0 0
        %2377 = vmatprep.subr.bf16.mxu0 0
        %2378 = vmatpush2.bf16.xpose.msra.mxu0 0
        %2379 = vmatprep.subr.bf16.mxu0 0
        %2380 = vmatpush2.bf16.xpose.msra.mxu0 0
        %2381 = vmatprep.subr.bf16.mxu0 0
        %2382 = vmatpush2.bf16.xpose.msra.mxu0 0
        %2383 = vmatprep.subr.bf16.mxu0 0
        %2384 = vmatpush2.bf16.xpose.msra.mxu0 0
        %2385 = vmatprep.subr.bf16.mxu0 0
        %2386 = vmatpush2.bf16.xpose.msra.mxu0 0
        %2387 = vmatprep.subr.bf16.mxu0 0
        %2388 = vmatpush2.bf16.xpose.msra.mxu0 0
        %2389 = vmatprep.mubr.bf16.mxu0 0
        %2390 = vmatmul.mubr.bf16.gmra.mxu0 %v2135
        %v2391 = vpop.f32.mrf.mxu0
        %v2392 = vadd.f32 0.0, %v2391
        %v2393 = vpop.f32.mrf.mxu0
        %v2394 = vpop.f32.mrf.mxu0
        %v2395 = vpop.f32.mrf.mxu0
        %2396 = vdwg.mxu0
        %2397 = vmatprep.subr.bf16.mxu0 0
        %2398 = vmatpush1.bf16.xpose.msra.mxu0 0
        %2399 = vmatprep.subr.bf16.mxu0 0
        %2400 = vmatpush1.bf16.xpose.msra.mxu0 0
        %2401 = vmatprep.subr.bf16.mxu0 0
        %2402 = vmatpush1.bf16.xpose.msra.mxu0 0
        %2403 = vmatprep.subr.bf16.mxu0 0
        %2404 = vmatpush1.bf16.xpose.msra.mxu0 0
        %2405 = vmatprep.subr.bf16.mxu0 0
        %2406 = vmatpush1.bf16.xpose.msra.mxu0 0
        %2407 = vmatprep.subr.bf16.mxu0 0
        %2408 = vmatpush1.bf16.xpose.msra.mxu0 0
        %2409 = vmatprep.subr.bf16.mxu0 0
        %2410 = vmatpush1.bf16.xpose.msra.mxu0 0
        %2411 = vmatprep.subr.bf16.mxu0 0
        %2412 = vmatpush1.bf16.xpose.msra.mxu0 %v2353
        %2413 = vmatprep.subr.bf16.mxu0 0
        %2414 = vmatpush2.bf16.xpose.msra.mxu0 0
        %2415 = vmatprep.subr.bf16.mxu0 0
        %2416 = vmatpush2.bf16.xpose.msra.mxu0 0
        %2417 = vmatprep.subr.bf16.mxu0 0
        %2418 = vmatpush2.bf16.xpose.msra.mxu0 0
        %2419 = vmatprep.subr.bf16.mxu0 0
        %2420 = vmatpush2.bf16.xpose.msra.mxu0 0
        %2421 = vmatprep.subr.bf16.mxu0 0
        %2422 = vmatpush2.bf16.xpose.msra.mxu0 0
        %2423 = vmatprep.subr.bf16.mxu0 0
        %2424 = vmatpush2.bf16.xpose.msra.mxu0 0
        %2425 = vmatprep.subr.bf16.mxu0 0
        %2426 = vmatpush2.bf16.xpose.msra.mxu0 0
        %2427 = vmatprep.subr.bf16.mxu0 0
        %2428 = vmatpush2.bf16.xpose.msra.mxu0 0
        %2429 = vmatprep.mubr.bf16.mxu0 0
        %2430 = vmatmul.mubr.bf16.gmra.mxu0 %v2139
        %v2431 = vpop.f32.mrf.mxu0
        %v2432 = vadd.f32 0.0, %v2431
        %v2433 = vpop.f32.mrf.mxu0
        %v2434 = vpop.f32.mrf.mxu0
        %v2435 = vpop.f32.mrf.mxu0
        %2436 = vdwg.mxu0
        %v2437 = vsel %vm2225, %v2392, -inf
        %2438 = vmax.xlane.f32.xlu0 %v2437
        %v2439 = vpop.xlane.xlu0 %2438
        %v2440 = vsel %vm2225, %v2432, -inf
        %2441 = vmax.xlane.f32.xlu0 %v2440
        %v2442 = vpop.xlane.xlu0 %2441
        %v2443 = vmax.f32 %v2228, %v2439
        %v2444 = vmax.f32 %v2231, %v2442
        %v2445 = vsub.f32 %v2228, %v2443
        %v2446 = vsub.f32 %v2231, %v2444
        %v2447 = vmul.f32 %v2445, 1.442695
        %v2448 = vpow.pop %v2447
        %v2449 = vmul.f32 %v2446, 1.442695
        %v2450 = vpow.pop %v2449
        %v2451 = vsub.f32 %v2392, %v2443
        %v2452 = vsub.f32 %v2432, %v2444
        %v2453 = vmul.f32 %v2451, 1.442695
        %v2454 = vpow.pop %v2453
        %v2455 = vmul.f32 %v2452, 1.442695
        %v2456 = vpow.pop %v2455
        %v2457 = vmul.f32 %v2448, %v2252
        %v2458 = vmul.f32 %v2450, %v2253
        %v2459 = vsel %vm2225, %v2454, 0.0
        %2460 = vadd.xlane.f32.xlu0 %v2459
        %v2461 = vpop.xlane.xlu0 %2460
        %v2462 = vsel %vm2225, %v2456, 0.0
        %2463 = vadd.xlane.f32.xlu0 %v2462
        %v2464 = vpop.xlane.xlu0 %2463
        %v2465 = vadd.f32 %v2457, %v2461
        %v2466 = vadd.f32 %v2458, %v2464
        %v2467 = vmul.f32 %v2448, %v2349
        %v2468 = vmul.f32 %v2450, %v2350
        %v2469 = vpack.c.bf16 %v2454, %v2454
        %v2470 = vpack.c.bf16 %v2456, %v2456
        %v2472 = vsel %vm2225, %v2469, 0
        %v2475 = vsel %vm2259, %v2355, 0
        %2477 = vmatprep.subr.bf16.mxu0 0
        %2478 = vmatpush1.bf16.msra.mxu0 0
        %2479 = vmatprep.subr.bf16.mxu0 0
        %2480 = vmatpush1.bf16.msra.mxu0 0
        %2481 = vmatprep.subr.bf16.mxu0 0
        %2482 = vmatpush1.bf16.msra.mxu0 0
        %2483 = vmatprep.subr.bf16.mxu0 0
        %2484 = vmatpush1.bf16.msra.mxu0 0
        %2485 = vmatprep.subr.bf16.mxu0 0
        %2486 = vmatpush1.bf16.msra.mxu0 0
        %2487 = vmatprep.subr.bf16.mxu0 0
        %2488 = vmatpush1.bf16.msra.mxu0 0
        %2489 = vmatprep.subr.bf16.mxu0 0
        %2490 = vmatpush1.bf16.msra.mxu0 0
        %2491 = vmatprep.subr.bf16.mxu0 0
        %2492 = vmatpush1.bf16.msra.mxu0 %v2475
        %2493 = vmatprep.subr.bf16.mxu0 0
        %2494 = vmatpush2.bf16.msra.mxu0 0
        %2495 = vmatprep.subr.bf16.mxu0 0
        %2496 = vmatpush2.bf16.msra.mxu0 0
        %2497 = vmatprep.subr.bf16.mxu0 0
        %2498 = vmatpush2.bf16.msra.mxu0 0
        %2499 = vmatprep.subr.bf16.mxu0 0
        %2500 = vmatpush2.bf16.msra.mxu0 0
        %2501 = vmatprep.subr.bf16.mxu0 0
        %2502 = vmatpush2.bf16.msra.mxu0 0
        %2503 = vmatprep.subr.bf16.mxu0 0
        %2504 = vmatpush2.bf16.msra.mxu0 0
        %2505 = vmatprep.subr.bf16.mxu0 0
        %2506 = vmatpush2.bf16.msra.mxu0 0
        %2507 = vmatprep.subr.bf16.mxu0 0
        %2508 = vmatpush2.bf16.msra.mxu0 0
        %2509 = vmatprep.mubr.bf16.mxu0 0
        %2510 = vmatmul.mubr.bf16.gmra.mxu0 %v2472
        %v2511 = vpop.f32.mrf.mxu0
        %v2512 = vadd.f32 0.0, %v2511
        %v2513 = vpop.f32.mrf.mxu0
        %v2514 = vpop.f32.mrf.mxu0
        %v2515 = vpop.f32.mrf.mxu0
        %2516 = vdwg.mxu0
        %v2518 = vsel %vm2225, %v2470, 0
        %v2521 = vsel %vm2259, %v2356, 0
        %2523 = vmatprep.subr.bf16.mxu0 0
        %2524 = vmatpush1.bf16.msra.mxu0 0
        %2525 = vmatprep.subr.bf16.mxu0 0
        %2526 = vmatpush1.bf16.msra.mxu0 0
        %2527 = vmatprep.subr.bf16.mxu0 0
        %2528 = vmatpush1.bf16.msra.mxu0 0
        %2529 = vmatprep.subr.bf16.mxu0 0
        %2530 = vmatpush1.bf16.msra.mxu0 0
        %2531 = vmatprep.subr.bf16.mxu0 0
        %2532 = vmatpush1.bf16.msra.mxu0 0
        %2533 = vmatprep.subr.bf16.mxu0 0
        %2534 = vmatpush1.bf16.msra.mxu0 0
        %2535 = vmatprep.subr.bf16.mxu0 0
        %2536 = vmatpush1.bf16.msra.mxu0 0
        %2537 = vmatprep.subr.bf16.mxu0 0
        %2538 = vmatpush1.bf16.msra.mxu0 %v2521
        %2539 = vmatprep.subr.bf16.mxu0 0
        %2540 = vmatpush2.bf16.msra.mxu0 0
        %2541 = vmatprep.subr.bf16.mxu0 0
        %2542 = vmatpush2.bf16.msra.mxu0 0
        %2543 = vmatprep.subr.bf16.mxu0 0
        %2544 = vmatpush2.bf16.msra.mxu0 0
        %2545 = vmatprep.subr.bf16.mxu0 0
        %2546 = vmatpush2.bf16.msra.mxu0 0
        %2547 = vmatprep.subr.bf16.mxu0 0
        %2548 = vmatpush2.bf16.msra.mxu0 0
        %2549 = vmatprep.subr.bf16.mxu0 0
        %2550 = vmatpush2.bf16.msra.mxu0 0
        %2551 = vmatprep.subr.bf16.mxu0 0
        %2552 = vmatpush2.bf16.msra.mxu0 0
        %2553 = vmatprep.subr.bf16.mxu0 0
        %2554 = vmatpush2.bf16.msra.mxu0 0
        %2555 = vmatprep.mubr.bf16.mxu0 0
        %2556 = vmatmul.mubr.bf16.gmra.mxu0 %v2518
        %v2557 = vpop.f32.mrf.mxu0
        %v2558 = vadd.f32 0.0, %v2557
        %v2559 = vpop.f32.mrf.mxu0
        %v2560 = vpop.f32.mrf.mxu0
        %v2561 = vpop.f32.mrf.mxu0
        %2562 = vdwg.mxu0
        %v2563 = vadd.f32 %v2467, %v2512
        %v2564 = vadd.f32 %v2468, %v2558
        %v2565 = vrcp.pop %v2465
        %v2566 = vrcp.pop %v2466
        %v2567 = vmul.f32 %v2563, %v2565
        %v2568 = vmul.f32 %v2564, %v2566
        %v2569 = vcombine.high %v2567, 0.0
        %v2571 = vunpack.c.l.s4 1983009808
        %v2572 = vunpack.c.0.s8 %v2571
        %v2573 = vlaneseq
        %v2574 = vshrl.u32 %v2573, 7
        %v2575 = vsub.s32 %v2572, %v2574
        %v2576 = vrot.slane %v2567, %v2575
        %v2578 = vunpack.c.l.s4 1983009808
        %v2579 = vunpack.c.0.s8 %v2578
        %v2580 = vlaneseq
        %v2581 = vshrl.u32 %v2580, 7
        %v2582 = vsub.s32 %v2579, %v2581
        %v2583 = vrot.slane %v2569, %v2582
        %v2584 = vcombine.high %v2568, 0.0
        %v2586 = vunpack.c.l.s4 1983009808
        %v2587 = vunpack.c.0.s8 %v2586
        %v2588 = vlaneseq
        %v2589 = vshrl.u32 %v2588, 7
        %v2590 = vsub.s32 %v2587, %v2589
        %v2591 = vrot.slane %v2568, %v2590
        %v2593 = vunpack.c.l.s4 1983009808
        %v2594 = vunpack.c.0.s8 %v2593
        %v2595 = vlaneseq
        %v2596 = vshrl.u32 %v2595, 7
        %v2597 = vsub.s32 %v2594, %v2596
        %v2598 = vrot.slane %v2584, %v2597
        %v2599 = vcombine.low %v2576, %v2591
        %v2600 = vcombine.high %v2576, %v2591
        %v2602 = vunpack.c.l.s4 1934713408
        %v2603 = vunpack.c.0.s8 %v2602
        %v2604 = vlaneseq
        %v2605 = vshrl.u32 %v2604, 7
        %v2606 = vsub.s32 %v2603, %v2605
        %v2607 = vrot.slane %v2599, %v2606
        %v2609 = vunpack.c.l.s4 1934713408
        %v2610 = vunpack.c.0.s8 %v2609
        %v2611 = vlaneseq
        %v2612 = vshrl.u32 %v2611, 7
        %v2613 = vsub.s32 %v2610, %v2612
        %v2614 = vrot.slane %v2600, %v2613
        %v2615 = vcombine.low %v2583, %v2598
        %v2616 = vcombine.high %v2583, %v2598
        %v2618 = vunpack.c.l.s4 1934713408
        %v2619 = vunpack.c.0.s8 %v2618
        %v2620 = vlaneseq
        %v2621 = vshrl.u32 %v2620, 7
        %v2622 = vsub.s32 %v2619, %v2621
        %v2623 = vrot.slane %v2615, %v2622
        %v2625 = vunpack.c.l.s4 1934713408
        %v2626 = vunpack.c.0.s8 %v2625
        %v2627 = vlaneseq
        %v2628 = vshrl.u32 %v2627, 7
        %v2629 = vsub.s32 %v2626, %v2628
        %v2630 = vrot.slane %v2616, %v2629
        %v2631 = vcombine.high %v2607, 0.0
        %v2632 = vcombine.high %v2614, 0.0
        %v2633 = vcombine.high %v2623, 0.0
        %v2634 = vcombine.high %v2630, 0.0
        %v2635 = vcombine.low %v2607, %v2614
        %v2637 = vunpack.c.l.s4 1983009808
        %v2638 = vunpack.c.0.s8 %v2637
        %v2639 = vlaneseq
        %v2640 = vshrl.u32 %v2639, 7
        %v2641 = vsub.s32 %v2638, %v2640
        %v2642 = vrot.slane %v2635, %v2641
        %v2643 = vcombine.low %v2631, %v2632
        %v2645 = vunpack.c.l.s4 1983009808
        %v2646 = vunpack.c.0.s8 %v2645
        %v2647 = vlaneseq
        %v2648 = vshrl.u32 %v2647, 7
        %v2649 = vsub.s32 %v2646, %v2648
        %v2650 = vrot.slane %v2643, %v2649
        %v2651 = vcombine.low %v2623, %v2630
        %v2653 = vunpack.c.l.s4 1983009808
        %v2654 = vunpack.c.0.s8 %v2653
        %v2655 = vlaneseq
        %v2656 = vshrl.u32 %v2655, 7
        %v2657 = vsub.s32 %v2654, %v2656
        %v2658 = vrot.slane %v2651, %v2657
        %v2659 = vcombine.low %v2633, %v2634
        %v2661 = vunpack.c.l.s4 1983009808
        %v2662 = vunpack.c.0.s8 %v2661
        %v2663 = vlaneseq
        %v2664 = vshrl.u32 %v2663, 7
        %v2665 = vsub.s32 %v2662, %v2664
        %v2666 = vrot.slane %v2659, %v2665
        %v2667 = vcombine.low %v2642, %v2650
        %v2669 = vunpack.c.l.s4 1934713408
        %v2670 = vunpack.c.0.s8 %v2669
        %v2671 = vlaneseq
        %v2672 = vshrl.u32 %v2671, 7
        %v2673 = vsub.s32 %v2670, %v2672
        %v2674 = vrot.slane %v2667, %v2673
        %v2675 = vcombine.low %v2658, %v2666
        %v2677 = vunpack.c.l.s4 1934713408
        %v2678 = vunpack.c.0.s8 %v2677
        %v2679 = vlaneseq
        %v2680 = vshrl.u32 %v2679, 7
        %v2681 = vsub.s32 %v2678, %v2680
        %v2682 = vrot.slane %v2675, %v2681
        %v2683 = vcombine.low %v2674, %v2682
        %v2684 = vcombine.high %v2674, %v2682
        %v2685 = vpack.c.bf16 %v2683, %v2683
        %v2686 = vpack.c.bf16 %v2684, %v2684
        %v2687 = vld [vmem:[#allocation13] sm:$0xff]
        %v2688 = vld [vmem:[#allocation13 + $0x8] sm:$0xff]
        %v2689 = vld [vmem:[#allocation13 + $0x10] sm:$0xff]
        %v2690 = vld [vmem:[#allocation13 + $0x18] sm:$0xff]
        %v2691 = vld [vmem:[#allocation13 + $0x20] sm:$0xff]
        %v2692 = vld [vmem:[#allocation13 + $0x28] sm:$0xff]
        %v2693 = vld [vmem:[#allocation13 + $0x30] sm:$0xff]
        %v2694 = vld [vmem:[#allocation13 + $0x38] sm:$0xff]
        %v2695 = vld [vmem:[#allocation13 + $0x40] sm:$0xff]
        %v2696 = vld [vmem:[#allocation13 + $0x48] sm:$0xff]
        %v2697 = vld [vmem:[#allocation13 + $0x50] sm:$0xff]
        %v2698 = vld [vmem:[#allocation13 + $0x58] sm:$0xff]
        %v2699 = vld [vmem:[#allocation13 + $0x60] sm:$0xff]
        %v2700 = vld [vmem:[#allocation13 + $0x68] sm:$0xff]
        %v2701 = vld [vmem:[#allocation13 + $0x70] sm:$0xff]
        %v2702 = vld [vmem:[#allocation13 + $0x78] sm:$0xff]
        %v2703 = vld [vmem:[#allocation13 + $0x80] sm:$0xff]
        %v2704 = vld [vmem:[#allocation13 + $0x88] sm:$0xff]
        %v2705 = vld [vmem:[#allocation13 + $0x90] sm:$0xff]
        %v2706 = vld [vmem:[#allocation13 + $0x98] sm:$0xff]
        %v2707 = vld [vmem:[#allocation13 + $0xa0] sm:$0xff]
        %v2708 = vld [vmem:[#allocation13 + $0xa8] sm:$0xff]
        %v2709 = vld [vmem:[#allocation13 + $0xb0] sm:$0xff]
        %v2710 = vld [vmem:[#allocation13 + $0xb8] sm:$0xff]
        %v2711 = vld [vmem:[#allocation13 + $0xc0] sm:$0xff]
        %v2712 = vld [vmem:[#allocation13 + $0xc8] sm:$0xff]
        %v2713 = vld [vmem:[#allocation13 + $0xd0] sm:$0xff]
        %v2714 = vld [vmem:[#allocation13 + $0xd8] sm:$0xff]
        %v2715 = vld [vmem:[#allocation13 + $0xe0] sm:$0xff]
        %v2716 = vld [vmem:[#allocation13 + $0xe8] sm:$0xff]
        %v2717 = vld [vmem:[#allocation13 + $0xf0] sm:$0xff]
        %v2718 = vld [vmem:[#allocation13 + $0xf8] sm:$0xff]
        %v2719 = vld [vmem:[%s9] sm:$0x3]
        %v2721 = vlaneseq
        %v2722 = vshrl.u32 %v2721, 7
        %v2723 = vsub.s32 0, %v2722
        %v2724 = vrot.slane %v2719, %v2723
        %v2725 = vlaneseq
        %v2726 = vshrl.u32 %v2725, 7
        %v2727 = vsub.s32 1, %v2726
        %v2728 = vrot.slane %v2719, %v2727
        %v2763 = vunpack.c.l.b16 %v2687
        %v2764 = vunpack.c.h.b16 %v2687
        %v2765 = vunpack.c.l.b16 %v2688
        %v2766 = vunpack.c.h.b16 %v2688
        %v2767 = vunpack.c.l.b16 %v2689
        %v2768 = vunpack.c.h.b16 %v2689
        %v2769 = vunpack.c.l.b16 %v2690
        %v2770 = vunpack.c.h.b16 %v2690
        %v2771 = vunpack.c.l.b16 %v2691
        %v2772 = vunpack.c.h.b16 %v2691
        %v2773 = vunpack.c.l.b16 %v2692
        %v2774 = vunpack.c.h.b16 %v2692
        %v2775 = vunpack.c.l.b16 %v2693
        %v2776 = vunpack.c.h.b16 %v2693
        %v2777 = vunpack.c.l.b16 %v2694
        %v2778 = vunpack.c.h.b16 %v2694
        %v2779 = vunpack.c.l.b16 %v2695
        %v2780 = vunpack.c.h.b16 %v2695
        %v2781 = vunpack.c.l.b16 %v2696
        %v2782 = vunpack.c.h.b16 %v2696
        %v2783 = vunpack.c.l.b16 %v2697
        %v2784 = vunpack.c.h.b16 %v2697
        %v2785 = vunpack.c.l.b16 %v2698
        %v2786 = vunpack.c.h.b16 %v2698
        %v2787 = vunpack.c.l.b16 %v2699
        %v2788 = vunpack.c.h.b16 %v2699
        %v2789 = vunpack.c.l.b16 %v2700
        %v2790 = vunpack.c.h.b16 %v2700
        %v2791 = vunpack.c.l.b16 %v2701
        %v2792 = vunpack.c.h.b16 %v2701
        %v2793 = vunpack.c.l.b16 %v2702
        %v2794 = vunpack.c.h.b16 %v2702
        %v2795 = vunpack.c.l.b16 %v2703
        %v2796 = vunpack.c.h.b16 %v2703
        %v2797 = vunpack.c.l.b16 %v2704
        %v2798 = vunpack.c.h.b16 %v2704
        %v2799 = vunpack.c.l.b16 %v2705
        %v2800 = vunpack.c.h.b16 %v2705
        %v2801 = vunpack.c.l.b16 %v2706
        %v2802 = vunpack.c.h.b16 %v2706
        %v2803 = vunpack.c.l.b16 %v2707
        %v2804 = vunpack.c.h.b16 %v2707
        %v2805 = vunpack.c.l.b16 %v2708
        %v2806 = vunpack.c.h.b16 %v2708
        %v2807 = vunpack.c.l.b16 %v2709
        %v2808 = vunpack.c.h.b16 %v2709
        %v2809 = vunpack.c.l.b16 %v2710
        %v2810 = vunpack.c.h.b16 %v2710
        %v2811 = vunpack.c.l.b16 %v2711
        %v2812 = vunpack.c.h.b16 %v2711
        %v2813 = vunpack.c.l.b16 %v2712
        %v2814 = vunpack.c.h.b16 %v2712
        %v2815 = vunpack.c.l.b16 %v2713
        %v2816 = vunpack.c.h.b16 %v2713
        %v2817 = vunpack.c.l.b16 %v2714
        %v2818 = vunpack.c.h.b16 %v2714
        %v2819 = vunpack.c.l.b16 %v2715
        %v2820 = vunpack.c.h.b16 %v2715
        %v2821 = vunpack.c.l.b16 %v2716
        %v2822 = vunpack.c.h.b16 %v2716
        %v2823 = vunpack.c.l.b16 %v2717
        %v2824 = vunpack.c.h.b16 %v2717
        %v2825 = vunpack.c.l.b16 %v2718
        %v2826 = vunpack.c.h.b16 %v2718
        %v2827 = vpack.c.b16 %v2765, %v2763
        %v2828 = vpack.c.b16 %v2766, %v2764
        %v2829 = vpack.c.b16 %v2769, %v2767
        %v2830 = vpack.c.b16 %v2770, %v2768
        %v2831 = vpack.c.b16 %v2773, %v2771
        %v2832 = vpack.c.b16 %v2774, %v2772
        %v2833 = vpack.c.b16 %v2777, %v2775
        %v2834 = vpack.c.b16 %v2778, %v2776
        %v2835 = vpack.c.b16 %v2781, %v2779
        %v2836 = vpack.c.b16 %v2782, %v2780
        %v2837 = vpack.c.b16 %v2785, %v2783
        %v2838 = vpack.c.b16 %v2786, %v2784
        %v2839 = vpack.c.b16 %v2789, %v2787
        %v2840 = vpack.c.b16 %v2790, %v2788
        %v2841 = vpack.c.b16 %v2793, %v2791
        %v2842 = vpack.c.b16 %v2794, %v2792
        %v2843 = vpack.c.b16 %v2797, %v2795
        %v2844 = vpack.c.b16 %v2798, %v2796
        %v2845 = vpack.c.b16 %v2801, %v2799
        %v2846 = vpack.c.b16 %v2802, %v2800
        %v2847 = vpack.c.b16 %v2805, %v2803
        %v2848 = vpack.c.b16 %v2806, %v2804
        %v2849 = vpack.c.b16 %v2809, %v2807
        %v2850 = vpack.c.b16 %v2810, %v2808
        %v2851 = vpack.c.b16 %v2813, %v2811
        %v2852 = vpack.c.b16 %v2814, %v2812
        %v2853 = vpack.c.b16 %v2817, %v2815
        %v2854 = vpack.c.b16 %v2818, %v2816
        %v2855 = vpack.c.b16 %v2821, %v2819
        %v2856 = vpack.c.b16 %v2822, %v2820
        %v2857 = vpack.c.b16 %v2825, %v2823
        %v2858 = vpack.c.b16 %v2826, %v2824
        %2891 = vmatprep.subr.bf16.mxu0 %v2842
        %2892 = vmatpush1.bf16.msra.mxu0 %v2841
        %2893 = vmatprep.subr.bf16.mxu0 %v2840
        %2894 = vmatpush1.bf16.msra.mxu0 %v2839
        %2895 = vmatprep.subr.bf16.mxu0 %v2838
        %2896 = vmatpush1.bf16.msra.mxu0 %v2837
        %2897 = vmatprep.subr.bf16.mxu0 %v2836
        %2898 = vmatpush1.bf16.msra.mxu0 %v2835
        %2899 = vmatprep.subr.bf16.mxu0 %v2834
        %2900 = vmatpush1.bf16.msra.mxu0 %v2833
        %2901 = vmatprep.subr.bf16.mxu0 %v2832
        %2902 = vmatpush1.bf16.msra.mxu0 %v2831
        %2903 = vmatprep.subr.bf16.mxu0 %v2830
        %2904 = vmatpush1.bf16.msra.mxu0 %v2829
        %2905 = vmatprep.subr.bf16.mxu0 %v2828
        %2906 = vmatpush1.bf16.msra.mxu0 %v2827
        %2907 = vmatprep.subr.bf16.mxu0 %v2858
        %2908 = vmatpush2.bf16.msra.mxu0 %v2857
        %2909 = vmatprep.subr.bf16.mxu0 %v2856
        %2910 = vmatpush2.bf16.msra.mxu0 %v2855
        %2911 = vmatprep.subr.bf16.mxu0 %v2854
        %2912 = vmatpush2.bf16.msra.mxu0 %v2853
        %2913 = vmatprep.subr.bf16.mxu0 %v2852
        %2914 = vmatpush2.bf16.msra.mxu0 %v2851
        %2915 = vmatprep.subr.bf16.mxu0 %v2850
        %2916 = vmatpush2.bf16.msra.mxu0 %v2849
        %2917 = vmatprep.subr.bf16.mxu0 %v2848
        %2918 = vmatpush2.bf16.msra.mxu0 %v2847
        %2919 = vmatprep.subr.bf16.mxu0 %v2846
        %2920 = vmatpush2.bf16.msra.mxu0 %v2845
        %2921 = vmatprep.subr.bf16.mxu0 %v2844
        %2922 = vmatpush2.bf16.msra.mxu0 %v2843
        %2923 = vmatprep.mubr.bf16.mxu0 %v2686
        %2924 = vmatmul.mubr.bf16.gmra.mxu0 %v2685
        %v2925 = vpop.f32.mrf.mxu0
        %v2926 = vadd.f32 %v2724, %v2925
        %v2927 = vpop.f32.mrf.mxu0
        %v2928 = vadd.f32 %v2728, %v2927
        %v2929 = vpop.f32.mrf.mxu0
        %v2930 = vpop.f32.mrf.mxu0
        %2931 = vdwg.mxu0
        %v2932 = vadd.f32 %v1752, %v2926
        %v2933 = vadd.f32 %v1753, %v2928
        %v2934 = vld [vmem:[%s10] sm:$0x3]
        %v2935 = vld [vmem:[%s11] sm:$0x3]
        %v2936 = vadd.f32 %v2932, %v2933
        %2937 = vadd.xlane.f32.xlu0 %v2936
        %v2938 = vpop.xlane.xlu0 %2937
        %v2939 = vrcp.pop 256.0
        %v2940 = vmul.f32 %v2938, %v2939
        %v2941 = vsub.f32 %v2932, %v2940
        %v2942 = vsub.f32 %v2933, %v2940
        %v2943 = vmul.f32 %v2941, %v2941
        %v2944 = vmul.f32 %v2942, %v2942
        %v2945 = vadd.f32 %v2943, %v2944
        %2946 = vadd.xlane.f32.xlu0 %v2945
        %v2947 = vpop.xlane.xlu0 %2946
        %v2948 = vmul.f32 %v2947, %v2939
        %v2949 = vadd.f32 %v2948, 1e-05
        %v2950 = vrsqrt.pop %v2949
        %v2951 = vmul.f32 %v2941, %v2950
        %v2952 = vmul.f32 %v2942, %v2950
        %v2954 = vlaneseq
        %v2955 = vshrl.u32 %v2954, 7
        %v2956 = vsub.s32 0, %v2955
        %v2957 = vrot.slane %v2934, %v2956
        %v2958 = vlaneseq
        %v2959 = vshrl.u32 %v2958, 7
        %v2960 = vsub.s32 1, %v2959
        %v2961 = vrot.slane %v2934, %v2960
        %v2964 = vmul.f32 %v2957, %v2951
        %v2965 = vmul.f32 %v2961, %v2952
        %v2967 = vlaneseq
        %v2968 = vshrl.u32 %v2967, 7
        %v2969 = vsub.s32 0, %v2968
        %v2970 = vrot.slane %v2935, %v2969
        %v2971 = vlaneseq
        %v2972 = vshrl.u32 %v2971, 7
        %v2973 = vsub.s32 1, %v2972
        %v2974 = vrot.slane %v2935, %v2973
        %v2977 = vadd.f32 %v2964, %v2970
        %v2978 = vadd.f32 %v2965, %v2974
        %v2979 = vpack.c.bf16 %v2977, %v2977
        %v2980 = vpack.c.bf16 %v2978, %v2978
        %v2981 = vld [vmem:[#allocation15] sm:$0xff]
        %v2982 = vld [vmem:[#allocation15 + $0x8] sm:$0xff]
        %v2983 = vld [vmem:[#allocation15 + $0x10] sm:$0xff]
        %v2984 = vld [vmem:[#allocation15 + $0x18] sm:$0xff]
        %v2985 = vld [vmem:[#allocation15 + $0x20] sm:$0xff]
        %v2986 = vld [vmem:[#allocation15 + $0x28] sm:$0xff]
        %v2987 = vld [vmem:[#allocation15 + $0x30] sm:$0xff]
        %v2988 = vld [vmem:[#allocation15 + $0x38] sm:$0xff]
        %v2989 = vld [vmem:[#allocation15 + $0x40] sm:$0xff]
        %v2990 = vld [vmem:[#allocation15 + $0x48] sm:$0xff]
        %v2991 = vld [vmem:[#allocation15 + $0x50] sm:$0xff]
        %v2992 = vld [vmem:[#allocation15 + $0x58] sm:$0xff]
        %v2993 = vld [vmem:[#allocation15 + $0x60] sm:$0xff]
        %v2994 = vld [vmem:[#allocation15 + $0x68] sm:$0xff]
        %v2995 = vld [vmem:[#allocation15 + $0x70] sm:$0xff]
        %v2996 = vld [vmem:[#allocation15 + $0x78] sm:$0xff]
        %v2997 = vld [vmem:[#allocation15 + $0x80] sm:$0xff]
        %v2998 = vld [vmem:[#allocation15 + $0x88] sm:$0xff]
        %v2999 = vld [vmem:[#allocation15 + $0x90] sm:$0xff]
        %v3000 = vld [vmem:[#allocation15 + $0x98] sm:$0xff]
        %v3001 = vld [vmem:[#allocation15 + $0xa0] sm:$0xff]
        %v3002 = vld [vmem:[#allocation15 + $0xa8] sm:$0xff]
        %v3003 = vld [vmem:[#allocation15 + $0xb0] sm:$0xff]
        %v3004 = vld [vmem:[#allocation15 + $0xb8] sm:$0xff]
        %v3005 = vld [vmem:[#allocation15 + $0xc0] sm:$0xff]
        %v3006 = vld [vmem:[#allocation15 + $0xc8] sm:$0xff]
        %v3007 = vld [vmem:[#allocation15 + $0xd0] sm:$0xff]
        %v3008 = vld [vmem:[#allocation15 + $0xd8] sm:$0xff]
        %v3009 = vld [vmem:[#allocation15 + $0xe0] sm:$0xff]
        %v3010 = vld [vmem:[#allocation15 + $0xe8] sm:$0xff]
        %v3011 = vld [vmem:[#allocation15 + $0xf0] sm:$0xff]
        %v3012 = vld [vmem:[#allocation15 + $0xf8] sm:$0xff]
        %v3013 = vld [vmem:[#allocation15 + $0x100] sm:$0xff]
        %v3014 = vld [vmem:[#allocation15 + $0x108] sm:$0xff]
        %v3015 = vld [vmem:[#allocation15 + $0x110] sm:$0xff]
        %v3016 = vld [vmem:[#allocation15 + $0x118] sm:$0xff]
        %v3017 = vld [vmem:[#allocation15 + $0x120] sm:$0xff]
        %v3018 = vld [vmem:[#allocation15 + $0x128] sm:$0xff]
        %v3019 = vld [vmem:[#allocation15 + $0x130] sm:$0xff]
        %v3020 = vld [vmem:[#allocation15 + $0x138] sm:$0xff]
        %v3021 = vld [vmem:[#allocation15 + $0x140] sm:$0xff]
        %v3022 = vld [vmem:[#allocation15 + $0x148] sm:$0xff]
        %v3023 = vld [vmem:[#allocation15 + $0x150] sm:$0xff]
        %v3024 = vld [vmem:[#allocation15 + $0x158] sm:$0xff]
        %v3025 = vld [vmem:[#allocation15 + $0x160] sm:$0xff]
        %v3026 = vld [vmem:[#allocation15 + $0x168] sm:$0xff]
        %v3027 = vld [vmem:[#allocation15 + $0x170] sm:$0xff]
        %v3028 = vld [vmem:[#allocation15 + $0x178] sm:$0xff]
        %v3029 = vld [vmem:[#allocation15 + $0x180] sm:$0xff]
        %v3030 = vld [vmem:[#allocation15 + $0x188] sm:$0xff]
        %v3031 = vld [vmem:[#allocation15 + $0x190] sm:$0xff]
        %v3032 = vld [vmem:[#allocation15 + $0x198] sm:$0xff]
        %v3033 = vld [vmem:[#allocation15 + $0x1a0] sm:$0xff]
        %v3034 = vld [vmem:[#allocation15 + $0x1a8] sm:$0xff]
        %v3035 = vld [vmem:[#allocation15 + $0x1b0] sm:$0xff]
        %v3036 = vld [vmem:[#allocation15 + $0x1b8] sm:$0xff]
        %v3037 = vld [vmem:[#allocation15 + $0x1c0] sm:$0xff]
        %v3038 = vld [vmem:[#allocation15 + $0x1c8] sm:$0xff]
        %v3039 = vld [vmem:[#allocation15 + $0x1d0] sm:$0xff]
        %v3040 = vld [vmem:[#allocation15 + $0x1d8] sm:$0xff]
        %v3041 = vld [vmem:[#allocation15 + $0x1e0] sm:$0xff]
        %v3042 = vld [vmem:[#allocation15 + $0x1e8] sm:$0xff]
        %v3043 = vld [vmem:[#allocation15 + $0x1f0] sm:$0xff]
        %v3044 = vld [vmem:[#allocation15 + $0x1f8] sm:$0xff]
        %v3045 = vld [vmem:[%s13] sm:$0xf]
        %v3047 = vlaneseq
        %v3048 = vshrl.u32 %v3047, 7
        %v3049 = vsub.s32 0, %v3048
        %v3050 = vrot.slane %v3045, %v3049
        %v3051 = vlaneseq
        %v3052 = vshrl.u32 %v3051, 7
        %v3053 = vsub.s32 1, %v3052
        %v3054 = vrot.slane %v3045, %v3053
        %v3055 = vlaneseq
        %v3056 = vshrl.u32 %v3055, 7
        %v3057 = vsub.s32 2, %v3056
        %v3058 = vrot.slane %v3045, %v3057
        %v3059 = vlaneseq
        %v3060 = vshrl.u32 %v3059, 7
        %v3061 = vsub.s32 3, %v3060
        %v3062 = vrot.slane %v3045, %v3061
        %v3131 = vunpack.c.l.b16 %v2981
        %v3132 = vunpack.c.h.b16 %v2981
        %v3133 = vunpack.c.l.b16 %v2982
        %v3134 = vunpack.c.h.b16 %v2982
        %v3135 = vunpack.c.l.b16 %v2983
        %v3136 = vunpack.c.h.b16 %v2983
        %v3137 = vunpack.c.l.b16 %v2984
        %v3138 = vunpack.c.h.b16 %v2984
        %v3139 = vunpack.c.l.b16 %v2985
        %v3140 = vunpack.c.h.b16 %v2985
        %v3141 = vunpack.c.l.b16 %v2986
        %v3142 = vunpack.c.h.b16 %v2986
        %v3143 = vunpack.c.l.b16 %v2987
        %v3144 = vunpack.c.h.b16 %v2987
        %v3145 = vunpack.c.l.b16 %v2988
        %v3146 = vunpack.c.h.b16 %v2988
        %v3147 = vunpack.c.l.b16 %v2989
        %v3148 = vunpack.c.h.b16 %v2989
        %v3149 = vunpack.c.l.b16 %v2990
        %v3150 = vunpack.c.h.b16 %v2990
        %v3151 = vunpack.c.l.b16 %v2991
        %v3152 = vunpack.c.h.b16 %v2991
        %v3153 = vunpack.c.l.b16 %v2992
        %v3154 = vunpack.c.h.b16 %v2992
        %v3155 = vunpack.c.l.b16 %v2993
        %v3156 = vunpack.c.h.b16 %v2993
        %v3157 = vunpack.c.l.b16 %v2994
        %v3158 = vunpack.c.h.b16 %v2994
        %v3159 = vunpack.c.l.b16 %v2995
        %v3160 = vunpack.c.h.b16 %v2995
        %v3161 = vunpack.c.l.b16 %v2996
        %v3162 = vunpack.c.h.b16 %v2996
        %v3163 = vunpack.c.l.b16 %v2997
        %v3164 = vunpack.c.h.b16 %v2997
        %v3165 = vunpack.c.l.b16 %v2998
        %v3166 = vunpack.c.h.b16 %v2998
        %v3167 = vunpack.c.l.b16 %v2999
        %v3168 = vunpack.c.h.b16 %v2999
        %v3169 = vunpack.c.l.b16 %v3000
        %v3170 = vunpack.c.h.b16 %v3000
        %v3171 = vunpack.c.l.b16 %v3001
        %v3172 = vunpack.c.h.b16 %v3001
        %v3173 = vunpack.c.l.b16 %v3002
        %v3174 = vunpack.c.h.b16 %v3002
        %v3175 = vunpack.c.l.b16 %v3003
        %v3176 = vunpack.c.h.b16 %v3003
        %v3177 = vunpack.c.l.b16 %v3004
        %v3178 = vunpack.c.h.b16 %v3004
        %v3179 = vunpack.c.l.b16 %v3005
        %v3180 = vunpack.c.h.b16 %v3005
        %v3181 = vunpack.c.l.b16 %v3006
        %v3182 = vunpack.c.h.b16 %v3006
        %v3183 = vunpack.c.l.b16 %v3007
        %v3184 = vunpack.c.h.b16 %v3007
        %v3185 = vunpack.c.l.b16 %v3008
        %v3186 = vunpack.c.h.b16 %v3008
        %v3187 = vunpack.c.l.b16 %v3009
        %v3188 = vunpack.c.h.b16 %v3009
        %v3189 = vunpack.c.l.b16 %v3010
        %v3190 = vunpack.c.h.b16 %v3010
        %v3191 = vunpack.c.l.b16 %v3011
        %v3192 = vunpack.c.h.b16 %v3011
        %v3193 = vunpack.c.l.b16 %v3012
        %v3194 = vunpack.c.h.b16 %v3012
        %v3195 = vunpack.c.l.b16 %v3013
        %v3196 = vunpack.c.h.b16 %v3013
        %v3197 = vunpack.c.l.b16 %v3014
        %v3198 = vunpack.c.h.b16 %v3014
        %v3199 = vunpack.c.l.b16 %v3015
        %v3200 = vunpack.c.h.b16 %v3015
        %v3201 = vunpack.c.l.b16 %v3016
        %v3202 = vunpack.c.h.b16 %v3016
        %v3203 = vunpack.c.l.b16 %v3017
        %v3204 = vunpack.c.h.b16 %v3017
        %v3205 = vunpack.c.l.b16 %v3018
        %v3206 = vunpack.c.h.b16 %v3018
        %v3207 = vunpack.c.l.b16 %v3019
        %v3208 = vunpack.c.h.b16 %v3019
        %v3209 = vunpack.c.l.b16 %v3020
        %v3210 = vunpack.c.h.b16 %v3020
        %v3211 = vunpack.c.l.b16 %v3021
        %v3212 = vunpack.c.h.b16 %v3021
        %v3213 = vunpack.c.l.b16 %v3022
        %v3214 = vunpack.c.h.b16 %v3022
        %v3215 = vunpack.c.l.b16 %v3023
        %v3216 = vunpack.c.h.b16 %v3023
        %v3217 = vunpack.c.l.b16 %v3024
        %v3218 = vunpack.c.h.b16 %v3024
        %v3219 = vunpack.c.l.b16 %v3025
        %v3220 = vunpack.c.h.b16 %v3025
        %v3221 = vunpack.c.l.b16 %v3026
        %v3222 = vunpack.c.h.b16 %v3026
        %v3223 = vunpack.c.l.b16 %v3027
        %v3224 = vunpack.c.h.b16 %v3027
        %v3225 = vunpack.c.l.b16 %v3028
        %v3226 = vunpack.c.h.b16 %v3028
        %v3227 = vunpack.c.l.b16 %v3029
        %v3228 = vunpack.c.h.b16 %v3029
        %v3229 = vunpack.c.l.b16 %v3030
        %v3230 = vunpack.c.h.b16 %v3030
        %v3231 = vunpack.c.l.b16 %v3031
        %v3232 = vunpack.c.h.b16 %v3031
        %v3233 = vunpack.c.l.b16 %v3032
        %v3234 = vunpack.c.h.b16 %v3032
        %v3235 = vunpack.c.l.b16 %v3033
        %v3236 = vunpack.c.h.b16 %v3033
        %v3237 = vunpack.c.l.b16 %v3034
        %v3238 = vunpack.c.h.b16 %v3034
        %v3239 = vunpack.c.l.b16 %v3035
        %v3240 = vunpack.c.h.b16 %v3035
        %v3241 = vunpack.c.l.b16 %v3036
        %v3242 = vunpack.c.h.b16 %v3036
        %v3243 = vunpack.c.l.b16 %v3037
        %v3244 = vunpack.c.h.b16 %v3037
        %v3245 = vunpack.c.l.b16 %v3038
        %v3246 = vunpack.c.h.b16 %v3038
        %v3247 = vunpack.c.l.b16 %v3039
        %v3248 = vunpack.c.h.b16 %v3039
        %v3249 = vunpack.c.l.b16 %v3040
        %v3250 = vunpack.c.h.b16 %v3040
        %v3251 = vunpack.c.l.b16 %v3041
        %v3252 = vunpack.c.h.b16 %v3041
        %v3253 = vunpack.c.l.b16 %v3042
        %v3254 = vunpack.c.h.b16 %v3042
        %v3255 = vunpack.c.l.b16 %v3043
        %v3256 = vunpack.c.h.b16 %v3043
        %v3257 = vunpack.c.l.b16 %v3044
        %v3258 = vunpack.c.h.b16 %v3044
        %v3259 = vpack.c.b16 %v3135, %v3131
        %v3260 = vpack.c.b16 %v3136, %v3132
        %v3261 = vpack.c.b16 %v3137, %v3133
        %v3262 = vpack.c.b16 %v3138, %v3134
        %v3263 = vpack.c.b16 %v3143, %v3139
        %v3264 = vpack.c.b16 %v3144, %v3140
        %v3265 = vpack.c.b16 %v3145, %v3141
        %v3266 = vpack.c.b16 %v3146, %v3142
        %v3267 = vpack.c.b16 %v3151, %v3147
        %v3268 = vpack.c.b16 %v3152, %v3148
        %v3269 = vpack.c.b16 %v3153, %v3149
        %v3270 = vpack.c.b16 %v3154, %v3150
        %v3271 = vpack.c.b16 %v3159, %v3155
        %v3272 = vpack.c.b16 %v3160, %v3156
        %v3273 = vpack.c.b16 %v3161, %v3157
        %v3274 = vpack.c.b16 %v3162, %v3158
        %v3275 = vpack.c.b16 %v3167, %v3163
        %v3276 = vpack.c.b16 %v3168, %v3164
        %v3277 = vpack.c.b16 %v3169, %v3165
        %v3278 = vpack.c.b16 %v3170, %v3166
        %v3279 = vpack.c.b16 %v3175, %v3171
        %v3280 = vpack.c.b16 %v3176, %v3172
        %v3281 = vpack.c.b16 %v3177, %v3173
        %v3282 = vpack.c.b16 %v3178, %v3174
        %v3283 = vpack.c.b16 %v3183, %v3179
        %v3284 = vpack.c.b16 %v3184, %v3180
        %v3285 = vpack.c.b16 %v3185, %v3181
        %v3286 = vpack.c.b16 %v3186, %v3182
        %v3287 = vpack.c.b16 %v3191, %v3187
        %v3288 = vpack.c.b16 %v3192, %v3188
        %v3289 = vpack.c.b16 %v3193, %v3189
        %v3290 = vpack.c.b16 %v3194, %v3190
        %v3291 = vpack.c.b16 %v3199, %v3195
        %v3292 = vpack.c.b16 %v3200, %v3196
        %v3293 = vpack.c.b16 %v3201, %v3197
        %v3294 = vpack.c.b16 %v3202, %v3198
        %v3295 = vpack.c.b16 %v3207, %v3203
        %v3296 = vpack.c.b16 %v3208, %v3204
        %v3297 = vpack.c.b16 %v3209, %v3205
        %v3298 = vpack.c.b16 %v3210, %v3206
        %v3299 = vpack.c.b16 %v3215, %v3211
        %v3300 = vpack.c.b16 %v3216, %v3212
        %v3301 = vpack.c.b16 %v3217, %v3213
        %v3302 = vpack.c.b16 %v3218, %v3214
        %v3303 = vpack.c.b16 %v3223, %v3219
        %v3304 = vpack.c.b16 %v3224, %v3220
        %v3305 = vpack.c.b16 %v3225, %v3221
        %v3306 = vpack.c.b16 %v3226, %v3222
        %v3307 = vpack.c.b16 %v3231, %v3227
        %v3308 = vpack.c.b16 %v3232, %v3228
        %v3309 = vpack.c.b16 %v3233, %v3229
        %v3310 = vpack.c.b16 %v3234, %v3230
        %v3311 = vpack.c.b16 %v3239, %v3235
        %v3312 = vpack.c.b16 %v3240, %v3236
        %v3313 = vpack.c.b16 %v3241, %v3237
        %v3314 = vpack.c.b16 %v3242, %v3238
        %v3315 = vpack.c.b16 %v3247, %v3243
        %v3316 = vpack.c.b16 %v3248, %v3244
        %v3317 = vpack.c.b16 %v3249, %v3245
        %v3318 = vpack.c.b16 %v3250, %v3246
        %v3319 = vpack.c.b16 %v3255, %v3251
        %v3320 = vpack.c.b16 %v3256, %v3252
        %v3321 = vpack.c.b16 %v3257, %v3253
        %v3322 = vpack.c.b16 %v3258, %v3254
        %3387 = vmatprep.subr.bf16.mxu0 %v3288
        %3388 = vmatpush1.bf16.msra.mxu0 %v3287
        %3389 = vmatprep.subr.bf16.mxu0 %v3284
        %3390 = vmatpush1.bf16.msra.mxu0 %v3283
        %3391 = vmatprep.subr.bf16.mxu0 %v3280
        %3392 = vmatpush1.bf16.msra.mxu0 %v3279
        %3393 = vmatprep.subr.bf16.mxu0 %v3276
        %3394 = vmatpush1.bf16.msra.mxu0 %v3275
        %3395 = vmatprep.subr.bf16.mxu0 %v3272
        %3396 = vmatpush1.bf16.msra.mxu0 %v3271
        %3397 = vmatprep.subr.bf16.mxu0 %v3268
        %3398 = vmatpush1.bf16.msra.mxu0 %v3267
        %3399 = vmatprep.subr.bf16.mxu0 %v3264
        %3400 = vmatpush1.bf16.msra.mxu0 %v3263
        %3401 = vmatprep.subr.bf16.mxu0 %v3260
        %3402 = vmatpush1.bf16.msra.mxu0 %v3259
        %3403 = vmatprep.subr.bf16.mxu0 %v3320
        %3404 = vmatpush2.bf16.msra.mxu0 %v3319
        %3405 = vmatprep.subr.bf16.mxu0 %v3316
        %3406 = vmatpush2.bf16.msra.mxu0 %v3315
        %3407 = vmatprep.subr.bf16.mxu0 %v3312
        %3408 = vmatpush2.bf16.msra.mxu0 %v3311
        %3409 = vmatprep.subr.bf16.mxu0 %v3308
        %3410 = vmatpush2.bf16.msra.mxu0 %v3307
        %3411 = vmatprep.subr.bf16.mxu0 %v3304
        %3412 = vmatpush2.bf16.msra.mxu0 %v3303
        %3413 = vmatprep.subr.bf16.mxu0 %v3300
        %3414 = vmatpush2.bf16.msra.mxu0 %v3299
        %3415 = vmatprep.subr.bf16.mxu0 %v3296
        %3416 = vmatpush2.bf16.msra.mxu0 %v3295
        %3417 = vmatprep.subr.bf16.mxu0 %v3292
        %3418 = vmatpush2.bf16.msra.mxu0 %v3291
        %3419 = vmatprep.mubr.bf16.mxu0 %v2980
        %3420 = vmatmul.mubr.bf16.gmra.mxu0 %v2979
        %v3421 = vpop.f32.mrf.mxu0
        %v3422 = vadd.f32 %v3050, %v3421
        %v3423 = vpop.f32.mrf.mxu0
        %v3424 = vadd.f32 %v3054, %v3423
        %v3425 = vpop.f32.mrf.mxu0
        %v3426 = vpop.f32.mrf.mxu0
        %3427 = vdwg.mxu0
        %3428 = vmatprep.subr.bf16.mxu0 %v3290
        %3429 = vmatpush1.bf16.msra.mxu0 %v3289
        %3430 = vmatprep.subr.bf16.mxu0 %v3286
        %3431 = vmatpush1.bf16.msra.mxu0 %v3285
        %3432 = vmatprep.subr.bf16.mxu0 %v3282
        %3433 = vmatpush1.bf16.msra.mxu0 %v3281
        %3434 = vmatprep.subr.bf16.mxu0 %v3278
        %3435 = vmatpush1.bf16.msra.mxu0 %v3277
        %3436 = vmatprep.subr.bf16.mxu0 %v3274
        %3437 = vmatpush1.bf16.msra.mxu0 %v3273
        %3438 = vmatprep.subr.bf16.mxu0 %v3270
        %3439 = vmatpush1.bf16.msra.mxu0 %v3269
        %3440 = vmatprep.subr.bf16.mxu0 %v3266
        %3441 = vmatpush1.bf16.msra.mxu0 %v3265
        %3442 = vmatprep.subr.bf16.mxu0 %v3262
        %3443 = vmatpush1.bf16.msra.mxu0 %v3261
        %3444 = vmatprep.subr.bf16.mxu0 %v3322
        %3445 = vmatpush2.bf16.msra.mxu0 %v3321
        %3446 = vmatprep.subr.bf16.mxu0 %v3318
        %3447 = vmatpush2.bf16.msra.mxu0 %v3317
        %3448 = vmatprep.subr.bf16.mxu0 %v3314
        %3449 = vmatpush2.bf16.msra.mxu0 %v3313
        %3450 = vmatprep.subr.bf16.mxu0 %v3310
        %3451 = vmatpush2.bf16.msra.mxu0 %v3309
        %3452 = vmatprep.subr.bf16.mxu0 %v3306
        %3453 = vmatpush2.bf16.msra.mxu0 %v3305
        %3454 = vmatprep.subr.bf16.mxu0 %v3302
        %3455 = vmatpush2.bf16.msra.mxu0 %v3301
        %3456 = vmatprep.subr.bf16.mxu0 %v3298
        %3457 = vmatpush2.bf16.msra.mxu0 %v3297
        %3458 = vmatprep.subr.bf16.mxu0 %v3294
        %3459 = vmatpush2.bf16.msra.mxu0 %v3293
        %3460 = vmatprep.mubr.bf16.mxu0 %v2980
        %3461 = vmatmul.mubr.bf16.gmra.mxu0 %v2979
        %v3462 = vpop.f32.mrf.mxu0
        %v3463 = vadd.f32 %v3058, %v3462
        %v3464 = vpop.f32.mrf.mxu0
        %v3465 = vadd.f32 %v3062, %v3464
        %v3466 = vpop.f32.mrf.mxu0
        %v3467 = vpop.f32.mrf.mxu0
        %3468 = vdwg.mxu0
        %v3469 = vmul.f32 %v3422, 0.5
        %v3470 = vmul.f32 %v3424, 0.5
        %v3471 = vmul.f32 %v3463, 0.5
        %v3472 = vmul.f32 %v3465, 0.5
        %v3473 = vmul.f32 %v3422, 0.70710677
        %v3474 = vmul.f32 %v3424, 0.70710677
        %v3475 = vmul.f32 %v3463, 0.70710677
        %v3476 = vmul.f32 %v3465, 0.70710677
        %v3477 = verf.f32.pop %v3473
        %v3478 = verf.f32.pop %v3474
        %v3479 = verf.f32.pop %v3475
        %v3480 = verf.f32.pop %v3476
        %v3481 = vadd.f32 %v3477, 1.0
        %v3482 = vadd.f32 %v3478, 1.0
        %v3483 = vadd.f32 %v3479, 1.0
        %v3484 = vadd.f32 %v3480, 1.0
        %v3485 = vmul.f32 %v3469, %v3481
        %v3486 = vmul.f32 %v3470, %v3482
        %v3487 = vmul.f32 %v3471, %v3483
        %v3488 = vmul.f32 %v3472, %v3484
        %v3489 = vpack.c.bf16 %v3485, %v3485
        %v3490 = vpack.c.bf16 %v3486, %v3486
        %v3491 = vpack.c.bf16 %v3487, %v3487
        %v3492 = vpack.c.bf16 %v3488, %v3488
        %v3493 = vld [vmem:[#allocation16] sm:$0xff]
        %v3494 = vld [vmem:[#allocation16 + $0x8] sm:$0xff]
        %v3495 = vld [vmem:[#allocation16 + $0x10] sm:$0xff]
        %v3496 = vld [vmem:[#allocation16 + $0x18] sm:$0xff]
        %v3497 = vld [vmem:[#allocation16 + $0x20] sm:$0xff]
        %v3498 = vld [vmem:[#allocation16 + $0x28] sm:$0xff]
        %v3499 = vld [vmem:[#allocation16 + $0x30] sm:$0xff]
        %v3500 = vld [vmem:[#allocation16 + $0x38] sm:$0xff]
        %v3501 = vld [vmem:[#allocation16 + $0x40] sm:$0xff]
        %v3502 = vld [vmem:[#allocation16 + $0x48] sm:$0xff]
        %v3503 = vld [vmem:[#allocation16 + $0x50] sm:$0xff]
        %v3504 = vld [vmem:[#allocation16 + $0x58] sm:$0xff]
        %v3505 = vld [vmem:[#allocation16 + $0x60] sm:$0xff]
        %v3506 = vld [vmem:[#allocation16 + $0x68] sm:$0xff]
        %v3507 = vld [vmem:[#allocation16 + $0x70] sm:$0xff]
        %v3508 = vld [vmem:[#allocation16 + $0x78] sm:$0xff]
        %v3509 = vld [vmem:[#allocation16 + $0x80] sm:$0xff]
        %v3510 = vld [vmem:[#allocation16 + $0x88] sm:$0xff]
        %v3511 = vld [vmem:[#allocation16 + $0x90] sm:$0xff]
        %v3512 = vld [vmem:[#allocation16 + $0x98] sm:$0xff]
        %v3513 = vld [vmem:[#allocation16 + $0xa0] sm:$0xff]
        %v3514 = vld [vmem:[#allocation16 + $0xa8] sm:$0xff]
        %v3515 = vld [vmem:[#allocation16 + $0xb0] sm:$0xff]
        %v3516 = vld [vmem:[#allocation16 + $0xb8] sm:$0xff]
        %v3517 = vld [vmem:[#allocation16 + $0xc0] sm:$0xff]
        %v3518 = vld [vmem:[#allocation16 + $0xc8] sm:$0xff]
        %v3519 = vld [vmem:[#allocation16 + $0xd0] sm:$0xff]
        %v3520 = vld [vmem:[#allocation16 + $0xd8] sm:$0xff]
        %v3521 = vld [vmem:[#allocation16 + $0xe0] sm:$0xff]
        %v3522 = vld [vmem:[#allocation16 + $0xe8] sm:$0xff]
        %v3523 = vld [vmem:[#allocation16 + $0xf0] sm:$0xff]
        %v3524 = vld [vmem:[#allocation16 + $0xf8] sm:$0xff]
        %v3525 = vld [vmem:[#allocation16 + $0x100] sm:$0xff]
        %v3526 = vld [vmem:[#allocation16 + $0x108] sm:$0xff]
        %v3527 = vld [vmem:[#allocation16 + $0x110] sm:$0xff]
        %v3528 = vld [vmem:[#allocation16 + $0x118] sm:$0xff]
        %v3529 = vld [vmem:[#allocation16 + $0x120] sm:$0xff]
        %v3530 = vld [vmem:[#allocation16 + $0x128] sm:$0xff]
        %v3531 = vld [vmem:[#allocation16 + $0x130] sm:$0xff]
        %v3532 = vld [vmem:[#allocation16 + $0x138] sm:$0xff]
        %v3533 = vld [vmem:[#allocation16 + $0x140] sm:$0xff]
        %v3534 = vld [vmem:[#allocation16 + $0x148] sm:$0xff]
        %v3535 = vld [vmem:[#allocation16 + $0x150] sm:$0xff]
        %v3536 = vld [vmem:[#allocation16 + $0x158] sm:$0xff]
        %v3537 = vld [vmem:[#allocation16 + $0x160] sm:$0xff]
        %v3538 = vld [vmem:[#allocation16 + $0x168] sm:$0xff]
        %v3539 = vld [vmem:[#allocation16 + $0x170] sm:$0xff]
        %v3540 = vld [vmem:[#allocation16 + $0x178] sm:$0xff]
        %v3541 = vld [vmem:[#allocation16 + $0x180] sm:$0xff]
        %v3542 = vld [vmem:[#allocation16 + $0x188] sm:$0xff]
        %v3543 = vld [vmem:[#allocation16 + $0x190] sm:$0xff]
        %v3544 = vld [vmem:[#allocation16 + $0x198] sm:$0xff]
        %v3545 = vld [vmem:[#allocation16 + $0x1a0] sm:$0xff]
        %v3546 = vld [vmem:[#allocation16 + $0x1a8] sm:$0xff]
        %v3547 = vld [vmem:[#allocation16 + $0x1b0] sm:$0xff]
        %v3548 = vld [vmem:[#allocation16 + $0x1b8] sm:$0xff]
        %v3549 = vld [vmem:[#allocation16 + $0x1c0] sm:$0xff]
        %v3550 = vld [vmem:[#allocation16 + $0x1c8] sm:$0xff]
        %v3551 = vld [vmem:[#allocation16 + $0x1d0] sm:$0xff]
        %v3552 = vld [vmem:[#allocation16 + $0x1d8] sm:$0xff]
        %v3553 = vld [vmem:[#allocation16 + $0x1e0] sm:$0xff]
        %v3554 = vld [vmem:[#allocation16 + $0x1e8] sm:$0xff]
        %v3555 = vld [vmem:[#allocation16 + $0x1f0] sm:$0xff]
        %v3556 = vld [vmem:[#allocation16 + $0x1f8] sm:$0xff]
        %v3557 = vld [vmem:[%s15] sm:$0x3]
        %v3559 = vlaneseq
        %v3560 = vshrl.u32 %v3559, 7
        %v3561 = vsub.s32 0, %v3560
        %v3562 = vrot.slane %v3557, %v3561
        %v3563 = vlaneseq
        %v3564 = vshrl.u32 %v3563, 7
        %v3565 = vsub.s32 1, %v3564
        %v3566 = vrot.slane %v3557, %v3565
        %v3633 = vunpack.c.l.b16 %v3493
        %v3634 = vunpack.c.h.b16 %v3493
        %v3635 = vunpack.c.l.b16 %v3494
        %v3636 = vunpack.c.h.b16 %v3494
        %v3637 = vunpack.c.l.b16 %v3495
        %v3638 = vunpack.c.h.b16 %v3495
        %v3639 = vunpack.c.l.b16 %v3496
        %v3640 = vunpack.c.h.b16 %v3496
        %v3641 = vunpack.c.l.b16 %v3497
        %v3642 = vunpack.c.h.b16 %v3497
        %v3643 = vunpack.c.l.b16 %v3498
        %v3644 = vunpack.c.h.b16 %v3498
        %v3645 = vunpack.c.l.b16 %v3499
        %v3646 = vunpack.c.h.b16 %v3499
        %v3647 = vunpack.c.l.b16 %v3500
        %v3648 = vunpack.c.h.b16 %v3500
        %v3649 = vunpack.c.l.b16 %v3501
        %v3650 = vunpack.c.h.b16 %v3501
        %v3651 = vunpack.c.l.b16 %v3502
        %v3652 = vunpack.c.h.b16 %v3502
        %v3653 = vunpack.c.l.b16 %v3503
        %v3654 = vunpack.c.h.b16 %v3503
        %v3655 = vunpack.c.l.b16 %v3504
        %v3656 = vunpack.c.h.b16 %v3504
        %v3657 = vunpack.c.l.b16 %v3505
        %v3658 = vunpack.c.h.b16 %v3505
        %v3659 = vunpack.c.l.b16 %v3506
        %v3660 = vunpack.c.h.b16 %v3506
        %v3661 = vunpack.c.l.b16 %v3507
        %v3662 = vunpack.c.h.b16 %v3507
        %v3663 = vunpack.c.l.b16 %v3508
        %v3664 = vunpack.c.h.b16 %v3508
        %v3665 = vunpack.c.l.b16 %v3509
        %v3666 = vunpack.c.h.b16 %v3509
        %v3667 = vunpack.c.l.b16 %v3510
        %v3668 = vunpack.c.h.b16 %v3510
        %v3669 = vunpack.c.l.b16 %v3511
        %v3670 = vunpack.c.h.b16 %v3511
        %v3671 = vunpack.c.l.b16 %v3512
        %v3672 = vunpack.c.h.b16 %v3512
        %v3673 = vunpack.c.l.b16 %v3513
        %v3674 = vunpack.c.h.b16 %v3513
        %v3675 = vunpack.c.l.b16 %v3514
        %v3676 = vunpack.c.h.b16 %v3514
        %v3677 = vunpack.c.l.b16 %v3515
        %v3678 = vunpack.c.h.b16 %v3515
        %v3679 = vunpack.c.l.b16 %v3516
        %v3680 = vunpack.c.h.b16 %v3516
        %v3681 = vunpack.c.l.b16 %v3517
        %v3682 = vunpack.c.h.b16 %v3517
        %v3683 = vunpack.c.l.b16 %v3518
        %v3684 = vunpack.c.h.b16 %v3518
        %v3685 = vunpack.c.l.b16 %v3519
        %v3686 = vunpack.c.h.b16 %v3519
        %v3687 = vunpack.c.l.b16 %v3520
        %v3688 = vunpack.c.h.b16 %v3520
        %v3689 = vunpack.c.l.b16 %v3521
        %v3690 = vunpack.c.h.b16 %v3521
        %v3691 = vunpack.c.l.b16 %v3522
        %v3692 = vunpack.c.h.b16 %v3522
        %v3693 = vunpack.c.l.b16 %v3523
        %v3694 = vunpack.c.h.b16 %v3523
        %v3695 = vunpack.c.l.b16 %v3524
        %v3696 = vunpack.c.h.b16 %v3524
        %v3697 = vunpack.c.l.b16 %v3525
        %v3698 = vunpack.c.h.b16 %v3525
        %v3699 = vunpack.c.l.b16 %v3526
        %v3700 = vunpack.c.h.b16 %v3526
        %v3701 = vunpack.c.l.b16 %v3527
        %v3702 = vunpack.c.h.b16 %v3527
        %v3703 = vunpack.c.l.b16 %v3528
        %v3704 = vunpack.c.h.b16 %v3528
        %v3705 = vunpack.c.l.b16 %v3529
        %v3706 = vunpack.c.h.b16 %v3529
        %v3707 = vunpack.c.l.b16 %v3530
        %v3708 = vunpack.c.h.b16 %v3530
        %v3709 = vunpack.c.l.b16 %v3531
        %v3710 = vunpack.c.h.b16 %v3531
        %v3711 = vunpack.c.l.b16 %v3532
        %v3712 = vunpack.c.h.b16 %v3532
        %v3713 = vunpack.c.l.b16 %v3533
        %v3714 = vunpack.c.h.b16 %v3533
        %v3715 = vunpack.c.l.b16 %v3534
        %v3716 = vunpack.c.h.b16 %v3534
        %v3717 = vunpack.c.l.b16 %v3535
        %v3718 = vunpack.c.h.b16 %v3535
        %v3719 = vunpack.c.l.b16 %v3536
        %v3720 = vunpack.c.h.b16 %v3536
        %v3721 = vunpack.c.l.b16 %v3537
        %v3722 = vunpack.c.h.b16 %v3537
        %v3723 = vunpack.c.l.b16 %v3538
        %v3724 = vunpack.c.h.b16 %v3538
        %v3725 = vunpack.c.l.b16 %v3539
        %v3726 = vunpack.c.h.b16 %v3539
        %v3727 = vunpack.c.l.b16 %v3540
        %v3728 = vunpack.c.h.b16 %v3540
        %v3729 = vunpack.c.l.b16 %v3541
        %v3730 = vunpack.c.h.b16 %v3541
        %v3731 = vunpack.c.l.b16 %v3542
        %v3732 = vunpack.c.h.b16 %v3542
        %v3733 = vunpack.c.l.b16 %v3543
        %v3734 = vunpack.c.h.b16 %v3543
        %v3735 = vunpack.c.l.b16 %v3544
        %v3736 = vunpack.c.h.b16 %v3544
        %v3737 = vunpack.c.l.b16 %v3545
        %v3738 = vunpack.c.h.b16 %v3545
        %v3739 = vunpack.c.l.b16 %v3546
        %v3740 = vunpack.c.h.b16 %v3546
        %v3741 = vunpack.c.l.b16 %v3547
        %v3742 = vunpack.c.h.b16 %v3547
        %v3743 = vunpack.c.l.b16 %v3548
        %v3744 = vunpack.c.h.b16 %v3548
        %v3745 = vunpack.c.l.b16 %v3549
        %v3746 = vunpack.c.h.b16 %v3549
        %v3747 = vunpack.c.l.b16 %v3550
        %v3748 = vunpack.c.h.b16 %v3550
        %v3749 = vunpack.c.l.b16 %v3551
        %v3750 = vunpack.c.h.b16 %v3551
        %v3751 = vunpack.c.l.b16 %v3552
        %v3752 = vunpack.c.h.b16 %v3552
        %v3753 = vunpack.c.l.b16 %v3553
        %v3754 = vunpack.c.h.b16 %v3553
        %v3755 = vunpack.c.l.b16 %v3554
        %v3756 = vunpack.c.h.b16 %v3554
        %v3757 = vunpack.c.l.b16 %v3555
        %v3758 = vunpack.c.h.b16 %v3555
        %v3759 = vunpack.c.l.b16 %v3556
        %v3760 = vunpack.c.h.b16 %v3556
        %v3761 = vpack.c.b16 %v3635, %v3633
        %v3762 = vpack.c.b16 %v3636, %v3634
        %v3763 = vpack.c.b16 %v3639, %v3637
        %v3764 = vpack.c.b16 %v3640, %v3638
        %v3765 = vpack.c.b16 %v3643, %v3641
        %v3766 = vpack.c.b16 %v3644, %v3642
        %v3767 = vpack.c.b16 %v3647, %v3645
        %v3768 = vpack.c.b16 %v3648, %v3646
        %v3769 = vpack.c.b16 %v3651, %v3649
        %v3770 = vpack.c.b16 %v3652, %v3650
        %v3771 = vpack.c.b16 %v3655, %v3653
        %v3772 = vpack.c.b16 %v3656, %v3654
        %v3773 = vpack.c.b16 %v3659, %v3657
        %v3774 = vpack.c.b16 %v3660, %v3658
        %v3775 = vpack.c.b16 %v3663, %v3661
        %v3776 = vpack.c.b16 %v3664, %v3662
        %v3777 = vpack.c.b16 %v3667, %v3665
        %v3778 = vpack.c.b16 %v3668, %v3666
        %v3779 = vpack.c.b16 %v3671, %v3669
        %v3780 = vpack.c.b16 %v3672, %v3670
        %v3781 = vpack.c.b16 %v3675, %v3673
        %v3782 = vpack.c.b16 %v3676, %v3674
        %v3783 = vpack.c.b16 %v3679, %v3677
        %v3784 = vpack.c.b16 %v3680, %v3678
        %v3785 = vpack.c.b16 %v3683, %v3681
        %v3786 = vpack.c.b16 %v3684, %v3682
        %v3787 = vpack.c.b16 %v3687, %v3685
        %v3788 = vpack.c.b16 %v3688, %v3686
        %v3789 = vpack.c.b16 %v3691, %v3689
        %v3790 = vpack.c.b16 %v3692, %v3690
        %v3791 = vpack.c.b16 %v3695, %v3693
        %v3792 = vpack.c.b16 %v3696, %v3694
        %v3793 = vpack.c.b16 %v3699, %v3697
        %v3794 = vpack.c.b16 %v3700, %v3698
        %v3795 = vpack.c.b16 %v3703, %v3701
        %v3796 = vpack.c.b16 %v3704, %v3702
        %v3797 = vpack.c.b16 %v3707, %v3705
        %v3798 = vpack.c.b16 %v3708, %v3706
        %v3799 = vpack.c.b16 %v3711, %v3709
        %v3800 = vpack.c.b16 %v3712, %v3710
        %v3801 = vpack.c.b16 %v3715, %v3713
        %v3802 = vpack.c.b16 %v3716, %v3714
        %v3803 = vpack.c.b16 %v3719, %v3717
        %v3804 = vpack.c.b16 %v3720, %v3718
        %v3805 = vpack.c.b16 %v3723, %v3721
        %v3806 = vpack.c.b16 %v3724, %v3722
        %v3807 = vpack.c.b16 %v3727, %v3725
        %v3808 = vpack.c.b16 %v3728, %v3726
        %v3809 = vpack.c.b16 %v3731, %v3729
        %v3810 = vpack.c.b16 %v3732, %v3730
        %v3811 = vpack.c.b16 %v3735, %v3733
        %v3812 = vpack.c.b16 %v3736, %v3734
        %v3813 = vpack.c.b16 %v3739, %v3737
        %v3814 = vpack.c.b16 %v3740, %v3738
        %v3815 = vpack.c.b16 %v3743, %v3741
        %v3816 = vpack.c.b16 %v3744, %v3742
        %v3817 = vpack.c.b16 %v3747, %v3745
        %v3818 = vpack.c.b16 %v3748, %v3746
        %v3819 = vpack.c.b16 %v3751, %v3749
        %v3820 = vpack.c.b16 %v3752, %v3750
        %v3821 = vpack.c.b16 %v3755, %v3753
        %v3822 = vpack.c.b16 %v3756, %v3754
        %v3823 = vpack.c.b16 %v3759, %v3757
        %v3824 = vpack.c.b16 %v3760, %v3758
        %3889 = vmatprep.subr.bf16.mxu0 %v3776
        %3890 = vmatpush1.bf16.msra.mxu0 %v3775
        %3891 = vmatprep.subr.bf16.mxu0 %v3774
        %3892 = vmatpush1.bf16.msra.mxu0 %v3773
        %3893 = vmatprep.subr.bf16.mxu0 %v3772
        %3894 = vmatpush1.bf16.msra.mxu0 %v3771
        %3895 = vmatprep.subr.bf16.mxu0 %v3770
        %3896 = vmatpush1.bf16.msra.mxu0 %v3769
        %3897 = vmatprep.subr.bf16.mxu0 %v3768
        %3898 = vmatpush1.bf16.msra.mxu0 %v3767
        %3899 = vmatprep.subr.bf16.mxu0 %v3766
        %3900 = vmatpush1.bf16.msra.mxu0 %v3765
        %3901 = vmatprep.subr.bf16.mxu0 %v3764
        %3902 = vmatpush1.bf16.msra.mxu0 %v3763
        %3903 = vmatprep.subr.bf16.mxu0 %v3762
        %3904 = vmatpush1.bf16.msra.mxu0 %v3761
        %3905 = vmatprep.subr.bf16.mxu0 %v3792
        %3906 = vmatpush2.bf16.msra.mxu0 %v3791
        %3907 = vmatprep.subr.bf16.mxu0 %v3790
        %3908 = vmatpush2.bf16.msra.mxu0 %v3789
        %3909 = vmatprep.subr.bf16.mxu0 %v3788
        %3910 = vmatpush2.bf16.msra.mxu0 %v3787
        %3911 = vmatprep.subr.bf16.mxu0 %v3786
        %3912 = vmatpush2.bf16.msra.mxu0 %v3785
        %3913 = vmatprep.subr.bf16.mxu0 %v3784
        %3914 = vmatpush2.bf16.msra.mxu0 %v3783
        %3915 = vmatprep.subr.bf16.mxu0 %v3782
        %3916 = vmatpush2.bf16.msra.mxu0 %v3781
        %3917 = vmatprep.subr.bf16.mxu0 %v3780
        %3918 = vmatpush2.bf16.msra.mxu0 %v3779
        %3919 = vmatprep.subr.bf16.mxu0 %v3778
        %3920 = vmatpush2.bf16.msra.mxu0 %v3777
        %3921 = vmatprep.mubr.bf16.mxu0 %v3490
        %3922 = vmatmul.mubr.bf16.gmra.mxu0 %v3489
        %v3923 = vpop.f32.mrf.mxu0
        %v3924 = vadd.f32 %v3562, %v3923
        %v3925 = vpop.f32.mrf.mxu0
        %v3926 = vadd.f32 %v3566, %v3925
        %v3927 = vpop.f32.mrf.mxu0
        %v3928 = vpop.f32.mrf.mxu0
        %3929 = vdwg.mxu0
        %3930 = vmatprep.subr.bf16.mxu0 %v3808
        %3931 = vmatpush1.bf16.msra.mxu0 %v3807
        %3932 = vmatprep.subr.bf16.mxu0 %v3806
        %3933 = vmatpush1.bf16.msra.mxu0 %v3805
        %3934 = vmatprep.subr.bf16.mxu0 %v3804
        %3935 = vmatpush1.bf16.msra.mxu0 %v3803
        %3936 = vmatprep.subr.bf16.mxu0 %v3802
        %3937 = vmatpush1.bf16.msra.mxu0 %v3801
        %3938 = vmatprep.subr.bf16.mxu0 %v3800
        %3939 = vmatpush1.bf16.msra.mxu0 %v3799
        %3940 = vmatprep.subr.bf16.mxu0 %v3798
        %3941 = vmatpush1.bf16.msra.mxu0 %v3797
        %3942 = vmatprep.subr.bf16.mxu0 %v3796
        %3943 = vmatpush1.bf16.msra.mxu0 %v3795
        %3944 = vmatprep.subr.bf16.mxu0 %v3794
        %3945 = vmatpush1.bf16.msra.mxu0 %v3793
        %3946 = vmatprep.subr.bf16.mxu0 %v3824
        %3947 = vmatpush2.bf16.msra.mxu0 %v3823
        %3948 = vmatprep.subr.bf16.mxu0 %v3822
        %3949 = vmatpush2.bf16.msra.mxu0 %v3821
        %3950 = vmatprep.subr.bf16.mxu0 %v3820
        %3951 = vmatpush2.bf16.msra.mxu0 %v3819
        %3952 = vmatprep.subr.bf16.mxu0 %v3818
        %3953 = vmatpush2.bf16.msra.mxu0 %v3817
        %3954 = vmatprep.subr.bf16.mxu0 %v3816
        %3955 = vmatpush2.bf16.msra.mxu0 %v3815
        %3956 = vmatprep.subr.bf16.mxu0 %v3814
        %3957 = vmatpush2.bf16.msra.mxu0 %v3813
        %3958 = vmatprep.subr.bf16.mxu0 %v3812
        %3959 = vmatpush2.bf16.msra.mxu0 %v3811
        %3960 = vmatprep.subr.bf16.mxu0 %v3810
        %3961 = vmatpush2.bf16.msra.mxu0 %v3809
        %3962 = vmatprep.mubr.bf16.mxu0 %v3492
        %3963 = vmatmul.mubr.bf16.gmra.mxu0 %v3491
        %v3964 = vpop.f32.mrf.mxu0
        %v3965 = vadd.f32 %v3924, %v3964
        %v3966 = vpop.f32.mrf.mxu0
        %v3967 = vadd.f32 %v3926, %v3966
        %v3968 = vpop.f32.mrf.mxu0
        %v3969 = vpop.f32.mrf.mxu0
        %3970 = vdwg.mxu0
        %v3971 = vadd.f32 %v2977, %v3965
        %v3972 = vadd.f32 %v2978, %v3967
        %v3973 = vld [vmem:[%s16] sm:$0x3]
        %v3974 = vld [vmem:[%s17] sm:$0x3]
        %v3975 = vadd.f32 %v3971, %v3972
        %3976 = vadd.xlane.f32.xlu0 %v3975
        %v3977 = vpop.xlane.xlu0 %3976
        %v3978 = vmul.f32 %v3977, %v2939
        %v3979 = vsub.f32 %v3971, %v3978
        %v3980 = vsub.f32 %v3972, %v3978
        %v3981 = vmul.f32 %v3979, %v3979
        %v3982 = vmul.f32 %v3980, %v3980
        %v3983 = vadd.f32 %v3981, %v3982
        %3984 = vadd.xlane.f32.xlu0 %v3983
        %v3985 = vpop.xlane.xlu0 %3984
        %v3986 = vmul.f32 %v3985, %v2939
        %v3987 = vadd.f32 %v3986, 1e-05
        %v3988 = vrsqrt.pop %v3987
        %v3989 = vmul.f32 %v3979, %v3988
        %v3990 = vmul.f32 %v3980, %v3988
        %v3992 = vlaneseq
        %v3993 = vshrl.u32 %v3992, 7
        %v3994 = vsub.s32 0, %v3993
        %v3995 = vrot.slane %v3973, %v3994
        %v3996 = vlaneseq
        %v3997 = vshrl.u32 %v3996, 7
        %v3998 = vsub.s32 1, %v3997
        %v3999 = vrot.slane %v3973, %v3998
        %v4002 = vmul.f32 %v3995, %v3989
        %v4003 = vmul.f32 %v3999, %v3990
        %v4005 = vlaneseq
        %v4006 = vshrl.u32 %v4005, 7
        %v4007 = vsub.s32 0, %v4006
        %v4008 = vrot.slane %v3974, %v4007
        %v4009 = vlaneseq
        %v4010 = vshrl.u32 %v4009, 7
        %v4011 = vsub.s32 1, %v4010
        %v4012 = vrot.slane %v3974, %v4011
        %v4015 = vadd.f32 %v4002, %v4008
        %v4016 = vadd.f32 %v4003, %v4012
        %4017 = vst [vmem:[%s736] sm:$0xff] %v4015
        %4018 = vst [vmem:[%s736 + $0x8] sm:$0xff] %v4016
        %s4019 = sand.u32 %s453, 1
        %s4020 = scalar_lea.sflag [#allocation6], %s4019
        %s4021 = sand.u32 %s453, 1
        %s4022 = smul.addr %s4021, 16
        %s4023 = scalar_lea.vmem [#allocation18], %s4022
        // Predicated region
        $region129: #{tpu_custom_call.1} parent=91 // pred_check
          %p4024 = pneg %p463
        $region130: #{tpu_custom_call.1} parent=91 // pred_check_branch
          %4026 = sbr.rel (%p4024) target = $region132
        $region131: #{tpu_custom_call.1} parent=91 // pred_region
          %s4028 = ssub.s32 256, 256
          %4029 = vsyncadd %s4020, %s4028
          %s4030 = smul.addr %s46, 2
          %s4031 = smul.addr %s45, 4
          %s4032 = sadd.s32 %s4030, %s4031
          %s4033 = smul.addr %s4032, 128
          %s4034 = scalar_lea.hbm %s18, %s4033
          %s4036 = sshll.u32 %s4023, 4
          %s4037 = int_to_ptr.vmem [resolvable:$true] %s4036
          %4039 = dma.vmem_to_hbm [thread:$0]  %s4037, 256, %s4034, %s4020
        $region132: #{tpu_custom_call.1} parent=91 // pred_fallthru
          _
      $region92: #{tpu_custom_call.1} parent=5 // pred_fallthru
        _
      %p4040 = scmp.le.s32.totalorder 2, %s36
      // Predicated region
      $region133: #{tpu_custom_call.1} parent=5 // pred_check
        %p4041 = pneg %p4040
      $region134: #{tpu_custom_call.1} parent=5 // pred_check_branch
        %4043 = sbr.rel (%p4041) target = $region136
      $region135: #{tpu_custom_call.1} parent=5 // pred_region
        %s4044 = ssub.s32 %s36, 2
        // Predicated region
        $region137: #{tpu_custom_call.1} parent=135 // pred_check
          %p4045 = pneg %p469
        $region138: #{tpu_custom_call.1} parent=135 // pred_check_branch
          %4047 = sbr.rel (%p4045) target = $region140
        $region139: #{tpu_custom_call.1} parent=135 // pred_region
          %s4048 = sand.u32 %s454, 1
          %s4049 = scalar_lea.sflag [#allocation6], %s4048
          %s4050 = sand.u32 %s454, 1
          %s4051 = smul.addr %s4050, 16
          %s4052 = scalar_lea.vmem [#allocation18], %s4051
          %4053 = dma.done %s4049, 256
        $region140: #{tpu_custom_call.1} parent=135 // pred_fallthru
          _
      $region136: #{tpu_custom_call.1} parent=5 // pred_fallthru
        _
    $region6: #{tpu_custom_call.1} parent=1 // loop_footer
      %s40 = sadd.s32 1, %s36
    $region7: #{tpu_custom_call.1} parent=1 // loop_footer_branch
      %35 = sbr.rel target = $region3
    $region8: #{tpu_custom_call.1} parent=1 // loop_exit
      _
    %4054 = vsyncpa [#allocation5], 1
    %s4055 = scalar_lea.sflag [#allocation5], 1
    %4056 = vsyncpa %s4055, 1
    %4057 = vsyncpa [#allocation8], 1
    %s4058 = scalar_lea.sflag [#allocation8], 1
    %4059 = vsyncpa %s4058, 1
    %4060 = vsyncpa [#allocation11], 1
    %4061 = vsyncpa [#allocation14], 1
    %4062 = vsyncpa [#allocation17], 1
    %4063 = vsyncpa [#allocation6], 1
    %s4064 = scalar_lea.sflag [#allocation6], 1
    %4065 = vsyncpa %s4064, 1

</llo_original>
